<compile_context>
chip_gen: v7x
topology: tpu7x:2x2x1
jax: 0.10.0
libtpu: 0.0.40
codegen_flags: <defaults>
</compile_context>

<pallas_src>
import numpy as np
import jax
import jax.numpy as jnp
from jax.experimental import pallas as pl
from jax.experimental.pallas import tpu as pltpu

# ---- model dimensions (match RecurrentAutoencoder(seq_len, n_features, emb)) ----
SEQ_LEN = 8
N_FEATURES = 1            # must be 1 (the PyTorch module's reshapes require it)
EMBEDDING_DIM = 32
ENC_H1 = 2 * EMBEDDING_DIM   # encoder rnn1 hidden = 64
ENC_H2 = EMBEDDING_DIM       # encoder rnn2 hidden = 32
DEC_H1 = EMBEDDING_DIM       # decoder rnn1 hidden = 32
DEC_H2 = 2 * EMBEDDING_DIM   # decoder rnn2 hidden = 64

GATE_PAD = 128               # each gate padded to one full 128-lane vreg


# --------------------------------- kernel ------------------------------------
def autoencoder_kernel(x_ref,
                       e1_wi, e1_wh, e1_b,
                       e2_wi, e2_wh, e2_b,
                       d1_wi, d1_wh, d1_b,
                       d2_wi, d2_wh, d2_b,
                       wo, bo,
                       out_ref):
    HP = GATE_PAD

    def cell(gates_pre, h, c, w_hh):
        """One LSTM step. gates_pre = x_proj row (input projection + bias)."""
        gates = gates_pre + jnp.dot(h, w_hh, preferred_element_type=jnp.float32)
        # Padded gate layout: each gate occupies exactly one 128-lane block.
        i = jax.nn.sigmoid(gates[:, 0 * HP:1 * HP])
        f = jax.nn.sigmoid(gates[:, 1 * HP:2 * HP])
        g = jnp.tanh(gates[:, 2 * HP:3 * HP])
        o = jax.nn.sigmoid(gates[:, 3 * HP:4 * HP])
        c_new = f * c + i * g
        h_new = o * jnp.tanh(c_new)
        return h_new, c_new

    def run_layer(x_proj, w_hh):
        """Fully unrolled recurrence over SEQ_LEN steps."""
        h = jnp.zeros((1, HP), jnp.float32)
        c = jnp.zeros((1, HP), jnp.float32)
        hs = []
        for t in range(SEQ_LEN):           # compile-time unroll
            h, c = cell(x_proj[t:t + 1, :], h, c, w_hh)
            hs.append(h)
        return jnp.concatenate(hs, axis=0), h

    # ---- encoder LSTM 1 : n_features -> ENC_H1 -------------------------------
    # Hoisted input projection: (8, 1) @ (1, 512) + bias.
    x1_proj = (jnp.dot(x_ref[...], e1_wi[...],
                       preferred_element_type=jnp.float32) + e1_b[...])
    seq1, _ = run_layer(x1_proj, e1_wh[...])

    # ---- encoder LSTM 2 : ENC_H1 -> ENC_H2 (only final hidden state needed) --
    x2_proj = (jnp.dot(seq1, e2_wi[...],
                       preferred_element_type=jnp.float32) + e2_b[...])
    _, emb = run_layer(x2_proj, e2_wh[...])

    # ---- decoder LSTM 1 : embedding replicated as input at every timestep ----
    # The input projection is constant across time -> compute exactly once.
    emb_proj = (jnp.dot(emb, d1_wi[...],
                        preferred_element_type=jnp.float32) + d1_b[...])
    h = jnp.zeros((1, HP), jnp.float32)
    c = jnp.zeros((1, HP), jnp.float32)
    hs = []
    for t in range(SEQ_LEN):               # compile-time unroll
        h, c = cell(emb_proj, h, c, d1_wh[...])
        hs.append(h)
    seq2 = jnp.concatenate(hs, axis=0)

    # ---- decoder LSTM 2 : DEC_H1 -> DEC_H2 -----------------------------------
    x4_proj = (jnp.dot(seq2, d2_wi[...],
                       preferred_element_type=jnp.float32) + d2_b[...])
    seq3, _ = run_layer(x4_proj, d2_wh[...])

    # ---- output linear layer : (8, 128-padded) @ (128, 1) + bias -------------
    # TODO(synk): n_features=1 output column -> masked vst; negligible here.
    out_ref[...] = (jnp.dot(seq3, wo[...],
                            preferred_element_type=jnp.float32) + bo[...])


def recurrent_autoencoder(x, flat_params):
    n_in = 1 + len(flat_params)
    return pl.pallas_call(
        autoencoder_kernel,
        out_shape=jax.ShapeDtypeStruct((SEQ_LEN, N_FEATURES), jnp.float32),
        in_specs=[pl.BlockSpec(memory_space=pltpu.MemorySpace.VMEM)] * n_in,
        out_specs=pl.BlockSpec(memory_space=pltpu.MemorySpace.VMEM),
    )(x, *flat_params)


# ------------------------- parameter initialization --------------------------
def init_lstm_raw(key, in_dim, hidden):
    """PyTorch-style uniform(-1/sqrt(hidden), 1/sqrt(hidden)) init (raw layout)."""
    bound = 1.0 / np.sqrt(hidden)
    k0, k1, k2, k3 = jax.random.split(key, 4)
    w_ih = jax.random.uniform(k0, (4 * hidden, in_dim), jnp.float32, -bound, bound)
    w_hh = jax.random.uniform(k1, (4 * hidden, hidden), jnp.float32, -bound, bound)
    b_ih = jax.random.uniform(k2, (4 * hidden,), jnp.float32, -bound, bound)
    b_hh = jax.random.uniform(k3, (4 * hidden,), jnp.float32, -bound, bound)
    return w_ih, w_hh, b_ih, b_hh


def init_linear_raw(key, in_dim, out_dim):
    bound = 1.0 / np.sqrt(in_dim)
    k0, k1 = jax.random.split(key)
    w = jax.random.uniform(k0, (out_dim, in_dim), jnp.float32, -bound, bound)
    b = jax.random.uniform(k1, (out_dim,), jnp.float32, -bound, bound)
    return w, b


def pack_lstm(raw, in_dim, in_pad, hidden):
    """Pack raw PyTorch LSTM weights into the padded-gate kernel layout.

    Returns:
      wi : (in_pad, 4*GATE_PAD)   zero-padded input-projection weight
      wh : (GATE_PAD, 4*GATE_PAD) zero-padded recurrent weight
      b  : (1, 4*GATE_PAD)        combined bias (b_ih + b_hh), zero-padded
    Gate order stays PyTorch's (i, f, g, o); each gate block is 128 lanes wide
    with only the first `hidden` lanes populated.
    """
    w_ih, w_hh, b_ih, b_hh = raw
    w_ih_T = np.asarray(w_ih).T            # (in_dim, 4H)
    w_hh_T = np.asarray(w_hh).T            # (H, 4H)
    b = np.asarray(b_ih) + np.asarray(b_hh)

    wi = np.zeros((in_pad, 4 * GATE_PAD), np.float32)
    wh = np.zeros((GATE_PAD, 4 * GATE_PAD), np.float32)
    bp = np.zeros((1, 4 * GATE_PAD), np.float32)
    for k in range(4):
        src = slice(k * hidden, (k + 1) * hidden)
        dst = slice(k * GATE_PAD, k * GATE_PAD + hidden)
        wi[:in_dim, dst] = w_ih_T[:, src]
        wh[:hidden, dst] = w_hh_T[:, src]
        bp[0, dst] = b[src]
    return jnp.asarray(wi), jnp.asarray(wh), jnp.asarray(bp)


def pack_linear(raw, in_dim, in_pad, out_dim):
    w, b = raw
    wp = np.zeros((in_pad, out_dim), np.float32)
    wp[:in_dim, :] = np.asarray(w).T
    bp = np.asarray(b).reshape(1, out_dim).astype(np.float32)
    return jnp.asarray(wp), jnp.asarray(bp)


# ----------------------------- pure-JAX reference -----------------------------
def _lstm_ref(xs, raw, hidden):
    w_ih, w_hh, b_ih, b_hh = raw
    w_ih_T, w_hh_T = w_ih.T, w_hh.T
    b = (b_ih + b_hh).reshape(1, -1)
    h = jnp.zeros((1, hidden), jnp.float32)
    c = jnp.zeros((1, hidden), jnp.float32)
    outs = []
    for t in range(xs.shape[0]):
        x_t = xs[t:t + 1]
        gates = x_t @ w_ih_T + h @ w_hh_T + b
        i = jax.nn.sigmoid(gates[:, :hidden])
        f = jax.nn.sigmoid(gates[:, hidden:2 * hidden])
        g = jnp.tanh(gates[:, 2 * hidden:3 * hidden])
        o = jax.nn.sigmoid(gates[:, 3 * hidden:])
        c = f * c + i * g
        h = o * jnp.tanh(c)
        outs.append(h)
    return jnp.concatenate(outs, axis=0), h


def ref_forward(x, e1_raw, e2_raw, d1_raw, d2_raw, lin_raw):
    s1, _ = _lstm_ref(x, e1_raw, ENC_H1)
    _, emb = _lstm_ref(s1, e2_raw, ENC_H2)
    dec_in = jnp.tile(emb, (SEQ_LEN, 1))
    s2, _ = _lstm_ref(dec_in, d1_raw, DEC_H1)
    s3, _ = _lstm_ref(s2, d2_raw, DEC_H2)
    wo, bo = lin_raw
    return s3 @ wo.T + bo.reshape(1, -1)


# ---------------------------------- main --------------------------------------
if __name__ == "__main__":
    root = jax.random.PRNGKey(0)
    kx, k1, k2, k3, k4, k5 = jax.random.split(root, 6)

    x = jax.random.normal(kx, (SEQ_LEN, N_FEATURES), jnp.float32)

    enc1_raw = init_lstm_raw(k1, N_FEATURES, ENC_H1)
    enc2_raw = init_lstm_raw(k2, ENC_H1, ENC_H2)
    dec1_raw = init_lstm_raw(k3, EMBEDDING_DIM, DEC_H1)
    dec2_raw = init_lstm_raw(k4, DEC_H1, DEC_H2)
    lin_raw = init_linear_raw(k5, DEC_H2, N_FEATURES)

    # Pack into the padded-gate kernel layout (zero padding keeps math exact).
    enc1 = pack_lstm(enc1_raw, N_FEATURES, N_FEATURES, ENC_H1)  # in_dim=1, no pad
    enc2 = pack_lstm(enc2_raw, ENC_H1, GATE_PAD, ENC_H2)
    dec1 = pack_lstm(dec1_raw, EMBEDDING_DIM, GATE_PAD, DEC_H1)
    dec2 = pack_lstm(dec2_raw, DEC_H1, GATE_PAD, DEC_H2)
    wo_p, bo_p = pack_linear(lin_raw, DEC_H2, GATE_PAD, N_FEATURES)

    flat_params = (*enc1, *enc2, *dec1, *dec2, wo_p, bo_p)

    out = recurrent_autoencoder(x, flat_params)
    out = jax.block_until_ready(out)

    ref = ref_forward(x, enc1_raw, enc2_raw, dec1_raw, dec2_raw, lin_raw)
    np.testing.assert_allclose(np.asarray(out), np.asarray(ref),
                               rtol=1e-5, atol=1e-5)
    assert out.shape == (SEQ_LEN, N_FEATURES)
    print("KERNEL_OK")
</pallas_src>

<mosaic_0001>
module attributes {stable_mosaic.version = 11 : i64} {
  func.func @autoencoder_kernel(%arg0: memref<8x1xf32, #tpu.memory_space<vmem>>, %arg1: memref<1x512xf32, #tpu.memory_space<vmem>>, %arg2: memref<128x512xf32, #tpu.memory_space<vmem>>, %arg3: memref<1x512xf32, #tpu.memory_space<vmem>>, %arg4: memref<128x512xf32, #tpu.memory_space<vmem>>, %arg5: memref<128x512xf32, #tpu.memory_space<vmem>>, %arg6: memref<1x512xf32, #tpu.memory_space<vmem>>, %arg7: memref<128x512xf32, #tpu.memory_space<vmem>>, %arg8: memref<128x512xf32, #tpu.memory_space<vmem>>, %arg9: memref<1x512xf32, #tpu.memory_space<vmem>>, %arg10: memref<128x512xf32, #tpu.memory_space<vmem>>, %arg11: memref<128x512xf32, #tpu.memory_space<vmem>>, %arg12: memref<1x512xf32, #tpu.memory_space<vmem>>, %arg13: memref<128x1xf32, #tpu.memory_space<vmem>>, %arg14: memref<1x1xf32, #tpu.memory_space<vmem>>, %arg15: memref<8x1xf32, #tpu.memory_space<vmem>>) attributes {dimension_semantics = [], scalar_prefetch = 0 : i64, scratch_operands = 0 : i64, tpu.core_type = #tpu.core_type<tc>} {
    %c0 = arith.constant 0 : index
    %c0_0 = arith.constant 0 : index
    %0 = vector.load %arg0[%c0, %c0_0] : memref<8x1xf32, #tpu.memory_space<vmem>>, vector<8x1xf32>
    %c0_1 = arith.constant 0 : index
    %c0_2 = arith.constant 0 : index
    %1 = vector.load %arg1[%c0_1, %c0_2] : memref<1x512xf32, #tpu.memory_space<vmem>>, vector<1x512xf32>
    %cst = arith.constant dense<0.000000e+00> : vector<8x512xf32>
    %2 = tpu.matmul %0, %1, %cst {dimension_numbers = #tpu.dot_dimension_numbers<[1], [0], [0], [1], [0, 0, 1, 1], [], []>} : vector<8x1xf32>, vector<1x512xf32>, vector<8x512xf32> -> vector<8x512xf32>
    %c0_3 = arith.constant 0 : index
    %c0_4 = arith.constant 0 : index
    %3 = vector.load %arg3[%c0_3, %c0_4] : memref<1x512xf32, #tpu.memory_space<vmem>>, vector<1x512xf32>
    %4 = vector.broadcast %3 : vector<1x512xf32> to vector<8x512xf32>
    %5 = arith.addf %2, %4 : vector<8x512xf32>
    %c0_5 = arith.constant 0 : index
    %c0_6 = arith.constant 0 : index
    %6 = vector.load %arg2[%c0_5, %c0_6] : memref<128x512xf32, #tpu.memory_space<vmem>>, vector<128x512xf32>
    %cst_7 = arith.constant 0.000000e+00 : f32
    %7 = vector.broadcast %cst_7 : f32 to vector<1x128xf32>
    %cst_8 = arith.constant 0.000000e+00 : f32
    %8 = vector.broadcast %cst_8 : f32 to vector<1x128xf32>
    %9 = vector.extract_strided_slice %5 {offsets = [0, 0], sizes = [1, 512], strides = [1, 1]} : vector<8x512xf32> to vector<1x512xf32>
    %cst_9 = arith.constant dense<0.000000e+00> : vector<1x512xf32>
    %10 = tpu.matmul %7, %6, %cst_9 {dimension_numbers = #tpu.dot_dimension_numbers<[1], [0], [0], [1], [0, 0, 1, 1], [], []>} : vector<1x128xf32>, vector<128x512xf32>, vector<1x512xf32> -> vector<1x512xf32>
    %11 = arith.addf %9, %10 : vector<1x512xf32>
    %12 = vector.extract_strided_slice %11 {offsets = [0, 0], sizes = [1, 128], strides = [1, 1]} : vector<1x512xf32> to vector<1x128xf32>
    %13 = arith.negf %12 : vector<1x128xf32>
    %14 = math.exp %13 : vector<1x128xf32>
    %cst_10 = arith.constant 1.000000e+00 : f32
    %15 = vector.broadcast %cst_10 : f32 to vector<1x128xf32>
    %16 = arith.addf %15, %14 : vector<1x128xf32>
    %17 = arith.divf %15, %16 : vector<1x128xf32>
    %18 = vector.extract_strided_slice %11 {offsets = [0, 128], sizes = [1, 128], strides = [1, 1]} : vector<1x512xf32> to vector<1x128xf32>
    %19 = arith.negf %18 : vector<1x128xf32>
    %20 = math.exp %19 : vector<1x128xf32>
    %cst_11 = arith.constant 1.000000e+00 : f32
    %21 = vector.broadcast %cst_11 : f32 to vector<1x128xf32>
    %22 = arith.addf %21, %20 : vector<1x128xf32>
    %23 = arith.divf %21, %22 : vector<1x128xf32>
    %24 = vector.extract_strided_slice %11 {offsets = [0, 256], sizes = [1, 128], strides = [1, 1]} : vector<1x512xf32> to vector<1x128xf32>
    %25 = math.tanh %24 : vector<1x128xf32>
    %26 = vector.extract_strided_slice %11 {offsets = [0, 384], sizes = [1, 128], strides = [1, 1]} : vector<1x512xf32> to vector<1x128xf32>
    %27 = arith.negf %26 : vector<1x128xf32>
    %28 = math.exp %27 : vector<1x128xf32>
    %cst_12 = arith.constant 1.000000e+00 : f32
    %29 = vector.broadcast %cst_12 : f32 to vector<1x128xf32>
    %30 = arith.addf %29, %28 : vector<1x128xf32>
    %31 = arith.divf %29, %30 : vector<1x128xf32>
    %32 = arith.mulf %23, %8 : vector<1x128xf32>
    %33 = arith.mulf %17, %25 : vector<1x128xf32>
    %34 = arith.addf %32, %33 : vector<1x128xf32>
    %35 = math.tanh %34 : vector<1x128xf32>
    %36 = arith.mulf %31, %35 : vector<1x128xf32>
    %37 = vector.extract_strided_slice %5 {offsets = [1, 0], sizes = [1, 512], strides = [1, 1]} : vector<8x512xf32> to vector<1x512xf32>
    %cst_13 = arith.constant dense<0.000000e+00> : vector<1x512xf32>
    %38 = tpu.matmul %36, %6, %cst_13 {dimension_numbers = #tpu.dot_dimension_numbers<[1], [0], [0], [1], [0, 0, 1, 1], [], []>} : vector<1x128xf32>, vector<128x512xf32>, vector<1x512xf32> -> vector<1x512xf32>
    %39 = arith.addf %37, %38 : vector<1x512xf32>
    %40 = vector.extract_strided_slice %39 {offsets = [0, 0], sizes = [1, 128], strides = [1, 1]} : vector<1x512xf32> to vector<1x128xf32>
    %41 = arith.negf %40 : vector<1x128xf32>
    %42 = math.exp %41 : vector<1x128xf32>
    %cst_14 = arith.constant 1.000000e+00 : f32
    %43 = vector.broadcast %cst_14 : f32 to vector<1x128xf32>
    %44 = arith.addf %43, %42 : vector<1x128xf32>
    %45 = arith.divf %43, %44 : vector<1x128xf32>
    %46 = vector.extract_strided_slice %39 {offsets = [0, 128], sizes = [1, 128], strides = [1, 1]} : vector<1x512xf32> to vector<1x128xf32>
    %47 = arith.negf %46 : vector<1x128xf32>
    %48 = math.exp %47 : vector<1x128xf32>
    %cst_15 = arith.constant 1.000000e+00 : f32
    %49 = vector.broadcast %cst_15 : f32 to vector<1x128xf32>
    %50 = arith.addf %49, %48 : vector<1x128xf32>
    %51 = arith.divf %49, %50 : vector<1x128xf32>
    %52 = vector.extract_strided_slice %39 {offsets = [0, 256], sizes = [1, 128], strides = [1, 1]} : vector<1x512xf32> to vector<1x128xf32>
    %53 = math.tanh %52 : vector<1x128xf32>
    %54 = vector.extract_strided_slice %39 {offsets = [0, 384], sizes = [1, 128], strides = [1, 1]} : vector<1x512xf32> to vector<1x128xf32>
    %55 = arith.negf %54 : vector<1x128xf32>
    %56 = math.exp %55 : vector<1x128xf32>
    %cst_16 = arith.constant 1.000000e+00 : f32
    %57 = vector.broadcast %cst_16 : f32 to vector<1x128xf32>
    %58 = arith.addf %57, %56 : vector<1x128xf32>
    %59 = arith.divf %57, %58 : vector<1x128xf32>
    %60 = arith.mulf %51, %34 : vector<1x128xf32>
    %61 = arith.mulf %45, %53 : vector<1x128xf32>
    %62 = arith.addf %60, %61 : vector<1x128xf32>
    %63 = math.tanh %62 : vector<1x128xf32>
    %64 = arith.mulf %59, %63 : vector<1x128xf32>
    %65 = vector.extract_strided_slice %5 {offsets = [2, 0], sizes = [1, 512], strides = [1, 1]} : vector<8x512xf32> to vector<1x512xf32>
    %cst_17 = arith.constant dense<0.000000e+00> : vector<1x512xf32>
    %66 = tpu.matmul %64, %6, %cst_17 {dimension_numbers = #tpu.dot_dimension_numbers<[1], [0], [0], [1], [0, 0, 1, 1], [], []>} : vector<1x128xf32>, vector<128x512xf32>, vector<1x512xf32> -> vector<1x512xf32>
    %67 = arith.addf %65, %66 : vector<1x512xf32>
    %68 = vector.extract_strided_slice %67 {offsets = [0, 0], sizes = [1, 128], strides = [1, 1]} : vector<1x512xf32> to vector<1x128xf32>
    %69 = arith.negf %68 : vector<1x128xf32>
    %70 = math.exp %69 : vector<1x128xf32>
    %cst_18 = arith.constant 1.000000e+00 : f32
    %71 = vector.broadcast %cst_18 : f32 to vector<1x128xf32>
    %72 = arith.addf %71, %70 : vector<1x128xf32>
    %73 = arith.divf %71, %72 : vector<1x128xf32>
    %74 = vector.extract_strided_slice %67 {offsets = [0, 128], sizes = [1, 128], strides = [1, 1]} : vector<1x512xf32> to vector<1x128xf32>
    %75 = arith.negf %74 : vector<1x128xf32>
    %76 = math.exp %75 : vector<1x128xf32>
    %cst_19 = arith.constant 1.000000e+00 : f32
    %77 = vector.broadcast %cst_19 : f32 to vector<1x128xf32>
    %78 = arith.addf %77, %76 : vector<1x128xf32>
    %79 = arith.divf %77, %78 : vector<1x128xf32>
    %80 = vector.extract_strided_slice %67 {offsets = [0, 256], sizes = [1, 128], strides = [1, 1]} : vector<1x512xf32> to vector<1x128xf32>
    %81 = math.tanh %80 : vector<1x128xf32>
    %82 = vector.extract_strided_slice %67 {offsets = [0, 384], sizes = [1, 128], strides = [1, 1]} : vector<1x512xf32> to vector<1x128xf32>
    %83 = arith.negf %82 : vector<1x128xf32>
    %84 = math.exp %83 : vector<1x128xf32>
    %cst_20 = arith.constant 1.000000e+00 : f32
    %85 = vector.broadcast %cst_20 : f32 to vector<1x128xf32>
    %86 = arith.addf %85, %84 : vector<1x128xf32>
    %87 = arith.divf %85, %86 : vector<1x128xf32>
    %88 = arith.mulf %79, %62 : vector<1x128xf32>
    %89 = arith.mulf %73, %81 : vector<1x128xf32>
    %90 = arith.addf %88, %89 : vector<1x128xf32>
    %91 = math.tanh %90 : vector<1x128xf32>
    %92 = arith.mulf %87, %91 : vector<1x128xf32>
    %93 = vector.extract_strided_slice %5 {offsets = [3, 0], sizes = [1, 512], strides = [1, 1]} : vector<8x512xf32> to vector<1x512xf32>
    %cst_21 = arith.constant dense<0.000000e+00> : vector<1x512xf32>
    %94 = tpu.matmul %92, %6, %cst_21 {dimension_numbers = #tpu.dot_dimension_numbers<[1], [0], [0], [1], [0, 0, 1, 1], [], []>} : vector<1x128xf32>, vector<128x512xf32>, vector<1x512xf32> -> vector<1x512xf32>
    %95 = arith.addf %93, %94 : vector<1x512xf32>
    %96 = vector.extract_strided_slice %95 {offsets = [0, 0], sizes = [1, 128], strides = [1, 1]} : vector<1x512xf32> to vector<1x128xf32>
    %97 = arith.negf %96 : vector<1x128xf32>
    %98 = math.exp %97 : vector<1x128xf32>
    %cst_22 = arith.constant 1.000000e+00 : f32
    %99 = vector.broadcast %cst_22 : f32 to vector<1x128xf32>
    %100 = arith.addf %99, %98 : vector<1x128xf32>
    %101 = arith.divf %99, %100 : vector<1x128xf32>
    %102 = vector.extract_strided_slice %95 {offsets = [0, 128], sizes = [1, 128], strides = [1, 1]} : vector<1x512xf32> to vector<1x128xf32>
    %103 = arith.negf %102 : vector<1x128xf32>
    %104 = math.exp %103 : vector<1x128xf32>
    %cst_23 = arith.constant 1.000000e+00 : f32
    %105 = vector.broadcast %cst_23 : f32 to vector<1x128xf32>
    %106 = arith.addf %105, %104 : vector<1x128xf32>
    %107 = arith.divf %105, %106 : vector<1x128xf32>
    %108 = vector.extract_strided_slice %95 {offsets = [0, 256], sizes = [1, 128], strides = [1, 1]} : vector<1x512xf32> to vector<1x128xf32>
    %109 = math.tanh %108 : vector<1x128xf32>
    %110 = vector.extract_strided_slice %95 {offsets = [0, 384], sizes = [1, 128], strides = [1, 1]} : vector<1x512xf32> to vector<1x128xf32>
    %111 = arith.negf %110 : vector<1x128xf32>
    %112 = math.exp %111 : vector<1x128xf32>
    %cst_24 = arith.constant 1.000000e+00 : f32
    %113 = vector.broadcast %cst_24 : f32 to vector<1x128xf32>
    %114 = arith.addf %113, %112 : vector<1x128xf32>
    %115 = arith.divf %113, %114 : vector<1x128xf32>
    %116 = arith.mulf %107, %90 : vector<1x128xf32>
    %117 = arith.mulf %101, %109 : vector<1x128xf32>
    %118 = arith.addf %116, %117 : vector<1x128xf32>
    %119 = math.tanh %118 : vector<1x128xf32>
    %120 = arith.mulf %115, %119 : vector<1x128xf32>
    %121 = vector.extract_strided_slice %5 {offsets = [4, 0], sizes = [1, 512], strides = [1, 1]} : vector<8x512xf32> to vector<1x512xf32>
    %cst_25 = arith.constant dense<0.000000e+00> : vector<1x512xf32>
    %122 = tpu.matmul %120, %6, %cst_25 {dimension_numbers = #tpu.dot_dimension_numbers<[1], [0], [0], [1], [0, 0, 1, 1], [], []>} : vector<1x128xf32>, vector<128x512xf32>, vector<1x512xf32> -> vector<1x512xf32>
    %123 = arith.addf %121, %122 : vector<1x512xf32>
    %124 = vector.extract_strided_slice %123 {offsets = [0, 0], sizes = [1, 128], strides = [1, 1]} : vector<1x512xf32> to vector<1x128xf32>
    %125 = arith.negf %124 : vector<1x128xf32>
    %126 = math.exp %125 : vector<1x128xf32>
    %cst_26 = arith.constant 1.000000e+00 : f32
    %127 = vector.broadcast %cst_26 : f32 to vector<1x128xf32>
    %128 = arith.addf %127, %126 : vector<1x128xf32>
    %129 = arith.divf %127, %128 : vector<1x128xf32>
    %130 = vector.extract_strided_slice %123 {offsets = [0, 128], sizes = [1, 128], strides = [1, 1]} : vector<1x512xf32> to vector<1x128xf32>
    %131 = arith.negf %130 : vector<1x128xf32>
    %132 = math.exp %131 : vector<1x128xf32>
    %cst_27 = arith.constant 1.000000e+00 : f32
    %133 = vector.broadcast %cst_27 : f32 to vector<1x128xf32>
    %134 = arith.addf %133, %132 : vector<1x128xf32>
    %135 = arith.divf %133, %134 : vector<1x128xf32>
    %136 = vector.extract_strided_slice %123 {offsets = [0, 256], sizes = [1, 128], strides = [1, 1]} : vector<1x512xf32> to vector<1x128xf32>
    %137 = math.tanh %136 : vector<1x128xf32>
    %138 = vector.extract_strided_slice %123 {offsets = [0, 384], sizes = [1, 128], strides = [1, 1]} : vector<1x512xf32> to vector<1x128xf32>
    %139 = arith.negf %138 : vector<1x128xf32>
    %140 = math.exp %139 : vector<1x128xf32>
    %cst_28 = arith.constant 1.000000e+00 : f32
    %141 = vector.broadcast %cst_28 : f32 to vector<1x128xf32>
    %142 = arith.addf %141, %140 : vector<1x128xf32>
    %143 = arith.divf %141, %142 : vector<1x128xf32>
    %144 = arith.mulf %135, %118 : vector<1x128xf32>
    %145 = arith.mulf %129, %137 : vector<1x128xf32>
    %146 = arith.addf %144, %145 : vector<1x128xf32>
    %147 = math.tanh %146 : vector<1x128xf32>
    %148 = arith.mulf %143, %147 : vector<1x128xf32>
    %149 = vector.extract_strided_slice %5 {offsets = [5, 0], sizes = [1, 512], strides = [1, 1]} : vector<8x512xf32> to vector<1x512xf32>
    %cst_29 = arith.constant dense<0.000000e+00> : vector<1x512xf32>
    %150 = tpu.matmul %148, %6, %cst_29 {dimension_numbers = #tpu.dot_dimension_numbers<[1], [0], [0], [1], [0, 0, 1, 1], [], []>} : vector<1x128xf32>, vector<128x512xf32>, vector<1x512xf32> -> vector<1x512xf32>
    %151 = arith.addf %149, %150 : vector<1x512xf32>
    %152 = vector.extract_strided_slice %151 {offsets = [0, 0], sizes = [1, 128], strides = [1, 1]} : vector<1x512xf32> to vector<1x128xf32>
    %153 = arith.negf %152 : vector<1x128xf32>
    %154 = math.exp %153 : vector<1x128xf32>
    %cst_30 = arith.constant 1.000000e+00 : f32
    %155 = vector.broadcast %cst_30 : f32 to vector<1x128xf32>
    %156 = arith.addf %155, %154 : vector<1x128xf32>
    %157 = arith.divf %155, %156 : vector<1x128xf32>
    %158 = vector.extract_strided_slice %151 {offsets = [0, 128], sizes = [1, 128], strides = [1, 1]} : vector<1x512xf32> to vector<1x128xf32>
    %159 = arith.negf %158 : vector<1x128xf32>
    %160 = math.exp %159 : vector<1x128xf32>
    %cst_31 = arith.constant 1.000000e+00 : f32
    %161 = vector.broadcast %cst_31 : f32 to vector<1x128xf32>
    %162 = arith.addf %161, %160 : vector<1x128xf32>
    %163 = arith.divf %161, %162 : vector<1x128xf32>
    %164 = vector.extract_strided_slice %151 {offsets = [0, 256], sizes = [1, 128], strides = [1, 1]} : vector<1x512xf32> to vector<1x128xf32>
    %165 = math.tanh %164 : vector<1x128xf32>
    %166 = vector.extract_strided_slice %151 {offsets = [0, 384], sizes = [1, 128], strides = [1, 1]} : vector<1x512xf32> to vector<1x128xf32>
    %167 = arith.negf %166 : vector<1x128xf32>
    %168 = math.exp %167 : vector<1x128xf32>
    %cst_32 = arith.constant 1.000000e+00 : f32
    %169 = vector.broadcast %cst_32 : f32 to vector<1x128xf32>
    %170 = arith.addf %169, %168 : vector<1x128xf32>
    %171 = arith.divf %169, %170 : vector<1x128xf32>
    %172 = arith.mulf %163, %146 : vector<1x128xf32>
    %173 = arith.mulf %157, %165 : vector<1x128xf32>
    %174 = arith.addf %172, %173 : vector<1x128xf32>
    %175 = math.tanh %174 : vector<1x128xf32>
    %176 = arith.mulf %171, %175 : vector<1x128xf32>
    %177 = vector.extract_strided_slice %5 {offsets = [6, 0], sizes = [1, 512], strides = [1, 1]} : vector<8x512xf32> to vector<1x512xf32>
    %cst_33 = arith.constant dense<0.000000e+00> : vector<1x512xf32>
    %178 = tpu.matmul %176, %6, %cst_33 {dimension_numbers = #tpu.dot_dimension_numbers<[1], [0], [0], [1], [0, 0, 1, 1], [], []>} : vector<1x128xf32>, vector<128x512xf32>, vector<1x512xf32> -> vector<1x512xf32>
    %179 = arith.addf %177, %178 : vector<1x512xf32>
    %180 = vector.extract_strided_slice %179 {offsets = [0, 0], sizes = [1, 128], strides = [1, 1]} : vector<1x512xf32> to vector<1x128xf32>
    %181 = arith.negf %180 : vector<1x128xf32>
    %182 = math.exp %181 : vector<1x128xf32>
    %cst_34 = arith.constant 1.000000e+00 : f32
    %183 = vector.broadcast %cst_34 : f32 to vector<1x128xf32>
    %184 = arith.addf %183, %182 : vector<1x128xf32>
    %185 = arith.divf %183, %184 : vector<1x128xf32>
    %186 = vector.extract_strided_slice %179 {offsets = [0, 128], sizes = [1, 128], strides = [1, 1]} : vector<1x512xf32> to vector<1x128xf32>
    %187 = arith.negf %186 : vector<1x128xf32>
    %188 = math.exp %187 : vector<1x128xf32>
    %cst_35 = arith.constant 1.000000e+00 : f32
    %189 = vector.broadcast %cst_35 : f32 to vector<1x128xf32>
    %190 = arith.addf %189, %188 : vector<1x128xf32>
    %191 = arith.divf %189, %190 : vector<1x128xf32>
    %192 = vector.extract_strided_slice %179 {offsets = [0, 256], sizes = [1, 128], strides = [1, 1]} : vector<1x512xf32> to vector<1x128xf32>
    %193 = math.tanh %192 : vector<1x128xf32>
    %194 = vector.extract_strided_slice %179 {offsets = [0, 384], sizes = [1, 128], strides = [1, 1]} : vector<1x512xf32> to vector<1x128xf32>
    %195 = arith.negf %194 : vector<1x128xf32>
    %196 = math.exp %195 : vector<1x128xf32>
    %cst_36 = arith.constant 1.000000e+00 : f32
    %197 = vector.broadcast %cst_36 : f32 to vector<1x128xf32>
    %198 = arith.addf %197, %196 : vector<1x128xf32>
    %199 = arith.divf %197, %198 : vector<1x128xf32>
    %200 = arith.mulf %191, %174 : vector<1x128xf32>
    %201 = arith.mulf %185, %193 : vector<1x128xf32>
    %202 = arith.addf %200, %201 : vector<1x128xf32>
    %203 = math.tanh %202 : vector<1x128xf32>
    %204 = arith.mulf %199, %203 : vector<1x128xf32>
    %205 = vector.extract_strided_slice %5 {offsets = [7, 0], sizes = [1, 512], strides = [1, 1]} : vector<8x512xf32> to vector<1x512xf32>
    %cst_37 = arith.constant dense<0.000000e+00> : vector<1x512xf32>
    %206 = tpu.matmul %204, %6, %cst_37 {dimension_numbers = #tpu.dot_dimension_numbers<[1], [0], [0], [1], [0, 0, 1, 1], [], []>} : vector<1x128xf32>, vector<128x512xf32>, vector<1x512xf32> -> vector<1x512xf32>
    %207 = arith.addf %205, %206 : vector<1x512xf32>
    %208 = vector.extract_strided_slice %207 {offsets = [0, 0], sizes = [1, 128], strides = [1, 1]} : vector<1x512xf32> to vector<1x128xf32>
    %209 = arith.negf %208 : vector<1x128xf32>
    %210 = math.exp %209 : vector<1x128xf32>
    %cst_38 = arith.constant 1.000000e+00 : f32
    %211 = vector.broadcast %cst_38 : f32 to vector<1x128xf32>
    %212 = arith.addf %211, %210 : vector<1x128xf32>
    %213 = arith.divf %211, %212 : vector<1x128xf32>
    %214 = vector.extract_strided_slice %207 {offsets = [0, 128], sizes = [1, 128], strides = [1, 1]} : vector<1x512xf32> to vector<1x128xf32>
    %215 = arith.negf %214 : vector<1x128xf32>
    %216 = math.exp %215 : vector<1x128xf32>
    %cst_39 = arith.constant 1.000000e+00 : f32
    %217 = vector.broadcast %cst_39 : f32 to vector<1x128xf32>
    %218 = arith.addf %217, %216 : vector<1x128xf32>
    %219 = arith.divf %217, %218 : vector<1x128xf32>
    %220 = vector.extract_strided_slice %207 {offsets = [0, 256], sizes = [1, 128], strides = [1, 1]} : vector<1x512xf32> to vector<1x128xf32>
    %221 = math.tanh %220 : vector<1x128xf32>
    %222 = vector.extract_strided_slice %207 {offsets = [0, 384], sizes = [1, 128], strides = [1, 1]} : vector<1x512xf32> to vector<1x128xf32>
    %223 = arith.negf %222 : vector<1x128xf32>
    %224 = math.exp %223 : vector<1x128xf32>
    %cst_40 = arith.constant 1.000000e+00 : f32
    %225 = vector.broadcast %cst_40 : f32 to vector<1x128xf32>
    %226 = arith.addf %225, %224 : vector<1x128xf32>
    %227 = arith.divf %225, %226 : vector<1x128xf32>
    %228 = arith.mulf %219, %202 : vector<1x128xf32>
    %229 = arith.mulf %213, %221 : vector<1x128xf32>
    %230 = arith.addf %228, %229 : vector<1x128xf32>
    %231 = math.tanh %230 : vector<1x128xf32>
    %232 = arith.mulf %227, %231 : vector<1x128xf32>
    %233 = tpu.concatenate %36, %64, %92, %120, %148, %176, %204, %232 in 0 : vector<1x128xf32>, vector<1x128xf32>, vector<1x128xf32>, vector<1x128xf32>, vector<1x128xf32>, vector<1x128xf32>, vector<1x128xf32>, vector<1x128xf32> -> vector<8x128xf32>
    %c0_41 = arith.constant 0 : index
    %c0_42 = arith.constant 0 : index
    %234 = vector.load %arg4[%c0_41, %c0_42] : memref<128x512xf32, #tpu.memory_space<vmem>>, vector<128x512xf32>
    %cst_43 = arith.constant dense<0.000000e+00> : vector<8x512xf32>
    %235 = tpu.matmul %233, %234, %cst_43 {dimension_numbers = #tpu.dot_dimension_numbers<[1], [0], [0], [1], [0, 0, 1, 1], [], []>} : vector<8x128xf32>, vector<128x512xf32>, vector<8x512xf32> -> vector<8x512xf32>
    %c0_44 = arith.constant 0 : index
    %c0_45 = arith.constant 0 : index
    %236 = vector.load %arg6[%c0_44, %c0_45] : memref<1x512xf32, #tpu.memory_space<vmem>>, vector<1x512xf32>
    %237 = vector.broadcast %236 : vector<1x512xf32> to vector<8x512xf32>
    %238 = arith.addf %235, %237 : vector<8x512xf32>
    %c0_46 = arith.constant 0 : index
    %c0_47 = arith.constant 0 : index
    %239 = vector.load %arg5[%c0_46, %c0_47] : memref<128x512xf32, #tpu.memory_space<vmem>>, vector<128x512xf32>
    %cst_48 = arith.constant 0.000000e+00 : f32
    %240 = vector.broadcast %cst_48 : f32 to vector<1x128xf32>
    %cst_49 = arith.constant 0.000000e+00 : f32
    %241 = vector.broadcast %cst_49 : f32 to vector<1x128xf32>
    %242 = vector.extract_strided_slice %238 {offsets = [0, 0], sizes = [1, 512], strides = [1, 1]} : vector<8x512xf32> to vector<1x512xf32>
    %cst_50 = arith.constant dense<0.000000e+00> : vector<1x512xf32>
    %243 = tpu.matmul %240, %239, %cst_50 {dimension_numbers = #tpu.dot_dimension_numbers<[1], [0], [0], [1], [0, 0, 1, 1], [], []>} : vector<1x128xf32>, vector<128x512xf32>, vector<1x512xf32> -> vector<1x512xf32>
    %244 = arith.addf %242, %243 : vector<1x512xf32>
    %245 = vector.extract_strided_slice %244 {offsets = [0, 0], sizes = [1, 128], strides = [1, 1]} : vector<1x512xf32> to vector<1x128xf32>
    %246 = arith.negf %245 : vector<1x128xf32>
    %247 = math.exp %246 : vector<1x128xf32>
    %cst_51 = arith.constant 1.000000e+00 : f32
    %248 = vector.broadcast %cst_51 : f32 to vector<1x128xf32>
    %249 = arith.addf %248, %247 : vector<1x128xf32>
    %250 = arith.divf %248, %249 : vector<1x128xf32>
    %251 = vector.extract_strided_slice %244 {offsets = [0, 128], sizes = [1, 128], strides = [1, 1]} : vector<1x512xf32> to vector<1x128xf32>
    %252 = arith.negf %251 : vector<1x128xf32>
    %253 = math.exp %252 : vector<1x128xf32>
    %cst_52 = arith.constant 1.000000e+00 : f32
    %254 = vector.broadcast %cst_52 : f32 to vector<1x128xf32>
    %255 = arith.addf %254, %253 : vector<1x128xf32>
    %256 = arith.divf %254, %255 : vector<1x128xf32>
    %257 = vector.extract_strided_slice %244 {offsets = [0, 256], sizes = [1, 128], strides = [1, 1]} : vector<1x512xf32> to vector<1x128xf32>
    %258 = math.tanh %257 : vector<1x128xf32>
    %259 = vector.extract_strided_slice %244 {offsets = [0, 384], sizes = [1, 128], strides = [1, 1]} : vector<1x512xf32> to vector<1x128xf32>
    %260 = arith.negf %259 : vector<1x128xf32>
    %261 = math.exp %260 : vector<1x128xf32>
    %cst_53 = arith.constant 1.000000e+00 : f32
    %262 = vector.broadcast %cst_53 : f32 to vector<1x128xf32>
    %263 = arith.addf %262, %261 : vector<1x128xf32>
    %264 = arith.divf %262, %263 : vector<1x128xf32>
    %265 = arith.mulf %256, %241 : vector<1x128xf32>
    %266 = arith.mulf %250, %258 : vector<1x128xf32>
    %267 = arith.addf %265, %266 : vector<1x128xf32>
    %268 = math.tanh %267 : vector<1x128xf32>
    %269 = arith.mulf %264, %268 : vector<1x128xf32>
    %270 = vector.extract_strided_slice %238 {offsets = [1, 0], sizes = [1, 512], strides = [1, 1]} : vector<8x512xf32> to vector<1x512xf32>
    %cst_54 = arith.constant dense<0.000000e+00> : vector<1x512xf32>
    %271 = tpu.matmul %269, %239, %cst_54 {dimension_numbers = #tpu.dot_dimension_numbers<[1], [0], [0], [1], [0, 0, 1, 1], [], []>} : vector<1x128xf32>, vector<128x512xf32>, vector<1x512xf32> -> vector<1x512xf32>
    %272 = arith.addf %270, %271 : vector<1x512xf32>
    %273 = vector.extract_strided_slice %272 {offsets = [0, 0], sizes = [1, 128], strides = [1, 1]} : vector<1x512xf32> to vector<1x128xf32>
    %274 = arith.negf %273 : vector<1x128xf32>
    %275 = math.exp %274 : vector<1x128xf32>
    %cst_55 = arith.constant 1.000000e+00 : f32
    %276 = vector.broadcast %cst_55 : f32 to vector<1x128xf32>
    %277 = arith.addf %276, %275 : vector<1x128xf32>
    %278 = arith.divf %276, %277 : vector<1x128xf32>
    %279 = vector.extract_strided_slice %272 {offsets = [0, 128], sizes = [1, 128], strides = [1, 1]} : vector<1x512xf32> to vector<1x128xf32>
    %280 = arith.negf %279 : vector<1x128xf32>
    %281 = math.exp %280 : vector<1x128xf32>
    %cst_56 = arith.constant 1.000000e+00 : f32
    %282 = vector.broadcast %cst_56 : f32 to vector<1x128xf32>
    %283 = arith.addf %282, %281 : vector<1x128xf32>
    %284 = arith.divf %282, %283 : vector<1x128xf32>
    %285 = vector.extract_strided_slice %272 {offsets = [0, 256], sizes = [1, 128], strides = [1, 1]} : vector<1x512xf32> to vector<1x128xf32>
    %286 = math.tanh %285 : vector<1x128xf32>
    %287 = vector.extract_strided_slice %272 {offsets = [0, 384], sizes = [1, 128], strides = [1, 1]} : vector<1x512xf32> to vector<1x128xf32>
    %288 = arith.negf %287 : vector<1x128xf32>
    %289 = math.exp %288 : vector<1x128xf32>
    %cst_57 = arith.constant 1.000000e+00 : f32
    %290 = vector.broadcast %cst_57 : f32 to vector<1x128xf32>
    %291 = arith.addf %290, %289 : vector<1x128xf32>
    %292 = arith.divf %290, %291 : vector<1x128xf32>
    %293 = arith.mulf %284, %267 : vector<1x128xf32>
    %294 = arith.mulf %278, %286 : vector<1x128xf32>
    %295 = arith.addf %293, %294 : vector<1x128xf32>
    %296 = math.tanh %295 : vector<1x128xf32>
    %297 = arith.mulf %292, %296 : vector<1x128xf32>
    %298 = vector.extract_strided_slice %238 {offsets = [2, 0], sizes = [1, 512], strides = [1, 1]} : vector<8x512xf32> to vector<1x512xf32>
    %cst_58 = arith.constant dense<0.000000e+00> : vector<1x512xf32>
    %299 = tpu.matmul %297, %239, %cst_58 {dimension_numbers = #tpu.dot_dimension_numbers<[1], [0], [0], [1], [0, 0, 1, 1], [], []>} : vector<1x128xf32>, vector<128x512xf32>, vector<1x512xf32> -> vector<1x512xf32>
    %300 = arith.addf %298, %299 : vector<1x512xf32>
    %301 = vector.extract_strided_slice %300 {offsets = [0, 0], sizes = [1, 128], strides = [1, 1]} : vector<1x512xf32> to vector<1x128xf32>
    %302 = arith.negf %301 : vector<1x128xf32>
    %303 = math.exp %302 : vector<1x128xf32>
    %cst_59 = arith.constant 1.000000e+00 : f32
    %304 = vector.broadcast %cst_59 : f32 to vector<1x128xf32>
    %305 = arith.addf %304, %303 : vector<1x128xf32>
    %306 = arith.divf %304, %305 : vector<1x128xf32>
    %307 = vector.extract_strided_slice %300 {offsets = [0, 128], sizes = [1, 128], strides = [1, 1]} : vector<1x512xf32> to vector<1x128xf32>
    %308 = arith.negf %307 : vector<1x128xf32>
    %309 = math.exp %308 : vector<1x128xf32>
    %cst_60 = arith.constant 1.000000e+00 : f32
    %310 = vector.broadcast %cst_60 : f32 to vector<1x128xf32>
    %311 = arith.addf %310, %309 : vector<1x128xf32>
    %312 = arith.divf %310, %311 : vector<1x128xf32>
    %313 = vector.extract_strided_slice %300 {offsets = [0, 256], sizes = [1, 128], strides = [1, 1]} : vector<1x512xf32> to vector<1x128xf32>
    %314 = math.tanh %313 : vector<1x128xf32>
    %315 = vector.extract_strided_slice %300 {offsets = [0, 384], sizes = [1, 128], strides = [1, 1]} : vector<1x512xf32> to vector<1x128xf32>
    %316 = arith.negf %315 : vector<1x128xf32>
    %317 = math.exp %316 : vector<1x128xf32>
    %cst_61 = arith.constant 1.000000e+00 : f32
    %318 = vector.broadcast %cst_61 : f32 to vector<1x128xf32>
    %319 = arith.addf %318, %317 : vector<1x128xf32>
    %320 = arith.divf %318, %319 : vector<1x128xf32>
    %321 = arith.mulf %312, %295 : vector<1x128xf32>
    %322 = arith.mulf %306, %314 : vector<1x128xf32>
    %323 = arith.addf %321, %322 : vector<1x128xf32>
    %324 = math.tanh %323 : vector<1x128xf32>
    %325 = arith.mulf %320, %324 : vector<1x128xf32>
    %326 = vector.extract_strided_slice %238 {offsets = [3, 0], sizes = [1, 512], strides = [1, 1]} : vector<8x512xf32> to vector<1x512xf32>
    %cst_62 = arith.constant dense<0.000000e+00> : vector<1x512xf32>
    %327 = tpu.matmul %325, %239, %cst_62 {dimension_numbers = #tpu.dot_dimension_numbers<[1], [0], [0], [1], [0, 0, 1, 1], [], []>} : vector<1x128xf32>, vector<128x512xf32>, vector<1x512xf32> -> vector<1x512xf32>
    %328 = arith.addf %326, %327 : vector<1x512xf32>
    %329 = vector.extract_strided_slice %328 {offsets = [0, 0], sizes = [1, 128], strides = [1, 1]} : vector<1x512xf32> to vector<1x128xf32>
    %330 = arith.negf %329 : vector<1x128xf32>
    %331 = math.exp %330 : vector<1x128xf32>
    %cst_63 = arith.constant 1.000000e+00 : f32
    %332 = vector.broadcast %cst_63 : f32 to vector<1x128xf32>
    %333 = arith.addf %332, %331 : vector<1x128xf32>
    %334 = arith.divf %332, %333 : vector<1x128xf32>
    %335 = vector.extract_strided_slice %328 {offsets = [0, 128], sizes = [1, 128], strides = [1, 1]} : vector<1x512xf32> to vector<1x128xf32>
    %336 = arith.negf %335 : vector<1x128xf32>
    %337 = math.exp %336 : vector<1x128xf32>
    %cst_64 = arith.constant 1.000000e+00 : f32
    %338 = vector.broadcast %cst_64 : f32 to vector<1x128xf32>
    %339 = arith.addf %338, %337 : vector<1x128xf32>
    %340 = arith.divf %338, %339 : vector<1x128xf32>
    %341 = vector.extract_strided_slice %328 {offsets = [0, 256], sizes = [1, 128], strides = [1, 1]} : vector<1x512xf32> to vector<1x128xf32>
    %342 = math.tanh %341 : vector<1x128xf32>
    %343 = vector.extract_strided_slice %328 {offsets = [0, 384], sizes = [1, 128], strides = [1, 1]} : vector<1x512xf32> to vector<1x128xf32>
    %344 = arith.negf %343 : vector<1x128xf32>
    %345 = math.exp %344 : vector<1x128xf32>
    %cst_65 = arith.constant 1.000000e+00 : f32
    %346 = vector.broadcast %cst_65 : f32 to vector<1x128xf32>
    %347 = arith.addf %346, %345 : vector<1x128xf32>
    %348 = arith.divf %346, %347 : vector<1x128xf32>
    %349 = arith.mulf %340, %323 : vector<1x128xf32>
    %350 = arith.mulf %334, %342 : vector<1x128xf32>
    %351 = arith.addf %349, %350 : vector<1x128xf32>
    %352 = math.tanh %351 : vector<1x128xf32>
    %353 = arith.mulf %348, %352 : vector<1x128xf32>
    %354 = vector.extract_strided_slice %238 {offsets = [4, 0], sizes = [1, 512], strides = [1, 1]} : vector<8x512xf32> to vector<1x512xf32>
    %cst_66 = arith.constant dense<0.000000e+00> : vector<1x512xf32>
    %355 = tpu.matmul %353, %239, %cst_66 {dimension_numbers = #tpu.dot_dimension_numbers<[1], [0], [0], [1], [0, 0, 1, 1], [], []>} : vector<1x128xf32>, vector<128x512xf32>, vector<1x512xf32> -> vector<1x512xf32>
    %356 = arith.addf %354, %355 : vector<1x512xf32>
    %357 = vector.extract_strided_slice %356 {offsets = [0, 0], sizes = [1, 128], strides = [1, 1]} : vector<1x512xf32> to vector<1x128xf32>
    %358 = arith.negf %357 : vector<1x128xf32>
    %359 = math.exp %358 : vector<1x128xf32>
    %cst_67 = arith.constant 1.000000e+00 : f32
    %360 = vector.broadcast %cst_67 : f32 to vector<1x128xf32>
    %361 = arith.addf %360, %359 : vector<1x128xf32>
    %362 = arith.divf %360, %361 : vector<1x128xf32>
    %363 = vector.extract_strided_slice %356 {offsets = [0, 128], sizes = [1, 128], strides = [1, 1]} : vector<1x512xf32> to vector<1x128xf32>
    %364 = arith.negf %363 : vector<1x128xf32>
    %365 = math.exp %364 : vector<1x128xf32>
    %cst_68 = arith.constant 1.000000e+00 : f32
    %366 = vector.broadcast %cst_68 : f32 to vector<1x128xf32>
    %367 = arith.addf %366, %365 : vector<1x128xf32>
    %368 = arith.divf %366, %367 : vector<1x128xf32>
    %369 = vector.extract_strided_slice %356 {offsets = [0, 256], sizes = [1, 128], strides = [1, 1]} : vector<1x512xf32> to vector<1x128xf32>
    %370 = math.tanh %369 : vector<1x128xf32>
    %371 = vector.extract_strided_slice %356 {offsets = [0, 384], sizes = [1, 128], strides = [1, 1]} : vector<1x512xf32> to vector<1x128xf32>
    %372 = arith.negf %371 : vector<1x128xf32>
    %373 = math.exp %372 : vector<1x128xf32>
    %cst_69 = arith.constant 1.000000e+00 : f32
    %374 = vector.broadcast %cst_69 : f32 to vector<1x128xf32>
    %375 = arith.addf %374, %373 : vector<1x128xf32>
    %376 = arith.divf %374, %375 : vector<1x128xf32>
    %377 = arith.mulf %368, %351 : vector<1x128xf32>
    %378 = arith.mulf %362, %370 : vector<1x128xf32>
    %379 = arith.addf %377, %378 : vector<1x128xf32>
    %380 = math.tanh %379 : vector<1x128xf32>
    %381 = arith.mulf %376, %380 : vector<1x128xf32>
    %382 = vector.extract_strided_slice %238 {offsets = [5, 0], sizes = [1, 512], strides = [1, 1]} : vector<8x512xf32> to vector<1x512xf32>
    %cst_70 = arith.constant dense<0.000000e+00> : vector<1x512xf32>
    %383 = tpu.matmul %381, %239, %cst_70 {dimension_numbers = #tpu.dot_dimension_numbers<[1], [0], [0], [1], [0, 0, 1, 1], [], []>} : vector<1x128xf32>, vector<128x512xf32>, vector<1x512xf32> -> vector<1x512xf32>
    %384 = arith.addf %382, %383 : vector<1x512xf32>
    %385 = vector.extract_strided_slice %384 {offsets = [0, 0], sizes = [1, 128], strides = [1, 1]} : vector<1x512xf32> to vector<1x128xf32>
    %386 = arith.negf %385 : vector<1x128xf32>
    %387 = math.exp %386 : vector<1x128xf32>
    %cst_71 = arith.constant 1.000000e+00 : f32
    %388 = vector.broadcast %cst_71 : f32 to vector<1x128xf32>
    %389 = arith.addf %388, %387 : vector<1x128xf32>
    %390 = arith.divf %388, %389 : vector<1x128xf32>
    %391 = vector.extract_strided_slice %384 {offsets = [0, 128], sizes = [1, 128], strides = [1, 1]} : vector<1x512xf32> to vector<1x128xf32>
    %392 = arith.negf %391 : vector<1x128xf32>
    %393 = math.exp %392 : vector<1x128xf32>
    %cst_72 = arith.constant 1.000000e+00 : f32
    %394 = vector.broadcast %cst_72 : f32 to vector<1x128xf32>
    %395 = arith.addf %394, %393 : vector<1x128xf32>
    %396 = arith.divf %394, %395 : vector<1x128xf32>
    %397 = vector.extract_strided_slice %384 {offsets = [0, 256], sizes = [1, 128], strides = [1, 1]} : vector<1x512xf32> to vector<1x128xf32>
    %398 = math.tanh %397 : vector<1x128xf32>
    %399 = vector.extract_strided_slice %384 {offsets = [0, 384], sizes = [1, 128], strides = [1, 1]} : vector<1x512xf32> to vector<1x128xf32>
    %400 = arith.negf %399 : vector<1x128xf32>
    %401 = math.exp %400 : vector<1x128xf32>
    %cst_73 = arith.constant 1.000000e+00 : f32
    %402 = vector.broadcast %cst_73 : f32 to vector<1x128xf32>
    %403 = arith.addf %402, %401 : vector<1x128xf32>
    %404 = arith.divf %402, %403 : vector<1x128xf32>
    %405 = arith.mulf %396, %379 : vector<1x128xf32>
    %406 = arith.mulf %390, %398 : vector<1x128xf32>
    %407 = arith.addf %405, %406 : vector<1x128xf32>
    %408 = math.tanh %407 : vector<1x128xf32>
    %409 = arith.mulf %404, %408 : vector<1x128xf32>
    %410 = vector.extract_strided_slice %238 {offsets = [6, 0], sizes = [1, 512], strides = [1, 1]} : vector<8x512xf32> to vector<1x512xf32>
    %cst_74 = arith.constant dense<0.000000e+00> : vector<1x512xf32>
    %411 = tpu.matmul %409, %239, %cst_74 {dimension_numbers = #tpu.dot_dimension_numbers<[1], [0], [0], [1], [0, 0, 1, 1], [], []>} : vector<1x128xf32>, vector<128x512xf32>, vector<1x512xf32> -> vector<1x512xf32>
    %412 = arith.addf %410, %411 : vector<1x512xf32>
    %413 = vector.extract_strided_slice %412 {offsets = [0, 0], sizes = [1, 128], strides = [1, 1]} : vector<1x512xf32> to vector<1x128xf32>
    %414 = arith.negf %413 : vector<1x128xf32>
    %415 = math.exp %414 : vector<1x128xf32>
    %cst_75 = arith.constant 1.000000e+00 : f32
    %416 = vector.broadcast %cst_75 : f32 to vector<1x128xf32>
    %417 = arith.addf %416, %415 : vector<1x128xf32>
    %418 = arith.divf %416, %417 : vector<1x128xf32>
    %419 = vector.extract_strided_slice %412 {offsets = [0, 128], sizes = [1, 128], strides = [1, 1]} : vector<1x512xf32> to vector<1x128xf32>
    %420 = arith.negf %419 : vector<1x128xf32>
    %421 = math.exp %420 : vector<1x128xf32>
    %cst_76 = arith.constant 1.000000e+00 : f32
    %422 = vector.broadcast %cst_76 : f32 to vector<1x128xf32>
    %423 = arith.addf %422, %421 : vector<1x128xf32>
    %424 = arith.divf %422, %423 : vector<1x128xf32>
    %425 = vector.extract_strided_slice %412 {offsets = [0, 256], sizes = [1, 128], strides = [1, 1]} : vector<1x512xf32> to vector<1x128xf32>
    %426 = math.tanh %425 : vector<1x128xf32>
    %427 = vector.extract_strided_slice %412 {offsets = [0, 384], sizes = [1, 128], strides = [1, 1]} : vector<1x512xf32> to vector<1x128xf32>
    %428 = arith.negf %427 : vector<1x128xf32>
    %429 = math.exp %428 : vector<1x128xf32>
    %cst_77 = arith.constant 1.000000e+00 : f32
    %430 = vector.broadcast %cst_77 : f32 to vector<1x128xf32>
    %431 = arith.addf %430, %429 : vector<1x128xf32>
    %432 = arith.divf %430, %431 : vector<1x128xf32>
    %433 = arith.mulf %424, %407 : vector<1x128xf32>
    %434 = arith.mulf %418, %426 : vector<1x128xf32>
    %435 = arith.addf %433, %434 : vector<1x128xf32>
    %436 = math.tanh %435 : vector<1x128xf32>
    %437 = arith.mulf %432, %436 : vector<1x128xf32>
    %438 = vector.extract_strided_slice %238 {offsets = [7, 0], sizes = [1, 512], strides = [1, 1]} : vector<8x512xf32> to vector<1x512xf32>
    %cst_78 = arith.constant dense<0.000000e+00> : vector<1x512xf32>
    %439 = tpu.matmul %437, %239, %cst_78 {dimension_numbers = #tpu.dot_dimension_numbers<[1], [0], [0], [1], [0, 0, 1, 1], [], []>} : vector<1x128xf32>, vector<128x512xf32>, vector<1x512xf32> -> vector<1x512xf32>
    %440 = arith.addf %438, %439 : vector<1x512xf32>
    %441 = vector.extract_strided_slice %440 {offsets = [0, 0], sizes = [1, 128], strides = [1, 1]} : vector<1x512xf32> to vector<1x128xf32>
    %442 = arith.negf %441 : vector<1x128xf32>
    %443 = math.exp %442 : vector<1x128xf32>
    %cst_79 = arith.constant 1.000000e+00 : f32
    %444 = vector.broadcast %cst_79 : f32 to vector<1x128xf32>
    %445 = arith.addf %444, %443 : vector<1x128xf32>
    %446 = arith.divf %444, %445 : vector<1x128xf32>
    %447 = vector.extract_strided_slice %440 {offsets = [0, 128], sizes = [1, 128], strides = [1, 1]} : vector<1x512xf32> to vector<1x128xf32>
    %448 = arith.negf %447 : vector<1x128xf32>
    %449 = math.exp %448 : vector<1x128xf32>
    %cst_80 = arith.constant 1.000000e+00 : f32
    %450 = vector.broadcast %cst_80 : f32 to vector<1x128xf32>
    %451 = arith.addf %450, %449 : vector<1x128xf32>
    %452 = arith.divf %450, %451 : vector<1x128xf32>
    %453 = vector.extract_strided_slice %440 {offsets = [0, 256], sizes = [1, 128], strides = [1, 1]} : vector<1x512xf32> to vector<1x128xf32>
    %454 = math.tanh %453 : vector<1x128xf32>
    %455 = vector.extract_strided_slice %440 {offsets = [0, 384], sizes = [1, 128], strides = [1, 1]} : vector<1x512xf32> to vector<1x128xf32>
    %456 = arith.negf %455 : vector<1x128xf32>
    %457 = math.exp %456 : vector<1x128xf32>
    %cst_81 = arith.constant 1.000000e+00 : f32
    %458 = vector.broadcast %cst_81 : f32 to vector<1x128xf32>
    %459 = arith.addf %458, %457 : vector<1x128xf32>
    %460 = arith.divf %458, %459 : vector<1x128xf32>
    %461 = arith.mulf %452, %435 : vector<1x128xf32>
    %462 = arith.mulf %446, %454 : vector<1x128xf32>
    %463 = arith.addf %461, %462 : vector<1x128xf32>
    %464 = math.tanh %463 : vector<1x128xf32>
    %465 = arith.mulf %460, %464 : vector<1x128xf32>
    %c0_82 = arith.constant 0 : index
    %c0_83 = arith.constant 0 : index
    %466 = vector.load %arg7[%c0_82, %c0_83] : memref<128x512xf32, #tpu.memory_space<vmem>>, vector<128x512xf32>
    %cst_84 = arith.constant dense<0.000000e+00> : vector<1x512xf32>
    %467 = tpu.matmul %465, %466, %cst_84 {dimension_numbers = #tpu.dot_dimension_numbers<[1], [0], [0], [1], [0, 0, 1, 1], [], []>} : vector<1x128xf32>, vector<128x512xf32>, vector<1x512xf32> -> vector<1x512xf32>
    %c0_85 = arith.constant 0 : index
    %c0_86 = arith.constant 0 : index
    %468 = vector.load %arg9[%c0_85, %c0_86] : memref<1x512xf32, #tpu.memory_space<vmem>>, vector<1x512xf32>
    %469 = arith.addf %467, %468 : vector<1x512xf32>
    %cst_87 = arith.constant 0.000000e+00 : f32
    %470 = vector.broadcast %cst_87 : f32 to vector<1x128xf32>
    %cst_88 = arith.constant 0.000000e+00 : f32
    %471 = vector.broadcast %cst_88 : f32 to vector<1x128xf32>
    %c0_89 = arith.constant 0 : index
    %c0_90 = arith.constant 0 : index
    %472 = vector.load %arg8[%c0_89, %c0_90] : memref<128x512xf32, #tpu.memory_space<vmem>>, vector<128x512xf32>
    %cst_91 = arith.constant dense<0.000000e+00> : vector<1x512xf32>
    %473 = tpu.matmul %470, %472, %cst_91 {dimension_numbers = #tpu.dot_dimension_numbers<[1], [0], [0], [1], [0, 0, 1, 1], [], []>} : vector<1x128xf32>, vector<128x512xf32>, vector<1x512xf32> -> vector<1x512xf32>
    %474 = arith.addf %469, %473 : vector<1x512xf32>
    %475 = vector.extract_strided_slice %474 {offsets = [0, 0], sizes = [1, 128], strides = [1, 1]} : vector<1x512xf32> to vector<1x128xf32>
    %476 = arith.negf %475 : vector<1x128xf32>
    %477 = math.exp %476 : vector<1x128xf32>
    %cst_92 = arith.constant 1.000000e+00 : f32
    %478 = vector.broadcast %cst_92 : f32 to vector<1x128xf32>
    %479 = arith.addf %478, %477 : vector<1x128xf32>
    %480 = arith.divf %478, %479 : vector<1x128xf32>
    %481 = vector.extract_strided_slice %474 {offsets = [0, 128], sizes = [1, 128], strides = [1, 1]} : vector<1x512xf32> to vector<1x128xf32>
    %482 = arith.negf %481 : vector<1x128xf32>
    %483 = math.exp %482 : vector<1x128xf32>
    %cst_93 = arith.constant 1.000000e+00 : f32
    %484 = vector.broadcast %cst_93 : f32 to vector<1x128xf32>
    %485 = arith.addf %484, %483 : vector<1x128xf32>
    %486 = arith.divf %484, %485 : vector<1x128xf32>
    %487 = vector.extract_strided_slice %474 {offsets = [0, 256], sizes = [1, 128], strides = [1, 1]} : vector<1x512xf32> to vector<1x128xf32>
    %488 = math.tanh %487 : vector<1x128xf32>
    %489 = vector.extract_strided_slice %474 {offsets = [0, 384], sizes = [1, 128], strides = [1, 1]} : vector<1x512xf32> to vector<1x128xf32>
    %490 = arith.negf %489 : vector<1x128xf32>
    %491 = math.exp %490 : vector<1x128xf32>
    %cst_94 = arith.constant 1.000000e+00 : f32
    %492 = vector.broadcast %cst_94 : f32 to vector<1x128xf32>
    %493 = arith.addf %492, %491 : vector<1x128xf32>
    %494 = arith.divf %492, %493 : vector<1x128xf32>
    %495 = arith.mulf %486, %471 : vector<1x128xf32>
    %496 = arith.mulf %480, %488 : vector<1x128xf32>
    %497 = arith.addf %495, %496 : vector<1x128xf32>
    %498 = math.tanh %497 : vector<1x128xf32>
    %499 = arith.mulf %494, %498 : vector<1x128xf32>
    %c0_95 = arith.constant 0 : index
    %c0_96 = arith.constant 0 : index
    %500 = vector.load %arg8[%c0_95, %c0_96] : memref<128x512xf32, #tpu.memory_space<vmem>>, vector<128x512xf32>
    %cst_97 = arith.constant dense<0.000000e+00> : vector<1x512xf32>
    %501 = tpu.matmul %499, %500, %cst_97 {dimension_numbers = #tpu.dot_dimension_numbers<[1], [0], [0], [1], [0, 0, 1, 1], [], []>} : vector<1x128xf32>, vector<128x512xf32>, vector<1x512xf32> -> vector<1x512xf32>
    %502 = arith.addf %469, %501 : vector<1x512xf32>
    %503 = vector.extract_strided_slice %502 {offsets = [0, 0], sizes = [1, 128], strides = [1, 1]} : vector<1x512xf32> to vector<1x128xf32>
    %504 = arith.negf %503 : vector<1x128xf32>
    %505 = math.exp %504 : vector<1x128xf32>
    %cst_98 = arith.constant 1.000000e+00 : f32
    %506 = vector.broadcast %cst_98 : f32 to vector<1x128xf32>
    %507 = arith.addf %506, %505 : vector<1x128xf32>
    %508 = arith.divf %506, %507 : vector<1x128xf32>
    %509 = vector.extract_strided_slice %502 {offsets = [0, 128], sizes = [1, 128], strides = [1, 1]} : vector<1x512xf32> to vector<1x128xf32>
    %510 = arith.negf %509 : vector<1x128xf32>
    %511 = math.exp %510 : vector<1x128xf32>
    %cst_99 = arith.constant 1.000000e+00 : f32
    %512 = vector.broadcast %cst_99 : f32 to vector<1x128xf32>
    %513 = arith.addf %512, %511 : vector<1x128xf32>
    %514 = arith.divf %512, %513 : vector<1x128xf32>
    %515 = vector.extract_strided_slice %502 {offsets = [0, 256], sizes = [1, 128], strides = [1, 1]} : vector<1x512xf32> to vector<1x128xf32>
    %516 = math.tanh %515 : vector<1x128xf32>
    %517 = vector.extract_strided_slice %502 {offsets = [0, 384], sizes = [1, 128], strides = [1, 1]} : vector<1x512xf32> to vector<1x128xf32>
    %518 = arith.negf %517 : vector<1x128xf32>
    %519 = math.exp %518 : vector<1x128xf32>
    %cst_100 = arith.constant 1.000000e+00 : f32
    %520 = vector.broadcast %cst_100 : f32 to vector<1x128xf32>
    %521 = arith.addf %520, %519 : vector<1x128xf32>
    %522 = arith.divf %520, %521 : vector<1x128xf32>
    %523 = arith.mulf %514, %497 : vector<1x128xf32>
    %524 = arith.mulf %508, %516 : vector<1x128xf32>
    %525 = arith.addf %523, %524 : vector<1x128xf32>
    %526 = math.tanh %525 : vector<1x128xf32>
    %527 = arith.mulf %522, %526 : vector<1x128xf32>
    %c0_101 = arith.constant 0 : index
    %c0_102 = arith.constant 0 : index
    %528 = vector.load %arg8[%c0_101, %c0_102] : memref<128x512xf32, #tpu.memory_space<vmem>>, vector<128x512xf32>
    %cst_103 = arith.constant dense<0.000000e+00> : vector<1x512xf32>
    %529 = tpu.matmul %527, %528, %cst_103 {dimension_numbers = #tpu.dot_dimension_numbers<[1], [0], [0], [1], [0, 0, 1, 1], [], []>} : vector<1x128xf32>, vector<128x512xf32>, vector<1x512xf32> -> vector<1x512xf32>
    %530 = arith.addf %469, %529 : vector<1x512xf32>
    %531 = vector.extract_strided_slice %530 {offsets = [0, 0], sizes = [1, 128], strides = [1, 1]} : vector<1x512xf32> to vector<1x128xf32>
    %532 = arith.negf %531 : vector<1x128xf32>
    %533 = math.exp %532 : vector<1x128xf32>
    %cst_104 = arith.constant 1.000000e+00 : f32
    %534 = vector.broadcast %cst_104 : f32 to vector<1x128xf32>
    %535 = arith.addf %534, %533 : vector<1x128xf32>
    %536 = arith.divf %534, %535 : vector<1x128xf32>
    %537 = vector.extract_strided_slice %530 {offsets = [0, 128], sizes = [1, 128], strides = [1, 1]} : vector<1x512xf32> to vector<1x128xf32>
    %538 = arith.negf %537 : vector<1x128xf32>
    %539 = math.exp %538 : vector<1x128xf32>
    %cst_105 = arith.constant 1.000000e+00 : f32
    %540 = vector.broadcast %cst_105 : f32 to vector<1x128xf32>
    %541 = arith.addf %540, %539 : vector<1x128xf32>
    %542 = arith.divf %540, %541 : vector<1x128xf32>
    %543 = vector.extract_strided_slice %530 {offsets = [0, 256], sizes = [1, 128], strides = [1, 1]} : vector<1x512xf32> to vector<1x128xf32>
    %544 = math.tanh %543 : vector<1x128xf32>
    %545 = vector.extract_strided_slice %530 {offsets = [0, 384], sizes = [1, 128], strides = [1, 1]} : vector<1x512xf32> to vector<1x128xf32>
    %546 = arith.negf %545 : vector<1x128xf32>
    %547 = math.exp %546 : vector<1x128xf32>
    %cst_106 = arith.constant 1.000000e+00 : f32
    %548 = vector.broadcast %cst_106 : f32 to vector<1x128xf32>
    %549 = arith.addf %548, %547 : vector<1x128xf32>
    %550 = arith.divf %548, %549 : vector<1x128xf32>
    %551 = arith.mulf %542, %525 : vector<1x128xf32>
    %552 = arith.mulf %536, %544 : vector<1x128xf32>
    %553 = arith.addf %551, %552 : vector<1x128xf32>
    %554 = math.tanh %553 : vector<1x128xf32>
    %555 = arith.mulf %550, %554 : vector<1x128xf32>
    %c0_107 = arith.constant 0 : index
    %c0_108 = arith.constant 0 : index
    %556 = vector.load %arg8[%c0_107, %c0_108] : memref<128x512xf32, #tpu.memory_space<vmem>>, vector<128x512xf32>
    %cst_109 = arith.constant dense<0.000000e+00> : vector<1x512xf32>
    %557 = tpu.matmul %555, %556, %cst_109 {dimension_numbers = #tpu.dot_dimension_numbers<[1], [0], [0], [1], [0, 0, 1, 1], [], []>} : vector<1x128xf32>, vector<128x512xf32>, vector<1x512xf32> -> vector<1x512xf32>
    %558 = arith.addf %469, %557 : vector<1x512xf32>
    %559 = vector.extract_strided_slice %558 {offsets = [0, 0], sizes = [1, 128], strides = [1, 1]} : vector<1x512xf32> to vector<1x128xf32>
    %560 = arith.negf %559 : vector<1x128xf32>
    %561 = math.exp %560 : vector<1x128xf32>
    %cst_110 = arith.constant 1.000000e+00 : f32
    %562 = vector.broadcast %cst_110 : f32 to vector<1x128xf32>
    %563 = arith.addf %562, %561 : vector<1x128xf32>
    %564 = arith.divf %562, %563 : vector<1x128xf32>
    %565 = vector.extract_strided_slice %558 {offsets = [0, 128], sizes = [1, 128], strides = [1, 1]} : vector<1x512xf32> to vector<1x128xf32>
    %566 = arith.negf %565 : vector<1x128xf32>
    %567 = math.exp %566 : vector<1x128xf32>
    %cst_111 = arith.constant 1.000000e+00 : f32
    %568 = vector.broadcast %cst_111 : f32 to vector<1x128xf32>
    %569 = arith.addf %568, %567 : vector<1x128xf32>
    %570 = arith.divf %568, %569 : vector<1x128xf32>
    %571 = vector.extract_strided_slice %558 {offsets = [0, 256], sizes = [1, 128], strides = [1, 1]} : vector<1x512xf32> to vector<1x128xf32>
    %572 = math.tanh %571 : vector<1x128xf32>
    %573 = vector.extract_strided_slice %558 {offsets = [0, 384], sizes = [1, 128], strides = [1, 1]} : vector<1x512xf32> to vector<1x128xf32>
    %574 = arith.negf %573 : vector<1x128xf32>
    %575 = math.exp %574 : vector<1x128xf32>
    %cst_112 = arith.constant 1.000000e+00 : f32
    %576 = vector.broadcast %cst_112 : f32 to vector<1x128xf32>
    %577 = arith.addf %576, %575 : vector<1x128xf32>
    %578 = arith.divf %576, %577 : vector<1x128xf32>
    %579 = arith.mulf %570, %553 : vector<1x128xf32>
    %580 = arith.mulf %564, %572 : vector<1x128xf32>
    %581 = arith.addf %579, %580 : vector<1x128xf32>
    %582 = math.tanh %581 : vector<1x128xf32>
    %583 = arith.mulf %578, %582 : vector<1x128xf32>
    %c0_113 = arith.constant 0 : index
    %c0_114 = arith.constant 0 : index
    %584 = vector.load %arg8[%c0_113, %c0_114] : memref<128x512xf32, #tpu.memory_space<vmem>>, vector<128x512xf32>
    %cst_115 = arith.constant dense<0.000000e+00> : vector<1x512xf32>
    %585 = tpu.matmul %583, %584, %cst_115 {dimension_numbers = #tpu.dot_dimension_numbers<[1], [0], [0], [1], [0, 0, 1, 1], [], []>} : vector<1x128xf32>, vector<128x512xf32>, vector<1x512xf32> -> vector<1x512xf32>
    %586 = arith.addf %469, %585 : vector<1x512xf32>
    %587 = vector.extract_strided_slice %586 {offsets = [0, 0], sizes = [1, 128], strides = [1, 1]} : vector<1x512xf32> to vector<1x128xf32>
    %588 = arith.negf %587 : vector<1x128xf32>
    %589 = math.exp %588 : vector<1x128xf32>
    %cst_116 = arith.constant 1.000000e+00 : f32
    %590 = vector.broadcast %cst_116 : f32 to vector<1x128xf32>
    %591 = arith.addf %590, %589 : vector<1x128xf32>
    %592 = arith.divf %590, %591 : vector<1x128xf32>
    %593 = vector.extract_strided_slice %586 {offsets = [0, 128], sizes = [1, 128], strides = [1, 1]} : vector<1x512xf32> to vector<1x128xf32>
    %594 = arith.negf %593 : vector<1x128xf32>
    %595 = math.exp %594 : vector<1x128xf32>
    %cst_117 = arith.constant 1.000000e+00 : f32
    %596 = vector.broadcast %cst_117 : f32 to vector<1x128xf32>
    %597 = arith.addf %596, %595 : vector<1x128xf32>
    %598 = arith.divf %596, %597 : vector<1x128xf32>
    %599 = vector.extract_strided_slice %586 {offsets = [0, 256], sizes = [1, 128], strides = [1, 1]} : vector<1x512xf32> to vector<1x128xf32>
    %600 = math.tanh %599 : vector<1x128xf32>
    %601 = vector.extract_strided_slice %586 {offsets = [0, 384], sizes = [1, 128], strides = [1, 1]} : vector<1x512xf32> to vector<1x128xf32>
    %602 = arith.negf %601 : vector<1x128xf32>
    %603 = math.exp %602 : vector<1x128xf32>
    %cst_118 = arith.constant 1.000000e+00 : f32
    %604 = vector.broadcast %cst_118 : f32 to vector<1x128xf32>
    %605 = arith.addf %604, %603 : vector<1x128xf32>
    %606 = arith.divf %604, %605 : vector<1x128xf32>
    %607 = arith.mulf %598, %581 : vector<1x128xf32>
    %608 = arith.mulf %592, %600 : vector<1x128xf32>
    %609 = arith.addf %607, %608 : vector<1x128xf32>
    %610 = math.tanh %609 : vector<1x128xf32>
    %611 = arith.mulf %606, %610 : vector<1x128xf32>
    %c0_119 = arith.constant 0 : index
    %c0_120 = arith.constant 0 : index
    %612 = vector.load %arg8[%c0_119, %c0_120] : memref<128x512xf32, #tpu.memory_space<vmem>>, vector<128x512xf32>
    %cst_121 = arith.constant dense<0.000000e+00> : vector<1x512xf32>
    %613 = tpu.matmul %611, %612, %cst_121 {dimension_numbers = #tpu.dot_dimension_numbers<[1], [0], [0], [1], [0, 0, 1, 1], [], []>} : vector<1x128xf32>, vector<128x512xf32>, vector<1x512xf32> -> vector<1x512xf32>
    %614 = arith.addf %469, %613 : vector<1x512xf32>
    %615 = vector.extract_strided_slice %614 {offsets = [0, 0], sizes = [1, 128], strides = [1, 1]} : vector<1x512xf32> to vector<1x128xf32>
    %616 = arith.negf %615 : vector<1x128xf32>
    %617 = math.exp %616 : vector<1x128xf32>
    %cst_122 = arith.constant 1.000000e+00 : f32
    %618 = vector.broadcast %cst_122 : f32 to vector<1x128xf32>
    %619 = arith.addf %618, %617 : vector<1x128xf32>
    %620 = arith.divf %618, %619 : vector<1x128xf32>
    %621 = vector.extract_strided_slice %614 {offsets = [0, 128], sizes = [1, 128], strides = [1, 1]} : vector<1x512xf32> to vector<1x128xf32>
    %622 = arith.negf %621 : vector<1x128xf32>
    %623 = math.exp %622 : vector<1x128xf32>
    %cst_123 = arith.constant 1.000000e+00 : f32
    %624 = vector.broadcast %cst_123 : f32 to vector<1x128xf32>
    %625 = arith.addf %624, %623 : vector<1x128xf32>
    %626 = arith.divf %624, %625 : vector<1x128xf32>
    %627 = vector.extract_strided_slice %614 {offsets = [0, 256], sizes = [1, 128], strides = [1, 1]} : vector<1x512xf32> to vector<1x128xf32>
    %628 = math.tanh %627 : vector<1x128xf32>
    %629 = vector.extract_strided_slice %614 {offsets = [0, 384], sizes = [1, 128], strides = [1, 1]} : vector<1x512xf32> to vector<1x128xf32>
    %630 = arith.negf %629 : vector<1x128xf32>
    %631 = math.exp %630 : vector<1x128xf32>
    %cst_124 = arith.constant 1.000000e+00 : f32
    %632 = vector.broadcast %cst_124 : f32 to vector<1x128xf32>
    %633 = arith.addf %632, %631 : vector<1x128xf32>
    %634 = arith.divf %632, %633 : vector<1x128xf32>
    %635 = arith.mulf %626, %609 : vector<1x128xf32>
    %636 = arith.mulf %620, %628 : vector<1x128xf32>
    %637 = arith.addf %635, %636 : vector<1x128xf32>
    %638 = math.tanh %637 : vector<1x128xf32>
    %639 = arith.mulf %634, %638 : vector<1x128xf32>
    %c0_125 = arith.constant 0 : index
    %c0_126 = arith.constant 0 : index
    %640 = vector.load %arg8[%c0_125, %c0_126] : memref<128x512xf32, #tpu.memory_space<vmem>>, vector<128x512xf32>
    %cst_127 = arith.constant dense<0.000000e+00> : vector<1x512xf32>
    %641 = tpu.matmul %639, %640, %cst_127 {dimension_numbers = #tpu.dot_dimension_numbers<[1], [0], [0], [1], [0, 0, 1, 1], [], []>} : vector<1x128xf32>, vector<128x512xf32>, vector<1x512xf32> -> vector<1x512xf32>
    %642 = arith.addf %469, %641 : vector<1x512xf32>
    %643 = vector.extract_strided_slice %642 {offsets = [0, 0], sizes = [1, 128], strides = [1, 1]} : vector<1x512xf32> to vector<1x128xf32>
    %644 = arith.negf %643 : vector<1x128xf32>
    %645 = math.exp %644 : vector<1x128xf32>
    %cst_128 = arith.constant 1.000000e+00 : f32
    %646 = vector.broadcast %cst_128 : f32 to vector<1x128xf32>
    %647 = arith.addf %646, %645 : vector<1x128xf32>
    %648 = arith.divf %646, %647 : vector<1x128xf32>
    %649 = vector.extract_strided_slice %642 {offsets = [0, 128], sizes = [1, 128], strides = [1, 1]} : vector<1x512xf32> to vector<1x128xf32>
    %650 = arith.negf %649 : vector<1x128xf32>
    %651 = math.exp %650 : vector<1x128xf32>
    %cst_129 = arith.constant 1.000000e+00 : f32
    %652 = vector.broadcast %cst_129 : f32 to vector<1x128xf32>
    %653 = arith.addf %652, %651 : vector<1x128xf32>
    %654 = arith.divf %652, %653 : vector<1x128xf32>
    %655 = vector.extract_strided_slice %642 {offsets = [0, 256], sizes = [1, 128], strides = [1, 1]} : vector<1x512xf32> to vector<1x128xf32>
    %656 = math.tanh %655 : vector<1x128xf32>
    %657 = vector.extract_strided_slice %642 {offsets = [0, 384], sizes = [1, 128], strides = [1, 1]} : vector<1x512xf32> to vector<1x128xf32>
    %658 = arith.negf %657 : vector<1x128xf32>
    %659 = math.exp %658 : vector<1x128xf32>
    %cst_130 = arith.constant 1.000000e+00 : f32
    %660 = vector.broadcast %cst_130 : f32 to vector<1x128xf32>
    %661 = arith.addf %660, %659 : vector<1x128xf32>
    %662 = arith.divf %660, %661 : vector<1x128xf32>
    %663 = arith.mulf %654, %637 : vector<1x128xf32>
    %664 = arith.mulf %648, %656 : vector<1x128xf32>
    %665 = arith.addf %663, %664 : vector<1x128xf32>
    %666 = math.tanh %665 : vector<1x128xf32>
    %667 = arith.mulf %662, %666 : vector<1x128xf32>
    %c0_131 = arith.constant 0 : index
    %c0_132 = arith.constant 0 : index
    %668 = vector.load %arg8[%c0_131, %c0_132] : memref<128x512xf32, #tpu.memory_space<vmem>>, vector<128x512xf32>
    %cst_133 = arith.constant dense<0.000000e+00> : vector<1x512xf32>
    %669 = tpu.matmul %667, %668, %cst_133 {dimension_numbers = #tpu.dot_dimension_numbers<[1], [0], [0], [1], [0, 0, 1, 1], [], []>} : vector<1x128xf32>, vector<128x512xf32>, vector<1x512xf32> -> vector<1x512xf32>
    %670 = arith.addf %469, %669 : vector<1x512xf32>
    %671 = vector.extract_strided_slice %670 {offsets = [0, 0], sizes = [1, 128], strides = [1, 1]} : vector<1x512xf32> to vector<1x128xf32>
    %672 = arith.negf %671 : vector<1x128xf32>
    %673 = math.exp %672 : vector<1x128xf32>
    %cst_134 = arith.constant 1.000000e+00 : f32
    %674 = vector.broadcast %cst_134 : f32 to vector<1x128xf32>
    %675 = arith.addf %674, %673 : vector<1x128xf32>
    %676 = arith.divf %674, %675 : vector<1x128xf32>
    %677 = vector.extract_strided_slice %670 {offsets = [0, 128], sizes = [1, 128], strides = [1, 1]} : vector<1x512xf32> to vector<1x128xf32>
    %678 = arith.negf %677 : vector<1x128xf32>
    %679 = math.exp %678 : vector<1x128xf32>
    %cst_135 = arith.constant 1.000000e+00 : f32
    %680 = vector.broadcast %cst_135 : f32 to vector<1x128xf32>
    %681 = arith.addf %680, %679 : vector<1x128xf32>
    %682 = arith.divf %680, %681 : vector<1x128xf32>
    %683 = vector.extract_strided_slice %670 {offsets = [0, 256], sizes = [1, 128], strides = [1, 1]} : vector<1x512xf32> to vector<1x128xf32>
    %684 = math.tanh %683 : vector<1x128xf32>
    %685 = vector.extract_strided_slice %670 {offsets = [0, 384], sizes = [1, 128], strides = [1, 1]} : vector<1x512xf32> to vector<1x128xf32>
    %686 = arith.negf %685 : vector<1x128xf32>
    %687 = math.exp %686 : vector<1x128xf32>
    %cst_136 = arith.constant 1.000000e+00 : f32
    %688 = vector.broadcast %cst_136 : f32 to vector<1x128xf32>
    %689 = arith.addf %688, %687 : vector<1x128xf32>
    %690 = arith.divf %688, %689 : vector<1x128xf32>
    %691 = arith.mulf %682, %665 : vector<1x128xf32>
    %692 = arith.mulf %676, %684 : vector<1x128xf32>
    %693 = arith.addf %691, %692 : vector<1x128xf32>
    %694 = math.tanh %693 : vector<1x128xf32>
    %695 = arith.mulf %690, %694 : vector<1x128xf32>
    %696 = tpu.concatenate %499, %527, %555, %583, %611, %639, %667, %695 in 0 : vector<1x128xf32>, vector<1x128xf32>, vector<1x128xf32>, vector<1x128xf32>, vector<1x128xf32>, vector<1x128xf32>, vector<1x128xf32>, vector<1x128xf32> -> vector<8x128xf32>
    %c0_137 = arith.constant 0 : index
    %c0_138 = arith.constant 0 : index
    %697 = vector.load %arg10[%c0_137, %c0_138] : memref<128x512xf32, #tpu.memory_space<vmem>>, vector<128x512xf32>
    %cst_139 = arith.constant dense<0.000000e+00> : vector<8x512xf32>
    %698 = tpu.matmul %696, %697, %cst_139 {dimension_numbers = #tpu.dot_dimension_numbers<[1], [0], [0], [1], [0, 0, 1, 1], [], []>} : vector<8x128xf32>, vector<128x512xf32>, vector<8x512xf32> -> vector<8x512xf32>
    %c0_140 = arith.constant 0 : index
    %c0_141 = arith.constant 0 : index
    %699 = vector.load %arg12[%c0_140, %c0_141] : memref<1x512xf32, #tpu.memory_space<vmem>>, vector<1x512xf32>
    %700 = vector.broadcast %699 : vector<1x512xf32> to vector<8x512xf32>
    %701 = arith.addf %698, %700 : vector<8x512xf32>
    %c0_142 = arith.constant 0 : index
    %c0_143 = arith.constant 0 : index
    %702 = vector.load %arg11[%c0_142, %c0_143] : memref<128x512xf32, #tpu.memory_space<vmem>>, vector<128x512xf32>
    %cst_144 = arith.constant 0.000000e+00 : f32
    %703 = vector.broadcast %cst_144 : f32 to vector<1x128xf32>
    %cst_145 = arith.constant 0.000000e+00 : f32
    %704 = vector.broadcast %cst_145 : f32 to vector<1x128xf32>
    %705 = vector.extract_strided_slice %701 {offsets = [0, 0], sizes = [1, 512], strides = [1, 1]} : vector<8x512xf32> to vector<1x512xf32>
    %cst_146 = arith.constant dense<0.000000e+00> : vector<1x512xf32>
    %706 = tpu.matmul %703, %702, %cst_146 {dimension_numbers = #tpu.dot_dimension_numbers<[1], [0], [0], [1], [0, 0, 1, 1], [], []>} : vector<1x128xf32>, vector<128x512xf32>, vector<1x512xf32> -> vector<1x512xf32>
    %707 = arith.addf %705, %706 : vector<1x512xf32>
    %708 = vector.extract_strided_slice %707 {offsets = [0, 0], sizes = [1, 128], strides = [1, 1]} : vector<1x512xf32> to vector<1x128xf32>
    %709 = arith.negf %708 : vector<1x128xf32>
    %710 = math.exp %709 : vector<1x128xf32>
    %cst_147 = arith.constant 1.000000e+00 : f32
    %711 = vector.broadcast %cst_147 : f32 to vector<1x128xf32>
    %712 = arith.addf %711, %710 : vector<1x128xf32>
    %713 = arith.divf %711, %712 : vector<1x128xf32>
    %714 = vector.extract_strided_slice %707 {offsets = [0, 128], sizes = [1, 128], strides = [1, 1]} : vector<1x512xf32> to vector<1x128xf32>
    %715 = arith.negf %714 : vector<1x128xf32>
    %716 = math.exp %715 : vector<1x128xf32>
    %cst_148 = arith.constant 1.000000e+00 : f32
    %717 = vector.broadcast %cst_148 : f32 to vector<1x128xf32>
    %718 = arith.addf %717, %716 : vector<1x128xf32>
    %719 = arith.divf %717, %718 : vector<1x128xf32>
    %720 = vector.extract_strided_slice %707 {offsets = [0, 256], sizes = [1, 128], strides = [1, 1]} : vector<1x512xf32> to vector<1x128xf32>
    %721 = math.tanh %720 : vector<1x128xf32>
    %722 = vector.extract_strided_slice %707 {offsets = [0, 384], sizes = [1, 128], strides = [1, 1]} : vector<1x512xf32> to vector<1x128xf32>
    %723 = arith.negf %722 : vector<1x128xf32>
    %724 = math.exp %723 : vector<1x128xf32>
    %cst_149 = arith.constant 1.000000e+00 : f32
    %725 = vector.broadcast %cst_149 : f32 to vector<1x128xf32>
    %726 = arith.addf %725, %724 : vector<1x128xf32>
    %727 = arith.divf %725, %726 : vector<1x128xf32>
    %728 = arith.mulf %719, %704 : vector<1x128xf32>
    %729 = arith.mulf %713, %721 : vector<1x128xf32>
    %730 = arith.addf %728, %729 : vector<1x128xf32>
    %731 = math.tanh %730 : vector<1x128xf32>
    %732 = arith.mulf %727, %731 : vector<1x128xf32>
    %733 = vector.extract_strided_slice %701 {offsets = [1, 0], sizes = [1, 512], strides = [1, 1]} : vector<8x512xf32> to vector<1x512xf32>
    %cst_150 = arith.constant dense<0.000000e+00> : vector<1x512xf32>
    %734 = tpu.matmul %732, %702, %cst_150 {dimension_numbers = #tpu.dot_dimension_numbers<[1], [0], [0], [1], [0, 0, 1, 1], [], []>} : vector<1x128xf32>, vector<128x512xf32>, vector<1x512xf32> -> vector<1x512xf32>
    %735 = arith.addf %733, %734 : vector<1x512xf32>
    %736 = vector.extract_strided_slice %735 {offsets = [0, 0], sizes = [1, 128], strides = [1, 1]} : vector<1x512xf32> to vector<1x128xf32>
    %737 = arith.negf %736 : vector<1x128xf32>
    %738 = math.exp %737 : vector<1x128xf32>
    %cst_151 = arith.constant 1.000000e+00 : f32
    %739 = vector.broadcast %cst_151 : f32 to vector<1x128xf32>
    %740 = arith.addf %739, %738 : vector<1x128xf32>
    %741 = arith.divf %739, %740 : vector<1x128xf32>
    %742 = vector.extract_strided_slice %735 {offsets = [0, 128], sizes = [1, 128], strides = [1, 1]} : vector<1x512xf32> to vector<1x128xf32>
    %743 = arith.negf %742 : vector<1x128xf32>
    %744 = math.exp %743 : vector<1x128xf32>
    %cst_152 = arith.constant 1.000000e+00 : f32
    %745 = vector.broadcast %cst_152 : f32 to vector<1x128xf32>
    %746 = arith.addf %745, %744 : vector<1x128xf32>
    %747 = arith.divf %745, %746 : vector<1x128xf32>
    %748 = vector.extract_strided_slice %735 {offsets = [0, 256], sizes = [1, 128], strides = [1, 1]} : vector<1x512xf32> to vector<1x128xf32>
    %749 = math.tanh %748 : vector<1x128xf32>
    %750 = vector.extract_strided_slice %735 {offsets = [0, 384], sizes = [1, 128], strides = [1, 1]} : vector<1x512xf32> to vector<1x128xf32>
    %751 = arith.negf %750 : vector<1x128xf32>
    %752 = math.exp %751 : vector<1x128xf32>
    %cst_153 = arith.constant 1.000000e+00 : f32
    %753 = vector.broadcast %cst_153 : f32 to vector<1x128xf32>
    %754 = arith.addf %753, %752 : vector<1x128xf32>
    %755 = arith.divf %753, %754 : vector<1x128xf32>
    %756 = arith.mulf %747, %730 : vector<1x128xf32>
    %757 = arith.mulf %741, %749 : vector<1x128xf32>
    %758 = arith.addf %756, %757 : vector<1x128xf32>
    %759 = math.tanh %758 : vector<1x128xf32>
    %760 = arith.mulf %755, %759 : vector<1x128xf32>
    %761 = vector.extract_strided_slice %701 {offsets = [2, 0], sizes = [1, 512], strides = [1, 1]} : vector<8x512xf32> to vector<1x512xf32>
    %cst_154 = arith.constant dense<0.000000e+00> : vector<1x512xf32>
    %762 = tpu.matmul %760, %702, %cst_154 {dimension_numbers = #tpu.dot_dimension_numbers<[1], [0], [0], [1], [0, 0, 1, 1], [], []>} : vector<1x128xf32>, vector<128x512xf32>, vector<1x512xf32> -> vector<1x512xf32>
    %763 = arith.addf %761, %762 : vector<1x512xf32>
    %764 = vector.extract_strided_slice %763 {offsets = [0, 0], sizes = [1, 128], strides = [1, 1]} : vector<1x512xf32> to vector<1x128xf32>
    %765 = arith.negf %764 : vector<1x128xf32>
    %766 = math.exp %765 : vector<1x128xf32>
    %cst_155 = arith.constant 1.000000e+00 : f32
    %767 = vector.broadcast %cst_155 : f32 to vector<1x128xf32>
    %768 = arith.addf %767, %766 : vector<1x128xf32>
    %769 = arith.divf %767, %768 : vector<1x128xf32>
    %770 = vector.extract_strided_slice %763 {offsets = [0, 128], sizes = [1, 128], strides = [1, 1]} : vector<1x512xf32> to vector<1x128xf32>
    %771 = arith.negf %770 : vector<1x128xf32>
    %772 = math.exp %771 : vector<1x128xf32>
    %cst_156 = arith.constant 1.000000e+00 : f32
    %773 = vector.broadcast %cst_156 : f32 to vector<1x128xf32>
    %774 = arith.addf %773, %772 : vector<1x128xf32>
    %775 = arith.divf %773, %774 : vector<1x128xf32>
    %776 = vector.extract_strided_slice %763 {offsets = [0, 256], sizes = [1, 128], strides = [1, 1]} : vector<1x512xf32> to vector<1x128xf32>
    %777 = math.tanh %776 : vector<1x128xf32>
    %778 = vector.extract_strided_slice %763 {offsets = [0, 384], sizes = [1, 128], strides = [1, 1]} : vector<1x512xf32> to vector<1x128xf32>
    %779 = arith.negf %778 : vector<1x128xf32>
    %780 = math.exp %779 : vector<1x128xf32>
    %cst_157 = arith.constant 1.000000e+00 : f32
    %781 = vector.broadcast %cst_157 : f32 to vector<1x128xf32>
    %782 = arith.addf %781, %780 : vector<1x128xf32>
    %783 = arith.divf %781, %782 : vector<1x128xf32>
    %784 = arith.mulf %775, %758 : vector<1x128xf32>
    %785 = arith.mulf %769, %777 : vector<1x128xf32>
    %786 = arith.addf %784, %785 : vector<1x128xf32>
    %787 = math.tanh %786 : vector<1x128xf32>
    %788 = arith.mulf %783, %787 : vector<1x128xf32>
    %789 = vector.extract_strided_slice %701 {offsets = [3, 0], sizes = [1, 512], strides = [1, 1]} : vector<8x512xf32> to vector<1x512xf32>
    %cst_158 = arith.constant dense<0.000000e+00> : vector<1x512xf32>
    %790 = tpu.matmul %788, %702, %cst_158 {dimension_numbers = #tpu.dot_dimension_numbers<[1], [0], [0], [1], [0, 0, 1, 1], [], []>} : vector<1x128xf32>, vector<128x512xf32>, vector<1x512xf32> -> vector<1x512xf32>
    %791 = arith.addf %789, %790 : vector<1x512xf32>
    %792 = vector.extract_strided_slice %791 {offsets = [0, 0], sizes = [1, 128], strides = [1, 1]} : vector<1x512xf32> to vector<1x128xf32>
    %793 = arith.negf %792 : vector<1x128xf32>
    %794 = math.exp %793 : vector<1x128xf32>
    %cst_159 = arith.constant 1.000000e+00 : f32
    %795 = vector.broadcast %cst_159 : f32 to vector<1x128xf32>
    %796 = arith.addf %795, %794 : vector<1x128xf32>
    %797 = arith.divf %795, %796 : vector<1x128xf32>
    %798 = vector.extract_strided_slice %791 {offsets = [0, 128], sizes = [1, 128], strides = [1, 1]} : vector<1x512xf32> to vector<1x128xf32>
    %799 = arith.negf %798 : vector<1x128xf32>
    %800 = math.exp %799 : vector<1x128xf32>
    %cst_160 = arith.constant 1.000000e+00 : f32
    %801 = vector.broadcast %cst_160 : f32 to vector<1x128xf32>
    %802 = arith.addf %801, %800 : vector<1x128xf32>
    %803 = arith.divf %801, %802 : vector<1x128xf32>
    %804 = vector.extract_strided_slice %791 {offsets = [0, 256], sizes = [1, 128], strides = [1, 1]} : vector<1x512xf32> to vector<1x128xf32>
    %805 = math.tanh %804 : vector<1x128xf32>
    %806 = vector.extract_strided_slice %791 {offsets = [0, 384], sizes = [1, 128], strides = [1, 1]} : vector<1x512xf32> to vector<1x128xf32>
    %807 = arith.negf %806 : vector<1x128xf32>
    %808 = math.exp %807 : vector<1x128xf32>
    %cst_161 = arith.constant 1.000000e+00 : f32
    %809 = vector.broadcast %cst_161 : f32 to vector<1x128xf32>
    %810 = arith.addf %809, %808 : vector<1x128xf32>
    %811 = arith.divf %809, %810 : vector<1x128xf32>
    %812 = arith.mulf %803, %786 : vector<1x128xf32>
    %813 = arith.mulf %797, %805 : vector<1x128xf32>
    %814 = arith.addf %812, %813 : vector<1x128xf32>
    %815 = math.tanh %814 : vector<1x128xf32>
    %816 = arith.mulf %811, %815 : vector<1x128xf32>
    %817 = vector.extract_strided_slice %701 {offsets = [4, 0], sizes = [1, 512], strides = [1, 1]} : vector<8x512xf32> to vector<1x512xf32>
    %cst_162 = arith.constant dense<0.000000e+00> : vector<1x512xf32>
    %818 = tpu.matmul %816, %702, %cst_162 {dimension_numbers = #tpu.dot_dimension_numbers<[1], [0], [0], [1], [0, 0, 1, 1], [], []>} : vector<1x128xf32>, vector<128x512xf32>, vector<1x512xf32> -> vector<1x512xf32>
    %819 = arith.addf %817, %818 : vector<1x512xf32>
    %820 = vector.extract_strided_slice %819 {offsets = [0, 0], sizes = [1, 128], strides = [1, 1]} : vector<1x512xf32> to vector<1x128xf32>
    %821 = arith.negf %820 : vector<1x128xf32>
    %822 = math.exp %821 : vector<1x128xf32>
    %cst_163 = arith.constant 1.000000e+00 : f32
    %823 = vector.broadcast %cst_163 : f32 to vector<1x128xf32>
    %824 = arith.addf %823, %822 : vector<1x128xf32>
    %825 = arith.divf %823, %824 : vector<1x128xf32>
    %826 = vector.extract_strided_slice %819 {offsets = [0, 128], sizes = [1, 128], strides = [1, 1]} : vector<1x512xf32> to vector<1x128xf32>
    %827 = arith.negf %826 : vector<1x128xf32>
    %828 = math.exp %827 : vector<1x128xf32>
    %cst_164 = arith.constant 1.000000e+00 : f32
    %829 = vector.broadcast %cst_164 : f32 to vector<1x128xf32>
    %830 = arith.addf %829, %828 : vector<1x128xf32>
    %831 = arith.divf %829, %830 : vector<1x128xf32>
    %832 = vector.extract_strided_slice %819 {offsets = [0, 256], sizes = [1, 128], strides = [1, 1]} : vector<1x512xf32> to vector<1x128xf32>
    %833 = math.tanh %832 : vector<1x128xf32>
    %834 = vector.extract_strided_slice %819 {offsets = [0, 384], sizes = [1, 128], strides = [1, 1]} : vector<1x512xf32> to vector<1x128xf32>
    %835 = arith.negf %834 : vector<1x128xf32>
    %836 = math.exp %835 : vector<1x128xf32>
    %cst_165 = arith.constant 1.000000e+00 : f32
    %837 = vector.broadcast %cst_165 : f32 to vector<1x128xf32>
    %838 = arith.addf %837, %836 : vector<1x128xf32>
    %839 = arith.divf %837, %838 : vector<1x128xf32>
    %840 = arith.mulf %831, %814 : vector<1x128xf32>
    %841 = arith.mulf %825, %833 : vector<1x128xf32>
    %842 = arith.addf %840, %841 : vector<1x128xf32>
    %843 = math.tanh %842 : vector<1x128xf32>
    %844 = arith.mulf %839, %843 : vector<1x128xf32>
    %845 = vector.extract_strided_slice %701 {offsets = [5, 0], sizes = [1, 512], strides = [1, 1]} : vector<8x512xf32> to vector<1x512xf32>
    %cst_166 = arith.constant dense<0.000000e+00> : vector<1x512xf32>
    %846 = tpu.matmul %844, %702, %cst_166 {dimension_numbers = #tpu.dot_dimension_numbers<[1], [0], [0], [1], [0, 0, 1, 1], [], []>} : vector<1x128xf32>, vector<128x512xf32>, vector<1x512xf32> -> vector<1x512xf32>
    %847 = arith.addf %845, %846 : vector<1x512xf32>
    %848 = vector.extract_strided_slice %847 {offsets = [0, 0], sizes = [1, 128], strides = [1, 1]} : vector<1x512xf32> to vector<1x128xf32>
    %849 = arith.negf %848 : vector<1x128xf32>
    %850 = math.exp %849 : vector<1x128xf32>
    %cst_167 = arith.constant 1.000000e+00 : f32
    %851 = vector.broadcast %cst_167 : f32 to vector<1x128xf32>
    %852 = arith.addf %851, %850 : vector<1x128xf32>
    %853 = arith.divf %851, %852 : vector<1x128xf32>
    %854 = vector.extract_strided_slice %847 {offsets = [0, 128], sizes = [1, 128], strides = [1, 1]} : vector<1x512xf32> to vector<1x128xf32>
    %855 = arith.negf %854 : vector<1x128xf32>
    %856 = math.exp %855 : vector<1x128xf32>
    %cst_168 = arith.constant 1.000000e+00 : f32
    %857 = vector.broadcast %cst_168 : f32 to vector<1x128xf32>
    %858 = arith.addf %857, %856 : vector<1x128xf32>
    %859 = arith.divf %857, %858 : vector<1x128xf32>
    %860 = vector.extract_strided_slice %847 {offsets = [0, 256], sizes = [1, 128], strides = [1, 1]} : vector<1x512xf32> to vector<1x128xf32>
    %861 = math.tanh %860 : vector<1x128xf32>
    %862 = vector.extract_strided_slice %847 {offsets = [0, 384], sizes = [1, 128], strides = [1, 1]} : vector<1x512xf32> to vector<1x128xf32>
    %863 = arith.negf %862 : vector<1x128xf32>
    %864 = math.exp %863 : vector<1x128xf32>
    %cst_169 = arith.constant 1.000000e+00 : f32
    %865 = vector.broadcast %cst_169 : f32 to vector<1x128xf32>
    %866 = arith.addf %865, %864 : vector<1x128xf32>
    %867 = arith.divf %865, %866 : vector<1x128xf32>
    %868 = arith.mulf %859, %842 : vector<1x128xf32>
    %869 = arith.mulf %853, %861 : vector<1x128xf32>
    %870 = arith.addf %868, %869 : vector<1x128xf32>
    %871 = math.tanh %870 : vector<1x128xf32>
    %872 = arith.mulf %867, %871 : vector<1x128xf32>
    %873 = vector.extract_strided_slice %701 {offsets = [6, 0], sizes = [1, 512], strides = [1, 1]} : vector<8x512xf32> to vector<1x512xf32>
    %cst_170 = arith.constant dense<0.000000e+00> : vector<1x512xf32>
    %874 = tpu.matmul %872, %702, %cst_170 {dimension_numbers = #tpu.dot_dimension_numbers<[1], [0], [0], [1], [0, 0, 1, 1], [], []>} : vector<1x128xf32>, vector<128x512xf32>, vector<1x512xf32> -> vector<1x512xf32>
    %875 = arith.addf %873, %874 : vector<1x512xf32>
    %876 = vector.extract_strided_slice %875 {offsets = [0, 0], sizes = [1, 128], strides = [1, 1]} : vector<1x512xf32> to vector<1x128xf32>
    %877 = arith.negf %876 : vector<1x128xf32>
    %878 = math.exp %877 : vector<1x128xf32>
    %cst_171 = arith.constant 1.000000e+00 : f32
    %879 = vector.broadcast %cst_171 : f32 to vector<1x128xf32>
    %880 = arith.addf %879, %878 : vector<1x128xf32>
    %881 = arith.divf %879, %880 : vector<1x128xf32>
    %882 = vector.extract_strided_slice %875 {offsets = [0, 128], sizes = [1, 128], strides = [1, 1]} : vector<1x512xf32> to vector<1x128xf32>
    %883 = arith.negf %882 : vector<1x128xf32>
    %884 = math.exp %883 : vector<1x128xf32>
    %cst_172 = arith.constant 1.000000e+00 : f32
    %885 = vector.broadcast %cst_172 : f32 to vector<1x128xf32>
    %886 = arith.addf %885, %884 : vector<1x128xf32>
    %887 = arith.divf %885, %886 : vector<1x128xf32>
    %888 = vector.extract_strided_slice %875 {offsets = [0, 256], sizes = [1, 128], strides = [1, 1]} : vector<1x512xf32> to vector<1x128xf32>
    %889 = math.tanh %888 : vector<1x128xf32>
    %890 = vector.extract_strided_slice %875 {offsets = [0, 384], sizes = [1, 128], strides = [1, 1]} : vector<1x512xf32> to vector<1x128xf32>
    %891 = arith.negf %890 : vector<1x128xf32>
    %892 = math.exp %891 : vector<1x128xf32>
    %cst_173 = arith.constant 1.000000e+00 : f32
    %893 = vector.broadcast %cst_173 : f32 to vector<1x128xf32>
    %894 = arith.addf %893, %892 : vector<1x128xf32>
    %895 = arith.divf %893, %894 : vector<1x128xf32>
    %896 = arith.mulf %887, %870 : vector<1x128xf32>
    %897 = arith.mulf %881, %889 : vector<1x128xf32>
    %898 = arith.addf %896, %897 : vector<1x128xf32>
    %899 = math.tanh %898 : vector<1x128xf32>
    %900 = arith.mulf %895, %899 : vector<1x128xf32>
    %901 = vector.extract_strided_slice %701 {offsets = [7, 0], sizes = [1, 512], strides = [1, 1]} : vector<8x512xf32> to vector<1x512xf32>
    %cst_174 = arith.constant dense<0.000000e+00> : vector<1x512xf32>
    %902 = tpu.matmul %900, %702, %cst_174 {dimension_numbers = #tpu.dot_dimension_numbers<[1], [0], [0], [1], [0, 0, 1, 1], [], []>} : vector<1x128xf32>, vector<128x512xf32>, vector<1x512xf32> -> vector<1x512xf32>
    %903 = arith.addf %901, %902 : vector<1x512xf32>
    %904 = vector.extract_strided_slice %903 {offsets = [0, 0], sizes = [1, 128], strides = [1, 1]} : vector<1x512xf32> to vector<1x128xf32>
    %905 = arith.negf %904 : vector<1x128xf32>
    %906 = math.exp %905 : vector<1x128xf32>
    %cst_175 = arith.constant 1.000000e+00 : f32
    %907 = vector.broadcast %cst_175 : f32 to vector<1x128xf32>
    %908 = arith.addf %907, %906 : vector<1x128xf32>
    %909 = arith.divf %907, %908 : vector<1x128xf32>
    %910 = vector.extract_strided_slice %903 {offsets = [0, 128], sizes = [1, 128], strides = [1, 1]} : vector<1x512xf32> to vector<1x128xf32>
    %911 = arith.negf %910 : vector<1x128xf32>
    %912 = math.exp %911 : vector<1x128xf32>
    %cst_176 = arith.constant 1.000000e+00 : f32
    %913 = vector.broadcast %cst_176 : f32 to vector<1x128xf32>
    %914 = arith.addf %913, %912 : vector<1x128xf32>
    %915 = arith.divf %913, %914 : vector<1x128xf32>
    %916 = vector.extract_strided_slice %903 {offsets = [0, 256], sizes = [1, 128], strides = [1, 1]} : vector<1x512xf32> to vector<1x128xf32>
    %917 = math.tanh %916 : vector<1x128xf32>
    %918 = vector.extract_strided_slice %903 {offsets = [0, 384], sizes = [1, 128], strides = [1, 1]} : vector<1x512xf32> to vector<1x128xf32>
    %919 = arith.negf %918 : vector<1x128xf32>
    %920 = math.exp %919 : vector<1x128xf32>
    %cst_177 = arith.constant 1.000000e+00 : f32
    %921 = vector.broadcast %cst_177 : f32 to vector<1x128xf32>
    %922 = arith.addf %921, %920 : vector<1x128xf32>
    %923 = arith.divf %921, %922 : vector<1x128xf32>
    %924 = arith.mulf %915, %898 : vector<1x128xf32>
    %925 = arith.mulf %909, %917 : vector<1x128xf32>
    %926 = arith.addf %924, %925 : vector<1x128xf32>
    %927 = math.tanh %926 : vector<1x128xf32>
    %928 = arith.mulf %923, %927 : vector<1x128xf32>
    %929 = tpu.concatenate %732, %760, %788, %816, %844, %872, %900, %928 in 0 : vector<1x128xf32>, vector<1x128xf32>, vector<1x128xf32>, vector<1x128xf32>, vector<1x128xf32>, vector<1x128xf32>, vector<1x128xf32>, vector<1x128xf32> -> vector<8x128xf32>
    %c0_178 = arith.constant 0 : index
    %c0_179 = arith.constant 0 : index
    %930 = vector.load %arg13[%c0_178, %c0_179] : memref<128x1xf32, #tpu.memory_space<vmem>>, vector<128x1xf32>
    %cst_180 = arith.constant dense<0.000000e+00> : vector<8x1xf32>
    %931 = tpu.matmul %929, %930, %cst_180 {dimension_numbers = #tpu.dot_dimension_numbers<[1], [0], [0], [1], [0, 0, 1, 1], [], []>} : vector<8x128xf32>, vector<128x1xf32>, vector<8x1xf32> -> vector<8x1xf32>
    %c0_181 = arith.constant 0 : index
    %c0_182 = arith.constant 0 : index
    %932 = vector.load %arg14[%c0_181, %c0_182] : memref<1x1xf32, #tpu.memory_space<vmem>>, vector<1x1xf32>
    %933 = vector.broadcast %932 : vector<1x1xf32> to vector<8x1xf32>
    %934 = arith.addf %931, %933 : vector<8x1xf32>
    %c0_183 = arith.constant 0 : index
    %c0_184 = arith.constant 0 : index
    %935 = vector.load %arg15[%c0_183, %c0_184] : memref<8x1xf32, #tpu.memory_space<vmem>>, vector<8x1xf32>
    tpu.vector_store %arg15[%c0_183, %c0_184], %934 {strides = array<i32>} : memref<8x1xf32, #tpu.memory_space<vmem>>, vector<8x1xf32>,
    return
  }
}

</mosaic_0001>

<llo_original>
// kernel: tpu_custom_call.1
$region0: #{tpu_custom_call.1}
  #allocation0 [shape = 'u32[]', space=smem, size = 0x4, offset = 0x4, fixed_abs, tag = 'smem constant byte address 0x4 - core index']
  #allocation1 [shape = 'u32[144,128]{1,0:T(1,128)}', space=vmem, size = 0x12000, scoped, tag = 'internal scratch']
  #allocation2 [shape = 'f32[1,1]{1,0:T(1,128)S(1)}', space=vmem, size = 0x200, scoped, tag = 'scoped memory for tpu_custom_call.1']
  %s0 = inlined_call_operand.vmem [shape: f32[8,1], index: 0, kind: input, shape index: {}]
  %s1 = inlined_call_operand.vmem [shape: f32[1,512], index: 1, kind: input, shape index: {}]
  %s2 = inlined_call_operand.hbm [shape: f32[128,512], index: 2, kind: input, shape index: {}]
  %s3 = inlined_call_operand.vmem [shape: f32[1,512], index: 3, kind: input, shape index: {}]
  %s4 = inlined_call_operand.hbm [shape: f32[128,512], index: 4, kind: input, shape index: {}]
  %s5 = inlined_call_operand.hbm [shape: f32[128,512], index: 5, kind: input, shape index: {}]
  %s6 = inlined_call_operand.vmem [shape: f32[1,512], index: 6, kind: input, shape index: {}]
  %s7 = inlined_call_operand.hbm [shape: f32[128,512], index: 7, kind: input, shape index: {}]
  %s8 = inlined_call_operand.hbm [shape: f32[128,512], index: 8, kind: input, shape index: {}]
  %s9 = inlined_call_operand.vmem [shape: f32[1,512], index: 9, kind: input, shape index: {}]
  %s10 = inlined_call_operand.hbm [shape: f32[128,512], index: 10, kind: input, shape index: {}]
  %s11 = inlined_call_operand.hbm [shape: f32[128,512], index: 11, kind: input, shape index: {}]
  %s12 = inlined_call_operand.vmem [shape: f32[1,512], index: 12, kind: input, shape index: {}]
  %s13 = inlined_call_operand.vmem [shape: f32[128,1], index: 13, kind: input, shape index: {}]
  %s14 = inlined_call_operand.<no memory space> [shape: f32[1,1], index: 14, kind: input, shape index: {}]
  %s15 = inlined_call_operand.vmem [shape: f32[8,1], index: 15, kind: output, shape index: {}]
  %s16 = sld [smem:[#allocation0]]
  $region98: #{tpu_custom_call.1} parent=0
    _
  %s18 = ssub.s32 1, %s16
  %s19 = scalar_select 0, %s18, %s16
  %v20 = vstv %s14
  %21 = vst [vmem:[#allocation2] sm:$0x1] %v20
  $region1: #{tpu_custom_call.1} parent=0
    #allocation3 [shape = 'u8[262144]{0}', space=vmem, size = 0x40000, scoped, tag = 'input window, operand 2, single buffered']
    #allocation4 [shape = 's32[1]{0}', space=sflag, size = 0x4, scoped, tag = 'scoped memory for tpu_custom_call.1']
    #allocation5 [shape = 'u8[262144]{0}', space=vmem, size = 0x40000, scoped, tag = 'input window, operand 4, single buffered']
    #allocation6 [shape = 's32[1]{0}', space=sflag, size = 0x4, scoped, tag = 'scoped memory for tpu_custom_call.1']
    #allocation7 [shape = 'u8[262144]{0}', space=vmem, size = 0x40000, scoped, tag = 'input window, operand 5, single buffered']
    #allocation8 [shape = 'u8[262144]{0}', space=vmem, size = 0x40000, scoped, tag = 'input window, operand 7, single buffered']
    #allocation9 [shape = 's32[1]{0}', space=sflag, size = 0x4, scoped, tag = 'scoped memory for tpu_custom_call.1']
    #allocation10 [shape = 'u8[262144]{0}', space=vmem, size = 0x40000, scoped, tag = 'input window, operand 8, single buffered']
    #allocation11 [shape = 'u8[262144]{0}', space=vmem, size = 0x40000, scoped, tag = 'input window, operand 10, single buffered']
    #allocation12 [shape = 's32[1]{0}', space=sflag, size = 0x4, scoped, tag = 'scoped memory for tpu_custom_call.1']
    #allocation13 [shape = 'u8[262144]{0}', space=vmem, size = 0x40000, scoped, tag = 'input window, operand 11, single buffered']
    %22 = vsyncpa [#allocation4], 0
    %23 = vsyncpa [#allocation6], 0
    %24 = vsyncpa [#allocation9], 0
    %25 = vsyncpa [#allocation12], 0
    // Predicated region
    $region2: #{tpu_custom_call.1} parent=1 // pred_check
      _
    $region3: #{tpu_custom_call.1} parent=1 // pred_check_branch
      %27 = sbr.rel (0) target = $region5
    $region4: #{tpu_custom_call.1} parent=1 // pred_region
      _
    $region5: #{tpu_custom_call.1} parent=1 // pred_fallthru
      _
    // Predicated region
    $region6: #{tpu_custom_call.1} parent=1 // pred_check
      _
    $region7: #{tpu_custom_call.1} parent=1 // pred_check_branch
      %29 = sbr.rel (0) target = $region9
    $region8: #{tpu_custom_call.1} parent=1 // pred_region
      _
    $region9: #{tpu_custom_call.1} parent=1 // pred_fallthru
      _
    // Predicated region
    $region10: #{tpu_custom_call.1} parent=1 // pred_check
      _
    $region11: #{tpu_custom_call.1} parent=1 // pred_check_branch
      %31 = sbr.rel (0) target = $region13
    $region12: #{tpu_custom_call.1} parent=1 // pred_region
      %s33 = ssub.s32 8192, 8192
      %34 = vsyncadd [#allocation4], %s33
      %s35 = sshll.u32 [#allocation3], 4
      %s36 = int_to_ptr.vmem [resolvable:$true] %s35
      %41 = dma.hbm_to_vmem [thread:$0]  %s2, 8192, %s36, [#allocation4], 512, 512, 32
    $region13: #{tpu_custom_call.1} parent=1 // pred_fallthru
      _
    // Predicated region
    $region14: #{tpu_custom_call.1} parent=1 // pred_check
      _
    $region15: #{tpu_custom_call.1} parent=1 // pred_check_branch
      %43 = sbr.rel (0) target = $region17
    $region16: #{tpu_custom_call.1} parent=1 // pred_region
      _
    $region17: #{tpu_custom_call.1} parent=1 // pred_fallthru
      _
    // Predicated region
    $region18: #{tpu_custom_call.1} parent=1 // pred_check
      _
    $region19: #{tpu_custom_call.1} parent=1 // pred_check_branch
      %45 = sbr.rel (0) target = $region21
    $region20: #{tpu_custom_call.1} parent=1 // pred_region
      %s47 = ssub.s32 8192, 8192
      %48 = vsyncadd [#allocation6], %s47
      %s49 = sshll.u32 [#allocation5], 4
      %s50 = int_to_ptr.vmem [resolvable:$true] %s49
      %55 = dma.hbm_to_vmem [thread:$0]  %s4, 8192, %s50, [#allocation6], 512, 512, 32
    $region21: #{tpu_custom_call.1} parent=1 // pred_fallthru
      _
    // Predicated region
    $region22: #{tpu_custom_call.1} parent=1 // pred_check
      _
    $region23: #{tpu_custom_call.1} parent=1 // pred_check_branch
      %57 = sbr.rel (0) target = $region25
    $region24: #{tpu_custom_call.1} parent=1 // pred_region
      %s59 = ssub.s32 8192, 8192
      %60 = vsyncadd [#allocation6], %s59
      %s61 = sshll.u32 [#allocation7], 4
      %s62 = int_to_ptr.vmem [resolvable:$true] %s61
      %67 = dma.hbm_to_vmem [thread:$0]  %s5, 8192, %s62, [#allocation6], 512, 512, 32
    $region25: #{tpu_custom_call.1} parent=1 // pred_fallthru
      _
    // Predicated region
    $region26: #{tpu_custom_call.1} parent=1 // pred_check
      _
    $region27: #{tpu_custom_call.1} parent=1 // pred_check_branch
      %69 = sbr.rel (0) target = $region29
    $region28: #{tpu_custom_call.1} parent=1 // pred_region
      _
    $region29: #{tpu_custom_call.1} parent=1 // pred_fallthru
      _
    // Predicated region
    $region30: #{tpu_custom_call.1} parent=1 // pred_check
      _
    $region31: #{tpu_custom_call.1} parent=1 // pred_check_branch
      %71 = sbr.rel (0) target = $region33
    $region32: #{tpu_custom_call.1} parent=1 // pred_region
      %s73 = ssub.s32 8192, 8192
      %74 = vsyncadd [#allocation9], %s73
      %s75 = sshll.u32 [#allocation8], 4
      %s76 = int_to_ptr.vmem [resolvable:$true] %s75
      %81 = dma.hbm_to_vmem [thread:$0]  %s7, 8192, %s76, [#allocation9], 512, 512, 32
    $region33: #{tpu_custom_call.1} parent=1 // pred_fallthru
      _
    // Predicated region
    $region34: #{tpu_custom_call.1} parent=1 // pred_check
      _
    $region35: #{tpu_custom_call.1} parent=1 // pred_check_branch
      %83 = sbr.rel (0) target = $region37
    $region36: #{tpu_custom_call.1} parent=1 // pred_region
      %s85 = ssub.s32 8192, 8192
      %86 = vsyncadd [#allocation9], %s85
      %s87 = sshll.u32 [#allocation10], 4
      %s88 = int_to_ptr.vmem [resolvable:$true] %s87
      %93 = dma.hbm_to_vmem [thread:$0]  %s8, 8192, %s88, [#allocation9], 512, 512, 32
    $region37: #{tpu_custom_call.1} parent=1 // pred_fallthru
      _
    // Predicated region
    $region38: #{tpu_custom_call.1} parent=1 // pred_check
      _
    $region39: #{tpu_custom_call.1} parent=1 // pred_check_branch
      %95 = sbr.rel (0) target = $region41
    $region40: #{tpu_custom_call.1} parent=1 // pred_region
      _
    $region41: #{tpu_custom_call.1} parent=1 // pred_fallthru
      _
    // Predicated region
    $region42: #{tpu_custom_call.1} parent=1 // pred_check
      _
    $region43: #{tpu_custom_call.1} parent=1 // pred_check_branch
      %97 = sbr.rel (0) target = $region45
    $region44: #{tpu_custom_call.1} parent=1 // pred_region
      %s99 = ssub.s32 8192, 8192
      %100 = vsyncadd [#allocation12], %s99
      %s101 = sshll.u32 [#allocation11], 4
      %s102 = int_to_ptr.vmem [resolvable:$true] %s101
      %107 = dma.hbm_to_vmem [thread:$0]  %s10, 8192, %s102, [#allocation12], 512, 512, 32
    $region45: #{tpu_custom_call.1} parent=1 // pred_fallthru
      _
    // Predicated region
    $region46: #{tpu_custom_call.1} parent=1 // pred_check
      _
    $region47: #{tpu_custom_call.1} parent=1 // pred_check_branch
      %109 = sbr.rel (0) target = $region49
    $region48: #{tpu_custom_call.1} parent=1 // pred_region
      %s111 = ssub.s32 8192, 8192
      %112 = vsyncadd [#allocation12], %s111
      %s113 = sshll.u32 [#allocation13], 4
      %s114 = int_to_ptr.vmem [resolvable:$true] %s113
      %119 = dma.hbm_to_vmem [thread:$0]  %s11, 8192, %s114, [#allocation12], 512, 512, 32
    $region49: #{tpu_custom_call.1} parent=1 // pred_fallthru
      _
    // Predicated region
    $region50: #{tpu_custom_call.1} parent=1 // pred_check
      _
    $region51: #{tpu_custom_call.1} parent=1 // pred_check_branch
      %121 = sbr.rel (0) target = $region53
    $region52: #{tpu_custom_call.1} parent=1 // pred_region
      _
    $region53: #{tpu_custom_call.1} parent=1 // pred_fallthru
      _
    // Predicated region
    $region54: #{tpu_custom_call.1} parent=1 // pred_check
      _
    $region55: #{tpu_custom_call.1} parent=1 // pred_check_branch
      %123 = sbr.rel (0) target = $region57
    $region56: #{tpu_custom_call.1} parent=1 // pred_region
      _
    $region57: #{tpu_custom_call.1} parent=1 // pred_fallthru
      _
    // Predicated region
    $region58: #{tpu_custom_call.1} parent=1 // pred_check
      _
    $region59: #{tpu_custom_call.1} parent=1 // pred_check_branch
      %125 = sbr.rel (0) target = $region61
    $region60: #{tpu_custom_call.1} parent=1 // pred_region
      _
    $region61: #{tpu_custom_call.1} parent=1 // pred_fallthru
      _
    // Predicated region
    $region62: #{tpu_custom_call.1} parent=1 // pred_check
      _
    $region63: #{tpu_custom_call.1} parent=1 // pred_check_branch
      %127 = sbr.rel (0) target = $region65
    $region64: #{tpu_custom_call.1} parent=1 // pred_region
      %128 = dma.done [#allocation4], 8192
    $region65: #{tpu_custom_call.1} parent=1 // pred_fallthru
      _
    // Predicated region
    $region66: #{tpu_custom_call.1} parent=1 // pred_check
      _
    $region67: #{tpu_custom_call.1} parent=1 // pred_check_branch
      %130 = sbr.rel (0) target = $region69
    $region68: #{tpu_custom_call.1} parent=1 // pred_region
      %131 = dma.done [#allocation6], 8192
    $region69: #{tpu_custom_call.1} parent=1 // pred_fallthru
      _
    // Predicated region
    $region70: #{tpu_custom_call.1} parent=1 // pred_check
      _
    $region71: #{tpu_custom_call.1} parent=1 // pred_check_branch
      %133 = sbr.rel (0) target = $region73
    $region72: #{tpu_custom_call.1} parent=1 // pred_region
      %134 = dma.done [#allocation6], 8192
    $region73: #{tpu_custom_call.1} parent=1 // pred_fallthru
      _
    // Predicated region
    $region74: #{tpu_custom_call.1} parent=1 // pred_check
      _
    $region75: #{tpu_custom_call.1} parent=1 // pred_check_branch
      %136 = sbr.rel (0) target = $region77
    $region76: #{tpu_custom_call.1} parent=1 // pred_region
      %137 = dma.done [#allocation9], 8192
    $region77: #{tpu_custom_call.1} parent=1 // pred_fallthru
      _
    // Predicated region
    $region78: #{tpu_custom_call.1} parent=1 // pred_check
      _
    $region79: #{tpu_custom_call.1} parent=1 // pred_check_branch
      %139 = sbr.rel (0) target = $region81
    $region80: #{tpu_custom_call.1} parent=1 // pred_region
      %140 = dma.done [#allocation9], 8192
    $region81: #{tpu_custom_call.1} parent=1 // pred_fallthru
      _
    // Predicated region
    $region82: #{tpu_custom_call.1} parent=1 // pred_check
      _
    $region83: #{tpu_custom_call.1} parent=1 // pred_check_branch
      %142 = sbr.rel (0) target = $region85
    $region84: #{tpu_custom_call.1} parent=1 // pred_region
      %143 = dma.done [#allocation12], 8192
    $region85: #{tpu_custom_call.1} parent=1 // pred_fallthru
      _
    // Predicated region
    $region86: #{tpu_custom_call.1} parent=1 // pred_check
      _
    $region87: #{tpu_custom_call.1} parent=1 // pred_check_branch
      %145 = sbr.rel (0) target = $region89
    $region88: #{tpu_custom_call.1} parent=1 // pred_region
      %146 = dma.done [#allocation12], 8192
    $region89: #{tpu_custom_call.1} parent=1 // pred_fallthru
      _
    %v147 = vld [vmem:[%s0] sm:$0xff]
    %v148 = vld [vmem:[%s1] sm:$0xf]
    %v149 = vld [vmem:[%s3] sm:$0xf]
    %v151 = vlaneseq
    %v152 = vshrl.u32 %v151, 7
    %v153 = vsub.s32 0, %v152
    %v154 = vrot.slane %v149, %v153
    %v155 = vlaneseq
    %v156 = vshrl.u32 %v155, 7
    %v157 = vsub.s32 1, %v156
    %v158 = vrot.slane %v149, %v157
    %v159 = vlaneseq
    %v160 = vshrl.u32 %v159, 7
    %v161 = vsub.s32 2, %v160
    %v162 = vrot.slane %v149, %v161
    %v163 = vlaneseq
    %v164 = vshrl.u32 %v163, 7
    %v165 = vsub.s32 3, %v164
    %v166 = vrot.slane %v149, %v165
    %v172 = vlaneseq
    %v173 = vshrl.u32 %v172, 7
    %v174 = vsub.s32 0, %v173
    %v175 = vrot.slane %v148, %v174
    %v176 = vlaneseq
    %v177 = vshrl.u32 %v176, 7
    %v178 = vsub.s32 1, %v177
    %v179 = vrot.slane %v148, %v178
    %v180 = vlaneseq
    %v181 = vshrl.u32 %v180, 7
    %v182 = vsub.s32 2, %v181
    %v183 = vrot.slane %v148, %v182
    %v184 = vlaneseq
    %v185 = vshrl.u32 %v184, 7
    %v186 = vsub.s32 3, %v185
    %v187 = vrot.slane %v148, %v186
    %vm188 = vcmask 7168
    %v190 = vsel %vm188, %v147, 0
    %vm192 = vcmask 1040384
    %v193 = vsel %vm192, %v175, 0
    %v195 = vsel %vm192, %v179, 0
    %v197 = vsel %vm192, %v183, 0
    %v199 = vsel %vm192, %v187, 0
    %201 = vmatprep.subr.mxu0 %v195
    %202 = vmatpush1.msra.mxu0 %v193
    %203 = vmatprep.subr.mxu0 0.0
    %204 = vmatpush1.msra.mxu0 0.0
    %205 = vmatprep.subr.mxu0 0.0
    %206 = vmatpush1.msra.mxu0 0.0
    %207 = vmatprep.subr.mxu0 0.0
    %208 = vmatpush1.msra.mxu0 0.0
    %209 = vmatprep.subr.mxu0 0.0
    %210 = vmatpush1.msra.mxu0 0.0
    %211 = vmatprep.subr.mxu0 0.0
    %212 = vmatpush1.msra.mxu0 0.0
    %213 = vmatprep.subr.mxu0 0.0
    %214 = vmatpush1.msra.mxu0 0.0
    %215 = vmatprep.subr.mxu0 0.0
    %216 = vmatpush1.msra.mxu0 0.0
    %217 = vmatprep.subr.mxu0 0.0
    %218 = vmatpush1.msra.mxu0 0.0
    %219 = vmatprep.subr.mxu0 0.0
    %220 = vmatpush1.msra.mxu0 0.0
    %221 = vmatprep.subr.mxu0 0.0
    %222 = vmatpush1.msra.mxu0 0.0
    %223 = vmatprep.subr.mxu0 0.0
    %224 = vmatpush1.msra.mxu0 0.0
    %225 = vmatprep.subr.mxu0 0.0
    %226 = vmatpush1.msra.mxu0 0.0
    %227 = vmatprep.subr.mxu0 0.0
    %228 = vmatpush1.msra.mxu0 0.0
    %229 = vmatprep.subr.mxu0 0.0
    %230 = vmatpush1.msra.mxu0 0.0
    %231 = vmatprep.subr.mxu0 0.0
    %232 = vmatpush1.msra.mxu0 0.0
    %233 = vmatprep.subr.mxu0 0.0
    %234 = vmatpush1.msra.mxu0 0.0
    %235 = vmatprep.subr.mxu0 0.0
    %236 = vmatpush1.msra.mxu0 0.0
    %237 = vmatprep.subr.mxu0 0.0
    %238 = vmatpush1.msra.mxu0 0.0
    %239 = vmatprep.subr.mxu0 0.0
    %240 = vmatpush1.msra.mxu0 0.0
    %241 = vmatprep.subr.mxu0 0.0
    %242 = vmatpush1.msra.mxu0 0.0
    %243 = vmatprep.subr.mxu0 0.0
    %244 = vmatpush1.msra.mxu0 0.0
    %245 = vmatprep.subr.mxu0 0.0
    %246 = vmatpush1.msra.mxu0 0.0
    %247 = vmatprep.subr.mxu0 0.0
    %248 = vmatpush1.msra.mxu0 0.0
    %249 = vmatprep.subr.mxu0 0.0
    %250 = vmatpush1.msra.mxu0 0.0
    %251 = vmatprep.subr.mxu0 0.0
    %252 = vmatpush1.msra.mxu0 0.0
    %253 = vmatprep.subr.mxu0 0.0
    %254 = vmatpush1.msra.mxu0 0.0
    %255 = vmatprep.subr.mxu0 0.0
    %256 = vmatpush1.msra.mxu0 0.0
    %257 = vmatprep.subr.mxu0 0.0
    %258 = vmatpush1.msra.mxu0 0.0
    %259 = vmatprep.subr.mxu0 0.0
    %260 = vmatpush1.msra.mxu0 0.0
    %261 = vmatprep.subr.mxu0 0.0
    %262 = vmatpush1.msra.mxu0 0.0
    %263 = vmatprep.subr.mxu0 0.0
    %264 = vmatpush1.msra.mxu0 0.0
    %265 = vmatprep.mubr.f32.mxu0 0.0
    %266 = vmatmul.mubr.f32.gmra.mrb[0].mxu0 %v190
    %v267 = vpop.f32.mrb[0].mxu0
    %v268 = vadd.f32 %v154, %v267
    %v269 = vpop.f32.mrb[0].mxu0
    %v270 = vadd.f32 %v158, %v269
    %271 = vdwg.mxu0
    %272 = vmatprep.subr.mxu0 %v199
    %273 = vmatpush1.msra.mxu0 %v197
    %274 = vmatprep.subr.mxu0 0.0
    %275 = vmatpush1.msra.mxu0 0.0
    %276 = vmatprep.subr.mxu0 0.0
    %277 = vmatpush1.msra.mxu0 0.0
    %278 = vmatprep.subr.mxu0 0.0
    %279 = vmatpush1.msra.mxu0 0.0
    %280 = vmatprep.subr.mxu0 0.0
    %281 = vmatpush1.msra.mxu0 0.0
    %282 = vmatprep.subr.mxu0 0.0
    %283 = vmatpush1.msra.mxu0 0.0
    %284 = vmatprep.subr.mxu0 0.0
    %285 = vmatpush1.msra.mxu0 0.0
    %286 = vmatprep.subr.mxu0 0.0
    %287 = vmatpush1.msra.mxu0 0.0
    %288 = vmatprep.subr.mxu0 0.0
    %289 = vmatpush1.msra.mxu0 0.0
    %290 = vmatprep.subr.mxu0 0.0
    %291 = vmatpush1.msra.mxu0 0.0
    %292 = vmatprep.subr.mxu0 0.0
    %293 = vmatpush1.msra.mxu0 0.0
    %294 = vmatprep.subr.mxu0 0.0
    %295 = vmatpush1.msra.mxu0 0.0
    %296 = vmatprep.subr.mxu0 0.0
    %297 = vmatpush1.msra.mxu0 0.0
    %298 = vmatprep.subr.mxu0 0.0
    %299 = vmatpush1.msra.mxu0 0.0
    %300 = vmatprep.subr.mxu0 0.0
    %301 = vmatpush1.msra.mxu0 0.0
    %302 = vmatprep.subr.mxu0 0.0
    %303 = vmatpush1.msra.mxu0 0.0
    %304 = vmatprep.subr.mxu0 0.0
    %305 = vmatpush1.msra.mxu0 0.0
    %306 = vmatprep.subr.mxu0 0.0
    %307 = vmatpush1.msra.mxu0 0.0
    %308 = vmatprep.subr.mxu0 0.0
    %309 = vmatpush1.msra.mxu0 0.0
    %310 = vmatprep.subr.mxu0 0.0
    %311 = vmatpush1.msra.mxu0 0.0
    %312 = vmatprep.subr.mxu0 0.0
    %313 = vmatpush1.msra.mxu0 0.0
    %314 = vmatprep.subr.mxu0 0.0
    %315 = vmatpush1.msra.mxu0 0.0
    %316 = vmatprep.subr.mxu0 0.0
    %317 = vmatpush1.msra.mxu0 0.0
    %318 = vmatprep.subr.mxu0 0.0
    %319 = vmatpush1.msra.mxu0 0.0
    %320 = vmatprep.subr.mxu0 0.0
    %321 = vmatpush1.msra.mxu0 0.0
    %322 = vmatprep.subr.mxu0 0.0
    %323 = vmatpush1.msra.mxu0 0.0
    %324 = vmatprep.subr.mxu0 0.0
    %325 = vmatpush1.msra.mxu0 0.0
    %326 = vmatprep.subr.mxu0 0.0
    %327 = vmatpush1.msra.mxu0 0.0
    %328 = vmatprep.subr.mxu0 0.0
    %329 = vmatpush1.msra.mxu0 0.0
    %330 = vmatprep.subr.mxu0 0.0
    %331 = vmatpush1.msra.mxu0 0.0
    %332 = vmatprep.subr.mxu0 0.0
    %333 = vmatpush1.msra.mxu0 0.0
    %334 = vmatprep.subr.mxu0 0.0
    %335 = vmatpush1.msra.mxu0 0.0
    %336 = vmatprep.mubr.f32.mxu0 0.0
    %337 = vmatmul.mubr.f32.gmra.mrb[0].mxu0 %v190
    %v338 = vpop.f32.mrb[0].mxu0
    %v339 = vadd.f32 %v162, %v338
    %v340 = vpop.f32.mrb[0].mxu0
    %v341 = vadd.f32 %v166, %v340
    %342 = vdwg.mxu0
    %v343 = vld [vmem:[#allocation3] sm:$0xff]
    %v344 = vld [vmem:[#allocation3 + $0x8] sm:$0xff]
    %v345 = vld [vmem:[#allocation3 + $0x10] sm:$0xff]
    %v346 = vld [vmem:[#allocation3 + $0x18] sm:$0xff]
    %v347 = vld [vmem:[#allocation3 + $0x20] sm:$0xff]
    %v348 = vld [vmem:[#allocation3 + $0x28] sm:$0xff]
    %v349 = vld [vmem:[#allocation3 + $0x30] sm:$0xff]
    %v350 = vld [vmem:[#allocation3 + $0x38] sm:$0xff]
    %v351 = vld [vmem:[#allocation3 + $0x40] sm:$0xff]
    %v352 = vld [vmem:[#allocation3 + $0x48] sm:$0xff]
    %v353 = vld [vmem:[#allocation3 + $0x50] sm:$0xff]
    %v354 = vld [vmem:[#allocation3 + $0x58] sm:$0xff]
    %v355 = vld [vmem:[#allocation3 + $0x60] sm:$0xff]
    %v356 = vld [vmem:[#allocation3 + $0x68] sm:$0xff]
    %v357 = vld [vmem:[#allocation3 + $0x70] sm:$0xff]
    %v358 = vld [vmem:[#allocation3 + $0x78] sm:$0xff]
    %v359 = vld [vmem:[#allocation3 + $0x80] sm:$0xff]
    %v360 = vld [vmem:[#allocation3 + $0x88] sm:$0xff]
    %v361 = vld [vmem:[#allocation3 + $0x90] sm:$0xff]
    %v362 = vld [vmem:[#allocation3 + $0x98] sm:$0xff]
    %v363 = vld [vmem:[#allocation3 + $0xa0] sm:$0xff]
    %v364 = vld [vmem:[#allocation3 + $0xa8] sm:$0xff]
    %v365 = vld [vmem:[#allocation3 + $0xb0] sm:$0xff]
    %v366 = vld [vmem:[#allocation3 + $0xb8] sm:$0xff]
    %v367 = vld [vmem:[#allocation3 + $0xc0] sm:$0xff]
    %v368 = vld [vmem:[#allocation3 + $0xc8] sm:$0xff]
    %v369 = vld [vmem:[#allocation3 + $0xd0] sm:$0xff]
    %v370 = vld [vmem:[#allocation3 + $0xd8] sm:$0xff]
    %v371 = vld [vmem:[#allocation3 + $0xe0] sm:$0xff]
    %v372 = vld [vmem:[#allocation3 + $0xe8] sm:$0xff]
    %v373 = vld [vmem:[#allocation3 + $0xf0] sm:$0xff]
    %v374 = vld [vmem:[#allocation3 + $0xf8] sm:$0xff]
    %v375 = vld [vmem:[#allocation3 + $0x100] sm:$0xff]
    %v376 = vld [vmem:[#allocation3 + $0x108] sm:$0xff]
    %v377 = vld [vmem:[#allocation3 + $0x110] sm:$0xff]
    %v378 = vld [vmem:[#allocation3 + $0x118] sm:$0xff]
    %v379 = vld [vmem:[#allocation3 + $0x120] sm:$0xff]
    %v380 = vld [vmem:[#allocation3 + $0x128] sm:$0xff]
    %v381 = vld [vmem:[#allocation3 + $0x130] sm:$0xff]
    %v382 = vld [vmem:[#allocation3 + $0x138] sm:$0xff]
    %v383 = vld [vmem:[#allocation3 + $0x140] sm:$0xff]
    %v384 = vld [vmem:[#allocation3 + $0x148] sm:$0xff]
    %v385 = vld [vmem:[#allocation3 + $0x150] sm:$0xff]
    %v386 = vld [vmem:[#allocation3 + $0x158] sm:$0xff]
    %v387 = vld [vmem:[#allocation3 + $0x160] sm:$0xff]
    %v388 = vld [vmem:[#allocation3 + $0x168] sm:$0xff]
    %v389 = vld [vmem:[#allocation3 + $0x170] sm:$0xff]
    %v390 = vld [vmem:[#allocation3 + $0x178] sm:$0xff]
    %v391 = vld [vmem:[#allocation3 + $0x180] sm:$0xff]
    %v392 = vld [vmem:[#allocation3 + $0x188] sm:$0xff]
    %v393 = vld [vmem:[#allocation3 + $0x190] sm:$0xff]
    %v394 = vld [vmem:[#allocation3 + $0x198] sm:$0xff]
    %v395 = vld [vmem:[#allocation3 + $0x1a0] sm:$0xff]
    %v396 = vld [vmem:[#allocation3 + $0x1a8] sm:$0xff]
    %v397 = vld [vmem:[#allocation3 + $0x1b0] sm:$0xff]
    %v398 = vld [vmem:[#allocation3 + $0x1b8] sm:$0xff]
    %v399 = vld [vmem:[#allocation3 + $0x1c0] sm:$0xff]
    %v400 = vld [vmem:[#allocation3 + $0x1c8] sm:$0xff]
    %v401 = vld [vmem:[#allocation3 + $0x1d0] sm:$0xff]
    %v402 = vld [vmem:[#allocation3 + $0x1d8] sm:$0xff]
    %v403 = vld [vmem:[#allocation3 + $0x1e0] sm:$0xff]
    %v404 = vld [vmem:[#allocation3 + $0x1e8] sm:$0xff]
    %v405 = vld [vmem:[#allocation3 + $0x1f0] sm:$0xff]
    %v406 = vld [vmem:[#allocation3 + $0x1f8] sm:$0xff]
    %407 = vmatprep.subr.mxu0 %v344
    %408 = vmatpush1.msra.mxu0 %v343
    %409 = vmatprep.subr.mxu0 %v348
    %410 = vmatpush1.msra.mxu0 %v347
    %411 = vmatprep.subr.mxu0 %v352
    %412 = vmatpush1.msra.mxu0 %v351
    %413 = vmatprep.subr.mxu0 %v356
    %414 = vmatpush1.msra.mxu0 %v355
    %415 = vmatprep.subr.mxu0 %v360
    %416 = vmatpush1.msra.mxu0 %v359
    %417 = vmatprep.subr.mxu0 %v364
    %418 = vmatpush1.msra.mxu0 %v363
    %419 = vmatprep.subr.mxu0 %v368
    %420 = vmatpush1.msra.mxu0 %v367
    %421 = vmatprep.subr.mxu0 %v372
    %422 = vmatpush1.msra.mxu0 %v371
    %423 = vmatprep.subr.mxu0 %v376
    %424 = vmatpush1.msra.mxu0 %v375
    %425 = vmatprep.subr.mxu0 %v380
    %426 = vmatpush1.msra.mxu0 %v379
    %427 = vmatprep.subr.mxu0 %v384
    %428 = vmatpush1.msra.mxu0 %v383
    %429 = vmatprep.subr.mxu0 %v388
    %430 = vmatpush1.msra.mxu0 %v387
    %431 = vmatprep.subr.mxu0 %v392
    %432 = vmatpush1.msra.mxu0 %v391
    %433 = vmatprep.subr.mxu0 %v396
    %434 = vmatpush1.msra.mxu0 %v395
    %435 = vmatprep.subr.mxu0 %v400
    %436 = vmatpush1.msra.mxu0 %v399
    %437 = vmatprep.subr.mxu0 %v404
    %438 = vmatpush1.msra.mxu0 %v403
    %439 = vmatprep.subr.mxu0 0.0
    %440 = vmatpush1.msra.mxu0 0.0
    %441 = vmatprep.subr.mxu0 0.0
    %442 = vmatpush1.msra.mxu0 0.0
    %443 = vmatprep.subr.mxu0 0.0
    %444 = vmatpush1.msra.mxu0 0.0
    %445 = vmatprep.subr.mxu0 0.0
    %446 = vmatpush1.msra.mxu0 0.0
    %447 = vmatprep.subr.mxu0 0.0
    %448 = vmatpush1.msra.mxu0 0.0
    %449 = vmatprep.subr.mxu0 0.0
    %450 = vmatpush1.msra.mxu0 0.0
    %451 = vmatprep.subr.mxu0 0.0
    %452 = vmatpush1.msra.mxu0 0.0
    %453 = vmatprep.subr.mxu0 0.0
    %454 = vmatpush1.msra.mxu0 0.0
    %455 = vmatprep.subr.mxu0 0.0
    %456 = vmatpush1.msra.mxu0 0.0
    %457 = vmatprep.subr.mxu0 0.0
    %458 = vmatpush1.msra.mxu0 0.0
    %459 = vmatprep.subr.mxu0 0.0
    %460 = vmatpush1.msra.mxu0 0.0
    %461 = vmatprep.subr.mxu0 0.0
    %462 = vmatpush1.msra.mxu0 0.0
    %463 = vmatprep.subr.mxu0 0.0
    %464 = vmatpush1.msra.mxu0 0.0
    %465 = vmatprep.subr.mxu0 0.0
    %466 = vmatpush1.msra.mxu0 0.0
    %467 = vmatprep.subr.mxu0 0.0
    %468 = vmatpush1.msra.mxu0 0.0
    %469 = vmatprep.subr.mxu0 0.0
    %470 = vmatpush1.msra.mxu0 0.0
    %471 = vmatprep.mubr.f32.mxu0 0.0
    %472 = vmatmul.mubr.f32.gmra.mrb[0].mxu0 0.0
    %v473 = vpop.f32.mrb[0].mxu0
    %v474 = vadd.f32 0.0, %v473
    %v475 = vpop.f32.mrb[0].mxu0
    %v476 = vadd.f32 0.0, %v475
    %477 = vdwg.mxu0
    %478 = vmatprep.subr.mxu0 %v346
    %479 = vmatpush1.msra.mxu0 %v345
    %480 = vmatprep.subr.mxu0 %v350
    %481 = vmatpush1.msra.mxu0 %v349
    %482 = vmatprep.subr.mxu0 %v354
    %483 = vmatpush1.msra.mxu0 %v353
    %484 = vmatprep.subr.mxu0 %v358
    %485 = vmatpush1.msra.mxu0 %v357
    %486 = vmatprep.subr.mxu0 %v362
    %487 = vmatpush1.msra.mxu0 %v361
    %488 = vmatprep.subr.mxu0 %v366
    %489 = vmatpush1.msra.mxu0 %v365
    %490 = vmatprep.subr.mxu0 %v370
    %491 = vmatpush1.msra.mxu0 %v369
    %492 = vmatprep.subr.mxu0 %v374
    %493 = vmatpush1.msra.mxu0 %v373
    %494 = vmatprep.subr.mxu0 %v378
    %495 = vmatpush1.msra.mxu0 %v377
    %496 = vmatprep.subr.mxu0 %v382
    %497 = vmatpush1.msra.mxu0 %v381
    %498 = vmatprep.subr.mxu0 %v386
    %499 = vmatpush1.msra.mxu0 %v385
    %500 = vmatprep.subr.mxu0 %v390
    %501 = vmatpush1.msra.mxu0 %v389
    %502 = vmatprep.subr.mxu0 %v394
    %503 = vmatpush1.msra.mxu0 %v393
    %504 = vmatprep.subr.mxu0 %v398
    %505 = vmatpush1.msra.mxu0 %v397
    %506 = vmatprep.subr.mxu0 %v402
    %507 = vmatpush1.msra.mxu0 %v401
    %508 = vmatprep.subr.mxu0 %v406
    %509 = vmatpush1.msra.mxu0 %v405
    %510 = vmatprep.subr.mxu0 0.0
    %511 = vmatpush1.msra.mxu0 0.0
    %512 = vmatprep.subr.mxu0 0.0
    %513 = vmatpush1.msra.mxu0 0.0
    %514 = vmatprep.subr.mxu0 0.0
    %515 = vmatpush1.msra.mxu0 0.0
    %516 = vmatprep.subr.mxu0 0.0
    %517 = vmatpush1.msra.mxu0 0.0
    %518 = vmatprep.subr.mxu0 0.0
    %519 = vmatpush1.msra.mxu0 0.0
    %520 = vmatprep.subr.mxu0 0.0
    %521 = vmatpush1.msra.mxu0 0.0
    %522 = vmatprep.subr.mxu0 0.0
    %523 = vmatpush1.msra.mxu0 0.0
    %524 = vmatprep.subr.mxu0 0.0
    %525 = vmatpush1.msra.mxu0 0.0
    %526 = vmatprep.subr.mxu0 0.0
    %527 = vmatpush1.msra.mxu0 0.0
    %528 = vmatprep.subr.mxu0 0.0
    %529 = vmatpush1.msra.mxu0 0.0
    %530 = vmatprep.subr.mxu0 0.0
    %531 = vmatpush1.msra.mxu0 0.0
    %532 = vmatprep.subr.mxu0 0.0
    %533 = vmatpush1.msra.mxu0 0.0
    %534 = vmatprep.subr.mxu0 0.0
    %535 = vmatpush1.msra.mxu0 0.0
    %536 = vmatprep.subr.mxu0 0.0
    %537 = vmatpush1.msra.mxu0 0.0
    %538 = vmatprep.subr.mxu0 0.0
    %539 = vmatpush1.msra.mxu0 0.0
    %540 = vmatprep.subr.mxu0 0.0
    %541 = vmatpush1.msra.mxu0 0.0
    %542 = vmatprep.mubr.f32.mxu0 0.0
    %543 = vmatmul.mubr.f32.gmra.mrb[0].mxu0 0.0
    %v544 = vpop.f32.mrb[0].mxu0
    %v545 = vadd.f32 0.0, %v544
    %v546 = vpop.f32.mrb[0].mxu0
    %v547 = vadd.f32 0.0, %v546
    %548 = vdwg.mxu0
    %v549 = vadd.f32 %v268, %v474
    %v550 = vadd.f32 %v270, %v476
    %v551 = vadd.f32 %v339, %v545
    %v552 = vadd.f32 %v341, %v547
    %v553 = vxor.u32 %v549, 2147483648
    %v554 = vmul.f32 %v553, 1.442695
    %v555 = vpow.pop %v554
    %v556 = vadd.f32 %v555, 1.0
    %v557 = vrcp.pop %v556
    %v558 = vmul.f32 1.0, %v557
    %v559 = vxor.u32 %v550, 2147483648
    %v560 = vmul.f32 %v559, 1.442695
    %v561 = vpow.pop %v560
    %v562 = vadd.f32 %v561, 1.0
    %v563 = vrcp.pop %v562
    %v564 = vmul.f32 1.0, %v563
    %v565 = vtanh.pop %v551
    %v566 = vxor.u32 %v552, 2147483648
    %v567 = vmul.f32 %v566, 1.442695
    %v568 = vpow.pop %v567
    %v569 = vadd.f32 %v568, 1.0
    %v570 = vrcp.pop %v569
    %v571 = vmul.f32 1.0, %v570
    %v572 = vmul.f32 %v564, 0.0
    %v573 = vmul.f32 %v558, %v565
    %v574 = vadd.f32 %v572, %v573
    %v575 = vtanh.pop %v574
    %v576 = vmul.f32 %v571, %v575
    %577 = vmatprep.subr.mxu0 %v344
    %578 = vmatpush1.msra.mxu0 %v343
    %579 = vmatprep.subr.mxu0 %v348
    %580 = vmatpush1.msra.mxu0 %v347
    %581 = vmatprep.subr.mxu0 %v352
    %582 = vmatpush1.msra.mxu0 %v351
    %583 = vmatprep.subr.mxu0 %v356
    %584 = vmatpush1.msra.mxu0 %v355
    %585 = vmatprep.subr.mxu0 %v360
    %586 = vmatpush1.msra.mxu0 %v359
    %587 = vmatprep.subr.mxu0 %v364
    %588 = vmatpush1.msra.mxu0 %v363
    %589 = vmatprep.subr.mxu0 %v368
    %590 = vmatpush1.msra.mxu0 %v367
    %591 = vmatprep.subr.mxu0 %v372
    %592 = vmatpush1.msra.mxu0 %v371
    %593 = vmatprep.subr.mxu0 %v376
    %594 = vmatpush1.msra.mxu0 %v375
    %595 = vmatprep.subr.mxu0 %v380
    %596 = vmatpush1.msra.mxu0 %v379
    %597 = vmatprep.subr.mxu0 %v384
    %598 = vmatpush1.msra.mxu0 %v383
    %599 = vmatprep.subr.mxu0 %v388
    %600 = vmatpush1.msra.mxu0 %v387
    %601 = vmatprep.subr.mxu0 %v392
    %602 = vmatpush1.msra.mxu0 %v391
    %603 = vmatprep.subr.mxu0 %v396
    %604 = vmatpush1.msra.mxu0 %v395
    %605 = vmatprep.subr.mxu0 %v400
    %606 = vmatpush1.msra.mxu0 %v399
    %607 = vmatprep.subr.mxu0 %v404
    %608 = vmatpush1.msra.mxu0 %v403
    %609 = vmatprep.subr.mxu0 0.0
    %610 = vmatpush1.msra.mxu0 0.0
    %611 = vmatprep.subr.mxu0 0.0
    %612 = vmatpush1.msra.mxu0 0.0
    %613 = vmatprep.subr.mxu0 0.0
    %614 = vmatpush1.msra.mxu0 0.0
    %615 = vmatprep.subr.mxu0 0.0
    %616 = vmatpush1.msra.mxu0 0.0
    %617 = vmatprep.subr.mxu0 0.0
    %618 = vmatpush1.msra.mxu0 0.0
    %619 = vmatprep.subr.mxu0 0.0
    %620 = vmatpush1.msra.mxu0 0.0
    %621 = vmatprep.subr.mxu0 0.0
    %622 = vmatpush1.msra.mxu0 0.0
    %623 = vmatprep.subr.mxu0 0.0
    %624 = vmatpush1.msra.mxu0 0.0
    %625 = vmatprep.subr.mxu0 0.0
    %626 = vmatpush1.msra.mxu0 0.0
    %627 = vmatprep.subr.mxu0 0.0
    %628 = vmatpush1.msra.mxu0 0.0
    %629 = vmatprep.subr.mxu0 0.0
    %630 = vmatpush1.msra.mxu0 0.0
    %631 = vmatprep.subr.mxu0 0.0
    %632 = vmatpush1.msra.mxu0 0.0
    %633 = vmatprep.subr.mxu0 0.0
    %634 = vmatpush1.msra.mxu0 0.0
    %635 = vmatprep.subr.mxu0 0.0
    %636 = vmatpush1.msra.mxu0 0.0
    %637 = vmatprep.subr.mxu0 0.0
    %638 = vmatpush1.msra.mxu0 0.0
    %639 = vmatprep.subr.mxu0 0.0
    %640 = vmatpush1.msra.mxu0 0.0
    %641 = vmatprep.mubr.f32.mxu0 0.0
    %642 = vmatmul.mubr.f32.gmra.mrb[0].mxu0 %v576
    %v643 = vpop.f32.mrb[0].mxu0
    %v644 = vadd.f32 0.0, %v643
    %v645 = vpop.f32.mrb[0].mxu0
    %v646 = vadd.f32 0.0, %v645
    %647 = vdwg.mxu0
    %648 = vmatprep.subr.mxu0 %v346
    %649 = vmatpush1.msra.mxu0 %v345
    %650 = vmatprep.subr.mxu0 %v350
    %651 = vmatpush1.msra.mxu0 %v349
    %652 = vmatprep.subr.mxu0 %v354
    %653 = vmatpush1.msra.mxu0 %v353
    %654 = vmatprep.subr.mxu0 %v358
    %655 = vmatpush1.msra.mxu0 %v357
    %656 = vmatprep.subr.mxu0 %v362
    %657 = vmatpush1.msra.mxu0 %v361
    %658 = vmatprep.subr.mxu0 %v366
    %659 = vmatpush1.msra.mxu0 %v365
    %660 = vmatprep.subr.mxu0 %v370
    %661 = vmatpush1.msra.mxu0 %v369
    %662 = vmatprep.subr.mxu0 %v374
    %663 = vmatpush1.msra.mxu0 %v373
    %664 = vmatprep.subr.mxu0 %v378
    %665 = vmatpush1.msra.mxu0 %v377
    %666 = vmatprep.subr.mxu0 %v382
    %667 = vmatpush1.msra.mxu0 %v381
    %668 = vmatprep.subr.mxu0 %v386
    %669 = vmatpush1.msra.mxu0 %v385
    %670 = vmatprep.subr.mxu0 %v390
    %671 = vmatpush1.msra.mxu0 %v389
    %672 = vmatprep.subr.mxu0 %v394
    %673 = vmatpush1.msra.mxu0 %v393
    %674 = vmatprep.subr.mxu0 %v398
    %675 = vmatpush1.msra.mxu0 %v397
    %676 = vmatprep.subr.mxu0 %v402
    %677 = vmatpush1.msra.mxu0 %v401
    %678 = vmatprep.subr.mxu0 %v406
    %679 = vmatpush1.msra.mxu0 %v405
    %680 = vmatprep.subr.mxu0 0.0
    %681 = vmatpush1.msra.mxu0 0.0
    %682 = vmatprep.subr.mxu0 0.0
    %683 = vmatpush1.msra.mxu0 0.0
    %684 = vmatprep.subr.mxu0 0.0
    %685 = vmatpush1.msra.mxu0 0.0
    %686 = vmatprep.subr.mxu0 0.0
    %687 = vmatpush1.msra.mxu0 0.0
    %688 = vmatprep.subr.mxu0 0.0
    %689 = vmatpush1.msra.mxu0 0.0
    %690 = vmatprep.subr.mxu0 0.0
    %691 = vmatpush1.msra.mxu0 0.0
    %692 = vmatprep.subr.mxu0 0.0
    %693 = vmatpush1.msra.mxu0 0.0
    %694 = vmatprep.subr.mxu0 0.0
    %695 = vmatpush1.msra.mxu0 0.0
    %696 = vmatprep.subr.mxu0 0.0
    %697 = vmatpush1.msra.mxu0 0.0
    %698 = vmatprep.subr.mxu0 0.0
    %699 = vmatpush1.msra.mxu0 0.0
    %700 = vmatprep.subr.mxu0 0.0
    %701 = vmatpush1.msra.mxu0 0.0
    %702 = vmatprep.subr.mxu0 0.0
    %703 = vmatpush1.msra.mxu0 0.0
    %704 = vmatprep.subr.mxu0 0.0
    %705 = vmatpush1.msra.mxu0 0.0
    %706 = vmatprep.subr.mxu0 0.0
    %707 = vmatpush1.msra.mxu0 0.0
    %708 = vmatprep.subr.mxu0 0.0
    %709 = vmatpush1.msra.mxu0 0.0
    %710 = vmatprep.subr.mxu0 0.0
    %711 = vmatpush1.msra.mxu0 0.0
    %712 = vmatprep.mubr.f32.mxu0 0.0
    %713 = vmatmul.mubr.f32.gmra.mrb[0].mxu0 %v576
    %v714 = vpop.f32.mrb[0].mxu0
    %v715 = vadd.f32 0.0, %v714
    %v716 = vpop.f32.mrb[0].mxu0
    %v717 = vadd.f32 0.0, %v716
    %718 = vdwg.mxu0
    %v723 = vrot.slane %v644, 7
    %v724 = vrot.slane %v646, 7
    %v725 = vrot.slane %v715, 7
    %v726 = vrot.slane %v717, 7
    %v731 = vadd.f32 %v268, %v723
    %v732 = vadd.f32 %v270, %v724
    %v733 = vadd.f32 %v339, %v725
    %v734 = vadd.f32 %v341, %v726
    %v735 = vxor.u32 %v731, 2147483648
    %v736 = vmul.f32 %v735, 1.442695
    %v737 = vpow.pop %v736
    %v738 = vadd.f32 %v737, 1.0
    %v739 = vrcp.pop %v738
    %v740 = vmul.f32 1.0, %v739
    %v741 = vxor.u32 %v732, 2147483648
    %v742 = vmul.f32 %v741, 1.442695
    %v743 = vpow.pop %v742
    %v744 = vadd.f32 %v743, 1.0
    %v745 = vrcp.pop %v744
    %v746 = vmul.f32 1.0, %v745
    %v747 = vtanh.pop %v733
    %v748 = vxor.u32 %v734, 2147483648
    %v749 = vmul.f32 %v748, 1.442695
    %v750 = vpow.pop %v749
    %v751 = vadd.f32 %v750, 1.0
    %v752 = vrcp.pop %v751
    %v753 = vmul.f32 1.0, %v752
    %v755 = vrot.slane %v574, 7
    %v757 = vmul.f32 %v746, %v755
    %v758 = vmul.f32 %v740, %v747
    %v759 = vadd.f32 %v757, %v758
    %v760 = vtanh.pop %v759
    %v761 = vmul.f32 %v753, %v760
    %v763 = vrot.slane %v761, 1
    %765 = vmatprep.subr.mxu0 %v344
    %766 = vmatpush1.msra.mxu0 %v343
    %767 = vmatprep.subr.mxu0 %v348
    %768 = vmatpush1.msra.mxu0 %v347
    %769 = vmatprep.subr.mxu0 %v352
    %770 = vmatpush1.msra.mxu0 %v351
    %771 = vmatprep.subr.mxu0 %v356
    %772 = vmatpush1.msra.mxu0 %v355
    %773 = vmatprep.subr.mxu0 %v360
    %774 = vmatpush1.msra.mxu0 %v359
    %775 = vmatprep.subr.mxu0 %v364
    %776 = vmatpush1.msra.mxu0 %v363
    %777 = vmatprep.subr.mxu0 %v368
    %778 = vmatpush1.msra.mxu0 %v367
    %779 = vmatprep.subr.mxu0 %v372
    %780 = vmatpush1.msra.mxu0 %v371
    %781 = vmatprep.subr.mxu0 %v376
    %782 = vmatpush1.msra.mxu0 %v375
    %783 = vmatprep.subr.mxu0 %v380
    %784 = vmatpush1.msra.mxu0 %v379
    %785 = vmatprep.subr.mxu0 %v384
    %786 = vmatpush1.msra.mxu0 %v383
    %787 = vmatprep.subr.mxu0 %v388
    %788 = vmatpush1.msra.mxu0 %v387
    %789 = vmatprep.subr.mxu0 %v392
    %790 = vmatpush1.msra.mxu0 %v391
    %791 = vmatprep.subr.mxu0 %v396
    %792 = vmatpush1.msra.mxu0 %v395
    %793 = vmatprep.subr.mxu0 %v400
    %794 = vmatpush1.msra.mxu0 %v399
    %795 = vmatprep.subr.mxu0 %v404
    %796 = vmatpush1.msra.mxu0 %v403
    %797 = vmatprep.subr.mxu0 0.0
    %798 = vmatpush1.msra.mxu0 0.0
    %799 = vmatprep.subr.mxu0 0.0
    %800 = vmatpush1.msra.mxu0 0.0
    %801 = vmatprep.subr.mxu0 0.0
    %802 = vmatpush1.msra.mxu0 0.0
    %803 = vmatprep.subr.mxu0 0.0
    %804 = vmatpush1.msra.mxu0 0.0
    %805 = vmatprep.subr.mxu0 0.0
    %806 = vmatpush1.msra.mxu0 0.0
    %807 = vmatprep.subr.mxu0 0.0
    %808 = vmatpush1.msra.mxu0 0.0
    %809 = vmatprep.subr.mxu0 0.0
    %810 = vmatpush1.msra.mxu0 0.0
    %811 = vmatprep.subr.mxu0 0.0
    %812 = vmatpush1.msra.mxu0 0.0
    %813 = vmatprep.subr.mxu0 0.0
    %814 = vmatpush1.msra.mxu0 0.0
    %815 = vmatprep.subr.mxu0 0.0
    %816 = vmatpush1.msra.mxu0 0.0
    %817 = vmatprep.subr.mxu0 0.0
    %818 = vmatpush1.msra.mxu0 0.0
    %819 = vmatprep.subr.mxu0 0.0
    %820 = vmatpush1.msra.mxu0 0.0
    %821 = vmatprep.subr.mxu0 0.0
    %822 = vmatpush1.msra.mxu0 0.0
    %823 = vmatprep.subr.mxu0 0.0
    %824 = vmatpush1.msra.mxu0 0.0
    %825 = vmatprep.subr.mxu0 0.0
    %826 = vmatpush1.msra.mxu0 0.0
    %827 = vmatprep.subr.mxu0 0.0
    %828 = vmatpush1.msra.mxu0 0.0
    %829 = vmatprep.mubr.f32.mxu0 0.0
    %830 = vmatmul.mubr.f32.gmra.mrb[0].mxu0 %v763
    %v831 = vpop.f32.mrb[0].mxu0
    %v832 = vadd.f32 0.0, %v831
    %v833 = vpop.f32.mrb[0].mxu0
    %v834 = vadd.f32 0.0, %v833
    %835 = vdwg.mxu0
    %836 = vmatprep.subr.mxu0 %v346
    %837 = vmatpush1.msra.mxu0 %v345
    %838 = vmatprep.subr.mxu0 %v350
    %839 = vmatpush1.msra.mxu0 %v349
    %840 = vmatprep.subr.mxu0 %v354
    %841 = vmatpush1.msra.mxu0 %v353
    %842 = vmatprep.subr.mxu0 %v358
    %843 = vmatpush1.msra.mxu0 %v357
    %844 = vmatprep.subr.mxu0 %v362
    %845 = vmatpush1.msra.mxu0 %v361
    %846 = vmatprep.subr.mxu0 %v366
    %847 = vmatpush1.msra.mxu0 %v365
    %848 = vmatprep.subr.mxu0 %v370
    %849 = vmatpush1.msra.mxu0 %v369
    %850 = vmatprep.subr.mxu0 %v374
    %851 = vmatpush1.msra.mxu0 %v373
    %852 = vmatprep.subr.mxu0 %v378
    %853 = vmatpush1.msra.mxu0 %v377
    %854 = vmatprep.subr.mxu0 %v382
    %855 = vmatpush1.msra.mxu0 %v381
    %856 = vmatprep.subr.mxu0 %v386
    %857 = vmatpush1.msra.mxu0 %v385
    %858 = vmatprep.subr.mxu0 %v390
    %859 = vmatpush1.msra.mxu0 %v389
    %860 = vmatprep.subr.mxu0 %v394
    %861 = vmatpush1.msra.mxu0 %v393
    %862 = vmatprep.subr.mxu0 %v398
    %863 = vmatpush1.msra.mxu0 %v397
    %864 = vmatprep.subr.mxu0 %v402
    %865 = vmatpush1.msra.mxu0 %v401
    %866 = vmatprep.subr.mxu0 %v406
    %867 = vmatpush1.msra.mxu0 %v405
    %868 = vmatprep.subr.mxu0 0.0
    %869 = vmatpush1.msra.mxu0 0.0
    %870 = vmatprep.subr.mxu0 0.0
    %871 = vmatpush1.msra.mxu0 0.0
    %872 = vmatprep.subr.mxu0 0.0
    %873 = vmatpush1.msra.mxu0 0.0
    %874 = vmatprep.subr.mxu0 0.0
    %875 = vmatpush1.msra.mxu0 0.0
    %876 = vmatprep.subr.mxu0 0.0
    %877 = vmatpush1.msra.mxu0 0.0
    %878 = vmatprep.subr.mxu0 0.0
    %879 = vmatpush1.msra.mxu0 0.0
    %880 = vmatprep.subr.mxu0 0.0
    %881 = vmatpush1.msra.mxu0 0.0
    %882 = vmatprep.subr.mxu0 0.0
    %883 = vmatpush1.msra.mxu0 0.0
    %884 = vmatprep.subr.mxu0 0.0
    %885 = vmatpush1.msra.mxu0 0.0
    %886 = vmatprep.subr.mxu0 0.0
    %887 = vmatpush1.msra.mxu0 0.0
    %888 = vmatprep.subr.mxu0 0.0
    %889 = vmatpush1.msra.mxu0 0.0
    %890 = vmatprep.subr.mxu0 0.0
    %891 = vmatpush1.msra.mxu0 0.0
    %892 = vmatprep.subr.mxu0 0.0
    %893 = vmatpush1.msra.mxu0 0.0
    %894 = vmatprep.subr.mxu0 0.0
    %895 = vmatpush1.msra.mxu0 0.0
    %896 = vmatprep.subr.mxu0 0.0
    %897 = vmatpush1.msra.mxu0 0.0
    %898 = vmatprep.subr.mxu0 0.0
    %899 = vmatpush1.msra.mxu0 0.0
    %900 = vmatprep.mubr.f32.mxu0 0.0
    %901 = vmatmul.mubr.f32.gmra.mrb[0].mxu0 %v763
    %v902 = vpop.f32.mrb[0].mxu0
    %v903 = vadd.f32 0.0, %v902
    %v904 = vpop.f32.mrb[0].mxu0
    %v905 = vadd.f32 0.0, %v904
    %906 = vdwg.mxu0
    %v911 = vrot.slane %v832, 6
    %v912 = vrot.slane %v834, 6
    %v913 = vrot.slane %v903, 6
    %v914 = vrot.slane %v905, 6
    %v919 = vadd.f32 %v268, %v911
    %v920 = vadd.f32 %v270, %v912
    %v921 = vadd.f32 %v339, %v913
    %v922 = vadd.f32 %v341, %v914
    %v923 = vxor.u32 %v919, 2147483648
    %v924 = vmul.f32 %v923, 1.442695
    %v925 = vpow.pop %v924
    %v926 = vadd.f32 %v925, 1.0
    %v927 = vrcp.pop %v926
    %v928 = vmul.f32 1.0, %v927
    %v929 = vxor.u32 %v920, 2147483648
    %v930 = vmul.f32 %v929, 1.442695
    %v931 = vpow.pop %v930
    %v932 = vadd.f32 %v931, 1.0
    %v933 = vrcp.pop %v932
    %v934 = vmul.f32 1.0, %v933
    %v935 = vtanh.pop %v921
    %v936 = vxor.u32 %v922, 2147483648
    %v937 = vmul.f32 %v936, 1.442695
    %v938 = vpow.pop %v937
    %v939 = vadd.f32 %v938, 1.0
    %v940 = vrcp.pop %v939
    %v941 = vmul.f32 1.0, %v940
    %v943 = vrot.slane %v759, 7
    %v945 = vmul.f32 %v934, %v943
    %v946 = vmul.f32 %v928, %v935
    %v947 = vadd.f32 %v945, %v946
    %v948 = vtanh.pop %v947
    %v949 = vmul.f32 %v941, %v948
    %v951 = vrot.slane %v949, 2
    %953 = vmatprep.subr.mxu0 %v344
    %954 = vmatpush1.msra.mxu0 %v343
    %955 = vmatprep.subr.mxu0 %v348
    %956 = vmatpush1.msra.mxu0 %v347
    %957 = vmatprep.subr.mxu0 %v352
    %958 = vmatpush1.msra.mxu0 %v351
    %959 = vmatprep.subr.mxu0 %v356
    %960 = vmatpush1.msra.mxu0 %v355
    %961 = vmatprep.subr.mxu0 %v360
    %962 = vmatpush1.msra.mxu0 %v359
    %963 = vmatprep.subr.mxu0 %v364
    %964 = vmatpush1.msra.mxu0 %v363
    %965 = vmatprep.subr.mxu0 %v368
    %966 = vmatpush1.msra.mxu0 %v367
    %967 = vmatprep.subr.mxu0 %v372
    %968 = vmatpush1.msra.mxu0 %v371
    %969 = vmatprep.subr.mxu0 %v376
    %970 = vmatpush1.msra.mxu0 %v375
    %971 = vmatprep.subr.mxu0 %v380
    %972 = vmatpush1.msra.mxu0 %v379
    %973 = vmatprep.subr.mxu0 %v384
    %974 = vmatpush1.msra.mxu0 %v383
    %975 = vmatprep.subr.mxu0 %v388
    %976 = vmatpush1.msra.mxu0 %v387
    %977 = vmatprep.subr.mxu0 %v392
    %978 = vmatpush1.msra.mxu0 %v391
    %979 = vmatprep.subr.mxu0 %v396
    %980 = vmatpush1.msra.mxu0 %v395
    %981 = vmatprep.subr.mxu0 %v400
    %982 = vmatpush1.msra.mxu0 %v399
    %983 = vmatprep.subr.mxu0 %v404
    %984 = vmatpush1.msra.mxu0 %v403
    %985 = vmatprep.subr.mxu0 0.0
    %986 = vmatpush1.msra.mxu0 0.0
    %987 = vmatprep.subr.mxu0 0.0
    %988 = vmatpush1.msra.mxu0 0.0
    %989 = vmatprep.subr.mxu0 0.0
    %990 = vmatpush1.msra.mxu0 0.0
    %991 = vmatprep.subr.mxu0 0.0
    %992 = vmatpush1.msra.mxu0 0.0
    %993 = vmatprep.subr.mxu0 0.0
    %994 = vmatpush1.msra.mxu0 0.0
    %995 = vmatprep.subr.mxu0 0.0
    %996 = vmatpush1.msra.mxu0 0.0
    %997 = vmatprep.subr.mxu0 0.0
    %998 = vmatpush1.msra.mxu0 0.0
    %999 = vmatprep.subr.mxu0 0.0
    %1000 = vmatpush1.msra.mxu0 0.0
    %1001 = vmatprep.subr.mxu0 0.0
    %1002 = vmatpush1.msra.mxu0 0.0
    %1003 = vmatprep.subr.mxu0 0.0
    %1004 = vmatpush1.msra.mxu0 0.0
    %1005 = vmatprep.subr.mxu0 0.0
    %1006 = vmatpush1.msra.mxu0 0.0
    %1007 = vmatprep.subr.mxu0 0.0
    %1008 = vmatpush1.msra.mxu0 0.0
    %1009 = vmatprep.subr.mxu0 0.0
    %1010 = vmatpush1.msra.mxu0 0.0
    %1011 = vmatprep.subr.mxu0 0.0
    %1012 = vmatpush1.msra.mxu0 0.0
    %1013 = vmatprep.subr.mxu0 0.0
    %1014 = vmatpush1.msra.mxu0 0.0
    %1015 = vmatprep.subr.mxu0 0.0
    %1016 = vmatpush1.msra.mxu0 0.0
    %1017 = vmatprep.mubr.f32.mxu0 0.0
    %1018 = vmatmul.mubr.f32.gmra.mrb[0].mxu0 %v951
    %v1019 = vpop.f32.mrb[0].mxu0
    %v1020 = vadd.f32 0.0, %v1019
    %v1021 = vpop.f32.mrb[0].mxu0
    %v1022 = vadd.f32 0.0, %v1021
    %1023 = vdwg.mxu0
    %1024 = vmatprep.subr.mxu0 %v346
    %1025 = vmatpush1.msra.mxu0 %v345
    %1026 = vmatprep.subr.mxu0 %v350
    %1027 = vmatpush1.msra.mxu0 %v349
    %1028 = vmatprep.subr.mxu0 %v354
    %1029 = vmatpush1.msra.mxu0 %v353
    %1030 = vmatprep.subr.mxu0 %v358
    %1031 = vmatpush1.msra.mxu0 %v357
    %1032 = vmatprep.subr.mxu0 %v362
    %1033 = vmatpush1.msra.mxu0 %v361
    %1034 = vmatprep.subr.mxu0 %v366
    %1035 = vmatpush1.msra.mxu0 %v365
    %1036 = vmatprep.subr.mxu0 %v370
    %1037 = vmatpush1.msra.mxu0 %v369
    %1038 = vmatprep.subr.mxu0 %v374
    %1039 = vmatpush1.msra.mxu0 %v373
    %1040 = vmatprep.subr.mxu0 %v378
    %1041 = vmatpush1.msra.mxu0 %v377
    %1042 = vmatprep.subr.mxu0 %v382
    %1043 = vmatpush1.msra.mxu0 %v381
    %1044 = vmatprep.subr.mxu0 %v386
    %1045 = vmatpush1.msra.mxu0 %v385
    %1046 = vmatprep.subr.mxu0 %v390
    %1047 = vmatpush1.msra.mxu0 %v389
    %1048 = vmatprep.subr.mxu0 %v394
    %1049 = vmatpush1.msra.mxu0 %v393
    %1050 = vmatprep.subr.mxu0 %v398
    %1051 = vmatpush1.msra.mxu0 %v397
    %1052 = vmatprep.subr.mxu0 %v402
    %1053 = vmatpush1.msra.mxu0 %v401
    %1054 = vmatprep.subr.mxu0 %v406
    %1055 = vmatpush1.msra.mxu0 %v405
    %1056 = vmatprep.subr.mxu0 0.0
    %1057 = vmatpush1.msra.mxu0 0.0
    %1058 = vmatprep.subr.mxu0 0.0
    %1059 = vmatpush1.msra.mxu0 0.0
    %1060 = vmatprep.subr.mxu0 0.0
    %1061 = vmatpush1.msra.mxu0 0.0
    %1062 = vmatprep.subr.mxu0 0.0
    %1063 = vmatpush1.msra.mxu0 0.0
    %1064 = vmatprep.subr.mxu0 0.0
    %1065 = vmatpush1.msra.mxu0 0.0
    %1066 = vmatprep.subr.mxu0 0.0
    %1067 = vmatpush1.msra.mxu0 0.0
    %1068 = vmatprep.subr.mxu0 0.0
    %1069 = vmatpush1.msra.mxu0 0.0
    %1070 = vmatprep.subr.mxu0 0.0
    %1071 = vmatpush1.msra.mxu0 0.0
    %1072 = vmatprep.subr.mxu0 0.0
    %1073 = vmatpush1.msra.mxu0 0.0
    %1074 = vmatprep.subr.mxu0 0.0
    %1075 = vmatpush1.msra.mxu0 0.0
    %1076 = vmatprep.subr.mxu0 0.0
    %1077 = vmatpush1.msra.mxu0 0.0
    %1078 = vmatprep.subr.mxu0 0.0
    %1079 = vmatpush1.msra.mxu0 0.0
    %1080 = vmatprep.subr.mxu0 0.0
    %1081 = vmatpush1.msra.mxu0 0.0
    %1082 = vmatprep.subr.mxu0 0.0
    %1083 = vmatpush1.msra.mxu0 0.0
    %1084 = vmatprep.subr.mxu0 0.0
    %1085 = vmatpush1.msra.mxu0 0.0
    %1086 = vmatprep.subr.mxu0 0.0
    %1087 = vmatpush1.msra.mxu0 0.0
    %1088 = vmatprep.mubr.f32.mxu0 0.0
    %1089 = vmatmul.mubr.f32.gmra.mrb[0].mxu0 %v951
    %v1090 = vpop.f32.mrb[0].mxu0
    %v1091 = vadd.f32 0.0, %v1090
    %v1092 = vpop.f32.mrb[0].mxu0
    %v1093 = vadd.f32 0.0, %v1092
    %1094 = vdwg.mxu0
    %v1099 = vrot.slane %v1020, 5
    %v1100 = vrot.slane %v1022, 5
    %v1101 = vrot.slane %v1091, 5
    %v1102 = vrot.slane %v1093, 5
    %v1107 = vadd.f32 %v268, %v1099
    %v1108 = vadd.f32 %v270, %v1100
    %v1109 = vadd.f32 %v339, %v1101
    %v1110 = vadd.f32 %v341, %v1102
    %v1111 = vxor.u32 %v1107, 2147483648
    %v1112 = vmul.f32 %v1111, 1.442695
    %v1113 = vpow.pop %v1112
    %v1114 = vadd.f32 %v1113, 1.0
    %v1115 = vrcp.pop %v1114
    %v1116 = vmul.f32 1.0, %v1115
    %v1117 = vxor.u32 %v1108, 2147483648
    %v1118 = vmul.f32 %v1117, 1.442695
    %v1119 = vpow.pop %v1118
    %v1120 = vadd.f32 %v1119, 1.0
    %v1121 = vrcp.pop %v1120
    %v1122 = vmul.f32 1.0, %v1121
    %v1123 = vtanh.pop %v1109
    %v1124 = vxor.u32 %v1110, 2147483648
    %v1125 = vmul.f32 %v1124, 1.442695
    %v1126 = vpow.pop %v1125
    %v1127 = vadd.f32 %v1126, 1.0
    %v1128 = vrcp.pop %v1127
    %v1129 = vmul.f32 1.0, %v1128
    %v1131 = vrot.slane %v947, 7
    %v1133 = vmul.f32 %v1122, %v1131
    %v1134 = vmul.f32 %v1116, %v1123
    %v1135 = vadd.f32 %v1133, %v1134
    %v1136 = vtanh.pop %v1135
    %v1137 = vmul.f32 %v1129, %v1136
    %v1139 = vrot.slane %v1137, 3
    %1141 = vmatprep.subr.mxu0 %v344
    %1142 = vmatpush1.msra.mxu0 %v343
    %1143 = vmatprep.subr.mxu0 %v348
    %1144 = vmatpush1.msra.mxu0 %v347
    %1145 = vmatprep.subr.mxu0 %v352
    %1146 = vmatpush1.msra.mxu0 %v351
    %1147 = vmatprep.subr.mxu0 %v356
    %1148 = vmatpush1.msra.mxu0 %v355
    %1149 = vmatprep.subr.mxu0 %v360
    %1150 = vmatpush1.msra.mxu0 %v359
    %1151 = vmatprep.subr.mxu0 %v364
    %1152 = vmatpush1.msra.mxu0 %v363
    %1153 = vmatprep.subr.mxu0 %v368
    %1154 = vmatpush1.msra.mxu0 %v367
    %1155 = vmatprep.subr.mxu0 %v372
    %1156 = vmatpush1.msra.mxu0 %v371
    %1157 = vmatprep.subr.mxu0 %v376
    %1158 = vmatpush1.msra.mxu0 %v375
    %1159 = vmatprep.subr.mxu0 %v380
    %1160 = vmatpush1.msra.mxu0 %v379
    %1161 = vmatprep.subr.mxu0 %v384
    %1162 = vmatpush1.msra.mxu0 %v383
    %1163 = vmatprep.subr.mxu0 %v388
    %1164 = vmatpush1.msra.mxu0 %v387
    %1165 = vmatprep.subr.mxu0 %v392
    %1166 = vmatpush1.msra.mxu0 %v391
    %1167 = vmatprep.subr.mxu0 %v396
    %1168 = vmatpush1.msra.mxu0 %v395
    %1169 = vmatprep.subr.mxu0 %v400
    %1170 = vmatpush1.msra.mxu0 %v399
    %1171 = vmatprep.subr.mxu0 %v404
    %1172 = vmatpush1.msra.mxu0 %v403
    %1173 = vmatprep.subr.mxu0 0.0
    %1174 = vmatpush1.msra.mxu0 0.0
    %1175 = vmatprep.subr.mxu0 0.0
    %1176 = vmatpush1.msra.mxu0 0.0
    %1177 = vmatprep.subr.mxu0 0.0
    %1178 = vmatpush1.msra.mxu0 0.0
    %1179 = vmatprep.subr.mxu0 0.0
    %1180 = vmatpush1.msra.mxu0 0.0
    %1181 = vmatprep.subr.mxu0 0.0
    %1182 = vmatpush1.msra.mxu0 0.0
    %1183 = vmatprep.subr.mxu0 0.0
    %1184 = vmatpush1.msra.mxu0 0.0
    %1185 = vmatprep.subr.mxu0 0.0
    %1186 = vmatpush1.msra.mxu0 0.0
    %1187 = vmatprep.subr.mxu0 0.0
    %1188 = vmatpush1.msra.mxu0 0.0
    %1189 = vmatprep.subr.mxu0 0.0
    %1190 = vmatpush1.msra.mxu0 0.0
    %1191 = vmatprep.subr.mxu0 0.0
    %1192 = vmatpush1.msra.mxu0 0.0
    %1193 = vmatprep.subr.mxu0 0.0
    %1194 = vmatpush1.msra.mxu0 0.0
    %1195 = vmatprep.subr.mxu0 0.0
    %1196 = vmatpush1.msra.mxu0 0.0
    %1197 = vmatprep.subr.mxu0 0.0
    %1198 = vmatpush1.msra.mxu0 0.0
    %1199 = vmatprep.subr.mxu0 0.0
    %1200 = vmatpush1.msra.mxu0 0.0
    %1201 = vmatprep.subr.mxu0 0.0
    %1202 = vmatpush1.msra.mxu0 0.0
    %1203 = vmatprep.subr.mxu0 0.0
    %1204 = vmatpush1.msra.mxu0 0.0
    %1205 = vmatprep.mubr.f32.mxu0 0.0
    %1206 = vmatmul.mubr.f32.gmra.mrb[0].mxu0 %v1139
    %v1207 = vpop.f32.mrb[0].mxu0
    %v1208 = vadd.f32 0.0, %v1207
    %v1209 = vpop.f32.mrb[0].mxu0
    %v1210 = vadd.f32 0.0, %v1209
    %1211 = vdwg.mxu0
    %1212 = vmatprep.subr.mxu0 %v346
    %1213 = vmatpush1.msra.mxu0 %v345
    %1214 = vmatprep.subr.mxu0 %v350
    %1215 = vmatpush1.msra.mxu0 %v349
    %1216 = vmatprep.subr.mxu0 %v354
    %1217 = vmatpush1.msra.mxu0 %v353
    %1218 = vmatprep.subr.mxu0 %v358
    %1219 = vmatpush1.msra.mxu0 %v357
    %1220 = vmatprep.subr.mxu0 %v362
    %1221 = vmatpush1.msra.mxu0 %v361
    %1222 = vmatprep.subr.mxu0 %v366
    %1223 = vmatpush1.msra.mxu0 %v365
    %1224 = vmatprep.subr.mxu0 %v370
    %1225 = vmatpush1.msra.mxu0 %v369
    %1226 = vmatprep.subr.mxu0 %v374
    %1227 = vmatpush1.msra.mxu0 %v373
    %1228 = vmatprep.subr.mxu0 %v378
    %1229 = vmatpush1.msra.mxu0 %v377
    %1230 = vmatprep.subr.mxu0 %v382
    %1231 = vmatpush1.msra.mxu0 %v381
    %1232 = vmatprep.subr.mxu0 %v386
    %1233 = vmatpush1.msra.mxu0 %v385
    %1234 = vmatprep.subr.mxu0 %v390
    %1235 = vmatpush1.msra.mxu0 %v389
    %1236 = vmatprep.subr.mxu0 %v394
    %1237 = vmatpush1.msra.mxu0 %v393
    %1238 = vmatprep.subr.mxu0 %v398
    %1239 = vmatpush1.msra.mxu0 %v397
    %1240 = vmatprep.subr.mxu0 %v402
    %1241 = vmatpush1.msra.mxu0 %v401
    %1242 = vmatprep.subr.mxu0 %v406
    %1243 = vmatpush1.msra.mxu0 %v405
    %1244 = vmatprep.subr.mxu0 0.0
    %1245 = vmatpush1.msra.mxu0 0.0
    %1246 = vmatprep.subr.mxu0 0.0
    %1247 = vmatpush1.msra.mxu0 0.0
    %1248 = vmatprep.subr.mxu0 0.0
    %1249 = vmatpush1.msra.mxu0 0.0
    %1250 = vmatprep.subr.mxu0 0.0
    %1251 = vmatpush1.msra.mxu0 0.0
    %1252 = vmatprep.subr.mxu0 0.0
    %1253 = vmatpush1.msra.mxu0 0.0
    %1254 = vmatprep.subr.mxu0 0.0
    %1255 = vmatpush1.msra.mxu0 0.0
    %1256 = vmatprep.subr.mxu0 0.0
    %1257 = vmatpush1.msra.mxu0 0.0
    %1258 = vmatprep.subr.mxu0 0.0
    %1259 = vmatpush1.msra.mxu0 0.0
    %1260 = vmatprep.subr.mxu0 0.0
    %1261 = vmatpush1.msra.mxu0 0.0
    %1262 = vmatprep.subr.mxu0 0.0
    %1263 = vmatpush1.msra.mxu0 0.0
    %1264 = vmatprep.subr.mxu0 0.0
    %1265 = vmatpush1.msra.mxu0 0.0
    %1266 = vmatprep.subr.mxu0 0.0
    %1267 = vmatpush1.msra.mxu0 0.0
    %1268 = vmatprep.subr.mxu0 0.0
    %1269 = vmatpush1.msra.mxu0 0.0
    %1270 = vmatprep.subr.mxu0 0.0
    %1271 = vmatpush1.msra.mxu0 0.0
    %1272 = vmatprep.subr.mxu0 0.0
    %1273 = vmatpush1.msra.mxu0 0.0
    %1274 = vmatprep.subr.mxu0 0.0
    %1275 = vmatpush1.msra.mxu0 0.0
    %1276 = vmatprep.mubr.f32.mxu0 0.0
    %1277 = vmatmul.mubr.f32.gmra.mrb[0].mxu0 %v1139
    %v1278 = vpop.f32.mrb[0].mxu0
    %v1279 = vadd.f32 0.0, %v1278
    %v1280 = vpop.f32.mrb[0].mxu0
    %v1281 = vadd.f32 0.0, %v1280
    %1282 = vdwg.mxu0
    %v1287 = vrot.slane %v1208, 4
    %v1288 = vrot.slane %v1210, 4
    %v1289 = vrot.slane %v1279, 4
    %v1290 = vrot.slane %v1281, 4
    %v1295 = vadd.f32 %v268, %v1287
    %v1296 = vadd.f32 %v270, %v1288
    %v1297 = vadd.f32 %v339, %v1289
    %v1298 = vadd.f32 %v341, %v1290
    %v1299 = vxor.u32 %v1295, 2147483648
    %v1300 = vmul.f32 %v1299, 1.442695
    %v1301 = vpow.pop %v1300
    %v1302 = vadd.f32 %v1301, 1.0
    %v1303 = vrcp.pop %v1302
    %v1304 = vmul.f32 1.0, %v1303
    %v1305 = vxor.u32 %v1296, 2147483648
    %v1306 = vmul.f32 %v1305, 1.442695
    %v1307 = vpow.pop %v1306
    %v1308 = vadd.f32 %v1307, 1.0
    %v1309 = vrcp.pop %v1308
    %v1310 = vmul.f32 1.0, %v1309
    %v1311 = vtanh.pop %v1297
    %v1312 = vxor.u32 %v1298, 2147483648
    %v1313 = vmul.f32 %v1312, 1.442695
    %v1314 = vpow.pop %v1313
    %v1315 = vadd.f32 %v1314, 1.0
    %v1316 = vrcp.pop %v1315
    %v1317 = vmul.f32 1.0, %v1316
    %v1319 = vrot.slane %v1135, 7
    %v1321 = vmul.f32 %v1310, %v1319
    %v1322 = vmul.f32 %v1304, %v1311
    %v1323 = vadd.f32 %v1321, %v1322
    %v1324 = vtanh.pop %v1323
    %v1325 = vmul.f32 %v1317, %v1324
    %v1327 = vrot.slane %v1325, 4
    %1329 = vmatprep.subr.mxu0 %v344
    %1330 = vmatpush1.msra.mxu0 %v343
    %1331 = vmatprep.subr.mxu0 %v348
    %1332 = vmatpush1.msra.mxu0 %v347
    %1333 = vmatprep.subr.mxu0 %v352
    %1334 = vmatpush1.msra.mxu0 %v351
    %1335 = vmatprep.subr.mxu0 %v356
    %1336 = vmatpush1.msra.mxu0 %v355
    %1337 = vmatprep.subr.mxu0 %v360
    %1338 = vmatpush1.msra.mxu0 %v359
    %1339 = vmatprep.subr.mxu0 %v364
    %1340 = vmatpush1.msra.mxu0 %v363
    %1341 = vmatprep.subr.mxu0 %v368
    %1342 = vmatpush1.msra.mxu0 %v367
    %1343 = vmatprep.subr.mxu0 %v372
    %1344 = vmatpush1.msra.mxu0 %v371
    %1345 = vmatprep.subr.mxu0 %v376
    %1346 = vmatpush1.msra.mxu0 %v375
    %1347 = vmatprep.subr.mxu0 %v380
    %1348 = vmatpush1.msra.mxu0 %v379
    %1349 = vmatprep.subr.mxu0 %v384
    %1350 = vmatpush1.msra.mxu0 %v383
    %1351 = vmatprep.subr.mxu0 %v388
    %1352 = vmatpush1.msra.mxu0 %v387
    %1353 = vmatprep.subr.mxu0 %v392
    %1354 = vmatpush1.msra.mxu0 %v391
    %1355 = vmatprep.subr.mxu0 %v396
    %1356 = vmatpush1.msra.mxu0 %v395
    %1357 = vmatprep.subr.mxu0 %v400
    %1358 = vmatpush1.msra.mxu0 %v399
    %1359 = vmatprep.subr.mxu0 %v404
    %1360 = vmatpush1.msra.mxu0 %v403
    %1361 = vmatprep.subr.mxu0 0.0
    %1362 = vmatpush1.msra.mxu0 0.0
    %1363 = vmatprep.subr.mxu0 0.0
    %1364 = vmatpush1.msra.mxu0 0.0
    %1365 = vmatprep.subr.mxu0 0.0
    %1366 = vmatpush1.msra.mxu0 0.0
    %1367 = vmatprep.subr.mxu0 0.0
    %1368 = vmatpush1.msra.mxu0 0.0
    %1369 = vmatprep.subr.mxu0 0.0
    %1370 = vmatpush1.msra.mxu0 0.0
    %1371 = vmatprep.subr.mxu0 0.0
    %1372 = vmatpush1.msra.mxu0 0.0
    %1373 = vmatprep.subr.mxu0 0.0
    %1374 = vmatpush1.msra.mxu0 0.0
    %1375 = vmatprep.subr.mxu0 0.0
    %1376 = vmatpush1.msra.mxu0 0.0
    %1377 = vmatprep.subr.mxu0 0.0
    %1378 = vmatpush1.msra.mxu0 0.0
    %1379 = vmatprep.subr.mxu0 0.0
    %1380 = vmatpush1.msra.mxu0 0.0
    %1381 = vmatprep.subr.mxu0 0.0
    %1382 = vmatpush1.msra.mxu0 0.0
    %1383 = vmatprep.subr.mxu0 0.0
    %1384 = vmatpush1.msra.mxu0 0.0
    %1385 = vmatprep.subr.mxu0 0.0
    %1386 = vmatpush1.msra.mxu0 0.0
    %1387 = vmatprep.subr.mxu0 0.0
    %1388 = vmatpush1.msra.mxu0 0.0
    %1389 = vmatprep.subr.mxu0 0.0
    %1390 = vmatpush1.msra.mxu0 0.0
    %1391 = vmatprep.subr.mxu0 0.0
    %1392 = vmatpush1.msra.mxu0 0.0
    %1393 = vmatprep.mubr.f32.mxu0 0.0
    %1394 = vmatmul.mubr.f32.gmra.mrb[0].mxu0 %v1327
    %v1395 = vpop.f32.mrb[0].mxu0
    %v1396 = vadd.f32 0.0, %v1395
    %v1397 = vpop.f32.mrb[0].mxu0
    %v1398 = vadd.f32 0.0, %v1397
    %1399 = vdwg.mxu0
    %1400 = vmatprep.subr.mxu0 %v346
    %1401 = vmatpush1.msra.mxu0 %v345
    %1402 = vmatprep.subr.mxu0 %v350
    %1403 = vmatpush1.msra.mxu0 %v349
    %1404 = vmatprep.subr.mxu0 %v354
    %1405 = vmatpush1.msra.mxu0 %v353
    %1406 = vmatprep.subr.mxu0 %v358
    %1407 = vmatpush1.msra.mxu0 %v357
    %1408 = vmatprep.subr.mxu0 %v362
    %1409 = vmatpush1.msra.mxu0 %v361
    %1410 = vmatprep.subr.mxu0 %v366
    %1411 = vmatpush1.msra.mxu0 %v365
    %1412 = vmatprep.subr.mxu0 %v370
    %1413 = vmatpush1.msra.mxu0 %v369
    %1414 = vmatprep.subr.mxu0 %v374
    %1415 = vmatpush1.msra.mxu0 %v373
    %1416 = vmatprep.subr.mxu0 %v378
    %1417 = vmatpush1.msra.mxu0 %v377
    %1418 = vmatprep.subr.mxu0 %v382
    %1419 = vmatpush1.msra.mxu0 %v381
    %1420 = vmatprep.subr.mxu0 %v386
    %1421 = vmatpush1.msra.mxu0 %v385
    %1422 = vmatprep.subr.mxu0 %v390
    %1423 = vmatpush1.msra.mxu0 %v389
    %1424 = vmatprep.subr.mxu0 %v394
    %1425 = vmatpush1.msra.mxu0 %v393
    %1426 = vmatprep.subr.mxu0 %v398
    %1427 = vmatpush1.msra.mxu0 %v397
    %1428 = vmatprep.subr.mxu0 %v402
    %1429 = vmatpush1.msra.mxu0 %v401
    %1430 = vmatprep.subr.mxu0 %v406
    %1431 = vmatpush1.msra.mxu0 %v405
    %1432 = vmatprep.subr.mxu0 0.0
    %1433 = vmatpush1.msra.mxu0 0.0
    %1434 = vmatprep.subr.mxu0 0.0
    %1435 = vmatpush1.msra.mxu0 0.0
    %1436 = vmatprep.subr.mxu0 0.0
    %1437 = vmatpush1.msra.mxu0 0.0
    %1438 = vmatprep.subr.mxu0 0.0
    %1439 = vmatpush1.msra.mxu0 0.0
    %1440 = vmatprep.subr.mxu0 0.0
    %1441 = vmatpush1.msra.mxu0 0.0
    %1442 = vmatprep.subr.mxu0 0.0
    %1443 = vmatpush1.msra.mxu0 0.0
    %1444 = vmatprep.subr.mxu0 0.0
    %1445 = vmatpush1.msra.mxu0 0.0
    %1446 = vmatprep.subr.mxu0 0.0
    %1447 = vmatpush1.msra.mxu0 0.0
    %1448 = vmatprep.subr.mxu0 0.0
    %1449 = vmatpush1.msra.mxu0 0.0
    %1450 = vmatprep.subr.mxu0 0.0
    %1451 = vmatpush1.msra.mxu0 0.0
    %1452 = vmatprep.subr.mxu0 0.0
    %1453 = vmatpush1.msra.mxu0 0.0
    %1454 = vmatprep.subr.mxu0 0.0
    %1455 = vmatpush1.msra.mxu0 0.0
    %1456 = vmatprep.subr.mxu0 0.0
    %1457 = vmatpush1.msra.mxu0 0.0
    %1458 = vmatprep.subr.mxu0 0.0
    %1459 = vmatpush1.msra.mxu0 0.0
    %1460 = vmatprep.subr.mxu0 0.0
    %1461 = vmatpush1.msra.mxu0 0.0
    %1462 = vmatprep.subr.mxu0 0.0
    %1463 = vmatpush1.msra.mxu0 0.0
    %1464 = vmatprep.mubr.f32.mxu0 0.0
    %1465 = vmatmul.mubr.f32.gmra.mrb[0].mxu0 %v1327
    %v1466 = vpop.f32.mrb[0].mxu0
    %v1467 = vadd.f32 0.0, %v1466
    %v1468 = vpop.f32.mrb[0].mxu0
    %v1469 = vadd.f32 0.0, %v1468
    %1470 = vdwg.mxu0
    %v1475 = vrot.slane %v1396, 3
    %v1476 = vrot.slane %v1398, 3
    %v1477 = vrot.slane %v1467, 3
    %v1478 = vrot.slane %v1469, 3
    %v1483 = vadd.f32 %v268, %v1475
    %v1484 = vadd.f32 %v270, %v1476
    %v1485 = vadd.f32 %v339, %v1477
    %v1486 = vadd.f32 %v341, %v1478
    %v1487 = vxor.u32 %v1483, 2147483648
    %v1488 = vmul.f32 %v1487, 1.442695
    %v1489 = vpow.pop %v1488
    %v1490 = vadd.f32 %v1489, 1.0
    %v1491 = vrcp.pop %v1490
    %v1492 = vmul.f32 1.0, %v1491
    %v1493 = vxor.u32 %v1484, 2147483648
    %v1494 = vmul.f32 %v1493, 1.442695
    %v1495 = vpow.pop %v1494
    %v1496 = vadd.f32 %v1495, 1.0
    %v1497 = vrcp.pop %v1496
    %v1498 = vmul.f32 1.0, %v1497
    %v1499 = vtanh.pop %v1485
    %v1500 = vxor.u32 %v1486, 2147483648
    %v1501 = vmul.f32 %v1500, 1.442695
    %v1502 = vpow.pop %v1501
    %v1503 = vadd.f32 %v1502, 1.0
    %v1504 = vrcp.pop %v1503
    %v1505 = vmul.f32 1.0, %v1504
    %v1507 = vrot.slane %v1323, 7
    %v1509 = vmul.f32 %v1498, %v1507
    %v1510 = vmul.f32 %v1492, %v1499
    %v1511 = vadd.f32 %v1509, %v1510
    %v1512 = vtanh.pop %v1511
    %v1513 = vmul.f32 %v1505, %v1512
    %v1515 = vrot.slane %v1513, 5
    %1517 = vmatprep.subr.mxu0 %v344
    %1518 = vmatpush1.msra.mxu0 %v343
    %1519 = vmatprep.subr.mxu0 %v348
    %1520 = vmatpush1.msra.mxu0 %v347
    %1521 = vmatprep.subr.mxu0 %v352
    %1522 = vmatpush1.msra.mxu0 %v351
    %1523 = vmatprep.subr.mxu0 %v356
    %1524 = vmatpush1.msra.mxu0 %v355
    %1525 = vmatprep.subr.mxu0 %v360
    %1526 = vmatpush1.msra.mxu0 %v359
    %1527 = vmatprep.subr.mxu0 %v364
    %1528 = vmatpush1.msra.mxu0 %v363
    %1529 = vmatprep.subr.mxu0 %v368
    %1530 = vmatpush1.msra.mxu0 %v367
    %1531 = vmatprep.subr.mxu0 %v372
    %1532 = vmatpush1.msra.mxu0 %v371
    %1533 = vmatprep.subr.mxu0 %v376
    %1534 = vmatpush1.msra.mxu0 %v375
    %1535 = vmatprep.subr.mxu0 %v380
    %1536 = vmatpush1.msra.mxu0 %v379
    %1537 = vmatprep.subr.mxu0 %v384
    %1538 = vmatpush1.msra.mxu0 %v383
    %1539 = vmatprep.subr.mxu0 %v388
    %1540 = vmatpush1.msra.mxu0 %v387
    %1541 = vmatprep.subr.mxu0 %v392
    %1542 = vmatpush1.msra.mxu0 %v391
    %1543 = vmatprep.subr.mxu0 %v396
    %1544 = vmatpush1.msra.mxu0 %v395
    %1545 = vmatprep.subr.mxu0 %v400
    %1546 = vmatpush1.msra.mxu0 %v399
    %1547 = vmatprep.subr.mxu0 %v404
    %1548 = vmatpush1.msra.mxu0 %v403
    %1549 = vmatprep.subr.mxu0 0.0
    %1550 = vmatpush1.msra.mxu0 0.0
    %1551 = vmatprep.subr.mxu0 0.0
    %1552 = vmatpush1.msra.mxu0 0.0
    %1553 = vmatprep.subr.mxu0 0.0
    %1554 = vmatpush1.msra.mxu0 0.0
    %1555 = vmatprep.subr.mxu0 0.0
    %1556 = vmatpush1.msra.mxu0 0.0
    %1557 = vmatprep.subr.mxu0 0.0
    %1558 = vmatpush1.msra.mxu0 0.0
    %1559 = vmatprep.subr.mxu0 0.0
    %1560 = vmatpush1.msra.mxu0 0.0
    %1561 = vmatprep.subr.mxu0 0.0
    %1562 = vmatpush1.msra.mxu0 0.0
    %1563 = vmatprep.subr.mxu0 0.0
    %1564 = vmatpush1.msra.mxu0 0.0
    %1565 = vmatprep.subr.mxu0 0.0
    %1566 = vmatpush1.msra.mxu0 0.0
    %1567 = vmatprep.subr.mxu0 0.0
    %1568 = vmatpush1.msra.mxu0 0.0
    %1569 = vmatprep.subr.mxu0 0.0
    %1570 = vmatpush1.msra.mxu0 0.0
    %1571 = vmatprep.subr.mxu0 0.0
    %1572 = vmatpush1.msra.mxu0 0.0
    %1573 = vmatprep.subr.mxu0 0.0
    %1574 = vmatpush1.msra.mxu0 0.0
    %1575 = vmatprep.subr.mxu0 0.0
    %1576 = vmatpush1.msra.mxu0 0.0
    %1577 = vmatprep.subr.mxu0 0.0
    %1578 = vmatpush1.msra.mxu0 0.0
    %1579 = vmatprep.subr.mxu0 0.0
    %1580 = vmatpush1.msra.mxu0 0.0
    %1581 = vmatprep.mubr.f32.mxu0 0.0
    %1582 = vmatmul.mubr.f32.gmra.mrb[0].mxu0 %v1515
    %v1583 = vpop.f32.mrb[0].mxu0
    %v1584 = vadd.f32 0.0, %v1583
    %v1585 = vpop.f32.mrb[0].mxu0
    %v1586 = vadd.f32 0.0, %v1585
    %1587 = vdwg.mxu0
    %1588 = vmatprep.subr.mxu0 %v346
    %1589 = vmatpush1.msra.mxu0 %v345
    %1590 = vmatprep.subr.mxu0 %v350
    %1591 = vmatpush1.msra.mxu0 %v349
    %1592 = vmatprep.subr.mxu0 %v354
    %1593 = vmatpush1.msra.mxu0 %v353
    %1594 = vmatprep.subr.mxu0 %v358
    %1595 = vmatpush1.msra.mxu0 %v357
    %1596 = vmatprep.subr.mxu0 %v362
    %1597 = vmatpush1.msra.mxu0 %v361
    %1598 = vmatprep.subr.mxu0 %v366
    %1599 = vmatpush1.msra.mxu0 %v365
    %1600 = vmatprep.subr.mxu0 %v370
    %1601 = vmatpush1.msra.mxu0 %v369
    %1602 = vmatprep.subr.mxu0 %v374
    %1603 = vmatpush1.msra.mxu0 %v373
    %1604 = vmatprep.subr.mxu0 %v378
    %1605 = vmatpush1.msra.mxu0 %v377
    %1606 = vmatprep.subr.mxu0 %v382
    %1607 = vmatpush1.msra.mxu0 %v381
    %1608 = vmatprep.subr.mxu0 %v386
    %1609 = vmatpush1.msra.mxu0 %v385
    %1610 = vmatprep.subr.mxu0 %v390
    %1611 = vmatpush1.msra.mxu0 %v389
    %1612 = vmatprep.subr.mxu0 %v394
    %1613 = vmatpush1.msra.mxu0 %v393
    %1614 = vmatprep.subr.mxu0 %v398
    %1615 = vmatpush1.msra.mxu0 %v397
    %1616 = vmatprep.subr.mxu0 %v402
    %1617 = vmatpush1.msra.mxu0 %v401
    %1618 = vmatprep.subr.mxu0 %v406
    %1619 = vmatpush1.msra.mxu0 %v405
    %1620 = vmatprep.subr.mxu0 0.0
    %1621 = vmatpush1.msra.mxu0 0.0
    %1622 = vmatprep.subr.mxu0 0.0
    %1623 = vmatpush1.msra.mxu0 0.0
    %1624 = vmatprep.subr.mxu0 0.0
    %1625 = vmatpush1.msra.mxu0 0.0
    %1626 = vmatprep.subr.mxu0 0.0
    %1627 = vmatpush1.msra.mxu0 0.0
    %1628 = vmatprep.subr.mxu0 0.0
    %1629 = vmatpush1.msra.mxu0 0.0
    %1630 = vmatprep.subr.mxu0 0.0
    %1631 = vmatpush1.msra.mxu0 0.0
    %1632 = vmatprep.subr.mxu0 0.0
    %1633 = vmatpush1.msra.mxu0 0.0
    %1634 = vmatprep.subr.mxu0 0.0
    %1635 = vmatpush1.msra.mxu0 0.0
    %1636 = vmatprep.subr.mxu0 0.0
    %1637 = vmatpush1.msra.mxu0 0.0
    %1638 = vmatprep.subr.mxu0 0.0
    %1639 = vmatpush1.msra.mxu0 0.0
    %1640 = vmatprep.subr.mxu0 0.0
    %1641 = vmatpush1.msra.mxu0 0.0
    %1642 = vmatprep.subr.mxu0 0.0
    %1643 = vmatpush1.msra.mxu0 0.0
    %1644 = vmatprep.subr.mxu0 0.0
    %1645 = vmatpush1.msra.mxu0 0.0
    %1646 = vmatprep.subr.mxu0 0.0
    %1647 = vmatpush1.msra.mxu0 0.0
    %1648 = vmatprep.subr.mxu0 0.0
    %1649 = vmatpush1.msra.mxu0 0.0
    %1650 = vmatprep.subr.mxu0 0.0
    %1651 = vmatpush1.msra.mxu0 0.0
    %1652 = vmatprep.mubr.f32.mxu0 0.0
    %1653 = vmatmul.mubr.f32.gmra.mrb[0].mxu0 %v1515
    %v1654 = vpop.f32.mrb[0].mxu0
    %v1655 = vadd.f32 0.0, %v1654
    %v1656 = vpop.f32.mrb[0].mxu0
    %v1657 = vadd.f32 0.0, %v1656
    %1658 = vdwg.mxu0
    %v1663 = vrot.slane %v1584, 2
    %v1664 = vrot.slane %v1586, 2
    %v1665 = vrot.slane %v1655, 2
    %v1666 = vrot.slane %v1657, 2
    %v1671 = vadd.f32 %v268, %v1663
    %v1672 = vadd.f32 %v270, %v1664
    %v1673 = vadd.f32 %v339, %v1665
    %v1674 = vadd.f32 %v341, %v1666
    %v1675 = vxor.u32 %v1671, 2147483648
    %v1676 = vmul.f32 %v1675, 1.442695
    %v1677 = vpow.pop %v1676
    %v1678 = vadd.f32 %v1677, 1.0
    %v1679 = vrcp.pop %v1678
    %v1680 = vmul.f32 1.0, %v1679
    %v1681 = vxor.u32 %v1672, 2147483648
    %v1682 = vmul.f32 %v1681, 1.442695
    %v1683 = vpow.pop %v1682
    %v1684 = vadd.f32 %v1683, 1.0
    %v1685 = vrcp.pop %v1684
    %v1686 = vmul.f32 1.0, %v1685
    %v1687 = vtanh.pop %v1673
    %v1688 = vxor.u32 %v1674, 2147483648
    %v1689 = vmul.f32 %v1688, 1.442695
    %v1690 = vpow.pop %v1689
    %v1691 = vadd.f32 %v1690, 1.0
    %v1692 = vrcp.pop %v1691
    %v1693 = vmul.f32 1.0, %v1692
    %v1695 = vrot.slane %v1511, 7
    %v1697 = vmul.f32 %v1686, %v1695
    %v1698 = vmul.f32 %v1680, %v1687
    %v1699 = vadd.f32 %v1697, %v1698
    %v1700 = vtanh.pop %v1699
    %v1701 = vmul.f32 %v1693, %v1700
    %v1703 = vrot.slane %v1701, 6
    %1705 = vmatprep.subr.mxu0 %v344
    %1706 = vmatpush1.msra.mxu0 %v343
    %1707 = vmatprep.subr.mxu0 %v348
    %1708 = vmatpush1.msra.mxu0 %v347
    %1709 = vmatprep.subr.mxu0 %v352
    %1710 = vmatpush1.msra.mxu0 %v351
    %1711 = vmatprep.subr.mxu0 %v356
    %1712 = vmatpush1.msra.mxu0 %v355
    %1713 = vmatprep.subr.mxu0 %v360
    %1714 = vmatpush1.msra.mxu0 %v359
    %1715 = vmatprep.subr.mxu0 %v364
    %1716 = vmatpush1.msra.mxu0 %v363
    %1717 = vmatprep.subr.mxu0 %v368
    %1718 = vmatpush1.msra.mxu0 %v367
    %1719 = vmatprep.subr.mxu0 %v372
    %1720 = vmatpush1.msra.mxu0 %v371
    %1721 = vmatprep.subr.mxu0 %v376
    %1722 = vmatpush1.msra.mxu0 %v375
    %1723 = vmatprep.subr.mxu0 %v380
    %1724 = vmatpush1.msra.mxu0 %v379
    %1725 = vmatprep.subr.mxu0 %v384
    %1726 = vmatpush1.msra.mxu0 %v383
    %1727 = vmatprep.subr.mxu0 %v388
    %1728 = vmatpush1.msra.mxu0 %v387
    %1729 = vmatprep.subr.mxu0 %v392
    %1730 = vmatpush1.msra.mxu0 %v391
    %1731 = vmatprep.subr.mxu0 %v396
    %1732 = vmatpush1.msra.mxu0 %v395
    %1733 = vmatprep.subr.mxu0 %v400
    %1734 = vmatpush1.msra.mxu0 %v399
    %1735 = vmatprep.subr.mxu0 %v404
    %1736 = vmatpush1.msra.mxu0 %v403
    %1737 = vmatprep.subr.mxu0 0.0
    %1738 = vmatpush1.msra.mxu0 0.0
    %1739 = vmatprep.subr.mxu0 0.0
    %1740 = vmatpush1.msra.mxu0 0.0
    %1741 = vmatprep.subr.mxu0 0.0
    %1742 = vmatpush1.msra.mxu0 0.0
    %1743 = vmatprep.subr.mxu0 0.0
    %1744 = vmatpush1.msra.mxu0 0.0
    %1745 = vmatprep.subr.mxu0 0.0
    %1746 = vmatpush1.msra.mxu0 0.0
    %1747 = vmatprep.subr.mxu0 0.0
    %1748 = vmatpush1.msra.mxu0 0.0
    %1749 = vmatprep.subr.mxu0 0.0
    %1750 = vmatpush1.msra.mxu0 0.0
    %1751 = vmatprep.subr.mxu0 0.0
    %1752 = vmatpush1.msra.mxu0 0.0
    %1753 = vmatprep.subr.mxu0 0.0
    %1754 = vmatpush1.msra.mxu0 0.0
    %1755 = vmatprep.subr.mxu0 0.0
    %1756 = vmatpush1.msra.mxu0 0.0
    %1757 = vmatprep.subr.mxu0 0.0
    %1758 = vmatpush1.msra.mxu0 0.0
    %1759 = vmatprep.subr.mxu0 0.0
    %1760 = vmatpush1.msra.mxu0 0.0
    %1761 = vmatprep.subr.mxu0 0.0
    %1762 = vmatpush1.msra.mxu0 0.0
    %1763 = vmatprep.subr.mxu0 0.0
    %1764 = vmatpush1.msra.mxu0 0.0
    %1765 = vmatprep.subr.mxu0 0.0
    %1766 = vmatpush1.msra.mxu0 0.0
    %1767 = vmatprep.subr.mxu0 0.0
    %1768 = vmatpush1.msra.mxu0 0.0
    %1769 = vmatprep.mubr.f32.mxu0 0.0
    %1770 = vmatmul.mubr.f32.gmra.mrb[0].mxu0 %v1703
    %v1771 = vpop.f32.mrb[0].mxu0
    %v1772 = vadd.f32 0.0, %v1771
    %v1773 = vpop.f32.mrb[0].mxu0
    %v1774 = vadd.f32 0.0, %v1773
    %1775 = vdwg.mxu0
    %1776 = vmatprep.subr.mxu0 %v346
    %1777 = vmatpush1.msra.mxu0 %v345
    %1778 = vmatprep.subr.mxu0 %v350
    %1779 = vmatpush1.msra.mxu0 %v349
    %1780 = vmatprep.subr.mxu0 %v354
    %1781 = vmatpush1.msra.mxu0 %v353
    %1782 = vmatprep.subr.mxu0 %v358
    %1783 = vmatpush1.msra.mxu0 %v357
    %1784 = vmatprep.subr.mxu0 %v362
    %1785 = vmatpush1.msra.mxu0 %v361
    %1786 = vmatprep.subr.mxu0 %v366
    %1787 = vmatpush1.msra.mxu0 %v365
    %1788 = vmatprep.subr.mxu0 %v370
    %1789 = vmatpush1.msra.mxu0 %v369
    %1790 = vmatprep.subr.mxu0 %v374
    %1791 = vmatpush1.msra.mxu0 %v373
    %1792 = vmatprep.subr.mxu0 %v378
    %1793 = vmatpush1.msra.mxu0 %v377
    %1794 = vmatprep.subr.mxu0 %v382
    %1795 = vmatpush1.msra.mxu0 %v381
    %1796 = vmatprep.subr.mxu0 %v386
    %1797 = vmatpush1.msra.mxu0 %v385
    %1798 = vmatprep.subr.mxu0 %v390
    %1799 = vmatpush1.msra.mxu0 %v389
    %1800 = vmatprep.subr.mxu0 %v394
    %1801 = vmatpush1.msra.mxu0 %v393
    %1802 = vmatprep.subr.mxu0 %v398
    %1803 = vmatpush1.msra.mxu0 %v397
    %1804 = vmatprep.subr.mxu0 %v402
    %1805 = vmatpush1.msra.mxu0 %v401
    %1806 = vmatprep.subr.mxu0 %v406
    %1807 = vmatpush1.msra.mxu0 %v405
    %1808 = vmatprep.subr.mxu0 0.0
    %1809 = vmatpush1.msra.mxu0 0.0
    %1810 = vmatprep.subr.mxu0 0.0
    %1811 = vmatpush1.msra.mxu0 0.0
    %1812 = vmatprep.subr.mxu0 0.0
    %1813 = vmatpush1.msra.mxu0 0.0
    %1814 = vmatprep.subr.mxu0 0.0
    %1815 = vmatpush1.msra.mxu0 0.0
    %1816 = vmatprep.subr.mxu0 0.0
    %1817 = vmatpush1.msra.mxu0 0.0
    %1818 = vmatprep.subr.mxu0 0.0
    %1819 = vmatpush1.msra.mxu0 0.0
    %1820 = vmatprep.subr.mxu0 0.0
    %1821 = vmatpush1.msra.mxu0 0.0
    %1822 = vmatprep.subr.mxu0 0.0
    %1823 = vmatpush1.msra.mxu0 0.0
    %1824 = vmatprep.subr.mxu0 0.0
    %1825 = vmatpush1.msra.mxu0 0.0
    %1826 = vmatprep.subr.mxu0 0.0
    %1827 = vmatpush1.msra.mxu0 0.0
    %1828 = vmatprep.subr.mxu0 0.0
    %1829 = vmatpush1.msra.mxu0 0.0
    %1830 = vmatprep.subr.mxu0 0.0
    %1831 = vmatpush1.msra.mxu0 0.0
    %1832 = vmatprep.subr.mxu0 0.0
    %1833 = vmatpush1.msra.mxu0 0.0
    %1834 = vmatprep.subr.mxu0 0.0
    %1835 = vmatpush1.msra.mxu0 0.0
    %1836 = vmatprep.subr.mxu0 0.0
    %1837 = vmatpush1.msra.mxu0 0.0
    %1838 = vmatprep.subr.mxu0 0.0
    %1839 = vmatpush1.msra.mxu0 0.0
    %1840 = vmatprep.mubr.f32.mxu0 0.0
    %1841 = vmatmul.mubr.f32.gmra.mrb[0].mxu0 %v1703
    %v1842 = vpop.f32.mrb[0].mxu0
    %v1843 = vadd.f32 0.0, %v1842
    %v1844 = vpop.f32.mrb[0].mxu0
    %v1845 = vadd.f32 0.0, %v1844
    %1846 = vdwg.mxu0
    %v1851 = vrot.slane %v1772, 1
    %v1852 = vrot.slane %v1774, 1
    %v1853 = vrot.slane %v1843, 1
    %v1854 = vrot.slane %v1845, 1
    %v1859 = vadd.f32 %v268, %v1851
    %v1860 = vadd.f32 %v270, %v1852
    %v1861 = vadd.f32 %v339, %v1853
    %v1862 = vadd.f32 %v341, %v1854
    %v1863 = vxor.u32 %v1859, 2147483648
    %v1864 = vmul.f32 %v1863, 1.442695
    %v1865 = vpow.pop %v1864
    %v1866 = vadd.f32 %v1865, 1.0
    %v1867 = vrcp.pop %v1866
    %v1868 = vmul.f32 1.0, %v1867
    %v1869 = vxor.u32 %v1860, 2147483648
    %v1870 = vmul.f32 %v1869, 1.442695
    %v1871 = vpow.pop %v1870
    %v1872 = vadd.f32 %v1871, 1.0
    %v1873 = vrcp.pop %v1872
    %v1874 = vmul.f32 1.0, %v1873
    %v1875 = vtanh.pop %v1861
    %v1876 = vxor.u32 %v1862, 2147483648
    %v1877 = vmul.f32 %v1876, 1.442695
    %v1878 = vpow.pop %v1877
    %v1879 = vadd.f32 %v1878, 1.0
    %v1880 = vrcp.pop %v1879
    %v1881 = vmul.f32 1.0, %v1880
    %v1883 = vrot.slane %v1699, 7
    %v1885 = vmul.f32 %v1874, %v1883
    %v1886 = vmul.f32 %v1868, %v1875
    %v1887 = vadd.f32 %v1885, %v1886
    %v1888 = vtanh.pop %v1887
    %v1889 = vmul.f32 %v1881, %v1888
    %v1890 = vsel %vm192, %v576, %v761
    %vm1891 = vcmask 1041408
    %v1892 = vsel %vm1891, %v1890, %v949
    %vm1893 = vcmask 1042432
    %v1894 = vsel %vm1893, %v1892, %v1137
    %vm1895 = vcmask 1043456
    %v1896 = vsel %vm1895, %v1894, %v1325
    %vm1897 = vcmask 1044480
    %v1898 = vsel %vm1897, %v1896, %v1513
    %vm1899 = vcmask 1045504
    %v1900 = vsel %vm1899, %v1898, %v1701
    %vm1901 = vcmask 1046528
    %v1902 = vsel %vm1901, %v1900, %v1889
    %v1903 = vld [vmem:[#allocation5] sm:$0xff]
    %v1904 = vld [vmem:[#allocation5 + $0x8] sm:$0xff]
    %v1905 = vld [vmem:[#allocation5 + $0x10] sm:$0xff]
    %v1906 = vld [vmem:[#allocation5 + $0x18] sm:$0xff]
    %v1907 = vld [vmem:[#allocation5 + $0x20] sm:$0xff]
    %v1908 = vld [vmem:[#allocation5 + $0x28] sm:$0xff]
    %v1909 = vld [vmem:[#allocation5 + $0x30] sm:$0xff]
    %v1910 = vld [vmem:[#allocation5 + $0x38] sm:$0xff]
    %v1911 = vld [vmem:[#allocation5 + $0x40] sm:$0xff]
    %v1912 = vld [vmem:[#allocation5 + $0x48] sm:$0xff]
    %v1913 = vld [vmem:[#allocation5 + $0x50] sm:$0xff]
    %v1914 = vld [vmem:[#allocation5 + $0x58] sm:$0xff]
    %v1915 = vld [vmem:[#allocation5 + $0x60] sm:$0xff]
    %v1916 = vld [vmem:[#allocation5 + $0x68] sm:$0xff]
    %v1917 = vld [vmem:[#allocation5 + $0x70] sm:$0xff]
    %v1918 = vld [vmem:[#allocation5 + $0x78] sm:$0xff]
    %v1919 = vld [vmem:[#allocation5 + $0x80] sm:$0xff]
    %v1920 = vld [vmem:[#allocation5 + $0x88] sm:$0xff]
    %v1921 = vld [vmem:[#allocation5 + $0x90] sm:$0xff]
    %v1922 = vld [vmem:[#allocation5 + $0x98] sm:$0xff]
    %v1923 = vld [vmem:[#allocation5 + $0xa0] sm:$0xff]
    %v1924 = vld [vmem:[#allocation5 + $0xa8] sm:$0xff]
    %v1925 = vld [vmem:[#allocation5 + $0xb0] sm:$0xff]
    %v1926 = vld [vmem:[#allocation5 + $0xb8] sm:$0xff]
    %v1927 = vld [vmem:[#allocation5 + $0xc0] sm:$0xff]
    %v1928 = vld [vmem:[#allocation5 + $0xc8] sm:$0xff]
    %v1929 = vld [vmem:[#allocation5 + $0xd0] sm:$0xff]
    %v1930 = vld [vmem:[#allocation5 + $0xd8] sm:$0xff]
    %v1931 = vld [vmem:[#allocation5 + $0xe0] sm:$0xff]
    %v1932 = vld [vmem:[#allocation5 + $0xe8] sm:$0xff]
    %v1933 = vld [vmem:[#allocation5 + $0xf0] sm:$0xff]
    %v1934 = vld [vmem:[#allocation5 + $0xf8] sm:$0xff]
    %v1935 = vld [vmem:[#allocation5 + $0x100] sm:$0xff]
    %v1936 = vld [vmem:[#allocation5 + $0x108] sm:$0xff]
    %v1937 = vld [vmem:[#allocation5 + $0x110] sm:$0xff]
    %v1938 = vld [vmem:[#allocation5 + $0x118] sm:$0xff]
    %v1939 = vld [vmem:[#allocation5 + $0x120] sm:$0xff]
    %v1940 = vld [vmem:[#allocation5 + $0x128] sm:$0xff]
    %v1941 = vld [vmem:[#allocation5 + $0x130] sm:$0xff]
    %v1942 = vld [vmem:[#allocation5 + $0x138] sm:$0xff]
    %v1943 = vld [vmem:[#allocation5 + $0x140] sm:$0xff]
    %v1944 = vld [vmem:[#allocation5 + $0x148] sm:$0xff]
    %v1945 = vld [vmem:[#allocation5 + $0x150] sm:$0xff]
    %v1946 = vld [vmem:[#allocation5 + $0x158] sm:$0xff]
    %v1947 = vld [vmem:[#allocation5 + $0x160] sm:$0xff]
    %v1948 = vld [vmem:[#allocation5 + $0x168] sm:$0xff]
    %v1949 = vld [vmem:[#allocation5 + $0x170] sm:$0xff]
    %v1950 = vld [vmem:[#allocation5 + $0x178] sm:$0xff]
    %v1951 = vld [vmem:[#allocation5 + $0x180] sm:$0xff]
    %v1952 = vld [vmem:[#allocation5 + $0x188] sm:$0xff]
    %v1953 = vld [vmem:[#allocation5 + $0x190] sm:$0xff]
    %v1954 = vld [vmem:[#allocation5 + $0x198] sm:$0xff]
    %v1955 = vld [vmem:[#allocation5 + $0x1a0] sm:$0xff]
    %v1956 = vld [vmem:[#allocation5 + $0x1a8] sm:$0xff]
    %v1957 = vld [vmem:[#allocation5 + $0x1b0] sm:$0xff]
    %v1958 = vld [vmem:[#allocation5 + $0x1b8] sm:$0xff]
    %v1959 = vld [vmem:[#allocation5 + $0x1c0] sm:$0xff]
    %v1960 = vld [vmem:[#allocation5 + $0x1c8] sm:$0xff]
    %v1961 = vld [vmem:[#allocation5 + $0x1d0] sm:$0xff]
    %v1962 = vld [vmem:[#allocation5 + $0x1d8] sm:$0xff]
    %v1963 = vld [vmem:[#allocation5 + $0x1e0] sm:$0xff]
    %v1964 = vld [vmem:[#allocation5 + $0x1e8] sm:$0xff]
    %v1965 = vld [vmem:[#allocation5 + $0x1f0] sm:$0xff]
    %v1966 = vld [vmem:[#allocation5 + $0x1f8] sm:$0xff]
    %v1967 = vld [vmem:[%s6] sm:$0xf]
    %v1969 = vlaneseq
    %v1970 = vshrl.u32 %v1969, 7
    %v1971 = vsub.s32 0, %v1970
    %v1972 = vrot.slane %v1967, %v1971
    %v1973 = vlaneseq
    %v1974 = vshrl.u32 %v1973, 7
    %v1975 = vsub.s32 1, %v1974
    %v1976 = vrot.slane %v1967, %v1975
    %v1977 = vlaneseq
    %v1978 = vshrl.u32 %v1977, 7
    %v1979 = vsub.s32 2, %v1978
    %v1980 = vrot.slane %v1967, %v1979
    %v1981 = vlaneseq
    %v1982 = vshrl.u32 %v1981, 7
    %v1983 = vsub.s32 3, %v1982
    %v1984 = vrot.slane %v1967, %v1983
    %1989 = vmatprep.subr.mxu0 %v1904
    %1990 = vmatpush1.msra.mxu0 %v1903
    %1991 = vmatprep.subr.mxu0 %v1908
    %1992 = vmatpush1.msra.mxu0 %v1907
    %1993 = vmatprep.subr.mxu0 %v1912
    %1994 = vmatpush1.msra.mxu0 %v1911
    %1995 = vmatprep.subr.mxu0 %v1916
    %1996 = vmatpush1.msra.mxu0 %v1915
    %1997 = vmatprep.subr.mxu0 %v1920
    %1998 = vmatpush1.msra.mxu0 %v1919
    %1999 = vmatprep.subr.mxu0 %v1924
    %2000 = vmatpush1.msra.mxu0 %v1923
    %2001 = vmatprep.subr.mxu0 %v1928
    %2002 = vmatpush1.msra.mxu0 %v1927
    %2003 = vmatprep.subr.mxu0 %v1932
    %2004 = vmatpush1.msra.mxu0 %v1931
    %2005 = vmatprep.subr.mxu0 %v1936
    %2006 = vmatpush1.msra.mxu0 %v1935
    %2007 = vmatprep.subr.mxu0 %v1940
    %2008 = vmatpush1.msra.mxu0 %v1939
    %2009 = vmatprep.subr.mxu0 %v1944
    %2010 = vmatpush1.msra.mxu0 %v1943
    %2011 = vmatprep.subr.mxu0 %v1948
    %2012 = vmatpush1.msra.mxu0 %v1947
    %2013 = vmatprep.subr.mxu0 %v1952
    %2014 = vmatpush1.msra.mxu0 %v1951
    %2015 = vmatprep.subr.mxu0 %v1956
    %2016 = vmatpush1.msra.mxu0 %v1955
    %2017 = vmatprep.subr.mxu0 %v1960
    %2018 = vmatpush1.msra.mxu0 %v1959
    %2019 = vmatprep.subr.mxu0 %v1964
    %2020 = vmatpush1.msra.mxu0 %v1963
    %2021 = vmatprep.subr.mxu0 0.0
    %2022 = vmatpush1.msra.mxu0 0.0
    %2023 = vmatprep.subr.mxu0 0.0
    %2024 = vmatpush1.msra.mxu0 0.0
    %2025 = vmatprep.subr.mxu0 0.0
    %2026 = vmatpush1.msra.mxu0 0.0
    %2027 = vmatprep.subr.mxu0 0.0
    %2028 = vmatpush1.msra.mxu0 0.0
    %2029 = vmatprep.subr.mxu0 0.0
    %2030 = vmatpush1.msra.mxu0 0.0
    %2031 = vmatprep.subr.mxu0 0.0
    %2032 = vmatpush1.msra.mxu0 0.0
    %2033 = vmatprep.subr.mxu0 0.0
    %2034 = vmatpush1.msra.mxu0 0.0
    %2035 = vmatprep.subr.mxu0 0.0
    %2036 = vmatpush1.msra.mxu0 0.0
    %2037 = vmatprep.subr.mxu0 0.0
    %2038 = vmatpush1.msra.mxu0 0.0
    %2039 = vmatprep.subr.mxu0 0.0
    %2040 = vmatpush1.msra.mxu0 0.0
    %2041 = vmatprep.subr.mxu0 0.0
    %2042 = vmatpush1.msra.mxu0 0.0
    %2043 = vmatprep.subr.mxu0 0.0
    %2044 = vmatpush1.msra.mxu0 0.0
    %2045 = vmatprep.subr.mxu0 0.0
    %2046 = vmatpush1.msra.mxu0 0.0
    %2047 = vmatprep.subr.mxu0 0.0
    %2048 = vmatpush1.msra.mxu0 0.0
    %2049 = vmatprep.subr.mxu0 0.0
    %2050 = vmatpush1.msra.mxu0 0.0
    %2051 = vmatprep.subr.mxu0 0.0
    %2052 = vmatpush1.msra.mxu0 0.0
    %2053 = vmatprep.mubr.f32.mxu0 0.0
    %2054 = vmatmul.mubr.f32.gmra.mrb[0].mxu0 %v1902
    %v2055 = vpop.f32.mrb[0].mxu0
    %v2056 = vadd.f32 %v1972, %v2055
    %v2057 = vpop.f32.mrb[0].mxu0
    %v2058 = vadd.f32 %v1976, %v2057
    %2059 = vdwg.mxu0
    %2060 = vmatprep.subr.mxu0 %v1906
    %2061 = vmatpush1.msra.mxu0 %v1905
    %2062 = vmatprep.subr.mxu0 %v1910
    %2063 = vmatpush1.msra.mxu0 %v1909
    %2064 = vmatprep.subr.mxu0 %v1914
    %2065 = vmatpush1.msra.mxu0 %v1913
    %2066 = vmatprep.subr.mxu0 %v1918
    %2067 = vmatpush1.msra.mxu0 %v1917
    %2068 = vmatprep.subr.mxu0 %v1922
    %2069 = vmatpush1.msra.mxu0 %v1921
    %2070 = vmatprep.subr.mxu0 %v1926
    %2071 = vmatpush1.msra.mxu0 %v1925
    %2072 = vmatprep.subr.mxu0 %v1930
    %2073 = vmatpush1.msra.mxu0 %v1929
    %2074 = vmatprep.subr.mxu0 %v1934
    %2075 = vmatpush1.msra.mxu0 %v1933
    %2076 = vmatprep.subr.mxu0 %v1938
    %2077 = vmatpush1.msra.mxu0 %v1937
    %2078 = vmatprep.subr.mxu0 %v1942
    %2079 = vmatpush1.msra.mxu0 %v1941
    %2080 = vmatprep.subr.mxu0 %v1946
    %2081 = vmatpush1.msra.mxu0 %v1945
    %2082 = vmatprep.subr.mxu0 %v1950
    %2083 = vmatpush1.msra.mxu0 %v1949
    %2084 = vmatprep.subr.mxu0 %v1954
    %2085 = vmatpush1.msra.mxu0 %v1953
    %2086 = vmatprep.subr.mxu0 %v1958
    %2087 = vmatpush1.msra.mxu0 %v1957
    %2088 = vmatprep.subr.mxu0 %v1962
    %2089 = vmatpush1.msra.mxu0 %v1961
    %2090 = vmatprep.subr.mxu0 %v1966
    %2091 = vmatpush1.msra.mxu0 %v1965
    %2092 = vmatprep.subr.mxu0 0.0
    %2093 = vmatpush1.msra.mxu0 0.0
    %2094 = vmatprep.subr.mxu0 0.0
    %2095 = vmatpush1.msra.mxu0 0.0
    %2096 = vmatprep.subr.mxu0 0.0
    %2097 = vmatpush1.msra.mxu0 0.0
    %2098 = vmatprep.subr.mxu0 0.0
    %2099 = vmatpush1.msra.mxu0 0.0
    %2100 = vmatprep.subr.mxu0 0.0
    %2101 = vmatpush1.msra.mxu0 0.0
    %2102 = vmatprep.subr.mxu0 0.0
    %2103 = vmatpush1.msra.mxu0 0.0
    %2104 = vmatprep.subr.mxu0 0.0
    %2105 = vmatpush1.msra.mxu0 0.0
    %2106 = vmatprep.subr.mxu0 0.0
    %2107 = vmatpush1.msra.mxu0 0.0
    %2108 = vmatprep.subr.mxu0 0.0
    %2109 = vmatpush1.msra.mxu0 0.0
    %2110 = vmatprep.subr.mxu0 0.0
    %2111 = vmatpush1.msra.mxu0 0.0
    %2112 = vmatprep.subr.mxu0 0.0
    %2113 = vmatpush1.msra.mxu0 0.0
    %2114 = vmatprep.subr.mxu0 0.0
    %2115 = vmatpush1.msra.mxu0 0.0
    %2116 = vmatprep.subr.mxu0 0.0
    %2117 = vmatpush1.msra.mxu0 0.0
    %2118 = vmatprep.subr.mxu0 0.0
    %2119 = vmatpush1.msra.mxu0 0.0
    %2120 = vmatprep.subr.mxu0 0.0
    %2121 = vmatpush1.msra.mxu0 0.0
    %2122 = vmatprep.subr.mxu0 0.0
    %2123 = vmatpush1.msra.mxu0 0.0
    %2124 = vmatprep.mubr.f32.mxu0 0.0
    %2125 = vmatmul.mubr.f32.gmra.mrb[0].mxu0 %v1902
    %v2126 = vpop.f32.mrb[0].mxu0
    %v2127 = vadd.f32 %v1980, %v2126
    %v2128 = vpop.f32.mrb[0].mxu0
    %v2129 = vadd.f32 %v1984, %v2128
    %2130 = vdwg.mxu0
    %v2131 = vld [vmem:[#allocation7] sm:$0xff]
    %v2132 = vld [vmem:[#allocation7 + $0x8] sm:$0xff]
    %v2133 = vld [vmem:[#allocation7 + $0x10] sm:$0xff]
    %v2134 = vld [vmem:[#allocation7 + $0x18] sm:$0xff]
    %v2135 = vld [vmem:[#allocation7 + $0x20] sm:$0xff]
    %v2136 = vld [vmem:[#allocation7 + $0x28] sm:$0xff]
    %v2137 = vld [vmem:[#allocation7 + $0x30] sm:$0xff]
    %v2138 = vld [vmem:[#allocation7 + $0x38] sm:$0xff]
    %v2139 = vld [vmem:[#allocation7 + $0x40] sm:$0xff]
    %v2140 = vld [vmem:[#allocation7 + $0x48] sm:$0xff]
    %v2141 = vld [vmem:[#allocation7 + $0x50] sm:$0xff]
    %v2142 = vld [vmem:[#allocation7 + $0x58] sm:$0xff]
    %v2143 = vld [vmem:[#allocation7 + $0x60] sm:$0xff]
    %v2144 = vld [vmem:[#allocation7 + $0x68] sm:$0xff]
    %v2145 = vld [vmem:[#allocation7 + $0x70] sm:$0xff]
    %v2146 = vld [vmem:[#allocation7 + $0x78] sm:$0xff]
    %v2147 = vld [vmem:[#allocation7 + $0x80] sm:$0xff]
    %v2148 = vld [vmem:[#allocation7 + $0x88] sm:$0xff]
    %v2149 = vld [vmem:[#allocation7 + $0x90] sm:$0xff]
    %v2150 = vld [vmem:[#allocation7 + $0x98] sm:$0xff]
    %v2151 = vld [vmem:[#allocation7 + $0xa0] sm:$0xff]
    %v2152 = vld [vmem:[#allocation7 + $0xa8] sm:$0xff]
    %v2153 = vld [vmem:[#allocation7 + $0xb0] sm:$0xff]
    %v2154 = vld [vmem:[#allocation7 + $0xb8] sm:$0xff]
    %v2155 = vld [vmem:[#allocation7 + $0xc0] sm:$0xff]
    %v2156 = vld [vmem:[#allocation7 + $0xc8] sm:$0xff]
    %v2157 = vld [vmem:[#allocation7 + $0xd0] sm:$0xff]
    %v2158 = vld [vmem:[#allocation7 + $0xd8] sm:$0xff]
    %v2159 = vld [vmem:[#allocation7 + $0xe0] sm:$0xff]
    %v2160 = vld [vmem:[#allocation7 + $0xe8] sm:$0xff]
    %v2161 = vld [vmem:[#allocation7 + $0xf0] sm:$0xff]
    %v2162 = vld [vmem:[#allocation7 + $0xf8] sm:$0xff]
    %v2163 = vld [vmem:[#allocation7 + $0x100] sm:$0xff]
    %v2164 = vld [vmem:[#allocation7 + $0x108] sm:$0xff]
    %v2165 = vld [vmem:[#allocation7 + $0x110] sm:$0xff]
    %v2166 = vld [vmem:[#allocation7 + $0x118] sm:$0xff]
    %v2167 = vld [vmem:[#allocation7 + $0x120] sm:$0xff]
    %v2168 = vld [vmem:[#allocation7 + $0x128] sm:$0xff]
    %v2169 = vld [vmem:[#allocation7 + $0x130] sm:$0xff]
    %v2170 = vld [vmem:[#allocation7 + $0x138] sm:$0xff]
    %v2171 = vld [vmem:[#allocation7 + $0x140] sm:$0xff]
    %v2172 = vld [vmem:[#allocation7 + $0x148] sm:$0xff]
    %v2173 = vld [vmem:[#allocation7 + $0x150] sm:$0xff]
    %v2174 = vld [vmem:[#allocation7 + $0x158] sm:$0xff]
    %v2175 = vld [vmem:[#allocation7 + $0x160] sm:$0xff]
    %v2176 = vld [vmem:[#allocation7 + $0x168] sm:$0xff]
    %v2177 = vld [vmem:[#allocation7 + $0x170] sm:$0xff]
    %v2178 = vld [vmem:[#allocation7 + $0x178] sm:$0xff]
    %v2179 = vld [vmem:[#allocation7 + $0x180] sm:$0xff]
    %v2180 = vld [vmem:[#allocation7 + $0x188] sm:$0xff]
    %v2181 = vld [vmem:[#allocation7 + $0x190] sm:$0xff]
    %v2182 = vld [vmem:[#allocation7 + $0x198] sm:$0xff]
    %v2183 = vld [vmem:[#allocation7 + $0x1a0] sm:$0xff]
    %v2184 = vld [vmem:[#allocation7 + $0x1a8] sm:$0xff]
    %v2185 = vld [vmem:[#allocation7 + $0x1b0] sm:$0xff]
    %v2186 = vld [vmem:[#allocation7 + $0x1b8] sm:$0xff]
    %v2187 = vld [vmem:[#allocation7 + $0x1c0] sm:$0xff]
    %v2188 = vld [vmem:[#allocation7 + $0x1c8] sm:$0xff]
    %v2189 = vld [vmem:[#allocation7 + $0x1d0] sm:$0xff]
    %v2190 = vld [vmem:[#allocation7 + $0x1d8] sm:$0xff]
    %v2191 = vld [vmem:[#allocation7 + $0x1e0] sm:$0xff]
    %v2192 = vld [vmem:[#allocation7 + $0x1e8] sm:$0xff]
    %v2193 = vld [vmem:[#allocation7 + $0x1f0] sm:$0xff]
    %v2194 = vld [vmem:[#allocation7 + $0x1f8] sm:$0xff]
    %2195 = vmatprep.subr.mxu0 %v2132
    %2196 = vmatpush1.msra.mxu0 %v2131
    %2197 = vmatprep.subr.mxu0 %v2136
    %2198 = vmatpush1.msra.mxu0 %v2135
    %2199 = vmatprep.subr.mxu0 %v2140
    %2200 = vmatpush1.msra.mxu0 %v2139
    %2201 = vmatprep.subr.mxu0 %v2144
    %2202 = vmatpush1.msra.mxu0 %v2143
    %2203 = vmatprep.subr.mxu0 %v2148
    %2204 = vmatpush1.msra.mxu0 %v2147
    %2205 = vmatprep.subr.mxu0 %v2152
    %2206 = vmatpush1.msra.mxu0 %v2151
    %2207 = vmatprep.subr.mxu0 %v2156
    %2208 = vmatpush1.msra.mxu0 %v2155
    %2209 = vmatprep.subr.mxu0 %v2160
    %2210 = vmatpush1.msra.mxu0 %v2159
    %2211 = vmatprep.subr.mxu0 %v2164
    %2212 = vmatpush1.msra.mxu0 %v2163
    %2213 = vmatprep.subr.mxu0 %v2168
    %2214 = vmatpush1.msra.mxu0 %v2167
    %2215 = vmatprep.subr.mxu0 %v2172
    %2216 = vmatpush1.msra.mxu0 %v2171
    %2217 = vmatprep.subr.mxu0 %v2176
    %2218 = vmatpush1.msra.mxu0 %v2175
    %2219 = vmatprep.subr.mxu0 %v2180
    %2220 = vmatpush1.msra.mxu0 %v2179
    %2221 = vmatprep.subr.mxu0 %v2184
    %2222 = vmatpush1.msra.mxu0 %v2183
    %2223 = vmatprep.subr.mxu0 %v2188
    %2224 = vmatpush1.msra.mxu0 %v2187
    %2225 = vmatprep.subr.mxu0 %v2192
    %2226 = vmatpush1.msra.mxu0 %v2191
    %2227 = vmatprep.subr.mxu0 0.0
    %2228 = vmatpush1.msra.mxu0 0.0
    %2229 = vmatprep.subr.mxu0 0.0
    %2230 = vmatpush1.msra.mxu0 0.0
    %2231 = vmatprep.subr.mxu0 0.0
    %2232 = vmatpush1.msra.mxu0 0.0
    %2233 = vmatprep.subr.mxu0 0.0
    %2234 = vmatpush1.msra.mxu0 0.0
    %2235 = vmatprep.subr.mxu0 0.0
    %2236 = vmatpush1.msra.mxu0 0.0
    %2237 = vmatprep.subr.mxu0 0.0
    %2238 = vmatpush1.msra.mxu0 0.0
    %2239 = vmatprep.subr.mxu0 0.0
    %2240 = vmatpush1.msra.mxu0 0.0
    %2241 = vmatprep.subr.mxu0 0.0
    %2242 = vmatpush1.msra.mxu0 0.0
    %2243 = vmatprep.subr.mxu0 0.0
    %2244 = vmatpush1.msra.mxu0 0.0
    %2245 = vmatprep.subr.mxu0 0.0
    %2246 = vmatpush1.msra.mxu0 0.0
    %2247 = vmatprep.subr.mxu0 0.0
    %2248 = vmatpush1.msra.mxu0 0.0
    %2249 = vmatprep.subr.mxu0 0.0
    %2250 = vmatpush1.msra.mxu0 0.0
    %2251 = vmatprep.subr.mxu0 0.0
    %2252 = vmatpush1.msra.mxu0 0.0
    %2253 = vmatprep.subr.mxu0 0.0
    %2254 = vmatpush1.msra.mxu0 0.0
    %2255 = vmatprep.subr.mxu0 0.0
    %2256 = vmatpush1.msra.mxu0 0.0
    %2257 = vmatprep.subr.mxu0 0.0
    %2258 = vmatpush1.msra.mxu0 0.0
    %2259 = vmatprep.mubr.f32.mxu0 0.0
    %2260 = vmatmul.mubr.f32.gmra.mrb[0].mxu0 0.0
    %v2261 = vpop.f32.mrb[0].mxu0
    %v2262 = vadd.f32 0.0, %v2261
    %v2263 = vpop.f32.mrb[0].mxu0
    %v2264 = vadd.f32 0.0, %v2263
    %2265 = vdwg.mxu0
    %2266 = vmatprep.subr.mxu0 %v2134
    %2267 = vmatpush1.msra.mxu0 %v2133
    %2268 = vmatprep.subr.mxu0 %v2138
    %2269 = vmatpush1.msra.mxu0 %v2137
    %2270 = vmatprep.subr.mxu0 %v2142
    %2271 = vmatpush1.msra.mxu0 %v2141
    %2272 = vmatprep.subr.mxu0 %v2146
    %2273 = vmatpush1.msra.mxu0 %v2145
    %2274 = vmatprep.subr.mxu0 %v2150
    %2275 = vmatpush1.msra.mxu0 %v2149
    %2276 = vmatprep.subr.mxu0 %v2154
    %2277 = vmatpush1.msra.mxu0 %v2153
    %2278 = vmatprep.subr.mxu0 %v2158
    %2279 = vmatpush1.msra.mxu0 %v2157
    %2280 = vmatprep.subr.mxu0 %v2162
    %2281 = vmatpush1.msra.mxu0 %v2161
    %2282 = vmatprep.subr.mxu0 %v2166
    %2283 = vmatpush1.msra.mxu0 %v2165
    %2284 = vmatprep.subr.mxu0 %v2170
    %2285 = vmatpush1.msra.mxu0 %v2169
    %2286 = vmatprep.subr.mxu0 %v2174
    %2287 = vmatpush1.msra.mxu0 %v2173
    %2288 = vmatprep.subr.mxu0 %v2178
    %2289 = vmatpush1.msra.mxu0 %v2177
    %2290 = vmatprep.subr.mxu0 %v2182
    %2291 = vmatpush1.msra.mxu0 %v2181
    %2292 = vmatprep.subr.mxu0 %v2186
    %2293 = vmatpush1.msra.mxu0 %v2185
    %2294 = vmatprep.subr.mxu0 %v2190
    %2295 = vmatpush1.msra.mxu0 %v2189
    %2296 = vmatprep.subr.mxu0 %v2194
    %2297 = vmatpush1.msra.mxu0 %v2193
    %2298 = vmatprep.subr.mxu0 0.0
    %2299 = vmatpush1.msra.mxu0 0.0
    %2300 = vmatprep.subr.mxu0 0.0
    %2301 = vmatpush1.msra.mxu0 0.0
    %2302 = vmatprep.subr.mxu0 0.0
    %2303 = vmatpush1.msra.mxu0 0.0
    %2304 = vmatprep.subr.mxu0 0.0
    %2305 = vmatpush1.msra.mxu0 0.0
    %2306 = vmatprep.subr.mxu0 0.0
    %2307 = vmatpush1.msra.mxu0 0.0
    %2308 = vmatprep.subr.mxu0 0.0
    %2309 = vmatpush1.msra.mxu0 0.0
    %2310 = vmatprep.subr.mxu0 0.0
    %2311 = vmatpush1.msra.mxu0 0.0
    %2312 = vmatprep.subr.mxu0 0.0
    %2313 = vmatpush1.msra.mxu0 0.0
    %2314 = vmatprep.subr.mxu0 0.0
    %2315 = vmatpush1.msra.mxu0 0.0
    %2316 = vmatprep.subr.mxu0 0.0
    %2317 = vmatpush1.msra.mxu0 0.0
    %2318 = vmatprep.subr.mxu0 0.0
    %2319 = vmatpush1.msra.mxu0 0.0
    %2320 = vmatprep.subr.mxu0 0.0
    %2321 = vmatpush1.msra.mxu0 0.0
    %2322 = vmatprep.subr.mxu0 0.0
    %2323 = vmatpush1.msra.mxu0 0.0
    %2324 = vmatprep.subr.mxu0 0.0
    %2325 = vmatpush1.msra.mxu0 0.0
    %2326 = vmatprep.subr.mxu0 0.0
    %2327 = vmatpush1.msra.mxu0 0.0
    %2328 = vmatprep.subr.mxu0 0.0
    %2329 = vmatpush1.msra.mxu0 0.0
    %2330 = vmatprep.mubr.f32.mxu0 0.0
    %2331 = vmatmul.mubr.f32.gmra.mrb[0].mxu0 0.0
    %v2332 = vpop.f32.mrb[0].mxu0
    %v2333 = vadd.f32 0.0, %v2332
    %v2334 = vpop.f32.mrb[0].mxu0
    %v2335 = vadd.f32 0.0, %v2334
    %2336 = vdwg.mxu0
    %v2337 = vadd.f32 %v2056, %v2262
    %v2338 = vadd.f32 %v2058, %v2264
    %v2339 = vadd.f32 %v2127, %v2333
    %v2340 = vadd.f32 %v2129, %v2335
    %v2341 = vxor.u32 %v2337, 2147483648
    %v2342 = vmul.f32 %v2341, 1.442695
    %v2343 = vpow.pop %v2342
    %v2344 = vadd.f32 %v2343, 1.0
    %v2345 = vrcp.pop %v2344
    %v2346 = vmul.f32 1.0, %v2345
    %v2347 = vxor.u32 %v2338, 2147483648
    %v2348 = vmul.f32 %v2347, 1.442695
    %v2349 = vpow.pop %v2348
    %v2350 = vadd.f32 %v2349, 1.0
    %v2351 = vrcp.pop %v2350
    %v2352 = vmul.f32 1.0, %v2351
    %v2353 = vtanh.pop %v2339
    %v2354 = vxor.u32 %v2340, 2147483648
    %v2355 = vmul.f32 %v2354, 1.442695
    %v2356 = vpow.pop %v2355
    %v2357 = vadd.f32 %v2356, 1.0
    %v2358 = vrcp.pop %v2357
    %v2359 = vmul.f32 1.0, %v2358
    %v2360 = vmul.f32 %v2352, 0.0
    %v2361 = vmul.f32 %v2346, %v2353
    %v2362 = vadd.f32 %v2360, %v2361
    %v2363 = vtanh.pop %v2362
    %v2364 = vmul.f32 %v2359, %v2363
    %2365 = vmatprep.subr.mxu0 %v2132
    %2366 = vmatpush1.msra.mxu0 %v2131
    %2367 = vmatprep.subr.mxu0 %v2136
    %2368 = vmatpush1.msra.mxu0 %v2135
    %2369 = vmatprep.subr.mxu0 %v2140
    %2370 = vmatpush1.msra.mxu0 %v2139
    %2371 = vmatprep.subr.mxu0 %v2144
    %2372 = vmatpush1.msra.mxu0 %v2143
    %2373 = vmatprep.subr.mxu0 %v2148
    %2374 = vmatpush1.msra.mxu0 %v2147
    %2375 = vmatprep.subr.mxu0 %v2152
    %2376 = vmatpush1.msra.mxu0 %v2151
    %2377 = vmatprep.subr.mxu0 %v2156
    %2378 = vmatpush1.msra.mxu0 %v2155
    %2379 = vmatprep.subr.mxu0 %v2160
    %2380 = vmatpush1.msra.mxu0 %v2159
    %2381 = vmatprep.subr.mxu0 %v2164
    %2382 = vmatpush1.msra.mxu0 %v2163
    %2383 = vmatprep.subr.mxu0 %v2168
    %2384 = vmatpush1.msra.mxu0 %v2167
    %2385 = vmatprep.subr.mxu0 %v2172
    %2386 = vmatpush1.msra.mxu0 %v2171
    %2387 = vmatprep.subr.mxu0 %v2176
    %2388 = vmatpush1.msra.mxu0 %v2175
    %2389 = vmatprep.subr.mxu0 %v2180
    %2390 = vmatpush1.msra.mxu0 %v2179
    %2391 = vmatprep.subr.mxu0 %v2184
    %2392 = vmatpush1.msra.mxu0 %v2183
    %2393 = vmatprep.subr.mxu0 %v2188
    %2394 = vmatpush1.msra.mxu0 %v2187
    %2395 = vmatprep.subr.mxu0 %v2192
    %2396 = vmatpush1.msra.mxu0 %v2191
    %2397 = vmatprep.subr.mxu0 0.0
    %2398 = vmatpush1.msra.mxu0 0.0
    %2399 = vmatprep.subr.mxu0 0.0
    %2400 = vmatpush1.msra.mxu0 0.0
    %2401 = vmatprep.subr.mxu0 0.0
    %2402 = vmatpush1.msra.mxu0 0.0
    %2403 = vmatprep.subr.mxu0 0.0
    %2404 = vmatpush1.msra.mxu0 0.0
    %2405 = vmatprep.subr.mxu0 0.0
    %2406 = vmatpush1.msra.mxu0 0.0
    %2407 = vmatprep.subr.mxu0 0.0
    %2408 = vmatpush1.msra.mxu0 0.0
    %2409 = vmatprep.subr.mxu0 0.0
    %2410 = vmatpush1.msra.mxu0 0.0
    %2411 = vmatprep.subr.mxu0 0.0
    %2412 = vmatpush1.msra.mxu0 0.0
    %2413 = vmatprep.subr.mxu0 0.0
    %2414 = vmatpush1.msra.mxu0 0.0
    %2415 = vmatprep.subr.mxu0 0.0
    %2416 = vmatpush1.msra.mxu0 0.0
    %2417 = vmatprep.subr.mxu0 0.0
    %2418 = vmatpush1.msra.mxu0 0.0
    %2419 = vmatprep.subr.mxu0 0.0
    %2420 = vmatpush1.msra.mxu0 0.0
    %2421 = vmatprep.subr.mxu0 0.0
    %2422 = vmatpush1.msra.mxu0 0.0
    %2423 = vmatprep.subr.mxu0 0.0
    %2424 = vmatpush1.msra.mxu0 0.0
    %2425 = vmatprep.subr.mxu0 0.0
    %2426 = vmatpush1.msra.mxu0 0.0
    %2427 = vmatprep.subr.mxu0 0.0
    %2428 = vmatpush1.msra.mxu0 0.0
    %2429 = vmatprep.mubr.f32.mxu0 0.0
    %2430 = vmatmul.mubr.f32.gmra.mrb[0].mxu0 %v2364
    %v2431 = vpop.f32.mrb[0].mxu0
    %v2432 = vadd.f32 0.0, %v2431
    %v2433 = vpop.f32.mrb[0].mxu0
    %v2434 = vadd.f32 0.0, %v2433
    %2435 = vdwg.mxu0
    %2436 = vmatprep.subr.mxu0 %v2134
    %2437 = vmatpush1.msra.mxu0 %v2133
    %2438 = vmatprep.subr.mxu0 %v2138
    %2439 = vmatpush1.msra.mxu0 %v2137
    %2440 = vmatprep.subr.mxu0 %v2142
    %2441 = vmatpush1.msra.mxu0 %v2141
    %2442 = vmatprep.subr.mxu0 %v2146
    %2443 = vmatpush1.msra.mxu0 %v2145
    %2444 = vmatprep.subr.mxu0 %v2150
    %2445 = vmatpush1.msra.mxu0 %v2149
    %2446 = vmatprep.subr.mxu0 %v2154
    %2447 = vmatpush1.msra.mxu0 %v2153
    %2448 = vmatprep.subr.mxu0 %v2158
    %2449 = vmatpush1.msra.mxu0 %v2157
    %2450 = vmatprep.subr.mxu0 %v2162
    %2451 = vmatpush1.msra.mxu0 %v2161
    %2452 = vmatprep.subr.mxu0 %v2166
    %2453 = vmatpush1.msra.mxu0 %v2165
    %2454 = vmatprep.subr.mxu0 %v2170
    %2455 = vmatpush1.msra.mxu0 %v2169
    %2456 = vmatprep.subr.mxu0 %v2174
    %2457 = vmatpush1.msra.mxu0 %v2173
    %2458 = vmatprep.subr.mxu0 %v2178
    %2459 = vmatpush1.msra.mxu0 %v2177
    %2460 = vmatprep.subr.mxu0 %v2182
    %2461 = vmatpush1.msra.mxu0 %v2181
    %2462 = vmatprep.subr.mxu0 %v2186
    %2463 = vmatpush1.msra.mxu0 %v2185
    %2464 = vmatprep.subr.mxu0 %v2190
    %2465 = vmatpush1.msra.mxu0 %v2189
    %2466 = vmatprep.subr.mxu0 %v2194
    %2467 = vmatpush1.msra.mxu0 %v2193
    %2468 = vmatprep.subr.mxu0 0.0
    %2469 = vmatpush1.msra.mxu0 0.0
    %2470 = vmatprep.subr.mxu0 0.0
    %2471 = vmatpush1.msra.mxu0 0.0
    %2472 = vmatprep.subr.mxu0 0.0
    %2473 = vmatpush1.msra.mxu0 0.0
    %2474 = vmatprep.subr.mxu0 0.0
    %2475 = vmatpush1.msra.mxu0 0.0
    %2476 = vmatprep.subr.mxu0 0.0
    %2477 = vmatpush1.msra.mxu0 0.0
    %2478 = vmatprep.subr.mxu0 0.0
    %2479 = vmatpush1.msra.mxu0 0.0
    %2480 = vmatprep.subr.mxu0 0.0
    %2481 = vmatpush1.msra.mxu0 0.0
    %2482 = vmatprep.subr.mxu0 0.0
    %2483 = vmatpush1.msra.mxu0 0.0
    %2484 = vmatprep.subr.mxu0 0.0
    %2485 = vmatpush1.msra.mxu0 0.0
    %2486 = vmatprep.subr.mxu0 0.0
    %2487 = vmatpush1.msra.mxu0 0.0
    %2488 = vmatprep.subr.mxu0 0.0
    %2489 = vmatpush1.msra.mxu0 0.0
    %2490 = vmatprep.subr.mxu0 0.0
    %2491 = vmatpush1.msra.mxu0 0.0
    %2492 = vmatprep.subr.mxu0 0.0
    %2493 = vmatpush1.msra.mxu0 0.0
    %2494 = vmatprep.subr.mxu0 0.0
    %2495 = vmatpush1.msra.mxu0 0.0
    %2496 = vmatprep.subr.mxu0 0.0
    %2497 = vmatpush1.msra.mxu0 0.0
    %2498 = vmatprep.subr.mxu0 0.0
    %2499 = vmatpush1.msra.mxu0 0.0
    %2500 = vmatprep.mubr.f32.mxu0 0.0
    %2501 = vmatmul.mubr.f32.gmra.mrb[0].mxu0 %v2364
    %v2502 = vpop.f32.mrb[0].mxu0
    %v2503 = vadd.f32 0.0, %v2502
    %v2504 = vpop.f32.mrb[0].mxu0
    %v2505 = vadd.f32 0.0, %v2504
    %2506 = vdwg.mxu0
    %v2511 = vrot.slane %v2432, 7
    %v2512 = vrot.slane %v2434, 7
    %v2513 = vrot.slane %v2503, 7
    %v2514 = vrot.slane %v2505, 7
    %v2519 = vadd.f32 %v2056, %v2511
    %v2520 = vadd.f32 %v2058, %v2512
    %v2521 = vadd.f32 %v2127, %v2513
    %v2522 = vadd.f32 %v2129, %v2514
    %v2523 = vxor.u32 %v2519, 2147483648
    %v2524 = vmul.f32 %v2523, 1.442695
    %v2525 = vpow.pop %v2524
    %v2526 = vadd.f32 %v2525, 1.0
    %v2527 = vrcp.pop %v2526
    %v2528 = vmul.f32 1.0, %v2527
    %v2529 = vxor.u32 %v2520, 2147483648
    %v2530 = vmul.f32 %v2529, 1.442695
    %v2531 = vpow.pop %v2530
    %v2532 = vadd.f32 %v2531, 1.0
    %v2533 = vrcp.pop %v2532
    %v2534 = vmul.f32 1.0, %v2533
    %v2535 = vtanh.pop %v2521
    %v2536 = vxor.u32 %v2522, 2147483648
    %v2537 = vmul.f32 %v2536, 1.442695
    %v2538 = vpow.pop %v2537
    %v2539 = vadd.f32 %v2538, 1.0
    %v2540 = vrcp.pop %v2539
    %v2541 = vmul.f32 1.0, %v2540
    %v2543 = vrot.slane %v2362, 7
    %v2545 = vmul.f32 %v2534, %v2543
    %v2546 = vmul.f32 %v2528, %v2535
    %v2547 = vadd.f32 %v2545, %v2546
    %v2548 = vtanh.pop %v2547
    %v2549 = vmul.f32 %v2541, %v2548
    %v2551 = vrot.slane %v2549, 1
    %2553 = vmatprep.subr.mxu0 %v2132
    %2554 = vmatpush1.msra.mxu0 %v2131
    %2555 = vmatprep.subr.mxu0 %v2136
    %2556 = vmatpush1.msra.mxu0 %v2135
    %2557 = vmatprep.subr.mxu0 %v2140
    %2558 = vmatpush1.msra.mxu0 %v2139
    %2559 = vmatprep.subr.mxu0 %v2144
    %2560 = vmatpush1.msra.mxu0 %v2143
    %2561 = vmatprep.subr.mxu0 %v2148
    %2562 = vmatpush1.msra.mxu0 %v2147
    %2563 = vmatprep.subr.mxu0 %v2152
    %2564 = vmatpush1.msra.mxu0 %v2151
    %2565 = vmatprep.subr.mxu0 %v2156
    %2566 = vmatpush1.msra.mxu0 %v2155
    %2567 = vmatprep.subr.mxu0 %v2160
    %2568 = vmatpush1.msra.mxu0 %v2159
    %2569 = vmatprep.subr.mxu0 %v2164
    %2570 = vmatpush1.msra.mxu0 %v2163
    %2571 = vmatprep.subr.mxu0 %v2168
    %2572 = vmatpush1.msra.mxu0 %v2167
    %2573 = vmatprep.subr.mxu0 %v2172
    %2574 = vmatpush1.msra.mxu0 %v2171
    %2575 = vmatprep.subr.mxu0 %v2176
    %2576 = vmatpush1.msra.mxu0 %v2175
    %2577 = vmatprep.subr.mxu0 %v2180
    %2578 = vmatpush1.msra.mxu0 %v2179
    %2579 = vmatprep.subr.mxu0 %v2184
    %2580 = vmatpush1.msra.mxu0 %v2183
    %2581 = vmatprep.subr.mxu0 %v2188
    %2582 = vmatpush1.msra.mxu0 %v2187
    %2583 = vmatprep.subr.mxu0 %v2192
    %2584 = vmatpush1.msra.mxu0 %v2191
    %2585 = vmatprep.subr.mxu0 0.0
    %2586 = vmatpush1.msra.mxu0 0.0
    %2587 = vmatprep.subr.mxu0 0.0
    %2588 = vmatpush1.msra.mxu0 0.0
    %2589 = vmatprep.subr.mxu0 0.0
    %2590 = vmatpush1.msra.mxu0 0.0
    %2591 = vmatprep.subr.mxu0 0.0
    %2592 = vmatpush1.msra.mxu0 0.0
    %2593 = vmatprep.subr.mxu0 0.0
    %2594 = vmatpush1.msra.mxu0 0.0
    %2595 = vmatprep.subr.mxu0 0.0
    %2596 = vmatpush1.msra.mxu0 0.0
    %2597 = vmatprep.subr.mxu0 0.0
    %2598 = vmatpush1.msra.mxu0 0.0
    %2599 = vmatprep.subr.mxu0 0.0
    %2600 = vmatpush1.msra.mxu0 0.0
    %2601 = vmatprep.subr.mxu0 0.0
    %2602 = vmatpush1.msra.mxu0 0.0
    %2603 = vmatprep.subr.mxu0 0.0
    %2604 = vmatpush1.msra.mxu0 0.0
    %2605 = vmatprep.subr.mxu0 0.0
    %2606 = vmatpush1.msra.mxu0 0.0
    %2607 = vmatprep.subr.mxu0 0.0
    %2608 = vmatpush1.msra.mxu0 0.0
    %2609 = vmatprep.subr.mxu0 0.0
    %2610 = vmatpush1.msra.mxu0 0.0
    %2611 = vmatprep.subr.mxu0 0.0
    %2612 = vmatpush1.msra.mxu0 0.0
    %2613 = vmatprep.subr.mxu0 0.0
    %2614 = vmatpush1.msra.mxu0 0.0
    %2615 = vmatprep.subr.mxu0 0.0
    %2616 = vmatpush1.msra.mxu0 0.0
    %2617 = vmatprep.mubr.f32.mxu0 0.0
    %2618 = vmatmul.mubr.f32.gmra.mrb[0].mxu0 %v2551
    %v2619 = vpop.f32.mrb[0].mxu0
    %v2620 = vadd.f32 0.0, %v2619
    %v2621 = vpop.f32.mrb[0].mxu0
    %v2622 = vadd.f32 0.0, %v2621
    %2623 = vdwg.mxu0
    %2624 = vmatprep.subr.mxu0 %v2134
    %2625 = vmatpush1.msra.mxu0 %v2133
    %2626 = vmatprep.subr.mxu0 %v2138
    %2627 = vmatpush1.msra.mxu0 %v2137
    %2628 = vmatprep.subr.mxu0 %v2142
    %2629 = vmatpush1.msra.mxu0 %v2141
    %2630 = vmatprep.subr.mxu0 %v2146
    %2631 = vmatpush1.msra.mxu0 %v2145
    %2632 = vmatprep.subr.mxu0 %v2150
    %2633 = vmatpush1.msra.mxu0 %v2149
    %2634 = vmatprep.subr.mxu0 %v2154
    %2635 = vmatpush1.msra.mxu0 %v2153
    %2636 = vmatprep.subr.mxu0 %v2158
    %2637 = vmatpush1.msra.mxu0 %v2157
    %2638 = vmatprep.subr.mxu0 %v2162
    %2639 = vmatpush1.msra.mxu0 %v2161
    %2640 = vmatprep.subr.mxu0 %v2166
    %2641 = vmatpush1.msra.mxu0 %v2165
    %2642 = vmatprep.subr.mxu0 %v2170
    %2643 = vmatpush1.msra.mxu0 %v2169
    %2644 = vmatprep.subr.mxu0 %v2174
    %2645 = vmatpush1.msra.mxu0 %v2173
    %2646 = vmatprep.subr.mxu0 %v2178
    %2647 = vmatpush1.msra.mxu0 %v2177
    %2648 = vmatprep.subr.mxu0 %v2182
    %2649 = vmatpush1.msra.mxu0 %v2181
    %2650 = vmatprep.subr.mxu0 %v2186
    %2651 = vmatpush1.msra.mxu0 %v2185
    %2652 = vmatprep.subr.mxu0 %v2190
    %2653 = vmatpush1.msra.mxu0 %v2189
    %2654 = vmatprep.subr.mxu0 %v2194
    %2655 = vmatpush1.msra.mxu0 %v2193
    %2656 = vmatprep.subr.mxu0 0.0
    %2657 = vmatpush1.msra.mxu0 0.0
    %2658 = vmatprep.subr.mxu0 0.0
    %2659 = vmatpush1.msra.mxu0 0.0
    %2660 = vmatprep.subr.mxu0 0.0
    %2661 = vmatpush1.msra.mxu0 0.0
    %2662 = vmatprep.subr.mxu0 0.0
    %2663 = vmatpush1.msra.mxu0 0.0
    %2664 = vmatprep.subr.mxu0 0.0
    %2665 = vmatpush1.msra.mxu0 0.0
    %2666 = vmatprep.subr.mxu0 0.0
    %2667 = vmatpush1.msra.mxu0 0.0
    %2668 = vmatprep.subr.mxu0 0.0
    %2669 = vmatpush1.msra.mxu0 0.0
    %2670 = vmatprep.subr.mxu0 0.0
    %2671 = vmatpush1.msra.mxu0 0.0
    %2672 = vmatprep.subr.mxu0 0.0
    %2673 = vmatpush1.msra.mxu0 0.0
    %2674 = vmatprep.subr.mxu0 0.0
    %2675 = vmatpush1.msra.mxu0 0.0
    %2676 = vmatprep.subr.mxu0 0.0
    %2677 = vmatpush1.msra.mxu0 0.0
    %2678 = vmatprep.subr.mxu0 0.0
    %2679 = vmatpush1.msra.mxu0 0.0
    %2680 = vmatprep.subr.mxu0 0.0
    %2681 = vmatpush1.msra.mxu0 0.0
    %2682 = vmatprep.subr.mxu0 0.0
    %2683 = vmatpush1.msra.mxu0 0.0
    %2684 = vmatprep.subr.mxu0 0.0
    %2685 = vmatpush1.msra.mxu0 0.0
    %2686 = vmatprep.subr.mxu0 0.0
    %2687 = vmatpush1.msra.mxu0 0.0
    %2688 = vmatprep.mubr.f32.mxu0 0.0
    %2689 = vmatmul.mubr.f32.gmra.mrb[0].mxu0 %v2551
    %v2690 = vpop.f32.mrb[0].mxu0
    %v2691 = vadd.f32 0.0, %v2690
    %v2692 = vpop.f32.mrb[0].mxu0
    %v2693 = vadd.f32 0.0, %v2692
    %2694 = vdwg.mxu0
    %v2699 = vrot.slane %v2620, 6
    %v2700 = vrot.slane %v2622, 6
    %v2701 = vrot.slane %v2691, 6
    %v2702 = vrot.slane %v2693, 6
    %v2707 = vadd.f32 %v2056, %v2699
    %v2708 = vadd.f32 %v2058, %v2700
    %v2709 = vadd.f32 %v2127, %v2701
    %v2710 = vadd.f32 %v2129, %v2702
    %v2711 = vxor.u32 %v2707, 2147483648
    %v2712 = vmul.f32 %v2711, 1.442695
    %v2713 = vpow.pop %v2712
    %v2714 = vadd.f32 %v2713, 1.0
    %v2715 = vrcp.pop %v2714
    %v2716 = vmul.f32 1.0, %v2715
    %v2717 = vxor.u32 %v2708, 2147483648
    %v2718 = vmul.f32 %v2717, 1.442695
    %v2719 = vpow.pop %v2718
    %v2720 = vadd.f32 %v2719, 1.0
    %v2721 = vrcp.pop %v2720
    %v2722 = vmul.f32 1.0, %v2721
    %v2723 = vtanh.pop %v2709
    %v2724 = vxor.u32 %v2710, 2147483648
    %v2725 = vmul.f32 %v2724, 1.442695
    %v2726 = vpow.pop %v2725
    %v2727 = vadd.f32 %v2726, 1.0
    %v2728 = vrcp.pop %v2727
    %v2729 = vmul.f32 1.0, %v2728
    %v2731 = vrot.slane %v2547, 7
    %v2733 = vmul.f32 %v2722, %v2731
    %v2734 = vmul.f32 %v2716, %v2723
    %v2735 = vadd.f32 %v2733, %v2734
    %v2736 = vtanh.pop %v2735
    %v2737 = vmul.f32 %v2729, %v2736
    %v2739 = vrot.slane %v2737, 2
    %2741 = vmatprep.subr.mxu0 %v2132
    %2742 = vmatpush1.msra.mxu0 %v2131
    %2743 = vmatprep.subr.mxu0 %v2136
    %2744 = vmatpush1.msra.mxu0 %v2135
    %2745 = vmatprep.subr.mxu0 %v2140
    %2746 = vmatpush1.msra.mxu0 %v2139
    %2747 = vmatprep.subr.mxu0 %v2144
    %2748 = vmatpush1.msra.mxu0 %v2143
    %2749 = vmatprep.subr.mxu0 %v2148
    %2750 = vmatpush1.msra.mxu0 %v2147
    %2751 = vmatprep.subr.mxu0 %v2152
    %2752 = vmatpush1.msra.mxu0 %v2151
    %2753 = vmatprep.subr.mxu0 %v2156
    %2754 = vmatpush1.msra.mxu0 %v2155
    %2755 = vmatprep.subr.mxu0 %v2160
    %2756 = vmatpush1.msra.mxu0 %v2159
    %2757 = vmatprep.subr.mxu0 %v2164
    %2758 = vmatpush1.msra.mxu0 %v2163
    %2759 = vmatprep.subr.mxu0 %v2168
    %2760 = vmatpush1.msra.mxu0 %v2167
    %2761 = vmatprep.subr.mxu0 %v2172
    %2762 = vmatpush1.msra.mxu0 %v2171
    %2763 = vmatprep.subr.mxu0 %v2176
    %2764 = vmatpush1.msra.mxu0 %v2175
    %2765 = vmatprep.subr.mxu0 %v2180
    %2766 = vmatpush1.msra.mxu0 %v2179
    %2767 = vmatprep.subr.mxu0 %v2184
    %2768 = vmatpush1.msra.mxu0 %v2183
    %2769 = vmatprep.subr.mxu0 %v2188
    %2770 = vmatpush1.msra.mxu0 %v2187
    %2771 = vmatprep.subr.mxu0 %v2192
    %2772 = vmatpush1.msra.mxu0 %v2191
    %2773 = vmatprep.subr.mxu0 0.0
    %2774 = vmatpush1.msra.mxu0 0.0
    %2775 = vmatprep.subr.mxu0 0.0
    %2776 = vmatpush1.msra.mxu0 0.0
    %2777 = vmatprep.subr.mxu0 0.0
    %2778 = vmatpush1.msra.mxu0 0.0
    %2779 = vmatprep.subr.mxu0 0.0
    %2780 = vmatpush1.msra.mxu0 0.0
    %2781 = vmatprep.subr.mxu0 0.0
    %2782 = vmatpush1.msra.mxu0 0.0
    %2783 = vmatprep.subr.mxu0 0.0
    %2784 = vmatpush1.msra.mxu0 0.0
    %2785 = vmatprep.subr.mxu0 0.0
    %2786 = vmatpush1.msra.mxu0 0.0
    %2787 = vmatprep.subr.mxu0 0.0
    %2788 = vmatpush1.msra.mxu0 0.0
    %2789 = vmatprep.subr.mxu0 0.0
    %2790 = vmatpush1.msra.mxu0 0.0
    %2791 = vmatprep.subr.mxu0 0.0
    %2792 = vmatpush1.msra.mxu0 0.0
    %2793 = vmatprep.subr.mxu0 0.0
    %2794 = vmatpush1.msra.mxu0 0.0
    %2795 = vmatprep.subr.mxu0 0.0
    %2796 = vmatpush1.msra.mxu0 0.0
    %2797 = vmatprep.subr.mxu0 0.0
    %2798 = vmatpush1.msra.mxu0 0.0
    %2799 = vmatprep.subr.mxu0 0.0
    %2800 = vmatpush1.msra.mxu0 0.0
    %2801 = vmatprep.subr.mxu0 0.0
    %2802 = vmatpush1.msra.mxu0 0.0
    %2803 = vmatprep.subr.mxu0 0.0
    %2804 = vmatpush1.msra.mxu0 0.0
    %2805 = vmatprep.mubr.f32.mxu0 0.0
    %2806 = vmatmul.mubr.f32.gmra.mrb[0].mxu0 %v2739
    %v2807 = vpop.f32.mrb[0].mxu0
    %v2808 = vadd.f32 0.0, %v2807
    %v2809 = vpop.f32.mrb[0].mxu0
    %v2810 = vadd.f32 0.0, %v2809
    %2811 = vdwg.mxu0
    %2812 = vmatprep.subr.mxu0 %v2134
    %2813 = vmatpush1.msra.mxu0 %v2133
    %2814 = vmatprep.subr.mxu0 %v2138
    %2815 = vmatpush1.msra.mxu0 %v2137
    %2816 = vmatprep.subr.mxu0 %v2142
    %2817 = vmatpush1.msra.mxu0 %v2141
    %2818 = vmatprep.subr.mxu0 %v2146
    %2819 = vmatpush1.msra.mxu0 %v2145
    %2820 = vmatprep.subr.mxu0 %v2150
    %2821 = vmatpush1.msra.mxu0 %v2149
    %2822 = vmatprep.subr.mxu0 %v2154
    %2823 = vmatpush1.msra.mxu0 %v2153
    %2824 = vmatprep.subr.mxu0 %v2158
    %2825 = vmatpush1.msra.mxu0 %v2157
    %2826 = vmatprep.subr.mxu0 %v2162
    %2827 = vmatpush1.msra.mxu0 %v2161
    %2828 = vmatprep.subr.mxu0 %v2166
    %2829 = vmatpush1.msra.mxu0 %v2165
    %2830 = vmatprep.subr.mxu0 %v2170
    %2831 = vmatpush1.msra.mxu0 %v2169
    %2832 = vmatprep.subr.mxu0 %v2174
    %2833 = vmatpush1.msra.mxu0 %v2173
    %2834 = vmatprep.subr.mxu0 %v2178
    %2835 = vmatpush1.msra.mxu0 %v2177
    %2836 = vmatprep.subr.mxu0 %v2182
    %2837 = vmatpush1.msra.mxu0 %v2181
    %2838 = vmatprep.subr.mxu0 %v2186
    %2839 = vmatpush1.msra.mxu0 %v2185
    %2840 = vmatprep.subr.mxu0 %v2190
    %2841 = vmatpush1.msra.mxu0 %v2189
    %2842 = vmatprep.subr.mxu0 %v2194
    %2843 = vmatpush1.msra.mxu0 %v2193
    %2844 = vmatprep.subr.mxu0 0.0
    %2845 = vmatpush1.msra.mxu0 0.0
    %2846 = vmatprep.subr.mxu0 0.0
    %2847 = vmatpush1.msra.mxu0 0.0
    %2848 = vmatprep.subr.mxu0 0.0
    %2849 = vmatpush1.msra.mxu0 0.0
    %2850 = vmatprep.subr.mxu0 0.0
    %2851 = vmatpush1.msra.mxu0 0.0
    %2852 = vmatprep.subr.mxu0 0.0
    %2853 = vmatpush1.msra.mxu0 0.0
    %2854 = vmatprep.subr.mxu0 0.0
    %2855 = vmatpush1.msra.mxu0 0.0
    %2856 = vmatprep.subr.mxu0 0.0
    %2857 = vmatpush1.msra.mxu0 0.0
    %2858 = vmatprep.subr.mxu0 0.0
    %2859 = vmatpush1.msra.mxu0 0.0
    %2860 = vmatprep.subr.mxu0 0.0
    %2861 = vmatpush1.msra.mxu0 0.0
    %2862 = vmatprep.subr.mxu0 0.0
    %2863 = vmatpush1.msra.mxu0 0.0
    %2864 = vmatprep.subr.mxu0 0.0
    %2865 = vmatpush1.msra.mxu0 0.0
    %2866 = vmatprep.subr.mxu0 0.0
    %2867 = vmatpush1.msra.mxu0 0.0
    %2868 = vmatprep.subr.mxu0 0.0
    %2869 = vmatpush1.msra.mxu0 0.0
    %2870 = vmatprep.subr.mxu0 0.0
    %2871 = vmatpush1.msra.mxu0 0.0
    %2872 = vmatprep.subr.mxu0 0.0
    %2873 = vmatpush1.msra.mxu0 0.0
    %2874 = vmatprep.subr.mxu0 0.0
    %2875 = vmatpush1.msra.mxu0 0.0
    %2876 = vmatprep.mubr.f32.mxu0 0.0
    %2877 = vmatmul.mubr.f32.gmra.mrb[0].mxu0 %v2739
    %v2878 = vpop.f32.mrb[0].mxu0
    %v2879 = vadd.f32 0.0, %v2878
    %v2880 = vpop.f32.mrb[0].mxu0
    %v2881 = vadd.f32 0.0, %v2880
    %2882 = vdwg.mxu0
    %v2887 = vrot.slane %v2808, 5
    %v2888 = vrot.slane %v2810, 5
    %v2889 = vrot.slane %v2879, 5
    %v2890 = vrot.slane %v2881, 5
    %v2895 = vadd.f32 %v2056, %v2887
    %v2896 = vadd.f32 %v2058, %v2888
    %v2897 = vadd.f32 %v2127, %v2889
    %v2898 = vadd.f32 %v2129, %v2890
    %v2899 = vxor.u32 %v2895, 2147483648
    %v2900 = vmul.f32 %v2899, 1.442695
    %v2901 = vpow.pop %v2900
    %v2902 = vadd.f32 %v2901, 1.0
    %v2903 = vrcp.pop %v2902
    %v2904 = vmul.f32 1.0, %v2903
    %v2905 = vxor.u32 %v2896, 2147483648
    %v2906 = vmul.f32 %v2905, 1.442695
    %v2907 = vpow.pop %v2906
    %v2908 = vadd.f32 %v2907, 1.0
    %v2909 = vrcp.pop %v2908
    %v2910 = vmul.f32 1.0, %v2909
    %v2911 = vtanh.pop %v2897
    %v2912 = vxor.u32 %v2898, 2147483648
    %v2913 = vmul.f32 %v2912, 1.442695
    %v2914 = vpow.pop %v2913
    %v2915 = vadd.f32 %v2914, 1.0
    %v2916 = vrcp.pop %v2915
    %v2917 = vmul.f32 1.0, %v2916
    %v2919 = vrot.slane %v2735, 7
    %v2921 = vmul.f32 %v2910, %v2919
    %v2922 = vmul.f32 %v2904, %v2911
    %v2923 = vadd.f32 %v2921, %v2922
    %v2924 = vtanh.pop %v2923
    %v2925 = vmul.f32 %v2917, %v2924
    %v2927 = vrot.slane %v2925, 3
    %2929 = vmatprep.subr.mxu0 %v2132
    %2930 = vmatpush1.msra.mxu0 %v2131
    %2931 = vmatprep.subr.mxu0 %v2136
    %2932 = vmatpush1.msra.mxu0 %v2135
    %2933 = vmatprep.subr.mxu0 %v2140
    %2934 = vmatpush1.msra.mxu0 %v2139
    %2935 = vmatprep.subr.mxu0 %v2144
    %2936 = vmatpush1.msra.mxu0 %v2143
    %2937 = vmatprep.subr.mxu0 %v2148
    %2938 = vmatpush1.msra.mxu0 %v2147
    %2939 = vmatprep.subr.mxu0 %v2152
    %2940 = vmatpush1.msra.mxu0 %v2151
    %2941 = vmatprep.subr.mxu0 %v2156
    %2942 = vmatpush1.msra.mxu0 %v2155
    %2943 = vmatprep.subr.mxu0 %v2160
    %2944 = vmatpush1.msra.mxu0 %v2159
    %2945 = vmatprep.subr.mxu0 %v2164
    %2946 = vmatpush1.msra.mxu0 %v2163
    %2947 = vmatprep.subr.mxu0 %v2168
    %2948 = vmatpush1.msra.mxu0 %v2167
    %2949 = vmatprep.subr.mxu0 %v2172
    %2950 = vmatpush1.msra.mxu0 %v2171
    %2951 = vmatprep.subr.mxu0 %v2176
    %2952 = vmatpush1.msra.mxu0 %v2175
    %2953 = vmatprep.subr.mxu0 %v2180
    %2954 = vmatpush1.msra.mxu0 %v2179
    %2955 = vmatprep.subr.mxu0 %v2184
    %2956 = vmatpush1.msra.mxu0 %v2183
    %2957 = vmatprep.subr.mxu0 %v2188
    %2958 = vmatpush1.msra.mxu0 %v2187
    %2959 = vmatprep.subr.mxu0 %v2192
    %2960 = vmatpush1.msra.mxu0 %v2191
    %2961 = vmatprep.subr.mxu0 0.0
    %2962 = vmatpush1.msra.mxu0 0.0
    %2963 = vmatprep.subr.mxu0 0.0
    %2964 = vmatpush1.msra.mxu0 0.0
    %2965 = vmatprep.subr.mxu0 0.0
    %2966 = vmatpush1.msra.mxu0 0.0
    %2967 = vmatprep.subr.mxu0 0.0
    %2968 = vmatpush1.msra.mxu0 0.0
    %2969 = vmatprep.subr.mxu0 0.0
    %2970 = vmatpush1.msra.mxu0 0.0
    %2971 = vmatprep.subr.mxu0 0.0
    %2972 = vmatpush1.msra.mxu0 0.0
    %2973 = vmatprep.subr.mxu0 0.0
    %2974 = vmatpush1.msra.mxu0 0.0
    %2975 = vmatprep.subr.mxu0 0.0
    %2976 = vmatpush1.msra.mxu0 0.0
    %2977 = vmatprep.subr.mxu0 0.0
    %2978 = vmatpush1.msra.mxu0 0.0
    %2979 = vmatprep.subr.mxu0 0.0
    %2980 = vmatpush1.msra.mxu0 0.0
    %2981 = vmatprep.subr.mxu0 0.0
    %2982 = vmatpush1.msra.mxu0 0.0
    %2983 = vmatprep.subr.mxu0 0.0
    %2984 = vmatpush1.msra.mxu0 0.0
    %2985 = vmatprep.subr.mxu0 0.0
    %2986 = vmatpush1.msra.mxu0 0.0
    %2987 = vmatprep.subr.mxu0 0.0
    %2988 = vmatpush1.msra.mxu0 0.0
    %2989 = vmatprep.subr.mxu0 0.0
    %2990 = vmatpush1.msra.mxu0 0.0
    %2991 = vmatprep.subr.mxu0 0.0
    %2992 = vmatpush1.msra.mxu0 0.0
    %2993 = vmatprep.mubr.f32.mxu0 0.0
    %2994 = vmatmul.mubr.f32.gmra.mrb[0].mxu0 %v2927
    %v2995 = vpop.f32.mrb[0].mxu0
    %v2996 = vadd.f32 0.0, %v2995
    %v2997 = vpop.f32.mrb[0].mxu0
    %v2998 = vadd.f32 0.0, %v2997
    %2999 = vdwg.mxu0
    %3000 = vmatprep.subr.mxu0 %v2134
    %3001 = vmatpush1.msra.mxu0 %v2133
    %3002 = vmatprep.subr.mxu0 %v2138
    %3003 = vmatpush1.msra.mxu0 %v2137
    %3004 = vmatprep.subr.mxu0 %v2142
    %3005 = vmatpush1.msra.mxu0 %v2141
    %3006 = vmatprep.subr.mxu0 %v2146
    %3007 = vmatpush1.msra.mxu0 %v2145
    %3008 = vmatprep.subr.mxu0 %v2150
    %3009 = vmatpush1.msra.mxu0 %v2149
    %3010 = vmatprep.subr.mxu0 %v2154
    %3011 = vmatpush1.msra.mxu0 %v2153
    %3012 = vmatprep.subr.mxu0 %v2158
    %3013 = vmatpush1.msra.mxu0 %v2157
    %3014 = vmatprep.subr.mxu0 %v2162
    %3015 = vmatpush1.msra.mxu0 %v2161
    %3016 = vmatprep.subr.mxu0 %v2166
    %3017 = vmatpush1.msra.mxu0 %v2165
    %3018 = vmatprep.subr.mxu0 %v2170
    %3019 = vmatpush1.msra.mxu0 %v2169
    %3020 = vmatprep.subr.mxu0 %v2174
    %3021 = vmatpush1.msra.mxu0 %v2173
    %3022 = vmatprep.subr.mxu0 %v2178
    %3023 = vmatpush1.msra.mxu0 %v2177
    %3024 = vmatprep.subr.mxu0 %v2182
    %3025 = vmatpush1.msra.mxu0 %v2181
    %3026 = vmatprep.subr.mxu0 %v2186
    %3027 = vmatpush1.msra.mxu0 %v2185
    %3028 = vmatprep.subr.mxu0 %v2190
    %3029 = vmatpush1.msra.mxu0 %v2189
    %3030 = vmatprep.subr.mxu0 %v2194
    %3031 = vmatpush1.msra.mxu0 %v2193
    %3032 = vmatprep.subr.mxu0 0.0
    %3033 = vmatpush1.msra.mxu0 0.0
    %3034 = vmatprep.subr.mxu0 0.0
    %3035 = vmatpush1.msra.mxu0 0.0
    %3036 = vmatprep.subr.mxu0 0.0
    %3037 = vmatpush1.msra.mxu0 0.0
    %3038 = vmatprep.subr.mxu0 0.0
    %3039 = vmatpush1.msra.mxu0 0.0
    %3040 = vmatprep.subr.mxu0 0.0
    %3041 = vmatpush1.msra.mxu0 0.0
    %3042 = vmatprep.subr.mxu0 0.0
    %3043 = vmatpush1.msra.mxu0 0.0
    %3044 = vmatprep.subr.mxu0 0.0
    %3045 = vmatpush1.msra.mxu0 0.0
    %3046 = vmatprep.subr.mxu0 0.0
    %3047 = vmatpush1.msra.mxu0 0.0
    %3048 = vmatprep.subr.mxu0 0.0
    %3049 = vmatpush1.msra.mxu0 0.0
    %3050 = vmatprep.subr.mxu0 0.0
    %3051 = vmatpush1.msra.mxu0 0.0
    %3052 = vmatprep.subr.mxu0 0.0
    %3053 = vmatpush1.msra.mxu0 0.0
    %3054 = vmatprep.subr.mxu0 0.0
    %3055 = vmatpush1.msra.mxu0 0.0
    %3056 = vmatprep.subr.mxu0 0.0
    %3057 = vmatpush1.msra.mxu0 0.0
    %3058 = vmatprep.subr.mxu0 0.0
    %3059 = vmatpush1.msra.mxu0 0.0
    %3060 = vmatprep.subr.mxu0 0.0
    %3061 = vmatpush1.msra.mxu0 0.0
    %3062 = vmatprep.subr.mxu0 0.0
    %3063 = vmatpush1.msra.mxu0 0.0
    %3064 = vmatprep.mubr.f32.mxu0 0.0
    %3065 = vmatmul.mubr.f32.gmra.mrb[0].mxu0 %v2927
    %v3066 = vpop.f32.mrb[0].mxu0
    %v3067 = vadd.f32 0.0, %v3066
    %v3068 = vpop.f32.mrb[0].mxu0
    %v3069 = vadd.f32 0.0, %v3068
    %3070 = vdwg.mxu0
    %v3075 = vrot.slane %v2996, 4
    %v3076 = vrot.slane %v2998, 4
    %v3077 = vrot.slane %v3067, 4
    %v3078 = vrot.slane %v3069, 4
    %v3083 = vadd.f32 %v2056, %v3075
    %v3084 = vadd.f32 %v2058, %v3076
    %v3085 = vadd.f32 %v2127, %v3077
    %v3086 = vadd.f32 %v2129, %v3078
    %v3087 = vxor.u32 %v3083, 2147483648
    %v3088 = vmul.f32 %v3087, 1.442695
    %v3089 = vpow.pop %v3088
    %v3090 = vadd.f32 %v3089, 1.0
    %v3091 = vrcp.pop %v3090
    %v3092 = vmul.f32 1.0, %v3091
    %v3093 = vxor.u32 %v3084, 2147483648
    %v3094 = vmul.f32 %v3093, 1.442695
    %v3095 = vpow.pop %v3094
    %v3096 = vadd.f32 %v3095, 1.0
    %v3097 = vrcp.pop %v3096
    %v3098 = vmul.f32 1.0, %v3097
    %v3099 = vtanh.pop %v3085
    %v3100 = vxor.u32 %v3086, 2147483648
    %v3101 = vmul.f32 %v3100, 1.442695
    %v3102 = vpow.pop %v3101
    %v3103 = vadd.f32 %v3102, 1.0
    %v3104 = vrcp.pop %v3103
    %v3105 = vmul.f32 1.0, %v3104
    %v3107 = vrot.slane %v2923, 7
    %v3109 = vmul.f32 %v3098, %v3107
    %v3110 = vmul.f32 %v3092, %v3099
    %v3111 = vadd.f32 %v3109, %v3110
    %v3112 = vtanh.pop %v3111
    %v3113 = vmul.f32 %v3105, %v3112
    %v3115 = vrot.slane %v3113, 4
    %3117 = vmatprep.subr.mxu0 %v2132
    %3118 = vmatpush1.msra.mxu0 %v2131
    %3119 = vmatprep.subr.mxu0 %v2136
    %3120 = vmatpush1.msra.mxu0 %v2135
    %3121 = vmatprep.subr.mxu0 %v2140
    %3122 = vmatpush1.msra.mxu0 %v2139
    %3123 = vmatprep.subr.mxu0 %v2144
    %3124 = vmatpush1.msra.mxu0 %v2143
    %3125 = vmatprep.subr.mxu0 %v2148
    %3126 = vmatpush1.msra.mxu0 %v2147
    %3127 = vmatprep.subr.mxu0 %v2152
    %3128 = vmatpush1.msra.mxu0 %v2151
    %3129 = vmatprep.subr.mxu0 %v2156
    %3130 = vmatpush1.msra.mxu0 %v2155
    %3131 = vmatprep.subr.mxu0 %v2160
    %3132 = vmatpush1.msra.mxu0 %v2159
    %3133 = vmatprep.subr.mxu0 %v2164
    %3134 = vmatpush1.msra.mxu0 %v2163
    %3135 = vmatprep.subr.mxu0 %v2168
    %3136 = vmatpush1.msra.mxu0 %v2167
    %3137 = vmatprep.subr.mxu0 %v2172
    %3138 = vmatpush1.msra.mxu0 %v2171
    %3139 = vmatprep.subr.mxu0 %v2176
    %3140 = vmatpush1.msra.mxu0 %v2175
    %3141 = vmatprep.subr.mxu0 %v2180
    %3142 = vmatpush1.msra.mxu0 %v2179
    %3143 = vmatprep.subr.mxu0 %v2184
    %3144 = vmatpush1.msra.mxu0 %v2183
    %3145 = vmatprep.subr.mxu0 %v2188
    %3146 = vmatpush1.msra.mxu0 %v2187
    %3147 = vmatprep.subr.mxu0 %v2192
    %3148 = vmatpush1.msra.mxu0 %v2191
    %3149 = vmatprep.subr.mxu0 0.0
    %3150 = vmatpush1.msra.mxu0 0.0
    %3151 = vmatprep.subr.mxu0 0.0
    %3152 = vmatpush1.msra.mxu0 0.0
    %3153 = vmatprep.subr.mxu0 0.0
    %3154 = vmatpush1.msra.mxu0 0.0
    %3155 = vmatprep.subr.mxu0 0.0
    %3156 = vmatpush1.msra.mxu0 0.0
    %3157 = vmatprep.subr.mxu0 0.0
    %3158 = vmatpush1.msra.mxu0 0.0
    %3159 = vmatprep.subr.mxu0 0.0
    %3160 = vmatpush1.msra.mxu0 0.0
    %3161 = vmatprep.subr.mxu0 0.0
    %3162 = vmatpush1.msra.mxu0 0.0
    %3163 = vmatprep.subr.mxu0 0.0
    %3164 = vmatpush1.msra.mxu0 0.0
    %3165 = vmatprep.subr.mxu0 0.0
    %3166 = vmatpush1.msra.mxu0 0.0
    %3167 = vmatprep.subr.mxu0 0.0
    %3168 = vmatpush1.msra.mxu0 0.0
    %3169 = vmatprep.subr.mxu0 0.0
    %3170 = vmatpush1.msra.mxu0 0.0
    %3171 = vmatprep.subr.mxu0 0.0
    %3172 = vmatpush1.msra.mxu0 0.0
    %3173 = vmatprep.subr.mxu0 0.0
    %3174 = vmatpush1.msra.mxu0 0.0
    %3175 = vmatprep.subr.mxu0 0.0
    %3176 = vmatpush1.msra.mxu0 0.0
    %3177 = vmatprep.subr.mxu0 0.0
    %3178 = vmatpush1.msra.mxu0 0.0
    %3179 = vmatprep.subr.mxu0 0.0
    %3180 = vmatpush1.msra.mxu0 0.0
    %3181 = vmatprep.mubr.f32.mxu0 0.0
    %3182 = vmatmul.mubr.f32.gmra.mrb[0].mxu0 %v3115
    %v3183 = vpop.f32.mrb[0].mxu0
    %v3184 = vadd.f32 0.0, %v3183
    %v3185 = vpop.f32.mrb[0].mxu0
    %v3186 = vadd.f32 0.0, %v3185
    %3187 = vdwg.mxu0
    %3188 = vmatprep.subr.mxu0 %v2134
    %3189 = vmatpush1.msra.mxu0 %v2133
    %3190 = vmatprep.subr.mxu0 %v2138
    %3191 = vmatpush1.msra.mxu0 %v2137
    %3192 = vmatprep.subr.mxu0 %v2142
    %3193 = vmatpush1.msra.mxu0 %v2141
    %3194 = vmatprep.subr.mxu0 %v2146
    %3195 = vmatpush1.msra.mxu0 %v2145
    %3196 = vmatprep.subr.mxu0 %v2150
    %3197 = vmatpush1.msra.mxu0 %v2149
    %3198 = vmatprep.subr.mxu0 %v2154
    %3199 = vmatpush1.msra.mxu0 %v2153
    %3200 = vmatprep.subr.mxu0 %v2158
    %3201 = vmatpush1.msra.mxu0 %v2157
    %3202 = vmatprep.subr.mxu0 %v2162
    %3203 = vmatpush1.msra.mxu0 %v2161
    %3204 = vmatprep.subr.mxu0 %v2166
    %3205 = vmatpush1.msra.mxu0 %v2165
    %3206 = vmatprep.subr.mxu0 %v2170
    %3207 = vmatpush1.msra.mxu0 %v2169
    %3208 = vmatprep.subr.mxu0 %v2174
    %3209 = vmatpush1.msra.mxu0 %v2173
    %3210 = vmatprep.subr.mxu0 %v2178
    %3211 = vmatpush1.msra.mxu0 %v2177
    %3212 = vmatprep.subr.mxu0 %v2182
    %3213 = vmatpush1.msra.mxu0 %v2181
    %3214 = vmatprep.subr.mxu0 %v2186
    %3215 = vmatpush1.msra.mxu0 %v2185
    %3216 = vmatprep.subr.mxu0 %v2190
    %3217 = vmatpush1.msra.mxu0 %v2189
    %3218 = vmatprep.subr.mxu0 %v2194
    %3219 = vmatpush1.msra.mxu0 %v2193
    %3220 = vmatprep.subr.mxu0 0.0
    %3221 = vmatpush1.msra.mxu0 0.0
    %3222 = vmatprep.subr.mxu0 0.0
    %3223 = vmatpush1.msra.mxu0 0.0
    %3224 = vmatprep.subr.mxu0 0.0
    %3225 = vmatpush1.msra.mxu0 0.0
    %3226 = vmatprep.subr.mxu0 0.0
    %3227 = vmatpush1.msra.mxu0 0.0
    %3228 = vmatprep.subr.mxu0 0.0
    %3229 = vmatpush1.msra.mxu0 0.0
    %3230 = vmatprep.subr.mxu0 0.0
    %3231 = vmatpush1.msra.mxu0 0.0
    %3232 = vmatprep.subr.mxu0 0.0
    %3233 = vmatpush1.msra.mxu0 0.0
    %3234 = vmatprep.subr.mxu0 0.0
    %3235 = vmatpush1.msra.mxu0 0.0
    %3236 = vmatprep.subr.mxu0 0.0
    %3237 = vmatpush1.msra.mxu0 0.0
    %3238 = vmatprep.subr.mxu0 0.0
    %3239 = vmatpush1.msra.mxu0 0.0
    %3240 = vmatprep.subr.mxu0 0.0
    %3241 = vmatpush1.msra.mxu0 0.0
    %3242 = vmatprep.subr.mxu0 0.0
    %3243 = vmatpush1.msra.mxu0 0.0
    %3244 = vmatprep.subr.mxu0 0.0
    %3245 = vmatpush1.msra.mxu0 0.0
    %3246 = vmatprep.subr.mxu0 0.0
    %3247 = vmatpush1.msra.mxu0 0.0
    %3248 = vmatprep.subr.mxu0 0.0
    %3249 = vmatpush1.msra.mxu0 0.0
    %3250 = vmatprep.subr.mxu0 0.0
    %3251 = vmatpush1.msra.mxu0 0.0
    %3252 = vmatprep.mubr.f32.mxu0 0.0
    %3253 = vmatmul.mubr.f32.gmra.mrb[0].mxu0 %v3115
    %v3254 = vpop.f32.mrb[0].mxu0
    %v3255 = vadd.f32 0.0, %v3254
    %v3256 = vpop.f32.mrb[0].mxu0
    %v3257 = vadd.f32 0.0, %v3256
    %3258 = vdwg.mxu0
    %v3263 = vrot.slane %v3184, 3
    %v3264 = vrot.slane %v3186, 3
    %v3265 = vrot.slane %v3255, 3
    %v3266 = vrot.slane %v3257, 3
    %v3271 = vadd.f32 %v2056, %v3263
    %v3272 = vadd.f32 %v2058, %v3264
    %v3273 = vadd.f32 %v2127, %v3265
    %v3274 = vadd.f32 %v2129, %v3266
    %v3275 = vxor.u32 %v3271, 2147483648
    %v3276 = vmul.f32 %v3275, 1.442695
    %v3277 = vpow.pop %v3276
    %v3278 = vadd.f32 %v3277, 1.0
    %v3279 = vrcp.pop %v3278
    %v3280 = vmul.f32 1.0, %v3279
    %v3281 = vxor.u32 %v3272, 2147483648
    %v3282 = vmul.f32 %v3281, 1.442695
    %v3283 = vpow.pop %v3282
    %v3284 = vadd.f32 %v3283, 1.0
    %v3285 = vrcp.pop %v3284
    %v3286 = vmul.f32 1.0, %v3285
    %v3287 = vtanh.pop %v3273
    %v3288 = vxor.u32 %v3274, 2147483648
    %v3289 = vmul.f32 %v3288, 1.442695
    %v3290 = vpow.pop %v3289
    %v3291 = vadd.f32 %v3290, 1.0
    %v3292 = vrcp.pop %v3291
    %v3293 = vmul.f32 1.0, %v3292
    %v3295 = vrot.slane %v3111, 7
    %v3297 = vmul.f32 %v3286, %v3295
    %v3298 = vmul.f32 %v3280, %v3287
    %v3299 = vadd.f32 %v3297, %v3298
    %v3300 = vtanh.pop %v3299
    %v3301 = vmul.f32 %v3293, %v3300
    %v3303 = vrot.slane %v3301, 5
    %3305 = vmatprep.subr.mxu0 %v2132
    %3306 = vmatpush1.msra.mxu0 %v2131
    %3307 = vmatprep.subr.mxu0 %v2136
    %3308 = vmatpush1.msra.mxu0 %v2135
    %3309 = vmatprep.subr.mxu0 %v2140
    %3310 = vmatpush1.msra.mxu0 %v2139
    %3311 = vmatprep.subr.mxu0 %v2144
    %3312 = vmatpush1.msra.mxu0 %v2143
    %3313 = vmatprep.subr.mxu0 %v2148
    %3314 = vmatpush1.msra.mxu0 %v2147
    %3315 = vmatprep.subr.mxu0 %v2152
    %3316 = vmatpush1.msra.mxu0 %v2151
    %3317 = vmatprep.subr.mxu0 %v2156
    %3318 = vmatpush1.msra.mxu0 %v2155
    %3319 = vmatprep.subr.mxu0 %v2160
    %3320 = vmatpush1.msra.mxu0 %v2159
    %3321 = vmatprep.subr.mxu0 %v2164
    %3322 = vmatpush1.msra.mxu0 %v2163
    %3323 = vmatprep.subr.mxu0 %v2168
    %3324 = vmatpush1.msra.mxu0 %v2167
    %3325 = vmatprep.subr.mxu0 %v2172
    %3326 = vmatpush1.msra.mxu0 %v2171
    %3327 = vmatprep.subr.mxu0 %v2176
    %3328 = vmatpush1.msra.mxu0 %v2175
    %3329 = vmatprep.subr.mxu0 %v2180
    %3330 = vmatpush1.msra.mxu0 %v2179
    %3331 = vmatprep.subr.mxu0 %v2184
    %3332 = vmatpush1.msra.mxu0 %v2183
    %3333 = vmatprep.subr.mxu0 %v2188
    %3334 = vmatpush1.msra.mxu0 %v2187
    %3335 = vmatprep.subr.mxu0 %v2192
    %3336 = vmatpush1.msra.mxu0 %v2191
    %3337 = vmatprep.subr.mxu0 0.0
    %3338 = vmatpush1.msra.mxu0 0.0
    %3339 = vmatprep.subr.mxu0 0.0
    %3340 = vmatpush1.msra.mxu0 0.0
    %3341 = vmatprep.subr.mxu0 0.0
    %3342 = vmatpush1.msra.mxu0 0.0
    %3343 = vmatprep.subr.mxu0 0.0
    %3344 = vmatpush1.msra.mxu0 0.0
    %3345 = vmatprep.subr.mxu0 0.0
    %3346 = vmatpush1.msra.mxu0 0.0
    %3347 = vmatprep.subr.mxu0 0.0
    %3348 = vmatpush1.msra.mxu0 0.0
    %3349 = vmatprep.subr.mxu0 0.0
    %3350 = vmatpush1.msra.mxu0 0.0
    %3351 = vmatprep.subr.mxu0 0.0
    %3352 = vmatpush1.msra.mxu0 0.0
    %3353 = vmatprep.subr.mxu0 0.0
    %3354 = vmatpush1.msra.mxu0 0.0
    %3355 = vmatprep.subr.mxu0 0.0
    %3356 = vmatpush1.msra.mxu0 0.0
    %3357 = vmatprep.subr.mxu0 0.0
    %3358 = vmatpush1.msra.mxu0 0.0
    %3359 = vmatprep.subr.mxu0 0.0
    %3360 = vmatpush1.msra.mxu0 0.0
    %3361 = vmatprep.subr.mxu0 0.0
    %3362 = vmatpush1.msra.mxu0 0.0
    %3363 = vmatprep.subr.mxu0 0.0
    %3364 = vmatpush1.msra.mxu0 0.0
    %3365 = vmatprep.subr.mxu0 0.0
    %3366 = vmatpush1.msra.mxu0 0.0
    %3367 = vmatprep.subr.mxu0 0.0
    %3368 = vmatpush1.msra.mxu0 0.0
    %3369 = vmatprep.mubr.f32.mxu0 0.0
    %3370 = vmatmul.mubr.f32.gmra.mrb[0].mxu0 %v3303
    %v3371 = vpop.f32.mrb[0].mxu0
    %v3372 = vadd.f32 0.0, %v3371
    %v3373 = vpop.f32.mrb[0].mxu0
    %v3374 = vadd.f32 0.0, %v3373
    %3375 = vdwg.mxu0
    %3376 = vmatprep.subr.mxu0 %v2134
    %3377 = vmatpush1.msra.mxu0 %v2133
    %3378 = vmatprep.subr.mxu0 %v2138
    %3379 = vmatpush1.msra.mxu0 %v2137
    %3380 = vmatprep.subr.mxu0 %v2142
    %3381 = vmatpush1.msra.mxu0 %v2141
    %3382 = vmatprep.subr.mxu0 %v2146
    %3383 = vmatpush1.msra.mxu0 %v2145
    %3384 = vmatprep.subr.mxu0 %v2150
    %3385 = vmatpush1.msra.mxu0 %v2149
    %3386 = vmatprep.subr.mxu0 %v2154
    %3387 = vmatpush1.msra.mxu0 %v2153
    %3388 = vmatprep.subr.mxu0 %v2158
    %3389 = vmatpush1.msra.mxu0 %v2157
    %3390 = vmatprep.subr.mxu0 %v2162
    %3391 = vmatpush1.msra.mxu0 %v2161
    %3392 = vmatprep.subr.mxu0 %v2166
    %3393 = vmatpush1.msra.mxu0 %v2165
    %3394 = vmatprep.subr.mxu0 %v2170
    %3395 = vmatpush1.msra.mxu0 %v2169
    %3396 = vmatprep.subr.mxu0 %v2174
    %3397 = vmatpush1.msra.mxu0 %v2173
    %3398 = vmatprep.subr.mxu0 %v2178
    %3399 = vmatpush1.msra.mxu0 %v2177
    %3400 = vmatprep.subr.mxu0 %v2182
    %3401 = vmatpush1.msra.mxu0 %v2181
    %3402 = vmatprep.subr.mxu0 %v2186
    %3403 = vmatpush1.msra.mxu0 %v2185
    %3404 = vmatprep.subr.mxu0 %v2190
    %3405 = vmatpush1.msra.mxu0 %v2189
    %3406 = vmatprep.subr.mxu0 %v2194
    %3407 = vmatpush1.msra.mxu0 %v2193
    %3408 = vmatprep.subr.mxu0 0.0
    %3409 = vmatpush1.msra.mxu0 0.0
    %3410 = vmatprep.subr.mxu0 0.0
    %3411 = vmatpush1.msra.mxu0 0.0
    %3412 = vmatprep.subr.mxu0 0.0
    %3413 = vmatpush1.msra.mxu0 0.0
    %3414 = vmatprep.subr.mxu0 0.0
    %3415 = vmatpush1.msra.mxu0 0.0
    %3416 = vmatprep.subr.mxu0 0.0
    %3417 = vmatpush1.msra.mxu0 0.0
    %3418 = vmatprep.subr.mxu0 0.0
    %3419 = vmatpush1.msra.mxu0 0.0
    %3420 = vmatprep.subr.mxu0 0.0
    %3421 = vmatpush1.msra.mxu0 0.0
    %3422 = vmatprep.subr.mxu0 0.0
    %3423 = vmatpush1.msra.mxu0 0.0
    %3424 = vmatprep.subr.mxu0 0.0
    %3425 = vmatpush1.msra.mxu0 0.0
    %3426 = vmatprep.subr.mxu0 0.0
    %3427 = vmatpush1.msra.mxu0 0.0
    %3428 = vmatprep.subr.mxu0 0.0
    %3429 = vmatpush1.msra.mxu0 0.0
    %3430 = vmatprep.subr.mxu0 0.0
    %3431 = vmatpush1.msra.mxu0 0.0
    %3432 = vmatprep.subr.mxu0 0.0
    %3433 = vmatpush1.msra.mxu0 0.0
    %3434 = vmatprep.subr.mxu0 0.0
    %3435 = vmatpush1.msra.mxu0 0.0
    %3436 = vmatprep.subr.mxu0 0.0
    %3437 = vmatpush1.msra.mxu0 0.0
    %3438 = vmatprep.subr.mxu0 0.0
    %3439 = vmatpush1.msra.mxu0 0.0
    %3440 = vmatprep.mubr.f32.mxu0 0.0
    %3441 = vmatmul.mubr.f32.gmra.mrb[0].mxu0 %v3303
    %v3442 = vpop.f32.mrb[0].mxu0
    %v3443 = vadd.f32 0.0, %v3442
    %v3444 = vpop.f32.mrb[0].mxu0
    %v3445 = vadd.f32 0.0, %v3444
    %3446 = vdwg.mxu0
    %v3451 = vrot.slane %v3372, 2
    %v3452 = vrot.slane %v3374, 2
    %v3453 = vrot.slane %v3443, 2
    %v3454 = vrot.slane %v3445, 2
    %v3459 = vadd.f32 %v2056, %v3451
    %v3460 = vadd.f32 %v2058, %v3452
    %v3461 = vadd.f32 %v2127, %v3453
    %v3462 = vadd.f32 %v2129, %v3454
    %v3463 = vxor.u32 %v3459, 2147483648
    %v3464 = vmul.f32 %v3463, 1.442695
    %v3465 = vpow.pop %v3464
    %v3466 = vadd.f32 %v3465, 1.0
    %v3467 = vrcp.pop %v3466
    %v3468 = vmul.f32 1.0, %v3467
    %v3469 = vxor.u32 %v3460, 2147483648
    %v3470 = vmul.f32 %v3469, 1.442695
    %v3471 = vpow.pop %v3470
    %v3472 = vadd.f32 %v3471, 1.0
    %v3473 = vrcp.pop %v3472
    %v3474 = vmul.f32 1.0, %v3473
    %v3475 = vtanh.pop %v3461
    %v3476 = vxor.u32 %v3462, 2147483648
    %v3477 = vmul.f32 %v3476, 1.442695
    %v3478 = vpow.pop %v3477
    %v3479 = vadd.f32 %v3478, 1.0
    %v3480 = vrcp.pop %v3479
    %v3481 = vmul.f32 1.0, %v3480
    %v3483 = vrot.slane %v3299, 7
    %v3485 = vmul.f32 %v3474, %v3483
    %v3486 = vmul.f32 %v3468, %v3475
    %v3487 = vadd.f32 %v3485, %v3486
    %v3488 = vtanh.pop %v3487
    %v3489 = vmul.f32 %v3481, %v3488
    %v3491 = vrot.slane %v3489, 6
    %3493 = vmatprep.subr.mxu0 %v2132
    %3494 = vmatpush1.msra.mxu0 %v2131
    %3495 = vmatprep.subr.mxu0 %v2136
    %3496 = vmatpush1.msra.mxu0 %v2135
    %3497 = vmatprep.subr.mxu0 %v2140
    %3498 = vmatpush1.msra.mxu0 %v2139
    %3499 = vmatprep.subr.mxu0 %v2144
    %3500 = vmatpush1.msra.mxu0 %v2143
    %3501 = vmatprep.subr.mxu0 %v2148
    %3502 = vmatpush1.msra.mxu0 %v2147
    %3503 = vmatprep.subr.mxu0 %v2152
    %3504 = vmatpush1.msra.mxu0 %v2151
    %3505 = vmatprep.subr.mxu0 %v2156
    %3506 = vmatpush1.msra.mxu0 %v2155
    %3507 = vmatprep.subr.mxu0 %v2160
    %3508 = vmatpush1.msra.mxu0 %v2159
    %3509 = vmatprep.subr.mxu0 %v2164
    %3510 = vmatpush1.msra.mxu0 %v2163
    %3511 = vmatprep.subr.mxu0 %v2168
    %3512 = vmatpush1.msra.mxu0 %v2167
    %3513 = vmatprep.subr.mxu0 %v2172
    %3514 = vmatpush1.msra.mxu0 %v2171
    %3515 = vmatprep.subr.mxu0 %v2176
    %3516 = vmatpush1.msra.mxu0 %v2175
    %3517 = vmatprep.subr.mxu0 %v2180
    %3518 = vmatpush1.msra.mxu0 %v2179
    %3519 = vmatprep.subr.mxu0 %v2184
    %3520 = vmatpush1.msra.mxu0 %v2183
    %3521 = vmatprep.subr.mxu0 %v2188
    %3522 = vmatpush1.msra.mxu0 %v2187
    %3523 = vmatprep.subr.mxu0 %v2192
    %3524 = vmatpush1.msra.mxu0 %v2191
    %3525 = vmatprep.subr.mxu0 0.0
    %3526 = vmatpush1.msra.mxu0 0.0
    %3527 = vmatprep.subr.mxu0 0.0
    %3528 = vmatpush1.msra.mxu0 0.0
    %3529 = vmatprep.subr.mxu0 0.0
    %3530 = vmatpush1.msra.mxu0 0.0
    %3531 = vmatprep.subr.mxu0 0.0
    %3532 = vmatpush1.msra.mxu0 0.0
    %3533 = vmatprep.subr.mxu0 0.0
    %3534 = vmatpush1.msra.mxu0 0.0
    %3535 = vmatprep.subr.mxu0 0.0
    %3536 = vmatpush1.msra.mxu0 0.0
    %3537 = vmatprep.subr.mxu0 0.0
    %3538 = vmatpush1.msra.mxu0 0.0
    %3539 = vmatprep.subr.mxu0 0.0
    %3540 = vmatpush1.msra.mxu0 0.0
    %3541 = vmatprep.subr.mxu0 0.0
    %3542 = vmatpush1.msra.mxu0 0.0
    %3543 = vmatprep.subr.mxu0 0.0
    %3544 = vmatpush1.msra.mxu0 0.0
    %3545 = vmatprep.subr.mxu0 0.0
    %3546 = vmatpush1.msra.mxu0 0.0
    %3547 = vmatprep.subr.mxu0 0.0
    %3548 = vmatpush1.msra.mxu0 0.0
    %3549 = vmatprep.subr.mxu0 0.0
    %3550 = vmatpush1.msra.mxu0 0.0
    %3551 = vmatprep.subr.mxu0 0.0
    %3552 = vmatpush1.msra.mxu0 0.0
    %3553 = vmatprep.subr.mxu0 0.0
    %3554 = vmatpush1.msra.mxu0 0.0
    %3555 = vmatprep.subr.mxu0 0.0
    %3556 = vmatpush1.msra.mxu0 0.0
    %3557 = vmatprep.mubr.f32.mxu0 0.0
    %3558 = vmatmul.mubr.f32.gmra.mrb[0].mxu0 %v3491
    %v3559 = vpop.f32.mrb[0].mxu0
    %v3560 = vadd.f32 0.0, %v3559
    %v3561 = vpop.f32.mrb[0].mxu0
    %v3562 = vadd.f32 0.0, %v3561
    %3563 = vdwg.mxu0
    %3564 = vmatprep.subr.mxu0 %v2134
    %3565 = vmatpush1.msra.mxu0 %v2133
    %3566 = vmatprep.subr.mxu0 %v2138
    %3567 = vmatpush1.msra.mxu0 %v2137
    %3568 = vmatprep.subr.mxu0 %v2142
    %3569 = vmatpush1.msra.mxu0 %v2141
    %3570 = vmatprep.subr.mxu0 %v2146
    %3571 = vmatpush1.msra.mxu0 %v2145
    %3572 = vmatprep.subr.mxu0 %v2150
    %3573 = vmatpush1.msra.mxu0 %v2149
    %3574 = vmatprep.subr.mxu0 %v2154
    %3575 = vmatpush1.msra.mxu0 %v2153
    %3576 = vmatprep.subr.mxu0 %v2158
    %3577 = vmatpush1.msra.mxu0 %v2157
    %3578 = vmatprep.subr.mxu0 %v2162
    %3579 = vmatpush1.msra.mxu0 %v2161
    %3580 = vmatprep.subr.mxu0 %v2166
    %3581 = vmatpush1.msra.mxu0 %v2165
    %3582 = vmatprep.subr.mxu0 %v2170
    %3583 = vmatpush1.msra.mxu0 %v2169
    %3584 = vmatprep.subr.mxu0 %v2174
    %3585 = vmatpush1.msra.mxu0 %v2173
    %3586 = vmatprep.subr.mxu0 %v2178
    %3587 = vmatpush1.msra.mxu0 %v2177
    %3588 = vmatprep.subr.mxu0 %v2182
    %3589 = vmatpush1.msra.mxu0 %v2181
    %3590 = vmatprep.subr.mxu0 %v2186
    %3591 = vmatpush1.msra.mxu0 %v2185
    %3592 = vmatprep.subr.mxu0 %v2190
    %3593 = vmatpush1.msra.mxu0 %v2189
    %3594 = vmatprep.subr.mxu0 %v2194
    %3595 = vmatpush1.msra.mxu0 %v2193
    %3596 = vmatprep.subr.mxu0 0.0
    %3597 = vmatpush1.msra.mxu0 0.0
    %3598 = vmatprep.subr.mxu0 0.0
    %3599 = vmatpush1.msra.mxu0 0.0
    %3600 = vmatprep.subr.mxu0 0.0
    %3601 = vmatpush1.msra.mxu0 0.0
    %3602 = vmatprep.subr.mxu0 0.0
    %3603 = vmatpush1.msra.mxu0 0.0
    %3604 = vmatprep.subr.mxu0 0.0
    %3605 = vmatpush1.msra.mxu0 0.0
    %3606 = vmatprep.subr.mxu0 0.0
    %3607 = vmatpush1.msra.mxu0 0.0
    %3608 = vmatprep.subr.mxu0 0.0
    %3609 = vmatpush1.msra.mxu0 0.0
    %3610 = vmatprep.subr.mxu0 0.0
    %3611 = vmatpush1.msra.mxu0 0.0
    %3612 = vmatprep.subr.mxu0 0.0
    %3613 = vmatpush1.msra.mxu0 0.0
    %3614 = vmatprep.subr.mxu0 0.0
    %3615 = vmatpush1.msra.mxu0 0.0
    %3616 = vmatprep.subr.mxu0 0.0
    %3617 = vmatpush1.msra.mxu0 0.0
    %3618 = vmatprep.subr.mxu0 0.0
    %3619 = vmatpush1.msra.mxu0 0.0
    %3620 = vmatprep.subr.mxu0 0.0
    %3621 = vmatpush1.msra.mxu0 0.0
    %3622 = vmatprep.subr.mxu0 0.0
    %3623 = vmatpush1.msra.mxu0 0.0
    %3624 = vmatprep.subr.mxu0 0.0
    %3625 = vmatpush1.msra.mxu0 0.0
    %3626 = vmatprep.subr.mxu0 0.0
    %3627 = vmatpush1.msra.mxu0 0.0
    %3628 = vmatprep.mubr.f32.mxu0 0.0
    %3629 = vmatmul.mubr.f32.gmra.mrb[0].mxu0 %v3491
    %v3630 = vpop.f32.mrb[0].mxu0
    %v3631 = vadd.f32 0.0, %v3630
    %v3632 = vpop.f32.mrb[0].mxu0
    %v3633 = vadd.f32 0.0, %v3632
    %3634 = vdwg.mxu0
    %v3639 = vrot.slane %v3560, 1
    %v3640 = vrot.slane %v3562, 1
    %v3641 = vrot.slane %v3631, 1
    %v3642 = vrot.slane %v3633, 1
    %v3647 = vadd.f32 %v2056, %v3639
    %v3648 = vadd.f32 %v2058, %v3640
    %v3649 = vadd.f32 %v2127, %v3641
    %v3650 = vadd.f32 %v2129, %v3642
    %v3651 = vxor.u32 %v3647, 2147483648
    %v3652 = vmul.f32 %v3651, 1.442695
    %v3653 = vpow.pop %v3652
    %v3654 = vadd.f32 %v3653, 1.0
    %v3655 = vrcp.pop %v3654
    %v3656 = vmul.f32 1.0, %v3655
    %v3657 = vxor.u32 %v3648, 2147483648
    %v3658 = vmul.f32 %v3657, 1.442695
    %v3659 = vpow.pop %v3658
    %v3660 = vadd.f32 %v3659, 1.0
    %v3661 = vrcp.pop %v3660
    %v3662 = vmul.f32 1.0, %v3661
    %v3663 = vtanh.pop %v3649
    %v3664 = vxor.u32 %v3650, 2147483648
    %v3665 = vmul.f32 %v3664, 1.442695
    %v3666 = vpow.pop %v3665
    %v3667 = vadd.f32 %v3666, 1.0
    %v3668 = vrcp.pop %v3667
    %v3669 = vmul.f32 1.0, %v3668
    %v3671 = vrot.slane %v3487, 7
    %v3673 = vmul.f32 %v3662, %v3671
    %v3674 = vmul.f32 %v3656, %v3663
    %v3675 = vadd.f32 %v3673, %v3674
    %v3676 = vtanh.pop %v3675
    %v3677 = vmul.f32 %v3669, %v3676
    %v3678 = vld [vmem:[#allocation8] sm:$0xff]
    %v3679 = vld [vmem:[#allocation8 + $0x8] sm:$0xff]
    %v3680 = vld [vmem:[#allocation8 + $0x10] sm:$0xff]
    %v3681 = vld [vmem:[#allocation8 + $0x18] sm:$0xff]
    %v3682 = vld [vmem:[#allocation8 + $0x20] sm:$0xff]
    %v3683 = vld [vmem:[#allocation8 + $0x28] sm:$0xff]
    %v3684 = vld [vmem:[#allocation8 + $0x30] sm:$0xff]
    %v3685 = vld [vmem:[#allocation8 + $0x38] sm:$0xff]
    %v3686 = vld [vmem:[#allocation8 + $0x40] sm:$0xff]
    %v3687 = vld [vmem:[#allocation8 + $0x48] sm:$0xff]
    %v3688 = vld [vmem:[#allocation8 + $0x50] sm:$0xff]
    %v3689 = vld [vmem:[#allocation8 + $0x58] sm:$0xff]
    %v3690 = vld [vmem:[#allocation8 + $0x60] sm:$0xff]
    %v3691 = vld [vmem:[#allocation8 + $0x68] sm:$0xff]
    %v3692 = vld [vmem:[#allocation8 + $0x70] sm:$0xff]
    %v3693 = vld [vmem:[#allocation8 + $0x78] sm:$0xff]
    %v3694 = vld [vmem:[#allocation8 + $0x80] sm:$0xff]
    %v3695 = vld [vmem:[#allocation8 + $0x88] sm:$0xff]
    %v3696 = vld [vmem:[#allocation8 + $0x90] sm:$0xff]
    %v3697 = vld [vmem:[#allocation8 + $0x98] sm:$0xff]
    %v3698 = vld [vmem:[#allocation8 + $0xa0] sm:$0xff]
    %v3699 = vld [vmem:[#allocation8 + $0xa8] sm:$0xff]
    %v3700 = vld [vmem:[#allocation8 + $0xb0] sm:$0xff]
    %v3701 = vld [vmem:[#allocation8 + $0xb8] sm:$0xff]
    %v3702 = vld [vmem:[#allocation8 + $0xc0] sm:$0xff]
    %v3703 = vld [vmem:[#allocation8 + $0xc8] sm:$0xff]
    %v3704 = vld [vmem:[#allocation8 + $0xd0] sm:$0xff]
    %v3705 = vld [vmem:[#allocation8 + $0xd8] sm:$0xff]
    %v3706 = vld [vmem:[#allocation8 + $0xe0] sm:$0xff]
    %v3707 = vld [vmem:[#allocation8 + $0xe8] sm:$0xff]
    %v3708 = vld [vmem:[#allocation8 + $0xf0] sm:$0xff]
    %v3709 = vld [vmem:[#allocation8 + $0xf8] sm:$0xff]
    %v3710 = vld [vmem:[#allocation8 + $0x100] sm:$0xff]
    %v3711 = vld [vmem:[#allocation8 + $0x108] sm:$0xff]
    %v3712 = vld [vmem:[#allocation8 + $0x110] sm:$0xff]
    %v3713 = vld [vmem:[#allocation8 + $0x118] sm:$0xff]
    %v3714 = vld [vmem:[#allocation8 + $0x120] sm:$0xff]
    %v3715 = vld [vmem:[#allocation8 + $0x128] sm:$0xff]
    %v3716 = vld [vmem:[#allocation8 + $0x130] sm:$0xff]
    %v3717 = vld [vmem:[#allocation8 + $0x138] sm:$0xff]
    %v3718 = vld [vmem:[#allocation8 + $0x140] sm:$0xff]
    %v3719 = vld [vmem:[#allocation8 + $0x148] sm:$0xff]
    %v3720 = vld [vmem:[#allocation8 + $0x150] sm:$0xff]
    %v3721 = vld [vmem:[#allocation8 + $0x158] sm:$0xff]
    %v3722 = vld [vmem:[#allocation8 + $0x160] sm:$0xff]
    %v3723 = vld [vmem:[#allocation8 + $0x168] sm:$0xff]
    %v3724 = vld [vmem:[#allocation8 + $0x170] sm:$0xff]
    %v3725 = vld [vmem:[#allocation8 + $0x178] sm:$0xff]
    %v3726 = vld [vmem:[#allocation8 + $0x180] sm:$0xff]
    %v3727 = vld [vmem:[#allocation8 + $0x188] sm:$0xff]
    %v3728 = vld [vmem:[#allocation8 + $0x190] sm:$0xff]
    %v3729 = vld [vmem:[#allocation8 + $0x198] sm:$0xff]
    %v3730 = vld [vmem:[#allocation8 + $0x1a0] sm:$0xff]
    %v3731 = vld [vmem:[#allocation8 + $0x1a8] sm:$0xff]
    %v3732 = vld [vmem:[#allocation8 + $0x1b0] sm:$0xff]
    %v3733 = vld [vmem:[#allocation8 + $0x1b8] sm:$0xff]
    %v3734 = vld [vmem:[#allocation8 + $0x1c0] sm:$0xff]
    %v3735 = vld [vmem:[#allocation8 + $0x1c8] sm:$0xff]
    %v3736 = vld [vmem:[#allocation8 + $0x1d0] sm:$0xff]
    %v3737 = vld [vmem:[#allocation8 + $0x1d8] sm:$0xff]
    %v3738 = vld [vmem:[#allocation8 + $0x1e0] sm:$0xff]
    %v3739 = vld [vmem:[#allocation8 + $0x1e8] sm:$0xff]
    %v3740 = vld [vmem:[#allocation8 + $0x1f0] sm:$0xff]
    %v3741 = vld [vmem:[#allocation8 + $0x1f8] sm:$0xff]
    %v3742 = vld [vmem:[%s9] sm:$0xf]
    %v3744 = vrot.slane %v3677, 7
    %v3747 = vlaneseq
    %v3748 = vshrl.u32 %v3747, 7
    %v3749 = vsub.s32 0, %v3748
    %v3750 = vrot.slane %v3742, %v3749
    %v3751 = vlaneseq
    %v3752 = vshrl.u32 %v3751, 7
    %v3753 = vsub.s32 1, %v3752
    %v3754 = vrot.slane %v3742, %v3753
    %v3755 = vlaneseq
    %v3756 = vshrl.u32 %v3755, 7
    %v3757 = vsub.s32 2, %v3756
    %v3758 = vrot.slane %v3742, %v3757
    %v3759 = vlaneseq
    %v3760 = vshrl.u32 %v3759, 7
    %v3761 = vsub.s32 3, %v3760
    %v3762 = vrot.slane %v3742, %v3761
    %3767 = vmatprep.subr.mxu0 %v3679
    %3768 = vmatpush1.msra.mxu0 %v3678
    %3769 = vmatprep.subr.mxu0 %v3683
    %3770 = vmatpush1.msra.mxu0 %v3682
    %3771 = vmatprep.subr.mxu0 %v3687
    %3772 = vmatpush1.msra.mxu0 %v3686
    %3773 = vmatprep.subr.mxu0 %v3691
    %3774 = vmatpush1.msra.mxu0 %v3690
    %3775 = vmatprep.subr.mxu0 %v3695
    %3776 = vmatpush1.msra.mxu0 %v3694
    %3777 = vmatprep.subr.mxu0 %v3699
    %3778 = vmatpush1.msra.mxu0 %v3698
    %3779 = vmatprep.subr.mxu0 %v3703
    %3780 = vmatpush1.msra.mxu0 %v3702
    %3781 = vmatprep.subr.mxu0 %v3707
    %3782 = vmatpush1.msra.mxu0 %v3706
    %3783 = vmatprep.subr.mxu0 %v3711
    %3784 = vmatpush1.msra.mxu0 %v3710
    %3785 = vmatprep.subr.mxu0 %v3715
    %3786 = vmatpush1.msra.mxu0 %v3714
    %3787 = vmatprep.subr.mxu0 %v3719
    %3788 = vmatpush1.msra.mxu0 %v3718
    %3789 = vmatprep.subr.mxu0 %v3723
    %3790 = vmatpush1.msra.mxu0 %v3722
    %3791 = vmatprep.subr.mxu0 %v3727
    %3792 = vmatpush1.msra.mxu0 %v3726
    %3793 = vmatprep.subr.mxu0 %v3731
    %3794 = vmatpush1.msra.mxu0 %v3730
    %3795 = vmatprep.subr.mxu0 %v3735
    %3796 = vmatpush1.msra.mxu0 %v3734
    %3797 = vmatprep.subr.mxu0 %v3739
    %3798 = vmatpush1.msra.mxu0 %v3738
    %3799 = vmatprep.subr.mxu0 0.0
    %3800 = vmatpush1.msra.mxu0 0.0
    %3801 = vmatprep.subr.mxu0 0.0
    %3802 = vmatpush1.msra.mxu0 0.0
    %3803 = vmatprep.subr.mxu0 0.0
    %3804 = vmatpush1.msra.mxu0 0.0
    %3805 = vmatprep.subr.mxu0 0.0
    %3806 = vmatpush1.msra.mxu0 0.0
    %3807 = vmatprep.subr.mxu0 0.0
    %3808 = vmatpush1.msra.mxu0 0.0
    %3809 = vmatprep.subr.mxu0 0.0
    %3810 = vmatpush1.msra.mxu0 0.0
    %3811 = vmatprep.subr.mxu0 0.0
    %3812 = vmatpush1.msra.mxu0 0.0
    %3813 = vmatprep.subr.mxu0 0.0
    %3814 = vmatpush1.msra.mxu0 0.0
    %3815 = vmatprep.subr.mxu0 0.0
    %3816 = vmatpush1.msra.mxu0 0.0
    %3817 = vmatprep.subr.mxu0 0.0
    %3818 = vmatpush1.msra.mxu0 0.0
    %3819 = vmatprep.subr.mxu0 0.0
    %3820 = vmatpush1.msra.mxu0 0.0
    %3821 = vmatprep.subr.mxu0 0.0
    %3822 = vmatpush1.msra.mxu0 0.0
    %3823 = vmatprep.subr.mxu0 0.0
    %3824 = vmatpush1.msra.mxu0 0.0
    %3825 = vmatprep.subr.mxu0 0.0
    %3826 = vmatpush1.msra.mxu0 0.0
    %3827 = vmatprep.subr.mxu0 0.0
    %3828 = vmatpush1.msra.mxu0 0.0
    %3829 = vmatprep.subr.mxu0 0.0
    %3830 = vmatpush1.msra.mxu0 0.0
    %3831 = vmatprep.mubr.f32.mxu0 0.0
    %3832 = vmatmul.mubr.f32.gmra.mrb[0].mxu0 %v3744
    %v3833 = vpop.f32.mrb[0].mxu0
    %v3834 = vadd.f32 %v3750, %v3833
    %v3835 = vpop.f32.mrb[0].mxu0
    %v3836 = vadd.f32 %v3754, %v3835
    %3837 = vdwg.mxu0
    %3838 = vmatprep.subr.mxu0 %v3681
    %3839 = vmatpush1.msra.mxu0 %v3680
    %3840 = vmatprep.subr.mxu0 %v3685
    %3841 = vmatpush1.msra.mxu0 %v3684
    %3842 = vmatprep.subr.mxu0 %v3689
    %3843 = vmatpush1.msra.mxu0 %v3688
    %3844 = vmatprep.subr.mxu0 %v3693
    %3845 = vmatpush1.msra.mxu0 %v3692
    %3846 = vmatprep.subr.mxu0 %v3697
    %3847 = vmatpush1.msra.mxu0 %v3696
    %3848 = vmatprep.subr.mxu0 %v3701
    %3849 = vmatpush1.msra.mxu0 %v3700
    %3850 = vmatprep.subr.mxu0 %v3705
    %3851 = vmatpush1.msra.mxu0 %v3704
    %3852 = vmatprep.subr.mxu0 %v3709
    %3853 = vmatpush1.msra.mxu0 %v3708
    %3854 = vmatprep.subr.mxu0 %v3713
    %3855 = vmatpush1.msra.mxu0 %v3712
    %3856 = vmatprep.subr.mxu0 %v3717
    %3857 = vmatpush1.msra.mxu0 %v3716
    %3858 = vmatprep.subr.mxu0 %v3721
    %3859 = vmatpush1.msra.mxu0 %v3720
    %3860 = vmatprep.subr.mxu0 %v3725
    %3861 = vmatpush1.msra.mxu0 %v3724
    %3862 = vmatprep.subr.mxu0 %v3729
    %3863 = vmatpush1.msra.mxu0 %v3728
    %3864 = vmatprep.subr.mxu0 %v3733
    %3865 = vmatpush1.msra.mxu0 %v3732
    %3866 = vmatprep.subr.mxu0 %v3737
    %3867 = vmatpush1.msra.mxu0 %v3736
    %3868 = vmatprep.subr.mxu0 %v3741
    %3869 = vmatpush1.msra.mxu0 %v3740
    %3870 = vmatprep.subr.mxu0 0.0
    %3871 = vmatpush1.msra.mxu0 0.0
    %3872 = vmatprep.subr.mxu0 0.0
    %3873 = vmatpush1.msra.mxu0 0.0
    %3874 = vmatprep.subr.mxu0 0.0
    %3875 = vmatpush1.msra.mxu0 0.0
    %3876 = vmatprep.subr.mxu0 0.0
    %3877 = vmatpush1.msra.mxu0 0.0
    %3878 = vmatprep.subr.mxu0 0.0
    %3879 = vmatpush1.msra.mxu0 0.0
    %3880 = vmatprep.subr.mxu0 0.0
    %3881 = vmatpush1.msra.mxu0 0.0
    %3882 = vmatprep.subr.mxu0 0.0
    %3883 = vmatpush1.msra.mxu0 0.0
    %3884 = vmatprep.subr.mxu0 0.0
    %3885 = vmatpush1.msra.mxu0 0.0
    %3886 = vmatprep.subr.mxu0 0.0
    %3887 = vmatpush1.msra.mxu0 0.0
    %3888 = vmatprep.subr.mxu0 0.0
    %3889 = vmatpush1.msra.mxu0 0.0
    %3890 = vmatprep.subr.mxu0 0.0
    %3891 = vmatpush1.msra.mxu0 0.0
    %3892 = vmatprep.subr.mxu0 0.0
    %3893 = vmatpush1.msra.mxu0 0.0
    %3894 = vmatprep.subr.mxu0 0.0
    %3895 = vmatpush1.msra.mxu0 0.0
    %3896 = vmatprep.subr.mxu0 0.0
    %3897 = vmatpush1.msra.mxu0 0.0
    %3898 = vmatprep.subr.mxu0 0.0
    %3899 = vmatpush1.msra.mxu0 0.0
    %3900 = vmatprep.subr.mxu0 0.0
    %3901 = vmatpush1.msra.mxu0 0.0
    %3902 = vmatprep.mubr.f32.mxu0 0.0
    %3903 = vmatmul.mubr.f32.gmra.mrb[0].mxu0 %v3744
    %v3904 = vpop.f32.mrb[0].mxu0
    %v3905 = vadd.f32 %v3758, %v3904
    %v3906 = vpop.f32.mrb[0].mxu0
    %v3907 = vadd.f32 %v3762, %v3906
    %3908 = vdwg.mxu0
    %v3909 = vld [vmem:[#allocation10] sm:$0xff]
    %v3910 = vld [vmem:[#allocation10 + $0x8] sm:$0xff]
    %v3911 = vld [vmem:[#allocation10 + $0x10] sm:$0xff]
    %v3912 = vld [vmem:[#allocation10 + $0x18] sm:$0xff]
    %v3913 = vld [vmem:[#allocation10 + $0x20] sm:$0xff]
    %v3914 = vld [vmem:[#allocation10 + $0x28] sm:$0xff]
    %v3915 = vld [vmem:[#allocation10 + $0x30] sm:$0xff]
    %v3916 = vld [vmem:[#allocation10 + $0x38] sm:$0xff]
    %v3917 = vld [vmem:[#allocation10 + $0x40] sm:$0xff]
    %v3918 = vld [vmem:[#allocation10 + $0x48] sm:$0xff]
    %v3919 = vld [vmem:[#allocation10 + $0x50] sm:$0xff]
    %v3920 = vld [vmem:[#allocation10 + $0x58] sm:$0xff]
    %v3921 = vld [vmem:[#allocation10 + $0x60] sm:$0xff]
    %v3922 = vld [vmem:[#allocation10 + $0x68] sm:$0xff]
    %v3923 = vld [vmem:[#allocation10 + $0x70] sm:$0xff]
    %v3924 = vld [vmem:[#allocation10 + $0x78] sm:$0xff]
    %v3925 = vld [vmem:[#allocation10 + $0x80] sm:$0xff]
    %v3926 = vld [vmem:[#allocation10 + $0x88] sm:$0xff]
    %v3927 = vld [vmem:[#allocation10 + $0x90] sm:$0xff]
    %v3928 = vld [vmem:[#allocation10 + $0x98] sm:$0xff]
    %v3929 = vld [vmem:[#allocation10 + $0xa0] sm:$0xff]
    %v3930 = vld [vmem:[#allocation10 + $0xa8] sm:$0xff]
    %v3931 = vld [vmem:[#allocation10 + $0xb0] sm:$0xff]
    %v3932 = vld [vmem:[#allocation10 + $0xb8] sm:$0xff]
    %v3933 = vld [vmem:[#allocation10 + $0xc0] sm:$0xff]
    %v3934 = vld [vmem:[#allocation10 + $0xc8] sm:$0xff]
    %v3935 = vld [vmem:[#allocation10 + $0xd0] sm:$0xff]
    %v3936 = vld [vmem:[#allocation10 + $0xd8] sm:$0xff]
    %v3937 = vld [vmem:[#allocation10 + $0xe0] sm:$0xff]
    %v3938 = vld [vmem:[#allocation10 + $0xe8] sm:$0xff]
    %v3939 = vld [vmem:[#allocation10 + $0xf0] sm:$0xff]
    %v3940 = vld [vmem:[#allocation10 + $0xf8] sm:$0xff]
    %v3941 = vld [vmem:[#allocation10 + $0x100] sm:$0xff]
    %v3942 = vld [vmem:[#allocation10 + $0x108] sm:$0xff]
    %v3943 = vld [vmem:[#allocation10 + $0x110] sm:$0xff]
    %v3944 = vld [vmem:[#allocation10 + $0x118] sm:$0xff]
    %v3945 = vld [vmem:[#allocation10 + $0x120] sm:$0xff]
    %v3946 = vld [vmem:[#allocation10 + $0x128] sm:$0xff]
    %v3947 = vld [vmem:[#allocation10 + $0x130] sm:$0xff]
    %v3948 = vld [vmem:[#allocation10 + $0x138] sm:$0xff]
    %v3949 = vld [vmem:[#allocation10 + $0x140] sm:$0xff]
    %v3950 = vld [vmem:[#allocation10 + $0x148] sm:$0xff]
    %v3951 = vld [vmem:[#allocation10 + $0x150] sm:$0xff]
    %v3952 = vld [vmem:[#allocation10 + $0x158] sm:$0xff]
    %v3953 = vld [vmem:[#allocation10 + $0x160] sm:$0xff]
    %v3954 = vld [vmem:[#allocation10 + $0x168] sm:$0xff]
    %v3955 = vld [vmem:[#allocation10 + $0x170] sm:$0xff]
    %v3956 = vld [vmem:[#allocation10 + $0x178] sm:$0xff]
    %v3957 = vld [vmem:[#allocation10 + $0x180] sm:$0xff]
    %v3958 = vld [vmem:[#allocation10 + $0x188] sm:$0xff]
    %v3959 = vld [vmem:[#allocation10 + $0x190] sm:$0xff]
    %v3960 = vld [vmem:[#allocation10 + $0x198] sm:$0xff]
    %v3961 = vld [vmem:[#allocation10 + $0x1a0] sm:$0xff]
    %v3962 = vld [vmem:[#allocation10 + $0x1a8] sm:$0xff]
    %v3963 = vld [vmem:[#allocation10 + $0x1b0] sm:$0xff]
    %v3964 = vld [vmem:[#allocation10 + $0x1b8] sm:$0xff]
    %v3965 = vld [vmem:[#allocation10 + $0x1c0] sm:$0xff]
    %v3966 = vld [vmem:[#allocation10 + $0x1c8] sm:$0xff]
    %v3967 = vld [vmem:[#allocation10 + $0x1d0] sm:$0xff]
    %v3968 = vld [vmem:[#allocation10 + $0x1d8] sm:$0xff]
    %v3969 = vld [vmem:[#allocation10 + $0x1e0] sm:$0xff]
    %v3970 = vld [vmem:[#allocation10 + $0x1e8] sm:$0xff]
    %v3971 = vld [vmem:[#allocation10 + $0x1f0] sm:$0xff]
    %v3972 = vld [vmem:[#allocation10 + $0x1f8] sm:$0xff]
    %3973 = vmatprep.subr.mxu0 %v3910
    %3974 = vmatpush1.msra.mxu0 %v3909
    %3975 = vmatprep.subr.mxu0 %v3914
    %3976 = vmatpush1.msra.mxu0 %v3913
    %3977 = vmatprep.subr.mxu0 %v3918
    %3978 = vmatpush1.msra.mxu0 %v3917
    %3979 = vmatprep.subr.mxu0 %v3922
    %3980 = vmatpush1.msra.mxu0 %v3921
    %3981 = vmatprep.subr.mxu0 %v3926
    %3982 = vmatpush1.msra.mxu0 %v3925
    %3983 = vmatprep.subr.mxu0 %v3930
    %3984 = vmatpush1.msra.mxu0 %v3929
    %3985 = vmatprep.subr.mxu0 %v3934
    %3986 = vmatpush1.msra.mxu0 %v3933
    %3987 = vmatprep.subr.mxu0 %v3938
    %3988 = vmatpush1.msra.mxu0 %v3937
    %3989 = vmatprep.subr.mxu0 %v3942
    %3990 = vmatpush1.msra.mxu0 %v3941
    %3991 = vmatprep.subr.mxu0 %v3946
    %3992 = vmatpush1.msra.mxu0 %v3945
    %3993 = vmatprep.subr.mxu0 %v3950
    %3994 = vmatpush1.msra.mxu0 %v3949
    %3995 = vmatprep.subr.mxu0 %v3954
    %3996 = vmatpush1.msra.mxu0 %v3953
    %3997 = vmatprep.subr.mxu0 %v3958
    %3998 = vmatpush1.msra.mxu0 %v3957
    %3999 = vmatprep.subr.mxu0 %v3962
    %4000 = vmatpush1.msra.mxu0 %v3961
    %4001 = vmatprep.subr.mxu0 %v3966
    %4002 = vmatpush1.msra.mxu0 %v3965
    %4003 = vmatprep.subr.mxu0 %v3970
    %4004 = vmatpush1.msra.mxu0 %v3969
    %4005 = vmatprep.subr.mxu0 0.0
    %4006 = vmatpush1.msra.mxu0 0.0
    %4007 = vmatprep.subr.mxu0 0.0
    %4008 = vmatpush1.msra.mxu0 0.0
    %4009 = vmatprep.subr.mxu0 0.0
    %4010 = vmatpush1.msra.mxu0 0.0
    %4011 = vmatprep.subr.mxu0 0.0
    %4012 = vmatpush1.msra.mxu0 0.0
    %4013 = vmatprep.subr.mxu0 0.0
    %4014 = vmatpush1.msra.mxu0 0.0
    %4015 = vmatprep.subr.mxu0 0.0
    %4016 = vmatpush1.msra.mxu0 0.0
    %4017 = vmatprep.subr.mxu0 0.0
    %4018 = vmatpush1.msra.mxu0 0.0
    %4019 = vmatprep.subr.mxu0 0.0
    %4020 = vmatpush1.msra.mxu0 0.0
    %4021 = vmatprep.subr.mxu0 0.0
    %4022 = vmatpush1.msra.mxu0 0.0
    %4023 = vmatprep.subr.mxu0 0.0
    %4024 = vmatpush1.msra.mxu0 0.0
    %4025 = vmatprep.subr.mxu0 0.0
    %4026 = vmatpush1.msra.mxu0 0.0
    %4027 = vmatprep.subr.mxu0 0.0
    %4028 = vmatpush1.msra.mxu0 0.0
    %4029 = vmatprep.subr.mxu0 0.0
    %4030 = vmatpush1.msra.mxu0 0.0
    %4031 = vmatprep.subr.mxu0 0.0
    %4032 = vmatpush1.msra.mxu0 0.0
    %4033 = vmatprep.subr.mxu0 0.0
    %4034 = vmatpush1.msra.mxu0 0.0
    %4035 = vmatprep.subr.mxu0 0.0
    %4036 = vmatpush1.msra.mxu0 0.0
    %4037 = vmatprep.mubr.f32.mxu0 0.0
    %4038 = vmatmul.mubr.f32.gmra.mrb[0].mxu0 0.0
    %v4039 = vpop.f32.mrb[0].mxu0
    %v4040 = vadd.f32 0.0, %v4039
    %v4041 = vpop.f32.mrb[0].mxu0
    %v4042 = vadd.f32 0.0, %v4041
    %4043 = vdwg.mxu0
    %4044 = vmatprep.subr.mxu0 %v3912
    %4045 = vmatpush1.msra.mxu0 %v3911
    %4046 = vmatprep.subr.mxu0 %v3916
    %4047 = vmatpush1.msra.mxu0 %v3915
    %4048 = vmatprep.subr.mxu0 %v3920
    %4049 = vmatpush1.msra.mxu0 %v3919
    %4050 = vmatprep.subr.mxu0 %v3924
    %4051 = vmatpush1.msra.mxu0 %v3923
    %4052 = vmatprep.subr.mxu0 %v3928
    %4053 = vmatpush1.msra.mxu0 %v3927
    %4054 = vmatprep.subr.mxu0 %v3932
    %4055 = vmatpush1.msra.mxu0 %v3931
    %4056 = vmatprep.subr.mxu0 %v3936
    %4057 = vmatpush1.msra.mxu0 %v3935
    %4058 = vmatprep.subr.mxu0 %v3940
    %4059 = vmatpush1.msra.mxu0 %v3939
    %4060 = vmatprep.subr.mxu0 %v3944
    %4061 = vmatpush1.msra.mxu0 %v3943
    %4062 = vmatprep.subr.mxu0 %v3948
    %4063 = vmatpush1.msra.mxu0 %v3947
    %4064 = vmatprep.subr.mxu0 %v3952
    %4065 = vmatpush1.msra.mxu0 %v3951
    %4066 = vmatprep.subr.mxu0 %v3956
    %4067 = vmatpush1.msra.mxu0 %v3955
    %4068 = vmatprep.subr.mxu0 %v3960
    %4069 = vmatpush1.msra.mxu0 %v3959
    %4070 = vmatprep.subr.mxu0 %v3964
    %4071 = vmatpush1.msra.mxu0 %v3963
    %4072 = vmatprep.subr.mxu0 %v3968
    %4073 = vmatpush1.msra.mxu0 %v3967
    %4074 = vmatprep.subr.mxu0 %v3972
    %4075 = vmatpush1.msra.mxu0 %v3971
    %4076 = vmatprep.subr.mxu0 0.0
    %4077 = vmatpush1.msra.mxu0 0.0
    %4078 = vmatprep.subr.mxu0 0.0
    %4079 = vmatpush1.msra.mxu0 0.0
    %4080 = vmatprep.subr.mxu0 0.0
    %4081 = vmatpush1.msra.mxu0 0.0
    %4082 = vmatprep.subr.mxu0 0.0
    %4083 = vmatpush1.msra.mxu0 0.0
    %4084 = vmatprep.subr.mxu0 0.0
    %4085 = vmatpush1.msra.mxu0 0.0
    %4086 = vmatprep.subr.mxu0 0.0
    %4087 = vmatpush1.msra.mxu0 0.0
    %4088 = vmatprep.subr.mxu0 0.0
    %4089 = vmatpush1.msra.mxu0 0.0
    %4090 = vmatprep.subr.mxu0 0.0
    %4091 = vmatpush1.msra.mxu0 0.0
    %4092 = vmatprep.subr.mxu0 0.0
    %4093 = vmatpush1.msra.mxu0 0.0
    %4094 = vmatprep.subr.mxu0 0.0
    %4095 = vmatpush1.msra.mxu0 0.0
    %4096 = vmatprep.subr.mxu0 0.0
    %4097 = vmatpush1.msra.mxu0 0.0
    %4098 = vmatprep.subr.mxu0 0.0
    %4099 = vmatpush1.msra.mxu0 0.0
    %4100 = vmatprep.subr.mxu0 0.0
    %4101 = vmatpush1.msra.mxu0 0.0
    %4102 = vmatprep.subr.mxu0 0.0
    %4103 = vmatpush1.msra.mxu0 0.0
    %4104 = vmatprep.subr.mxu0 0.0
    %4105 = vmatpush1.msra.mxu0 0.0
    %4106 = vmatprep.subr.mxu0 0.0
    %4107 = vmatpush1.msra.mxu0 0.0
    %4108 = vmatprep.mubr.f32.mxu0 0.0
    %4109 = vmatmul.mubr.f32.gmra.mrb[0].mxu0 0.0
    %v4110 = vpop.f32.mrb[0].mxu0
    %v4111 = vadd.f32 0.0, %v4110
    %v4112 = vpop.f32.mrb[0].mxu0
    %v4113 = vadd.f32 0.0, %v4112
    %4114 = vdwg.mxu0
    %v4115 = vadd.f32 %v3834, %v4040
    %v4116 = vadd.f32 %v3836, %v4042
    %v4117 = vadd.f32 %v3905, %v4111
    %v4118 = vadd.f32 %v3907, %v4113
    %v4119 = vxor.u32 %v4115, 2147483648
    %v4120 = vmul.f32 %v4119, 1.442695
    %v4121 = vpow.pop %v4120
    %v4122 = vadd.f32 %v4121, 1.0
    %v4123 = vrcp.pop %v4122
    %v4124 = vmul.f32 1.0, %v4123
    %v4125 = vxor.u32 %v4116, 2147483648
    %v4126 = vmul.f32 %v4125, 1.442695
    %v4127 = vpow.pop %v4126
    %v4128 = vadd.f32 %v4127, 1.0
    %v4129 = vrcp.pop %v4128
    %v4130 = vmul.f32 1.0, %v4129
    %v4131 = vtanh.pop %v4117
    %v4132 = vxor.u32 %v4118, 2147483648
    %v4133 = vmul.f32 %v4132, 1.442695
    %v4134 = vpow.pop %v4133
    %v4135 = vadd.f32 %v4134, 1.0
    %v4136 = vrcp.pop %v4135
    %v4137 = vmul.f32 1.0, %v4136
    %v4138 = vmul.f32 %v4130, 0.0
    %v4139 = vmul.f32 %v4124, %v4131
    %v4140 = vadd.f32 %v4138, %v4139
    %v4141 = vtanh.pop %v4140
    %v4142 = vmul.f32 %v4137, %v4141
    %4143 = vmatprep.subr.mxu0 %v3910
    %4144 = vmatpush1.msra.mxu0 %v3909
    %4145 = vmatprep.subr.mxu0 %v3914
    %4146 = vmatpush1.msra.mxu0 %v3913
    %4147 = vmatprep.subr.mxu0 %v3918
    %4148 = vmatpush1.msra.mxu0 %v3917
    %4149 = vmatprep.subr.mxu0 %v3922
    %4150 = vmatpush1.msra.mxu0 %v3921
    %4151 = vmatprep.subr.mxu0 %v3926
    %4152 = vmatpush1.msra.mxu0 %v3925
    %4153 = vmatprep.subr.mxu0 %v3930
    %4154 = vmatpush1.msra.mxu0 %v3929
    %4155 = vmatprep.subr.mxu0 %v3934
    %4156 = vmatpush1.msra.mxu0 %v3933
    %4157 = vmatprep.subr.mxu0 %v3938
    %4158 = vmatpush1.msra.mxu0 %v3937
    %4159 = vmatprep.subr.mxu0 %v3942
    %4160 = vmatpush1.msra.mxu0 %v3941
    %4161 = vmatprep.subr.mxu0 %v3946
    %4162 = vmatpush1.msra.mxu0 %v3945
    %4163 = vmatprep.subr.mxu0 %v3950
    %4164 = vmatpush1.msra.mxu0 %v3949
    %4165 = vmatprep.subr.mxu0 %v3954
    %4166 = vmatpush1.msra.mxu0 %v3953
    %4167 = vmatprep.subr.mxu0 %v3958
    %4168 = vmatpush1.msra.mxu0 %v3957
    %4169 = vmatprep.subr.mxu0 %v3962
    %4170 = vmatpush1.msra.mxu0 %v3961
    %4171 = vmatprep.subr.mxu0 %v3966
    %4172 = vmatpush1.msra.mxu0 %v3965
    %4173 = vmatprep.subr.mxu0 %v3970
    %4174 = vmatpush1.msra.mxu0 %v3969
    %4175 = vmatprep.subr.mxu0 0.0
    %4176 = vmatpush1.msra.mxu0 0.0
    %4177 = vmatprep.subr.mxu0 0.0
    %4178 = vmatpush1.msra.mxu0 0.0
    %4179 = vmatprep.subr.mxu0 0.0
    %4180 = vmatpush1.msra.mxu0 0.0
    %4181 = vmatprep.subr.mxu0 0.0
    %4182 = vmatpush1.msra.mxu0 0.0
    %4183 = vmatprep.subr.mxu0 0.0
    %4184 = vmatpush1.msra.mxu0 0.0
    %4185 = vmatprep.subr.mxu0 0.0
    %4186 = vmatpush1.msra.mxu0 0.0
    %4187 = vmatprep.subr.mxu0 0.0
    %4188 = vmatpush1.msra.mxu0 0.0
    %4189 = vmatprep.subr.mxu0 0.0
    %4190 = vmatpush1.msra.mxu0 0.0
    %4191 = vmatprep.subr.mxu0 0.0
    %4192 = vmatpush1.msra.mxu0 0.0
    %4193 = vmatprep.subr.mxu0 0.0
    %4194 = vmatpush1.msra.mxu0 0.0
    %4195 = vmatprep.subr.mxu0 0.0
    %4196 = vmatpush1.msra.mxu0 0.0
    %4197 = vmatprep.subr.mxu0 0.0
    %4198 = vmatpush1.msra.mxu0 0.0
    %4199 = vmatprep.subr.mxu0 0.0
    %4200 = vmatpush1.msra.mxu0 0.0
    %4201 = vmatprep.subr.mxu0 0.0
    %4202 = vmatpush1.msra.mxu0 0.0
    %4203 = vmatprep.subr.mxu0 0.0
    %4204 = vmatpush1.msra.mxu0 0.0
    %4205 = vmatprep.subr.mxu0 0.0
    %4206 = vmatpush1.msra.mxu0 0.0
    %4207 = vmatprep.mubr.f32.mxu0 0.0
    %4208 = vmatmul.mubr.f32.gmra.mrb[0].mxu0 %v4142
    %v4209 = vpop.f32.mrb[0].mxu0
    %v4210 = vadd.f32 0.0, %v4209
    %v4211 = vpop.f32.mrb[0].mxu0
    %v4212 = vadd.f32 0.0, %v4211
    %4213 = vdwg.mxu0
    %4214 = vmatprep.subr.mxu0 %v3912
    %4215 = vmatpush1.msra.mxu0 %v3911
    %4216 = vmatprep.subr.mxu0 %v3916
    %4217 = vmatpush1.msra.mxu0 %v3915
    %4218 = vmatprep.subr.mxu0 %v3920
    %4219 = vmatpush1.msra.mxu0 %v3919
    %4220 = vmatprep.subr.mxu0 %v3924
    %4221 = vmatpush1.msra.mxu0 %v3923
    %4222 = vmatprep.subr.mxu0 %v3928
    %4223 = vmatpush1.msra.mxu0 %v3927
    %4224 = vmatprep.subr.mxu0 %v3932
    %4225 = vmatpush1.msra.mxu0 %v3931
    %4226 = vmatprep.subr.mxu0 %v3936
    %4227 = vmatpush1.msra.mxu0 %v3935
    %4228 = vmatprep.subr.mxu0 %v3940
    %4229 = vmatpush1.msra.mxu0 %v3939
    %4230 = vmatprep.subr.mxu0 %v3944
    %4231 = vmatpush1.msra.mxu0 %v3943
    %4232 = vmatprep.subr.mxu0 %v3948
    %4233 = vmatpush1.msra.mxu0 %v3947
    %4234 = vmatprep.subr.mxu0 %v3952
    %4235 = vmatpush1.msra.mxu0 %v3951
    %4236 = vmatprep.subr.mxu0 %v3956
    %4237 = vmatpush1.msra.mxu0 %v3955
    %4238 = vmatprep.subr.mxu0 %v3960
    %4239 = vmatpush1.msra.mxu0 %v3959
    %4240 = vmatprep.subr.mxu0 %v3964
    %4241 = vmatpush1.msra.mxu0 %v3963
    %4242 = vmatprep.subr.mxu0 %v3968
    %4243 = vmatpush1.msra.mxu0 %v3967
    %4244 = vmatprep.subr.mxu0 %v3972
    %4245 = vmatpush1.msra.mxu0 %v3971
    %4246 = vmatprep.subr.mxu0 0.0
    %4247 = vmatpush1.msra.mxu0 0.0
    %4248 = vmatprep.subr.mxu0 0.0
    %4249 = vmatpush1.msra.mxu0 0.0
    %4250 = vmatprep.subr.mxu0 0.0
    %4251 = vmatpush1.msra.mxu0 0.0
    %4252 = vmatprep.subr.mxu0 0.0
    %4253 = vmatpush1.msra.mxu0 0.0
    %4254 = vmatprep.subr.mxu0 0.0
    %4255 = vmatpush1.msra.mxu0 0.0
    %4256 = vmatprep.subr.mxu0 0.0
    %4257 = vmatpush1.msra.mxu0 0.0
    %4258 = vmatprep.subr.mxu0 0.0
    %4259 = vmatpush1.msra.mxu0 0.0
    %4260 = vmatprep.subr.mxu0 0.0
    %4261 = vmatpush1.msra.mxu0 0.0
    %4262 = vmatprep.subr.mxu0 0.0
    %4263 = vmatpush1.msra.mxu0 0.0
    %4264 = vmatprep.subr.mxu0 0.0
    %4265 = vmatpush1.msra.mxu0 0.0
    %4266 = vmatprep.subr.mxu0 0.0
    %4267 = vmatpush1.msra.mxu0 0.0
    %4268 = vmatprep.subr.mxu0 0.0
    %4269 = vmatpush1.msra.mxu0 0.0
    %4270 = vmatprep.subr.mxu0 0.0
    %4271 = vmatpush1.msra.mxu0 0.0
    %4272 = vmatprep.subr.mxu0 0.0
    %4273 = vmatpush1.msra.mxu0 0.0
    %4274 = vmatprep.subr.mxu0 0.0
    %4275 = vmatpush1.msra.mxu0 0.0
    %4276 = vmatprep.subr.mxu0 0.0
    %4277 = vmatpush1.msra.mxu0 0.0
    %4278 = vmatprep.mubr.f32.mxu0 0.0
    %4279 = vmatmul.mubr.f32.gmra.mrb[0].mxu0 %v4142
    %v4280 = vpop.f32.mrb[0].mxu0
    %v4281 = vadd.f32 0.0, %v4280
    %v4282 = vpop.f32.mrb[0].mxu0
    %v4283 = vadd.f32 0.0, %v4282
    %4284 = vdwg.mxu0
    %v4285 = vadd.f32 %v3834, %v4210
    %v4286 = vadd.f32 %v3836, %v4212
    %v4287 = vadd.f32 %v3905, %v4281
    %v4288 = vadd.f32 %v3907, %v4283
    %v4289 = vxor.u32 %v4285, 2147483648
    %v4290 = vmul.f32 %v4289, 1.442695
    %v4291 = vpow.pop %v4290
    %v4292 = vadd.f32 %v4291, 1.0
    %v4293 = vrcp.pop %v4292
    %v4294 = vmul.f32 1.0, %v4293
    %v4295 = vxor.u32 %v4286, 2147483648
    %v4296 = vmul.f32 %v4295, 1.442695
    %v4297 = vpow.pop %v4296
    %v4298 = vadd.f32 %v4297, 1.0
    %v4299 = vrcp.pop %v4298
    %v4300 = vmul.f32 1.0, %v4299
    %v4301 = vtanh.pop %v4287
    %v4302 = vxor.u32 %v4288, 2147483648
    %v4303 = vmul.f32 %v4302, 1.442695
    %v4304 = vpow.pop %v4303
    %v4305 = vadd.f32 %v4304, 1.0
    %v4306 = vrcp.pop %v4305
    %v4307 = vmul.f32 1.0, %v4306
    %v4308 = vmul.f32 %v4300, %v4140
    %v4309 = vmul.f32 %v4294, %v4301
    %v4310 = vadd.f32 %v4308, %v4309
    %v4311 = vtanh.pop %v4310
    %v4312 = vmul.f32 %v4307, %v4311
    %4313 = vmatprep.subr.mxu0 %v3910
    %4314 = vmatpush1.msra.mxu0 %v3909
    %4315 = vmatprep.subr.mxu0 %v3914
    %4316 = vmatpush1.msra.mxu0 %v3913
    %4317 = vmatprep.subr.mxu0 %v3918
    %4318 = vmatpush1.msra.mxu0 %v3917
    %4319 = vmatprep.subr.mxu0 %v3922
    %4320 = vmatpush1.msra.mxu0 %v3921
    %4321 = vmatprep.subr.mxu0 %v3926
    %4322 = vmatpush1.msra.mxu0 %v3925
    %4323 = vmatprep.subr.mxu0 %v3930
    %4324 = vmatpush1.msra.mxu0 %v3929
    %4325 = vmatprep.subr.mxu0 %v3934
    %4326 = vmatpush1.msra.mxu0 %v3933
    %4327 = vmatprep.subr.mxu0 %v3938
    %4328 = vmatpush1.msra.mxu0 %v3937
    %4329 = vmatprep.subr.mxu0 %v3942
    %4330 = vmatpush1.msra.mxu0 %v3941
    %4331 = vmatprep.subr.mxu0 %v3946
    %4332 = vmatpush1.msra.mxu0 %v3945
    %4333 = vmatprep.subr.mxu0 %v3950
    %4334 = vmatpush1.msra.mxu0 %v3949
    %4335 = vmatprep.subr.mxu0 %v3954
    %4336 = vmatpush1.msra.mxu0 %v3953
    %4337 = vmatprep.subr.mxu0 %v3958
    %4338 = vmatpush1.msra.mxu0 %v3957
    %4339 = vmatprep.subr.mxu0 %v3962
    %4340 = vmatpush1.msra.mxu0 %v3961
    %4341 = vmatprep.subr.mxu0 %v3966
    %4342 = vmatpush1.msra.mxu0 %v3965
    %4343 = vmatprep.subr.mxu0 %v3970
    %4344 = vmatpush1.msra.mxu0 %v3969
    %4345 = vmatprep.subr.mxu0 0.0
    %4346 = vmatpush1.msra.mxu0 0.0
    %4347 = vmatprep.subr.mxu0 0.0
    %4348 = vmatpush1.msra.mxu0 0.0
    %4349 = vmatprep.subr.mxu0 0.0
    %4350 = vmatpush1.msra.mxu0 0.0
    %4351 = vmatprep.subr.mxu0 0.0
    %4352 = vmatpush1.msra.mxu0 0.0
    %4353 = vmatprep.subr.mxu0 0.0
    %4354 = vmatpush1.msra.mxu0 0.0
    %4355 = vmatprep.subr.mxu0 0.0
    %4356 = vmatpush1.msra.mxu0 0.0
    %4357 = vmatprep.subr.mxu0 0.0
    %4358 = vmatpush1.msra.mxu0 0.0
    %4359 = vmatprep.subr.mxu0 0.0
    %4360 = vmatpush1.msra.mxu0 0.0
    %4361 = vmatprep.subr.mxu0 0.0
    %4362 = vmatpush1.msra.mxu0 0.0
    %4363 = vmatprep.subr.mxu0 0.0
    %4364 = vmatpush1.msra.mxu0 0.0
    %4365 = vmatprep.subr.mxu0 0.0
    %4366 = vmatpush1.msra.mxu0 0.0
    %4367 = vmatprep.subr.mxu0 0.0
    %4368 = vmatpush1.msra.mxu0 0.0
    %4369 = vmatprep.subr.mxu0 0.0
    %4370 = vmatpush1.msra.mxu0 0.0
    %4371 = vmatprep.subr.mxu0 0.0
    %4372 = vmatpush1.msra.mxu0 0.0
    %4373 = vmatprep.subr.mxu0 0.0
    %4374 = vmatpush1.msra.mxu0 0.0
    %4375 = vmatprep.subr.mxu0 0.0
    %4376 = vmatpush1.msra.mxu0 0.0
    %4377 = vmatprep.mubr.f32.mxu0 0.0
    %4378 = vmatmul.mubr.f32.gmra.mrb[0].mxu0 %v4312
    %v4379 = vpop.f32.mrb[0].mxu0
    %v4380 = vadd.f32 0.0, %v4379
    %v4381 = vpop.f32.mrb[0].mxu0
    %v4382 = vadd.f32 0.0, %v4381
    %4383 = vdwg.mxu0
    %4384 = vmatprep.subr.mxu0 %v3912
    %4385 = vmatpush1.msra.mxu0 %v3911
    %4386 = vmatprep.subr.mxu0 %v3916
    %4387 = vmatpush1.msra.mxu0 %v3915
    %4388 = vmatprep.subr.mxu0 %v3920
    %4389 = vmatpush1.msra.mxu0 %v3919
    %4390 = vmatprep.subr.mxu0 %v3924
    %4391 = vmatpush1.msra.mxu0 %v3923
    %4392 = vmatprep.subr.mxu0 %v3928
    %4393 = vmatpush1.msra.mxu0 %v3927
    %4394 = vmatprep.subr.mxu0 %v3932
    %4395 = vmatpush1.msra.mxu0 %v3931
    %4396 = vmatprep.subr.mxu0 %v3936
    %4397 = vmatpush1.msra.mxu0 %v3935
    %4398 = vmatprep.subr.mxu0 %v3940
    %4399 = vmatpush1.msra.mxu0 %v3939
    %4400 = vmatprep.subr.mxu0 %v3944
    %4401 = vmatpush1.msra.mxu0 %v3943
    %4402 = vmatprep.subr.mxu0 %v3948
    %4403 = vmatpush1.msra.mxu0 %v3947
    %4404 = vmatprep.subr.mxu0 %v3952
    %4405 = vmatpush1.msra.mxu0 %v3951
    %4406 = vmatprep.subr.mxu0 %v3956
    %4407 = vmatpush1.msra.mxu0 %v3955
    %4408 = vmatprep.subr.mxu0 %v3960
    %4409 = vmatpush1.msra.mxu0 %v3959
    %4410 = vmatprep.subr.mxu0 %v3964
    %4411 = vmatpush1.msra.mxu0 %v3963
    %4412 = vmatprep.subr.mxu0 %v3968
    %4413 = vmatpush1.msra.mxu0 %v3967
    %4414 = vmatprep.subr.mxu0 %v3972
    %4415 = vmatpush1.msra.mxu0 %v3971
    %4416 = vmatprep.subr.mxu0 0.0
    %4417 = vmatpush1.msra.mxu0 0.0
    %4418 = vmatprep.subr.mxu0 0.0
    %4419 = vmatpush1.msra.mxu0 0.0
    %4420 = vmatprep.subr.mxu0 0.0
    %4421 = vmatpush1.msra.mxu0 0.0
    %4422 = vmatprep.subr.mxu0 0.0
    %4423 = vmatpush1.msra.mxu0 0.0
    %4424 = vmatprep.subr.mxu0 0.0
    %4425 = vmatpush1.msra.mxu0 0.0
    %4426 = vmatprep.subr.mxu0 0.0
    %4427 = vmatpush1.msra.mxu0 0.0
    %4428 = vmatprep.subr.mxu0 0.0
    %4429 = vmatpush1.msra.mxu0 0.0
    %4430 = vmatprep.subr.mxu0 0.0
    %4431 = vmatpush1.msra.mxu0 0.0
    %4432 = vmatprep.subr.mxu0 0.0
    %4433 = vmatpush1.msra.mxu0 0.0
    %4434 = vmatprep.subr.mxu0 0.0
    %4435 = vmatpush1.msra.mxu0 0.0
    %4436 = vmatprep.subr.mxu0 0.0
    %4437 = vmatpush1.msra.mxu0 0.0
    %4438 = vmatprep.subr.mxu0 0.0
    %4439 = vmatpush1.msra.mxu0 0.0
    %4440 = vmatprep.subr.mxu0 0.0
    %4441 = vmatpush1.msra.mxu0 0.0
    %4442 = vmatprep.subr.mxu0 0.0
    %4443 = vmatpush1.msra.mxu0 0.0
    %4444 = vmatprep.subr.mxu0 0.0
    %4445 = vmatpush1.msra.mxu0 0.0
    %4446 = vmatprep.subr.mxu0 0.0
    %4447 = vmatpush1.msra.mxu0 0.0
    %4448 = vmatprep.mubr.f32.mxu0 0.0
    %4449 = vmatmul.mubr.f32.gmra.mrb[0].mxu0 %v4312
    %v4450 = vpop.f32.mrb[0].mxu0
    %v4451 = vadd.f32 0.0, %v4450
    %v4452 = vpop.f32.mrb[0].mxu0
    %v4453 = vadd.f32 0.0, %v4452
    %4454 = vdwg.mxu0
    %v4455 = vadd.f32 %v3834, %v4380
    %v4456 = vadd.f32 %v3836, %v4382
    %v4457 = vadd.f32 %v3905, %v4451
    %v4458 = vadd.f32 %v3907, %v4453
    %v4459 = vxor.u32 %v4455, 2147483648
    %v4460 = vmul.f32 %v4459, 1.442695
    %v4461 = vpow.pop %v4460
    %v4462 = vadd.f32 %v4461, 1.0
    %v4463 = vrcp.pop %v4462
    %v4464 = vmul.f32 1.0, %v4463
    %v4465 = vxor.u32 %v4456, 2147483648
    %v4466 = vmul.f32 %v4465, 1.442695
    %v4467 = vpow.pop %v4466
    %v4468 = vadd.f32 %v4467, 1.0
    %v4469 = vrcp.pop %v4468
    %v4470 = vmul.f32 1.0, %v4469
    %v4471 = vtanh.pop %v4457
    %v4472 = vxor.u32 %v4458, 2147483648
    %v4473 = vmul.f32 %v4472, 1.442695
    %v4474 = vpow.pop %v4473
    %v4475 = vadd.f32 %v4474, 1.0
    %v4476 = vrcp.pop %v4475
    %v4477 = vmul.f32 1.0, %v4476
    %v4478 = vmul.f32 %v4470, %v4310
    %v4479 = vmul.f32 %v4464, %v4471
    %v4480 = vadd.f32 %v4478, %v4479
    %v4481 = vtanh.pop %v4480
    %v4482 = vmul.f32 %v4477, %v4481
    %4483 = vmatprep.subr.mxu0 %v3910
    %4484 = vmatpush1.msra.mxu0 %v3909
    %4485 = vmatprep.subr.mxu0 %v3914
    %4486 = vmatpush1.msra.mxu0 %v3913
    %4487 = vmatprep.subr.mxu0 %v3918
    %4488 = vmatpush1.msra.mxu0 %v3917
    %4489 = vmatprep.subr.mxu0 %v3922
    %4490 = vmatpush1.msra.mxu0 %v3921
    %4491 = vmatprep.subr.mxu0 %v3926
    %4492 = vmatpush1.msra.mxu0 %v3925
    %4493 = vmatprep.subr.mxu0 %v3930
    %4494 = vmatpush1.msra.mxu0 %v3929
    %4495 = vmatprep.subr.mxu0 %v3934
    %4496 = vmatpush1.msra.mxu0 %v3933
    %4497 = vmatprep.subr.mxu0 %v3938
    %4498 = vmatpush1.msra.mxu0 %v3937
    %4499 = vmatprep.subr.mxu0 %v3942
    %4500 = vmatpush1.msra.mxu0 %v3941
    %4501 = vmatprep.subr.mxu0 %v3946
    %4502 = vmatpush1.msra.mxu0 %v3945
    %4503 = vmatprep.subr.mxu0 %v3950
    %4504 = vmatpush1.msra.mxu0 %v3949
    %4505 = vmatprep.subr.mxu0 %v3954
    %4506 = vmatpush1.msra.mxu0 %v3953
    %4507 = vmatprep.subr.mxu0 %v3958
    %4508 = vmatpush1.msra.mxu0 %v3957
    %4509 = vmatprep.subr.mxu0 %v3962
    %4510 = vmatpush1.msra.mxu0 %v3961
    %4511 = vmatprep.subr.mxu0 %v3966
    %4512 = vmatpush1.msra.mxu0 %v3965
    %4513 = vmatprep.subr.mxu0 %v3970
    %4514 = vmatpush1.msra.mxu0 %v3969
    %4515 = vmatprep.subr.mxu0 0.0
    %4516 = vmatpush1.msra.mxu0 0.0
    %4517 = vmatprep.subr.mxu0 0.0
    %4518 = vmatpush1.msra.mxu0 0.0
    %4519 = vmatprep.subr.mxu0 0.0
    %4520 = vmatpush1.msra.mxu0 0.0
    %4521 = vmatprep.subr.mxu0 0.0
    %4522 = vmatpush1.msra.mxu0 0.0
    %4523 = vmatprep.subr.mxu0 0.0
    %4524 = vmatpush1.msra.mxu0 0.0
    %4525 = vmatprep.subr.mxu0 0.0
    %4526 = vmatpush1.msra.mxu0 0.0
    %4527 = vmatprep.subr.mxu0 0.0
    %4528 = vmatpush1.msra.mxu0 0.0
    %4529 = vmatprep.subr.mxu0 0.0
    %4530 = vmatpush1.msra.mxu0 0.0
    %4531 = vmatprep.subr.mxu0 0.0
    %4532 = vmatpush1.msra.mxu0 0.0
    %4533 = vmatprep.subr.mxu0 0.0
    %4534 = vmatpush1.msra.mxu0 0.0
    %4535 = vmatprep.subr.mxu0 0.0
    %4536 = vmatpush1.msra.mxu0 0.0
    %4537 = vmatprep.subr.mxu0 0.0
    %4538 = vmatpush1.msra.mxu0 0.0
    %4539 = vmatprep.subr.mxu0 0.0
    %4540 = vmatpush1.msra.mxu0 0.0
    %4541 = vmatprep.subr.mxu0 0.0
    %4542 = vmatpush1.msra.mxu0 0.0
    %4543 = vmatprep.subr.mxu0 0.0
    %4544 = vmatpush1.msra.mxu0 0.0
    %4545 = vmatprep.subr.mxu0 0.0
    %4546 = vmatpush1.msra.mxu0 0.0
    %4547 = vmatprep.mubr.f32.mxu0 0.0
    %4548 = vmatmul.mubr.f32.gmra.mrb[0].mxu0 %v4482
    %v4549 = vpop.f32.mrb[0].mxu0
    %v4550 = vadd.f32 0.0, %v4549
    %v4551 = vpop.f32.mrb[0].mxu0
    %v4552 = vadd.f32 0.0, %v4551
    %4553 = vdwg.mxu0
    %4554 = vmatprep.subr.mxu0 %v3912
    %4555 = vmatpush1.msra.mxu0 %v3911
    %4556 = vmatprep.subr.mxu0 %v3916
    %4557 = vmatpush1.msra.mxu0 %v3915
    %4558 = vmatprep.subr.mxu0 %v3920
    %4559 = vmatpush1.msra.mxu0 %v3919
    %4560 = vmatprep.subr.mxu0 %v3924
    %4561 = vmatpush1.msra.mxu0 %v3923
    %4562 = vmatprep.subr.mxu0 %v3928
    %4563 = vmatpush1.msra.mxu0 %v3927
    %4564 = vmatprep.subr.mxu0 %v3932
    %4565 = vmatpush1.msra.mxu0 %v3931
    %4566 = vmatprep.subr.mxu0 %v3936
    %4567 = vmatpush1.msra.mxu0 %v3935
    %4568 = vmatprep.subr.mxu0 %v3940
    %4569 = vmatpush1.msra.mxu0 %v3939
    %4570 = vmatprep.subr.mxu0 %v3944
    %4571 = vmatpush1.msra.mxu0 %v3943
    %4572 = vmatprep.subr.mxu0 %v3948
    %4573 = vmatpush1.msra.mxu0 %v3947
    %4574 = vmatprep.subr.mxu0 %v3952
    %4575 = vmatpush1.msra.mxu0 %v3951
    %4576 = vmatprep.subr.mxu0 %v3956
    %4577 = vmatpush1.msra.mxu0 %v3955
    %4578 = vmatprep.subr.mxu0 %v3960
    %4579 = vmatpush1.msra.mxu0 %v3959
    %4580 = vmatprep.subr.mxu0 %v3964
    %4581 = vmatpush1.msra.mxu0 %v3963
    %4582 = vmatprep.subr.mxu0 %v3968
    %4583 = vmatpush1.msra.mxu0 %v3967
    %4584 = vmatprep.subr.mxu0 %v3972
    %4585 = vmatpush1.msra.mxu0 %v3971
    %4586 = vmatprep.subr.mxu0 0.0
    %4587 = vmatpush1.msra.mxu0 0.0
    %4588 = vmatprep.subr.mxu0 0.0
    %4589 = vmatpush1.msra.mxu0 0.0
    %4590 = vmatprep.subr.mxu0 0.0
    %4591 = vmatpush1.msra.mxu0 0.0
    %4592 = vmatprep.subr.mxu0 0.0
    %4593 = vmatpush1.msra.mxu0 0.0
    %4594 = vmatprep.subr.mxu0 0.0
    %4595 = vmatpush1.msra.mxu0 0.0
    %4596 = vmatprep.subr.mxu0 0.0
    %4597 = vmatpush1.msra.mxu0 0.0
    %4598 = vmatprep.subr.mxu0 0.0
    %4599 = vmatpush1.msra.mxu0 0.0
    %4600 = vmatprep.subr.mxu0 0.0
    %4601 = vmatpush1.msra.mxu0 0.0
    %4602 = vmatprep.subr.mxu0 0.0
    %4603 = vmatpush1.msra.mxu0 0.0
    %4604 = vmatprep.subr.mxu0 0.0
    %4605 = vmatpush1.msra.mxu0 0.0
    %4606 = vmatprep.subr.mxu0 0.0
    %4607 = vmatpush1.msra.mxu0 0.0
    %4608 = vmatprep.subr.mxu0 0.0
    %4609 = vmatpush1.msra.mxu0 0.0
    %4610 = vmatprep.subr.mxu0 0.0
    %4611 = vmatpush1.msra.mxu0 0.0
    %4612 = vmatprep.subr.mxu0 0.0
    %4613 = vmatpush1.msra.mxu0 0.0
    %4614 = vmatprep.subr.mxu0 0.0
    %4615 = vmatpush1.msra.mxu0 0.0
    %4616 = vmatprep.subr.mxu0 0.0
    %4617 = vmatpush1.msra.mxu0 0.0
    %4618 = vmatprep.mubr.f32.mxu0 0.0
    %4619 = vmatmul.mubr.f32.gmra.mrb[0].mxu0 %v4482
    %v4620 = vpop.f32.mrb[0].mxu0
    %v4621 = vadd.f32 0.0, %v4620
    %v4622 = vpop.f32.mrb[0].mxu0
    %v4623 = vadd.f32 0.0, %v4622
    %4624 = vdwg.mxu0
    %v4625 = vadd.f32 %v3834, %v4550
    %v4626 = vadd.f32 %v3836, %v4552
    %v4627 = vadd.f32 %v3905, %v4621
    %v4628 = vadd.f32 %v3907, %v4623
    %v4629 = vxor.u32 %v4625, 2147483648
    %v4630 = vmul.f32 %v4629, 1.442695
    %v4631 = vpow.pop %v4630
    %v4632 = vadd.f32 %v4631, 1.0
    %v4633 = vrcp.pop %v4632
    %v4634 = vmul.f32 1.0, %v4633
    %v4635 = vxor.u32 %v4626, 2147483648
    %v4636 = vmul.f32 %v4635, 1.442695
    %v4637 = vpow.pop %v4636
    %v4638 = vadd.f32 %v4637, 1.0
    %v4639 = vrcp.pop %v4638
    %v4640 = vmul.f32 1.0, %v4639
    %v4641 = vtanh.pop %v4627
    %v4642 = vxor.u32 %v4628, 2147483648
    %v4643 = vmul.f32 %v4642, 1.442695
    %v4644 = vpow.pop %v4643
    %v4645 = vadd.f32 %v4644, 1.0
    %v4646 = vrcp.pop %v4645
    %v4647 = vmul.f32 1.0, %v4646
    %v4648 = vmul.f32 %v4640, %v4480
    %v4649 = vmul.f32 %v4634, %v4641
    %v4650 = vadd.f32 %v4648, %v4649
    %v4651 = vtanh.pop %v4650
    %v4652 = vmul.f32 %v4647, %v4651
    %4653 = vmatprep.subr.mxu0 %v3910
    %4654 = vmatpush1.msra.mxu0 %v3909
    %4655 = vmatprep.subr.mxu0 %v3914
    %4656 = vmatpush1.msra.mxu0 %v3913
    %4657 = vmatprep.subr.mxu0 %v3918
    %4658 = vmatpush1.msra.mxu0 %v3917
    %4659 = vmatprep.subr.mxu0 %v3922
    %4660 = vmatpush1.msra.mxu0 %v3921
    %4661 = vmatprep.subr.mxu0 %v3926
    %4662 = vmatpush1.msra.mxu0 %v3925
    %4663 = vmatprep.subr.mxu0 %v3930
    %4664 = vmatpush1.msra.mxu0 %v3929
    %4665 = vmatprep.subr.mxu0 %v3934
    %4666 = vmatpush1.msra.mxu0 %v3933
    %4667 = vmatprep.subr.mxu0 %v3938
    %4668 = vmatpush1.msra.mxu0 %v3937
    %4669 = vmatprep.subr.mxu0 %v3942
    %4670 = vmatpush1.msra.mxu0 %v3941
    %4671 = vmatprep.subr.mxu0 %v3946
    %4672 = vmatpush1.msra.mxu0 %v3945
    %4673 = vmatprep.subr.mxu0 %v3950
    %4674 = vmatpush1.msra.mxu0 %v3949
    %4675 = vmatprep.subr.mxu0 %v3954
    %4676 = vmatpush1.msra.mxu0 %v3953
    %4677 = vmatprep.subr.mxu0 %v3958
    %4678 = vmatpush1.msra.mxu0 %v3957
    %4679 = vmatprep.subr.mxu0 %v3962
    %4680 = vmatpush1.msra.mxu0 %v3961
    %4681 = vmatprep.subr.mxu0 %v3966
    %4682 = vmatpush1.msra.mxu0 %v3965
    %4683 = vmatprep.subr.mxu0 %v3970
    %4684 = vmatpush1.msra.mxu0 %v3969
    %4685 = vmatprep.subr.mxu0 0.0
    %4686 = vmatpush1.msra.mxu0 0.0
    %4687 = vmatprep.subr.mxu0 0.0
    %4688 = vmatpush1.msra.mxu0 0.0
    %4689 = vmatprep.subr.mxu0 0.0
    %4690 = vmatpush1.msra.mxu0 0.0
    %4691 = vmatprep.subr.mxu0 0.0
    %4692 = vmatpush1.msra.mxu0 0.0
    %4693 = vmatprep.subr.mxu0 0.0
    %4694 = vmatpush1.msra.mxu0 0.0
    %4695 = vmatprep.subr.mxu0 0.0
    %4696 = vmatpush1.msra.mxu0 0.0
    %4697 = vmatprep.subr.mxu0 0.0
    %4698 = vmatpush1.msra.mxu0 0.0
    %4699 = vmatprep.subr.mxu0 0.0
    %4700 = vmatpush1.msra.mxu0 0.0
    %4701 = vmatprep.subr.mxu0 0.0
    %4702 = vmatpush1.msra.mxu0 0.0
    %4703 = vmatprep.subr.mxu0 0.0
    %4704 = vmatpush1.msra.mxu0 0.0
    %4705 = vmatprep.subr.mxu0 0.0
    %4706 = vmatpush1.msra.mxu0 0.0
    %4707 = vmatprep.subr.mxu0 0.0
    %4708 = vmatpush1.msra.mxu0 0.0
    %4709 = vmatprep.subr.mxu0 0.0
    %4710 = vmatpush1.msra.mxu0 0.0
    %4711 = vmatprep.subr.mxu0 0.0
    %4712 = vmatpush1.msra.mxu0 0.0
    %4713 = vmatprep.subr.mxu0 0.0
    %4714 = vmatpush1.msra.mxu0 0.0
    %4715 = vmatprep.subr.mxu0 0.0
    %4716 = vmatpush1.msra.mxu0 0.0
    %4717 = vmatprep.mubr.f32.mxu0 0.0
    %4718 = vmatmul.mubr.f32.gmra.mrb[0].mxu0 %v4652
    %v4719 = vpop.f32.mrb[0].mxu0
    %v4720 = vadd.f32 0.0, %v4719
    %v4721 = vpop.f32.mrb[0].mxu0
    %v4722 = vadd.f32 0.0, %v4721
    %4723 = vdwg.mxu0
    %4724 = vmatprep.subr.mxu0 %v3912
    %4725 = vmatpush1.msra.mxu0 %v3911
    %4726 = vmatprep.subr.mxu0 %v3916
    %4727 = vmatpush1.msra.mxu0 %v3915
    %4728 = vmatprep.subr.mxu0 %v3920
    %4729 = vmatpush1.msra.mxu0 %v3919
    %4730 = vmatprep.subr.mxu0 %v3924
    %4731 = vmatpush1.msra.mxu0 %v3923
    %4732 = vmatprep.subr.mxu0 %v3928
    %4733 = vmatpush1.msra.mxu0 %v3927
    %4734 = vmatprep.subr.mxu0 %v3932
    %4735 = vmatpush1.msra.mxu0 %v3931
    %4736 = vmatprep.subr.mxu0 %v3936
    %4737 = vmatpush1.msra.mxu0 %v3935
    %4738 = vmatprep.subr.mxu0 %v3940
    %4739 = vmatpush1.msra.mxu0 %v3939
    %4740 = vmatprep.subr.mxu0 %v3944
    %4741 = vmatpush1.msra.mxu0 %v3943
    %4742 = vmatprep.subr.mxu0 %v3948
    %4743 = vmatpush1.msra.mxu0 %v3947
    %4744 = vmatprep.subr.mxu0 %v3952
    %4745 = vmatpush1.msra.mxu0 %v3951
    %4746 = vmatprep.subr.mxu0 %v3956
    %4747 = vmatpush1.msra.mxu0 %v3955
    %4748 = vmatprep.subr.mxu0 %v3960
    %4749 = vmatpush1.msra.mxu0 %v3959
    %4750 = vmatprep.subr.mxu0 %v3964
    %4751 = vmatpush1.msra.mxu0 %v3963
    %4752 = vmatprep.subr.mxu0 %v3968
    %4753 = vmatpush1.msra.mxu0 %v3967
    %4754 = vmatprep.subr.mxu0 %v3972
    %4755 = vmatpush1.msra.mxu0 %v3971
    %4756 = vmatprep.subr.mxu0 0.0
    %4757 = vmatpush1.msra.mxu0 0.0
    %4758 = vmatprep.subr.mxu0 0.0
    %4759 = vmatpush1.msra.mxu0 0.0
    %4760 = vmatprep.subr.mxu0 0.0
    %4761 = vmatpush1.msra.mxu0 0.0
    %4762 = vmatprep.subr.mxu0 0.0
    %4763 = vmatpush1.msra.mxu0 0.0
    %4764 = vmatprep.subr.mxu0 0.0
    %4765 = vmatpush1.msra.mxu0 0.0
    %4766 = vmatprep.subr.mxu0 0.0
    %4767 = vmatpush1.msra.mxu0 0.0
    %4768 = vmatprep.subr.mxu0 0.0
    %4769 = vmatpush1.msra.mxu0 0.0
    %4770 = vmatprep.subr.mxu0 0.0
    %4771 = vmatpush1.msra.mxu0 0.0
    %4772 = vmatprep.subr.mxu0 0.0
    %4773 = vmatpush1.msra.mxu0 0.0
    %4774 = vmatprep.subr.mxu0 0.0
    %4775 = vmatpush1.msra.mxu0 0.0
    %4776 = vmatprep.subr.mxu0 0.0
    %4777 = vmatpush1.msra.mxu0 0.0
    %4778 = vmatprep.subr.mxu0 0.0
    %4779 = vmatpush1.msra.mxu0 0.0
    %4780 = vmatprep.subr.mxu0 0.0
    %4781 = vmatpush1.msra.mxu0 0.0
    %4782 = vmatprep.subr.mxu0 0.0
    %4783 = vmatpush1.msra.mxu0 0.0
    %4784 = vmatprep.subr.mxu0 0.0
    %4785 = vmatpush1.msra.mxu0 0.0
    %4786 = vmatprep.subr.mxu0 0.0
    %4787 = vmatpush1.msra.mxu0 0.0
    %4788 = vmatprep.mubr.f32.mxu0 0.0
    %4789 = vmatmul.mubr.f32.gmra.mrb[0].mxu0 %v4652
    %v4790 = vpop.f32.mrb[0].mxu0
    %v4791 = vadd.f32 0.0, %v4790
    %v4792 = vpop.f32.mrb[0].mxu0
    %v4793 = vadd.f32 0.0, %v4792
    %4794 = vdwg.mxu0
    %v4795 = vadd.f32 %v3834, %v4720
    %v4796 = vadd.f32 %v3836, %v4722
    %v4797 = vadd.f32 %v3905, %v4791
    %v4798 = vadd.f32 %v3907, %v4793
    %v4799 = vxor.u32 %v4795, 2147483648
    %v4800 = vmul.f32 %v4799, 1.442695
    %v4801 = vpow.pop %v4800
    %v4802 = vadd.f32 %v4801, 1.0
    %v4803 = vrcp.pop %v4802
    %v4804 = vmul.f32 1.0, %v4803
    %v4805 = vxor.u32 %v4796, 2147483648
    %v4806 = vmul.f32 %v4805, 1.442695
    %v4807 = vpow.pop %v4806
    %v4808 = vadd.f32 %v4807, 1.0
    %v4809 = vrcp.pop %v4808
    %v4810 = vmul.f32 1.0, %v4809
    %v4811 = vtanh.pop %v4797
    %v4812 = vxor.u32 %v4798, 2147483648
    %v4813 = vmul.f32 %v4812, 1.442695
    %v4814 = vpow.pop %v4813
    %v4815 = vadd.f32 %v4814, 1.0
    %v4816 = vrcp.pop %v4815
    %v4817 = vmul.f32 1.0, %v4816
    %v4818 = vmul.f32 %v4810, %v4650
    %v4819 = vmul.f32 %v4804, %v4811
    %v4820 = vadd.f32 %v4818, %v4819
    %v4821 = vtanh.pop %v4820
    %v4822 = vmul.f32 %v4817, %v4821
    %4823 = vmatprep.subr.mxu0 %v3910
    %4824 = vmatpush1.msra.mxu0 %v3909
    %4825 = vmatprep.subr.mxu0 %v3914
    %4826 = vmatpush1.msra.mxu0 %v3913
    %4827 = vmatprep.subr.mxu0 %v3918
    %4828 = vmatpush1.msra.mxu0 %v3917
    %4829 = vmatprep.subr.mxu0 %v3922
    %4830 = vmatpush1.msra.mxu0 %v3921
    %4831 = vmatprep.subr.mxu0 %v3926
    %4832 = vmatpush1.msra.mxu0 %v3925
    %4833 = vmatprep.subr.mxu0 %v3930
    %4834 = vmatpush1.msra.mxu0 %v3929
    %4835 = vmatprep.subr.mxu0 %v3934
    %4836 = vmatpush1.msra.mxu0 %v3933
    %4837 = vmatprep.subr.mxu0 %v3938
    %4838 = vmatpush1.msra.mxu0 %v3937
    %4839 = vmatprep.subr.mxu0 %v3942
    %4840 = vmatpush1.msra.mxu0 %v3941
    %4841 = vmatprep.subr.mxu0 %v3946
    %4842 = vmatpush1.msra.mxu0 %v3945
    %4843 = vmatprep.subr.mxu0 %v3950
    %4844 = vmatpush1.msra.mxu0 %v3949
    %4845 = vmatprep.subr.mxu0 %v3954
    %4846 = vmatpush1.msra.mxu0 %v3953
    %4847 = vmatprep.subr.mxu0 %v3958
    %4848 = vmatpush1.msra.mxu0 %v3957
    %4849 = vmatprep.subr.mxu0 %v3962
    %4850 = vmatpush1.msra.mxu0 %v3961
    %4851 = vmatprep.subr.mxu0 %v3966
    %4852 = vmatpush1.msra.mxu0 %v3965
    %4853 = vmatprep.subr.mxu0 %v3970
    %4854 = vmatpush1.msra.mxu0 %v3969
    %4855 = vmatprep.subr.mxu0 0.0
    %4856 = vmatpush1.msra.mxu0 0.0
    %4857 = vmatprep.subr.mxu0 0.0
    %4858 = vmatpush1.msra.mxu0 0.0
    %4859 = vmatprep.subr.mxu0 0.0
    %4860 = vmatpush1.msra.mxu0 0.0
    %4861 = vmatprep.subr.mxu0 0.0
    %4862 = vmatpush1.msra.mxu0 0.0
    %4863 = vmatprep.subr.mxu0 0.0
    %4864 = vmatpush1.msra.mxu0 0.0
    %4865 = vmatprep.subr.mxu0 0.0
    %4866 = vmatpush1.msra.mxu0 0.0
    %4867 = vmatprep.subr.mxu0 0.0
    %4868 = vmatpush1.msra.mxu0 0.0
    %4869 = vmatprep.subr.mxu0 0.0
    %4870 = vmatpush1.msra.mxu0 0.0
    %4871 = vmatprep.subr.mxu0 0.0
    %4872 = vmatpush1.msra.mxu0 0.0
    %4873 = vmatprep.subr.mxu0 0.0
    %4874 = vmatpush1.msra.mxu0 0.0
    %4875 = vmatprep.subr.mxu0 0.0
    %4876 = vmatpush1.msra.mxu0 0.0
    %4877 = vmatprep.subr.mxu0 0.0
    %4878 = vmatpush1.msra.mxu0 0.0
    %4879 = vmatprep.subr.mxu0 0.0
    %4880 = vmatpush1.msra.mxu0 0.0
    %4881 = vmatprep.subr.mxu0 0.0
    %4882 = vmatpush1.msra.mxu0 0.0
    %4883 = vmatprep.subr.mxu0 0.0
    %4884 = vmatpush1.msra.mxu0 0.0
    %4885 = vmatprep.subr.mxu0 0.0
    %4886 = vmatpush1.msra.mxu0 0.0
    %4887 = vmatprep.mubr.f32.mxu0 0.0
    %4888 = vmatmul.mubr.f32.gmra.mrb[0].mxu0 %v4822
    %v4889 = vpop.f32.mrb[0].mxu0
    %v4890 = vadd.f32 0.0, %v4889
    %v4891 = vpop.f32.mrb[0].mxu0
    %v4892 = vadd.f32 0.0, %v4891
    %4893 = vdwg.mxu0
    %4894 = vmatprep.subr.mxu0 %v3912
    %4895 = vmatpush1.msra.mxu0 %v3911
    %4896 = vmatprep.subr.mxu0 %v3916
    %4897 = vmatpush1.msra.mxu0 %v3915
    %4898 = vmatprep.subr.mxu0 %v3920
    %4899 = vmatpush1.msra.mxu0 %v3919
    %4900 = vmatprep.subr.mxu0 %v3924
    %4901 = vmatpush1.msra.mxu0 %v3923
    %4902 = vmatprep.subr.mxu0 %v3928
    %4903 = vmatpush1.msra.mxu0 %v3927
    %4904 = vmatprep.subr.mxu0 %v3932
    %4905 = vmatpush1.msra.mxu0 %v3931
    %4906 = vmatprep.subr.mxu0 %v3936
    %4907 = vmatpush1.msra.mxu0 %v3935
    %4908 = vmatprep.subr.mxu0 %v3940
    %4909 = vmatpush1.msra.mxu0 %v3939
    %4910 = vmatprep.subr.mxu0 %v3944
    %4911 = vmatpush1.msra.mxu0 %v3943
    %4912 = vmatprep.subr.mxu0 %v3948
    %4913 = vmatpush1.msra.mxu0 %v3947
    %4914 = vmatprep.subr.mxu0 %v3952
    %4915 = vmatpush1.msra.mxu0 %v3951
    %4916 = vmatprep.subr.mxu0 %v3956
    %4917 = vmatpush1.msra.mxu0 %v3955
    %4918 = vmatprep.subr.mxu0 %v3960
    %4919 = vmatpush1.msra.mxu0 %v3959
    %4920 = vmatprep.subr.mxu0 %v3964
    %4921 = vmatpush1.msra.mxu0 %v3963
    %4922 = vmatprep.subr.mxu0 %v3968
    %4923 = vmatpush1.msra.mxu0 %v3967
    %4924 = vmatprep.subr.mxu0 %v3972
    %4925 = vmatpush1.msra.mxu0 %v3971
    %4926 = vmatprep.subr.mxu0 0.0
    %4927 = vmatpush1.msra.mxu0 0.0
    %4928 = vmatprep.subr.mxu0 0.0
    %4929 = vmatpush1.msra.mxu0 0.0
    %4930 = vmatprep.subr.mxu0 0.0
    %4931 = vmatpush1.msra.mxu0 0.0
    %4932 = vmatprep.subr.mxu0 0.0
    %4933 = vmatpush1.msra.mxu0 0.0
    %4934 = vmatprep.subr.mxu0 0.0
    %4935 = vmatpush1.msra.mxu0 0.0
    %4936 = vmatprep.subr.mxu0 0.0
    %4937 = vmatpush1.msra.mxu0 0.0
    %4938 = vmatprep.subr.mxu0 0.0
    %4939 = vmatpush1.msra.mxu0 0.0
    %4940 = vmatprep.subr.mxu0 0.0
    %4941 = vmatpush1.msra.mxu0 0.0
    %4942 = vmatprep.subr.mxu0 0.0
    %4943 = vmatpush1.msra.mxu0 0.0
    %4944 = vmatprep.subr.mxu0 0.0
    %4945 = vmatpush1.msra.mxu0 0.0
    %4946 = vmatprep.subr.mxu0 0.0
    %4947 = vmatpush1.msra.mxu0 0.0
    %4948 = vmatprep.subr.mxu0 0.0
    %4949 = vmatpush1.msra.mxu0 0.0
    %4950 = vmatprep.subr.mxu0 0.0
    %4951 = vmatpush1.msra.mxu0 0.0
    %4952 = vmatprep.subr.mxu0 0.0
    %4953 = vmatpush1.msra.mxu0 0.0
    %4954 = vmatprep.subr.mxu0 0.0
    %4955 = vmatpush1.msra.mxu0 0.0
    %4956 = vmatprep.subr.mxu0 0.0
    %4957 = vmatpush1.msra.mxu0 0.0
    %4958 = vmatprep.mubr.f32.mxu0 0.0
    %4959 = vmatmul.mubr.f32.gmra.mrb[0].mxu0 %v4822
    %v4960 = vpop.f32.mrb[0].mxu0
    %v4961 = vadd.f32 0.0, %v4960
    %v4962 = vpop.f32.mrb[0].mxu0
    %v4963 = vadd.f32 0.0, %v4962
    %4964 = vdwg.mxu0
    %v4965 = vadd.f32 %v3834, %v4890
    %v4966 = vadd.f32 %v3836, %v4892
    %v4967 = vadd.f32 %v3905, %v4961
    %v4968 = vadd.f32 %v3907, %v4963
    %v4969 = vxor.u32 %v4965, 2147483648
    %v4970 = vmul.f32 %v4969, 1.442695
    %v4971 = vpow.pop %v4970
    %v4972 = vadd.f32 %v4971, 1.0
    %v4973 = vrcp.pop %v4972
    %v4974 = vmul.f32 1.0, %v4973
    %v4975 = vxor.u32 %v4966, 2147483648
    %v4976 = vmul.f32 %v4975, 1.442695
    %v4977 = vpow.pop %v4976
    %v4978 = vadd.f32 %v4977, 1.0
    %v4979 = vrcp.pop %v4978
    %v4980 = vmul.f32 1.0, %v4979
    %v4981 = vtanh.pop %v4967
    %v4982 = vxor.u32 %v4968, 2147483648
    %v4983 = vmul.f32 %v4982, 1.442695
    %v4984 = vpow.pop %v4983
    %v4985 = vadd.f32 %v4984, 1.0
    %v4986 = vrcp.pop %v4985
    %v4987 = vmul.f32 1.0, %v4986
    %v4988 = vmul.f32 %v4980, %v4820
    %v4989 = vmul.f32 %v4974, %v4981
    %v4990 = vadd.f32 %v4988, %v4989
    %v4991 = vtanh.pop %v4990
    %v4992 = vmul.f32 %v4987, %v4991
    %4993 = vmatprep.subr.mxu0 %v3910
    %4994 = vmatpush1.msra.mxu0 %v3909
    %4995 = vmatprep.subr.mxu0 %v3914
    %4996 = vmatpush1.msra.mxu0 %v3913
    %4997 = vmatprep.subr.mxu0 %v3918
    %4998 = vmatpush1.msra.mxu0 %v3917
    %4999 = vmatprep.subr.mxu0 %v3922
    %5000 = vmatpush1.msra.mxu0 %v3921
    %5001 = vmatprep.subr.mxu0 %v3926
    %5002 = vmatpush1.msra.mxu0 %v3925
    %5003 = vmatprep.subr.mxu0 %v3930
    %5004 = vmatpush1.msra.mxu0 %v3929
    %5005 = vmatprep.subr.mxu0 %v3934
    %5006 = vmatpush1.msra.mxu0 %v3933
    %5007 = vmatprep.subr.mxu0 %v3938
    %5008 = vmatpush1.msra.mxu0 %v3937
    %5009 = vmatprep.subr.mxu0 %v3942
    %5010 = vmatpush1.msra.mxu0 %v3941
    %5011 = vmatprep.subr.mxu0 %v3946
    %5012 = vmatpush1.msra.mxu0 %v3945
    %5013 = vmatprep.subr.mxu0 %v3950
    %5014 = vmatpush1.msra.mxu0 %v3949
    %5015 = vmatprep.subr.mxu0 %v3954
    %5016 = vmatpush1.msra.mxu0 %v3953
    %5017 = vmatprep.subr.mxu0 %v3958
    %5018 = vmatpush1.msra.mxu0 %v3957
    %5019 = vmatprep.subr.mxu0 %v3962
    %5020 = vmatpush1.msra.mxu0 %v3961
    %5021 = vmatprep.subr.mxu0 %v3966
    %5022 = vmatpush1.msra.mxu0 %v3965
    %5023 = vmatprep.subr.mxu0 %v3970
    %5024 = vmatpush1.msra.mxu0 %v3969
    %5025 = vmatprep.subr.mxu0 0.0
    %5026 = vmatpush1.msra.mxu0 0.0
    %5027 = vmatprep.subr.mxu0 0.0
    %5028 = vmatpush1.msra.mxu0 0.0
    %5029 = vmatprep.subr.mxu0 0.0
    %5030 = vmatpush1.msra.mxu0 0.0
    %5031 = vmatprep.subr.mxu0 0.0
    %5032 = vmatpush1.msra.mxu0 0.0
    %5033 = vmatprep.subr.mxu0 0.0
    %5034 = vmatpush1.msra.mxu0 0.0
    %5035 = vmatprep.subr.mxu0 0.0
    %5036 = vmatpush1.msra.mxu0 0.0
    %5037 = vmatprep.subr.mxu0 0.0
    %5038 = vmatpush1.msra.mxu0 0.0
    %5039 = vmatprep.subr.mxu0 0.0
    %5040 = vmatpush1.msra.mxu0 0.0
    %5041 = vmatprep.subr.mxu0 0.0
    %5042 = vmatpush1.msra.mxu0 0.0
    %5043 = vmatprep.subr.mxu0 0.0
    %5044 = vmatpush1.msra.mxu0 0.0
    %5045 = vmatprep.subr.mxu0 0.0
    %5046 = vmatpush1.msra.mxu0 0.0
    %5047 = vmatprep.subr.mxu0 0.0
    %5048 = vmatpush1.msra.mxu0 0.0
    %5049 = vmatprep.subr.mxu0 0.0
    %5050 = vmatpush1.msra.mxu0 0.0
    %5051 = vmatprep.subr.mxu0 0.0
    %5052 = vmatpush1.msra.mxu0 0.0
    %5053 = vmatprep.subr.mxu0 0.0
    %5054 = vmatpush1.msra.mxu0 0.0
    %5055 = vmatprep.subr.mxu0 0.0
    %5056 = vmatpush1.msra.mxu0 0.0
    %5057 = vmatprep.mubr.f32.mxu0 0.0
    %5058 = vmatmul.mubr.f32.gmra.mrb[0].mxu0 %v4992
    %v5059 = vpop.f32.mrb[0].mxu0
    %v5060 = vadd.f32 0.0, %v5059
    %v5061 = vpop.f32.mrb[0].mxu0
    %v5062 = vadd.f32 0.0, %v5061
    %5063 = vdwg.mxu0
    %5064 = vmatprep.subr.mxu0 %v3912
    %5065 = vmatpush1.msra.mxu0 %v3911
    %5066 = vmatprep.subr.mxu0 %v3916
    %5067 = vmatpush1.msra.mxu0 %v3915
    %5068 = vmatprep.subr.mxu0 %v3920
    %5069 = vmatpush1.msra.mxu0 %v3919
    %5070 = vmatprep.subr.mxu0 %v3924
    %5071 = vmatpush1.msra.mxu0 %v3923
    %5072 = vmatprep.subr.mxu0 %v3928
    %5073 = vmatpush1.msra.mxu0 %v3927
    %5074 = vmatprep.subr.mxu0 %v3932
    %5075 = vmatpush1.msra.mxu0 %v3931
    %5076 = vmatprep.subr.mxu0 %v3936
    %5077 = vmatpush1.msra.mxu0 %v3935
    %5078 = vmatprep.subr.mxu0 %v3940
    %5079 = vmatpush1.msra.mxu0 %v3939
    %5080 = vmatprep.subr.mxu0 %v3944
    %5081 = vmatpush1.msra.mxu0 %v3943
    %5082 = vmatprep.subr.mxu0 %v3948
    %5083 = vmatpush1.msra.mxu0 %v3947
    %5084 = vmatprep.subr.mxu0 %v3952
    %5085 = vmatpush1.msra.mxu0 %v3951
    %5086 = vmatprep.subr.mxu0 %v3956
    %5087 = vmatpush1.msra.mxu0 %v3955
    %5088 = vmatprep.subr.mxu0 %v3960
    %5089 = vmatpush1.msra.mxu0 %v3959
    %5090 = vmatprep.subr.mxu0 %v3964
    %5091 = vmatpush1.msra.mxu0 %v3963
    %5092 = vmatprep.subr.mxu0 %v3968
    %5093 = vmatpush1.msra.mxu0 %v3967
    %5094 = vmatprep.subr.mxu0 %v3972
    %5095 = vmatpush1.msra.mxu0 %v3971
    %5096 = vmatprep.subr.mxu0 0.0
    %5097 = vmatpush1.msra.mxu0 0.0
    %5098 = vmatprep.subr.mxu0 0.0
    %5099 = vmatpush1.msra.mxu0 0.0
    %5100 = vmatprep.subr.mxu0 0.0
    %5101 = vmatpush1.msra.mxu0 0.0
    %5102 = vmatprep.subr.mxu0 0.0
    %5103 = vmatpush1.msra.mxu0 0.0
    %5104 = vmatprep.subr.mxu0 0.0
    %5105 = vmatpush1.msra.mxu0 0.0
    %5106 = vmatprep.subr.mxu0 0.0
    %5107 = vmatpush1.msra.mxu0 0.0
    %5108 = vmatprep.subr.mxu0 0.0
    %5109 = vmatpush1.msra.mxu0 0.0
    %5110 = vmatprep.subr.mxu0 0.0
    %5111 = vmatpush1.msra.mxu0 0.0
    %5112 = vmatprep.subr.mxu0 0.0
    %5113 = vmatpush1.msra.mxu0 0.0
    %5114 = vmatprep.subr.mxu0 0.0
    %5115 = vmatpush1.msra.mxu0 0.0
    %5116 = vmatprep.subr.mxu0 0.0
    %5117 = vmatpush1.msra.mxu0 0.0
    %5118 = vmatprep.subr.mxu0 0.0
    %5119 = vmatpush1.msra.mxu0 0.0
    %5120 = vmatprep.subr.mxu0 0.0
    %5121 = vmatpush1.msra.mxu0 0.0
    %5122 = vmatprep.subr.mxu0 0.0
    %5123 = vmatpush1.msra.mxu0 0.0
    %5124 = vmatprep.subr.mxu0 0.0
    %5125 = vmatpush1.msra.mxu0 0.0
    %5126 = vmatprep.subr.mxu0 0.0
    %5127 = vmatpush1.msra.mxu0 0.0
    %5128 = vmatprep.mubr.f32.mxu0 0.0
    %5129 = vmatmul.mubr.f32.gmra.mrb[0].mxu0 %v4992
    %v5130 = vpop.f32.mrb[0].mxu0
    %v5131 = vadd.f32 0.0, %v5130
    %v5132 = vpop.f32.mrb[0].mxu0
    %v5133 = vadd.f32 0.0, %v5132
    %5134 = vdwg.mxu0
    %v5135 = vadd.f32 %v3834, %v5060
    %v5136 = vadd.f32 %v3836, %v5062
    %v5137 = vadd.f32 %v3905, %v5131
    %v5138 = vadd.f32 %v3907, %v5133
    %v5139 = vxor.u32 %v5135, 2147483648
    %v5140 = vmul.f32 %v5139, 1.442695
    %v5141 = vpow.pop %v5140
    %v5142 = vadd.f32 %v5141, 1.0
    %v5143 = vrcp.pop %v5142
    %v5144 = vmul.f32 1.0, %v5143
    %v5145 = vxor.u32 %v5136, 2147483648
    %v5146 = vmul.f32 %v5145, 1.442695
    %v5147 = vpow.pop %v5146
    %v5148 = vadd.f32 %v5147, 1.0
    %v5149 = vrcp.pop %v5148
    %v5150 = vmul.f32 1.0, %v5149
    %v5151 = vtanh.pop %v5137
    %v5152 = vxor.u32 %v5138, 2147483648
    %v5153 = vmul.f32 %v5152, 1.442695
    %v5154 = vpow.pop %v5153
    %v5155 = vadd.f32 %v5154, 1.0
    %v5156 = vrcp.pop %v5155
    %v5157 = vmul.f32 1.0, %v5156
    %v5158 = vmul.f32 %v5150, %v4990
    %v5159 = vmul.f32 %v5144, %v5151
    %v5160 = vadd.f32 %v5158, %v5159
    %v5161 = vtanh.pop %v5160
    %v5162 = vmul.f32 %v5157, %v5161
    %5163 = vmatprep.subr.mxu0 %v3910
    %5164 = vmatpush1.msra.mxu0 %v3909
    %5165 = vmatprep.subr.mxu0 %v3914
    %5166 = vmatpush1.msra.mxu0 %v3913
    %5167 = vmatprep.subr.mxu0 %v3918
    %5168 = vmatpush1.msra.mxu0 %v3917
    %5169 = vmatprep.subr.mxu0 %v3922
    %5170 = vmatpush1.msra.mxu0 %v3921
    %5171 = vmatprep.subr.mxu0 %v3926
    %5172 = vmatpush1.msra.mxu0 %v3925
    %5173 = vmatprep.subr.mxu0 %v3930
    %5174 = vmatpush1.msra.mxu0 %v3929
    %5175 = vmatprep.subr.mxu0 %v3934
    %5176 = vmatpush1.msra.mxu0 %v3933
    %5177 = vmatprep.subr.mxu0 %v3938
    %5178 = vmatpush1.msra.mxu0 %v3937
    %5179 = vmatprep.subr.mxu0 %v3942
    %5180 = vmatpush1.msra.mxu0 %v3941
    %5181 = vmatprep.subr.mxu0 %v3946
    %5182 = vmatpush1.msra.mxu0 %v3945
    %5183 = vmatprep.subr.mxu0 %v3950
    %5184 = vmatpush1.msra.mxu0 %v3949
    %5185 = vmatprep.subr.mxu0 %v3954
    %5186 = vmatpush1.msra.mxu0 %v3953
    %5187 = vmatprep.subr.mxu0 %v3958
    %5188 = vmatpush1.msra.mxu0 %v3957
    %5189 = vmatprep.subr.mxu0 %v3962
    %5190 = vmatpush1.msra.mxu0 %v3961
    %5191 = vmatprep.subr.mxu0 %v3966
    %5192 = vmatpush1.msra.mxu0 %v3965
    %5193 = vmatprep.subr.mxu0 %v3970
    %5194 = vmatpush1.msra.mxu0 %v3969
    %5195 = vmatprep.subr.mxu0 0.0
    %5196 = vmatpush1.msra.mxu0 0.0
    %5197 = vmatprep.subr.mxu0 0.0
    %5198 = vmatpush1.msra.mxu0 0.0
    %5199 = vmatprep.subr.mxu0 0.0
    %5200 = vmatpush1.msra.mxu0 0.0
    %5201 = vmatprep.subr.mxu0 0.0
    %5202 = vmatpush1.msra.mxu0 0.0
    %5203 = vmatprep.subr.mxu0 0.0
    %5204 = vmatpush1.msra.mxu0 0.0
    %5205 = vmatprep.subr.mxu0 0.0
    %5206 = vmatpush1.msra.mxu0 0.0
    %5207 = vmatprep.subr.mxu0 0.0
    %5208 = vmatpush1.msra.mxu0 0.0
    %5209 = vmatprep.subr.mxu0 0.0
    %5210 = vmatpush1.msra.mxu0 0.0
    %5211 = vmatprep.subr.mxu0 0.0
    %5212 = vmatpush1.msra.mxu0 0.0
    %5213 = vmatprep.subr.mxu0 0.0
    %5214 = vmatpush1.msra.mxu0 0.0
    %5215 = vmatprep.subr.mxu0 0.0
    %5216 = vmatpush1.msra.mxu0 0.0
    %5217 = vmatprep.subr.mxu0 0.0
    %5218 = vmatpush1.msra.mxu0 0.0
    %5219 = vmatprep.subr.mxu0 0.0
    %5220 = vmatpush1.msra.mxu0 0.0
    %5221 = vmatprep.subr.mxu0 0.0
    %5222 = vmatpush1.msra.mxu0 0.0
    %5223 = vmatprep.subr.mxu0 0.0
    %5224 = vmatpush1.msra.mxu0 0.0
    %5225 = vmatprep.subr.mxu0 0.0
    %5226 = vmatpush1.msra.mxu0 0.0
    %5227 = vmatprep.mubr.f32.mxu0 0.0
    %5228 = vmatmul.mubr.f32.gmra.mrb[0].mxu0 %v5162
    %v5229 = vpop.f32.mrb[0].mxu0
    %v5230 = vadd.f32 0.0, %v5229
    %v5231 = vpop.f32.mrb[0].mxu0
    %v5232 = vadd.f32 0.0, %v5231
    %5233 = vdwg.mxu0
    %5234 = vmatprep.subr.mxu0 %v3912
    %5235 = vmatpush1.msra.mxu0 %v3911
    %5236 = vmatprep.subr.mxu0 %v3916
    %5237 = vmatpush1.msra.mxu0 %v3915
    %5238 = vmatprep.subr.mxu0 %v3920
    %5239 = vmatpush1.msra.mxu0 %v3919
    %5240 = vmatprep.subr.mxu0 %v3924
    %5241 = vmatpush1.msra.mxu0 %v3923
    %5242 = vmatprep.subr.mxu0 %v3928
    %5243 = vmatpush1.msra.mxu0 %v3927
    %5244 = vmatprep.subr.mxu0 %v3932
    %5245 = vmatpush1.msra.mxu0 %v3931
    %5246 = vmatprep.subr.mxu0 %v3936
    %5247 = vmatpush1.msra.mxu0 %v3935
    %5248 = vmatprep.subr.mxu0 %v3940
    %5249 = vmatpush1.msra.mxu0 %v3939
    %5250 = vmatprep.subr.mxu0 %v3944
    %5251 = vmatpush1.msra.mxu0 %v3943
    %5252 = vmatprep.subr.mxu0 %v3948
    %5253 = vmatpush1.msra.mxu0 %v3947
    %5254 = vmatprep.subr.mxu0 %v3952
    %5255 = vmatpush1.msra.mxu0 %v3951
    %5256 = vmatprep.subr.mxu0 %v3956
    %5257 = vmatpush1.msra.mxu0 %v3955
    %5258 = vmatprep.subr.mxu0 %v3960
    %5259 = vmatpush1.msra.mxu0 %v3959
    %5260 = vmatprep.subr.mxu0 %v3964
    %5261 = vmatpush1.msra.mxu0 %v3963
    %5262 = vmatprep.subr.mxu0 %v3968
    %5263 = vmatpush1.msra.mxu0 %v3967
    %5264 = vmatprep.subr.mxu0 %v3972
    %5265 = vmatpush1.msra.mxu0 %v3971
    %5266 = vmatprep.subr.mxu0 0.0
    %5267 = vmatpush1.msra.mxu0 0.0
    %5268 = vmatprep.subr.mxu0 0.0
    %5269 = vmatpush1.msra.mxu0 0.0
    %5270 = vmatprep.subr.mxu0 0.0
    %5271 = vmatpush1.msra.mxu0 0.0
    %5272 = vmatprep.subr.mxu0 0.0
    %5273 = vmatpush1.msra.mxu0 0.0
    %5274 = vmatprep.subr.mxu0 0.0
    %5275 = vmatpush1.msra.mxu0 0.0
    %5276 = vmatprep.subr.mxu0 0.0
    %5277 = vmatpush1.msra.mxu0 0.0
    %5278 = vmatprep.subr.mxu0 0.0
    %5279 = vmatpush1.msra.mxu0 0.0
    %5280 = vmatprep.subr.mxu0 0.0
    %5281 = vmatpush1.msra.mxu0 0.0
    %5282 = vmatprep.subr.mxu0 0.0
    %5283 = vmatpush1.msra.mxu0 0.0
    %5284 = vmatprep.subr.mxu0 0.0
    %5285 = vmatpush1.msra.mxu0 0.0
    %5286 = vmatprep.subr.mxu0 0.0
    %5287 = vmatpush1.msra.mxu0 0.0
    %5288 = vmatprep.subr.mxu0 0.0
    %5289 = vmatpush1.msra.mxu0 0.0
    %5290 = vmatprep.subr.mxu0 0.0
    %5291 = vmatpush1.msra.mxu0 0.0
    %5292 = vmatprep.subr.mxu0 0.0
    %5293 = vmatpush1.msra.mxu0 0.0
    %5294 = vmatprep.subr.mxu0 0.0
    %5295 = vmatpush1.msra.mxu0 0.0
    %5296 = vmatprep.subr.mxu0 0.0
    %5297 = vmatpush1.msra.mxu0 0.0
    %5298 = vmatprep.mubr.f32.mxu0 0.0
    %5299 = vmatmul.mubr.f32.gmra.mrb[0].mxu0 %v5162
    %v5300 = vpop.f32.mrb[0].mxu0
    %v5301 = vadd.f32 0.0, %v5300
    %v5302 = vpop.f32.mrb[0].mxu0
    %v5303 = vadd.f32 0.0, %v5302
    %5304 = vdwg.mxu0
    %v5305 = vadd.f32 %v3834, %v5230
    %v5306 = vadd.f32 %v3836, %v5232
    %v5307 = vadd.f32 %v3905, %v5301
    %v5308 = vadd.f32 %v3907, %v5303
    %v5309 = vxor.u32 %v5305, 2147483648
    %v5310 = vmul.f32 %v5309, 1.442695
    %v5311 = vpow.pop %v5310
    %v5312 = vadd.f32 %v5311, 1.0
    %v5313 = vrcp.pop %v5312
    %v5314 = vmul.f32 1.0, %v5313
    %v5315 = vxor.u32 %v5306, 2147483648
    %v5316 = vmul.f32 %v5315, 1.442695
    %v5317 = vpow.pop %v5316
    %v5318 = vadd.f32 %v5317, 1.0
    %v5319 = vrcp.pop %v5318
    %v5320 = vmul.f32 1.0, %v5319
    %v5321 = vtanh.pop %v5307
    %v5322 = vxor.u32 %v5308, 2147483648
    %v5323 = vmul.f32 %v5322, 1.442695
    %v5324 = vpow.pop %v5323
    %v5325 = vadd.f32 %v5324, 1.0
    %v5326 = vrcp.pop %v5325
    %v5327 = vmul.f32 1.0, %v5326
    %v5328 = vmul.f32 %v5320, %v5160
    %v5329 = vmul.f32 %v5314, %v5321
    %v5330 = vadd.f32 %v5328, %v5329
    %v5331 = vtanh.pop %v5330
    %v5332 = vmul.f32 %v5327, %v5331
    %v5334 = vrot.slane %v4312, 7
    %v5337 = vrot.slane %v4482, 6
    %v5340 = vrot.slane %v4652, 5
    %v5343 = vrot.slane %v4822, 4
    %v5346 = vrot.slane %v4992, 3
    %v5349 = vrot.slane %v5162, 2
    %v5352 = vrot.slane %v5332, 1
    %v5354 = vsel %vm192, %v4142, %v5334
    %v5355 = vsel %vm1891, %v5354, %v5337
    %v5356 = vsel %vm1893, %v5355, %v5340
    %v5357 = vsel %vm1895, %v5356, %v5343
    %v5358 = vsel %vm1897, %v5357, %v5346
    %v5359 = vsel %vm1899, %v5358, %v5349
    %v5360 = vsel %vm1901, %v5359, %v5352
    %v5361 = vld [vmem:[#allocation11] sm:$0xff]
    %v5362 = vld [vmem:[#allocation11 + $0x8] sm:$0xff]
    %v5363 = vld [vmem:[#allocation11 + $0x10] sm:$0xff]
    %v5364 = vld [vmem:[#allocation11 + $0x18] sm:$0xff]
    %v5365 = vld [vmem:[#allocation11 + $0x20] sm:$0xff]
    %v5366 = vld [vmem:[#allocation11 + $0x28] sm:$0xff]
    %v5367 = vld [vmem:[#allocation11 + $0x30] sm:$0xff]
    %v5368 = vld [vmem:[#allocation11 + $0x38] sm:$0xff]
    %v5369 = vld [vmem:[#allocation11 + $0x40] sm:$0xff]
    %v5370 = vld [vmem:[#allocation11 + $0x48] sm:$0xff]
    %v5371 = vld [vmem:[#allocation11 + $0x50] sm:$0xff]
    %v5372 = vld [vmem:[#allocation11 + $0x58] sm:$0xff]
    %v5373 = vld [vmem:[#allocation11 + $0x60] sm:$0xff]
    %v5374 = vld [vmem:[#allocation11 + $0x68] sm:$0xff]
    %v5375 = vld [vmem:[#allocation11 + $0x70] sm:$0xff]
    %v5376 = vld [vmem:[#allocation11 + $0x78] sm:$0xff]
    %v5377 = vld [vmem:[#allocation11 + $0x80] sm:$0xff]
    %v5378 = vld [vmem:[#allocation11 + $0x88] sm:$0xff]
    %v5379 = vld [vmem:[#allocation11 + $0x90] sm:$0xff]
    %v5380 = vld [vmem:[#allocation11 + $0x98] sm:$0xff]
    %v5381 = vld [vmem:[#allocation11 + $0xa0] sm:$0xff]
    %v5382 = vld [vmem:[#allocation11 + $0xa8] sm:$0xff]
    %v5383 = vld [vmem:[#allocation11 + $0xb0] sm:$0xff]
    %v5384 = vld [vmem:[#allocation11 + $0xb8] sm:$0xff]
    %v5385 = vld [vmem:[#allocation11 + $0xc0] sm:$0xff]
    %v5386 = vld [vmem:[#allocation11 + $0xc8] sm:$0xff]
    %v5387 = vld [vmem:[#allocation11 + $0xd0] sm:$0xff]
    %v5388 = vld [vmem:[#allocation11 + $0xd8] sm:$0xff]
    %v5389 = vld [vmem:[#allocation11 + $0xe0] sm:$0xff]
    %v5390 = vld [vmem:[#allocation11 + $0xe8] sm:$0xff]
    %v5391 = vld [vmem:[#allocation11 + $0xf0] sm:$0xff]
    %v5392 = vld [vmem:[#allocation11 + $0xf8] sm:$0xff]
    %v5393 = vld [vmem:[#allocation11 + $0x100] sm:$0xff]
    %v5394 = vld [vmem:[#allocation11 + $0x108] sm:$0xff]
    %v5395 = vld [vmem:[#allocation11 + $0x110] sm:$0xff]
    %v5396 = vld [vmem:[#allocation11 + $0x118] sm:$0xff]
    %v5397 = vld [vmem:[#allocation11 + $0x120] sm:$0xff]
    %v5398 = vld [vmem:[#allocation11 + $0x128] sm:$0xff]
    %v5399 = vld [vmem:[#allocation11 + $0x130] sm:$0xff]
    %v5400 = vld [vmem:[#allocation11 + $0x138] sm:$0xff]
    %v5401 = vld [vmem:[#allocation11 + $0x140] sm:$0xff]
    %v5402 = vld [vmem:[#allocation11 + $0x148] sm:$0xff]
    %v5403 = vld [vmem:[#allocation11 + $0x150] sm:$0xff]
    %v5404 = vld [vmem:[#allocation11 + $0x158] sm:$0xff]
    %v5405 = vld [vmem:[#allocation11 + $0x160] sm:$0xff]
    %v5406 = vld [vmem:[#allocation11 + $0x168] sm:$0xff]
    %v5407 = vld [vmem:[#allocation11 + $0x170] sm:$0xff]
    %v5408 = vld [vmem:[#allocation11 + $0x178] sm:$0xff]
    %v5409 = vld [vmem:[#allocation11 + $0x180] sm:$0xff]
    %v5410 = vld [vmem:[#allocation11 + $0x188] sm:$0xff]
    %v5411 = vld [vmem:[#allocation11 + $0x190] sm:$0xff]
    %v5412 = vld [vmem:[#allocation11 + $0x198] sm:$0xff]
    %v5413 = vld [vmem:[#allocation11 + $0x1a0] sm:$0xff]
    %v5414 = vld [vmem:[#allocation11 + $0x1a8] sm:$0xff]
    %v5415 = vld [vmem:[#allocation11 + $0x1b0] sm:$0xff]
    %v5416 = vld [vmem:[#allocation11 + $0x1b8] sm:$0xff]
    %v5417 = vld [vmem:[#allocation11 + $0x1c0] sm:$0xff]
    %v5418 = vld [vmem:[#allocation11 + $0x1c8] sm:$0xff]
    %v5419 = vld [vmem:[#allocation11 + $0x1d0] sm:$0xff]
    %v5420 = vld [vmem:[#allocation11 + $0x1d8] sm:$0xff]
    %v5421 = vld [vmem:[#allocation11 + $0x1e0] sm:$0xff]
    %v5422 = vld [vmem:[#allocation11 + $0x1e8] sm:$0xff]
    %v5423 = vld [vmem:[#allocation11 + $0x1f0] sm:$0xff]
    %v5424 = vld [vmem:[#allocation11 + $0x1f8] sm:$0xff]
    %v5425 = vld [vmem:[%s12] sm:$0xf]
    %v5427 = vlaneseq
    %v5428 = vshrl.u32 %v5427, 7
    %v5429 = vsub.s32 0, %v5428
    %v5430 = vrot.slane %v5425, %v5429
    %v5431 = vlaneseq
    %v5432 = vshrl.u32 %v5431, 7
    %v5433 = vsub.s32 1, %v5432
    %v5434 = vrot.slane %v5425, %v5433
    %v5435 = vlaneseq
    %v5436 = vshrl.u32 %v5435, 7
    %v5437 = vsub.s32 2, %v5436
    %v5438 = vrot.slane %v5425, %v5437
    %v5439 = vlaneseq
    %v5440 = vshrl.u32 %v5439, 7
    %v5441 = vsub.s32 3, %v5440
    %v5442 = vrot.slane %v5425, %v5441
    %5447 = vmatprep.subr.mxu0 %v5362
    %5448 = vmatpush1.msra.mxu0 %v5361
    %5449 = vmatprep.subr.mxu0 %v5366
    %5450 = vmatpush1.msra.mxu0 %v5365
    %5451 = vmatprep.subr.mxu0 %v5370
    %5452 = vmatpush1.msra.mxu0 %v5369
    %5453 = vmatprep.subr.mxu0 %v5374
    %5454 = vmatpush1.msra.mxu0 %v5373
    %5455 = vmatprep.subr.mxu0 %v5378
    %5456 = vmatpush1.msra.mxu0 %v5377
    %5457 = vmatprep.subr.mxu0 %v5382
    %5458 = vmatpush1.msra.mxu0 %v5381
    %5459 = vmatprep.subr.mxu0 %v5386
    %5460 = vmatpush1.msra.mxu0 %v5385
    %5461 = vmatprep.subr.mxu0 %v5390
    %5462 = vmatpush1.msra.mxu0 %v5389
    %5463 = vmatprep.subr.mxu0 %v5394
    %5464 = vmatpush1.msra.mxu0 %v5393
    %5465 = vmatprep.subr.mxu0 %v5398
    %5466 = vmatpush1.msra.mxu0 %v5397
    %5467 = vmatprep.subr.mxu0 %v5402
    %5468 = vmatpush1.msra.mxu0 %v5401
    %5469 = vmatprep.subr.mxu0 %v5406
    %5470 = vmatpush1.msra.mxu0 %v5405
    %5471 = vmatprep.subr.mxu0 %v5410
    %5472 = vmatpush1.msra.mxu0 %v5409
    %5473 = vmatprep.subr.mxu0 %v5414
    %5474 = vmatpush1.msra.mxu0 %v5413
    %5475 = vmatprep.subr.mxu0 %v5418
    %5476 = vmatpush1.msra.mxu0 %v5417
    %5477 = vmatprep.subr.mxu0 %v5422
    %5478 = vmatpush1.msra.mxu0 %v5421
    %5479 = vmatprep.subr.mxu0 0.0
    %5480 = vmatpush1.msra.mxu0 0.0
    %5481 = vmatprep.subr.mxu0 0.0
    %5482 = vmatpush1.msra.mxu0 0.0
    %5483 = vmatprep.subr.mxu0 0.0
    %5484 = vmatpush1.msra.mxu0 0.0
    %5485 = vmatprep.subr.mxu0 0.0
    %5486 = vmatpush1.msra.mxu0 0.0
    %5487 = vmatprep.subr.mxu0 0.0
    %5488 = vmatpush1.msra.mxu0 0.0
    %5489 = vmatprep.subr.mxu0 0.0
    %5490 = vmatpush1.msra.mxu0 0.0
    %5491 = vmatprep.subr.mxu0 0.0
    %5492 = vmatpush1.msra.mxu0 0.0
    %5493 = vmatprep.subr.mxu0 0.0
    %5494 = vmatpush1.msra.mxu0 0.0
    %5495 = vmatprep.subr.mxu0 0.0
    %5496 = vmatpush1.msra.mxu0 0.0
    %5497 = vmatprep.subr.mxu0 0.0
    %5498 = vmatpush1.msra.mxu0 0.0
    %5499 = vmatprep.subr.mxu0 0.0
    %5500 = vmatpush1.msra.mxu0 0.0
    %5501 = vmatprep.subr.mxu0 0.0
    %5502 = vmatpush1.msra.mxu0 0.0
    %5503 = vmatprep.subr.mxu0 0.0
    %5504 = vmatpush1.msra.mxu0 0.0
    %5505 = vmatprep.subr.mxu0 0.0
    %5506 = vmatpush1.msra.mxu0 0.0
    %5507 = vmatprep.subr.mxu0 0.0
    %5508 = vmatpush1.msra.mxu0 0.0
    %5509 = vmatprep.subr.mxu0 0.0
    %5510 = vmatpush1.msra.mxu0 0.0
    %5511 = vmatprep.mubr.f32.mxu0 0.0
    %5512 = vmatmul.mubr.f32.gmra.mrb[0].mxu0 %v5360
    %v5513 = vpop.f32.mrb[0].mxu0
    %v5514 = vadd.f32 %v5430, %v5513
    %v5515 = vpop.f32.mrb[0].mxu0
    %v5516 = vadd.f32 %v5434, %v5515
    %5517 = vdwg.mxu0
    %5518 = vmatprep.subr.mxu0 %v5364
    %5519 = vmatpush1.msra.mxu0 %v5363
    %5520 = vmatprep.subr.mxu0 %v5368
    %5521 = vmatpush1.msra.mxu0 %v5367
    %5522 = vmatprep.subr.mxu0 %v5372
    %5523 = vmatpush1.msra.mxu0 %v5371
    %5524 = vmatprep.subr.mxu0 %v5376
    %5525 = vmatpush1.msra.mxu0 %v5375
    %5526 = vmatprep.subr.mxu0 %v5380
    %5527 = vmatpush1.msra.mxu0 %v5379
    %5528 = vmatprep.subr.mxu0 %v5384
    %5529 = vmatpush1.msra.mxu0 %v5383
    %5530 = vmatprep.subr.mxu0 %v5388
    %5531 = vmatpush1.msra.mxu0 %v5387
    %5532 = vmatprep.subr.mxu0 %v5392
    %5533 = vmatpush1.msra.mxu0 %v5391
    %5534 = vmatprep.subr.mxu0 %v5396
    %5535 = vmatpush1.msra.mxu0 %v5395
    %5536 = vmatprep.subr.mxu0 %v5400
    %5537 = vmatpush1.msra.mxu0 %v5399
    %5538 = vmatprep.subr.mxu0 %v5404
    %5539 = vmatpush1.msra.mxu0 %v5403
    %5540 = vmatprep.subr.mxu0 %v5408
    %5541 = vmatpush1.msra.mxu0 %v5407
    %5542 = vmatprep.subr.mxu0 %v5412
    %5543 = vmatpush1.msra.mxu0 %v5411
    %5544 = vmatprep.subr.mxu0 %v5416
    %5545 = vmatpush1.msra.mxu0 %v5415
    %5546 = vmatprep.subr.mxu0 %v5420
    %5547 = vmatpush1.msra.mxu0 %v5419
    %5548 = vmatprep.subr.mxu0 %v5424
    %5549 = vmatpush1.msra.mxu0 %v5423
    %5550 = vmatprep.subr.mxu0 0.0
    %5551 = vmatpush1.msra.mxu0 0.0
    %5552 = vmatprep.subr.mxu0 0.0
    %5553 = vmatpush1.msra.mxu0 0.0
    %5554 = vmatprep.subr.mxu0 0.0
    %5555 = vmatpush1.msra.mxu0 0.0
    %5556 = vmatprep.subr.mxu0 0.0
    %5557 = vmatpush1.msra.mxu0 0.0
    %5558 = vmatprep.subr.mxu0 0.0
    %5559 = vmatpush1.msra.mxu0 0.0
    %5560 = vmatprep.subr.mxu0 0.0
    %5561 = vmatpush1.msra.mxu0 0.0
    %5562 = vmatprep.subr.mxu0 0.0
    %5563 = vmatpush1.msra.mxu0 0.0
    %5564 = vmatprep.subr.mxu0 0.0
    %5565 = vmatpush1.msra.mxu0 0.0
    %5566 = vmatprep.subr.mxu0 0.0
    %5567 = vmatpush1.msra.mxu0 0.0
    %5568 = vmatprep.subr.mxu0 0.0
    %5569 = vmatpush1.msra.mxu0 0.0
    %5570 = vmatprep.subr.mxu0 0.0
    %5571 = vmatpush1.msra.mxu0 0.0
    %5572 = vmatprep.subr.mxu0 0.0
    %5573 = vmatpush1.msra.mxu0 0.0
    %5574 = vmatprep.subr.mxu0 0.0
    %5575 = vmatpush1.msra.mxu0 0.0
    %5576 = vmatprep.subr.mxu0 0.0
    %5577 = vmatpush1.msra.mxu0 0.0
    %5578 = vmatprep.subr.mxu0 0.0
    %5579 = vmatpush1.msra.mxu0 0.0
    %5580 = vmatprep.subr.mxu0 0.0
    %5581 = vmatpush1.msra.mxu0 0.0
    %5582 = vmatprep.mubr.f32.mxu0 0.0
    %5583 = vmatmul.mubr.f32.gmra.mrb[0].mxu0 %v5360
    %v5584 = vpop.f32.mrb[0].mxu0
    %v5585 = vadd.f32 %v5438, %v5584
    %v5586 = vpop.f32.mrb[0].mxu0
    %v5587 = vadd.f32 %v5442, %v5586
    %5588 = vdwg.mxu0
    %v5589 = vld [vmem:[#allocation13] sm:$0xff]
    %v5590 = vld [vmem:[#allocation13 + $0x8] sm:$0xff]
    %v5591 = vld [vmem:[#allocation13 + $0x10] sm:$0xff]
    %v5592 = vld [vmem:[#allocation13 + $0x18] sm:$0xff]
    %v5593 = vld [vmem:[#allocation13 + $0x20] sm:$0xff]
    %v5594 = vld [vmem:[#allocation13 + $0x28] sm:$0xff]
    %v5595 = vld [vmem:[#allocation13 + $0x30] sm:$0xff]
    %v5596 = vld [vmem:[#allocation13 + $0x38] sm:$0xff]
    %v5597 = vld [vmem:[#allocation13 + $0x40] sm:$0xff]
    %v5598 = vld [vmem:[#allocation13 + $0x48] sm:$0xff]
    %v5599 = vld [vmem:[#allocation13 + $0x50] sm:$0xff]
    %v5600 = vld [vmem:[#allocation13 + $0x58] sm:$0xff]
    %v5601 = vld [vmem:[#allocation13 + $0x60] sm:$0xff]
    %v5602 = vld [vmem:[#allocation13 + $0x68] sm:$0xff]
    %v5603 = vld [vmem:[#allocation13 + $0x70] sm:$0xff]
    %v5604 = vld [vmem:[#allocation13 + $0x78] sm:$0xff]
    %v5605 = vld [vmem:[#allocation13 + $0x80] sm:$0xff]
    %v5606 = vld [vmem:[#allocation13 + $0x88] sm:$0xff]
    %v5607 = vld [vmem:[#allocation13 + $0x90] sm:$0xff]
    %v5608 = vld [vmem:[#allocation13 + $0x98] sm:$0xff]
    %v5609 = vld [vmem:[#allocation13 + $0xa0] sm:$0xff]
    %v5610 = vld [vmem:[#allocation13 + $0xa8] sm:$0xff]
    %v5611 = vld [vmem:[#allocation13 + $0xb0] sm:$0xff]
    %v5612 = vld [vmem:[#allocation13 + $0xb8] sm:$0xff]
    %v5613 = vld [vmem:[#allocation13 + $0xc0] sm:$0xff]
    %v5614 = vld [vmem:[#allocation13 + $0xc8] sm:$0xff]
    %v5615 = vld [vmem:[#allocation13 + $0xd0] sm:$0xff]
    %v5616 = vld [vmem:[#allocation13 + $0xd8] sm:$0xff]
    %v5617 = vld [vmem:[#allocation13 + $0xe0] sm:$0xff]
    %v5618 = vld [vmem:[#allocation13 + $0xe8] sm:$0xff]
    %v5619 = vld [vmem:[#allocation13 + $0xf0] sm:$0xff]
    %v5620 = vld [vmem:[#allocation13 + $0xf8] sm:$0xff]
    %v5621 = vld [vmem:[#allocation13 + $0x100] sm:$0xff]
    %v5622 = vld [vmem:[#allocation13 + $0x108] sm:$0xff]
    %v5623 = vld [vmem:[#allocation13 + $0x110] sm:$0xff]
    %v5624 = vld [vmem:[#allocation13 + $0x118] sm:$0xff]
    %v5625 = vld [vmem:[#allocation13 + $0x120] sm:$0xff]
    %v5626 = vld [vmem:[#allocation13 + $0x128] sm:$0xff]
    %v5627 = vld [vmem:[#allocation13 + $0x130] sm:$0xff]
    %v5628 = vld [vmem:[#allocation13 + $0x138] sm:$0xff]
    %v5629 = vld [vmem:[#allocation13 + $0x140] sm:$0xff]
    %v5630 = vld [vmem:[#allocation13 + $0x148] sm:$0xff]
    %v5631 = vld [vmem:[#allocation13 + $0x150] sm:$0xff]
    %v5632 = vld [vmem:[#allocation13 + $0x158] sm:$0xff]
    %v5633 = vld [vmem:[#allocation13 + $0x160] sm:$0xff]
    %v5634 = vld [vmem:[#allocation13 + $0x168] sm:$0xff]
    %v5635 = vld [vmem:[#allocation13 + $0x170] sm:$0xff]
    %v5636 = vld [vmem:[#allocation13 + $0x178] sm:$0xff]
    %v5637 = vld [vmem:[#allocation13 + $0x180] sm:$0xff]
    %v5638 = vld [vmem:[#allocation13 + $0x188] sm:$0xff]
    %v5639 = vld [vmem:[#allocation13 + $0x190] sm:$0xff]
    %v5640 = vld [vmem:[#allocation13 + $0x198] sm:$0xff]
    %v5641 = vld [vmem:[#allocation13 + $0x1a0] sm:$0xff]
    %v5642 = vld [vmem:[#allocation13 + $0x1a8] sm:$0xff]
    %v5643 = vld [vmem:[#allocation13 + $0x1b0] sm:$0xff]
    %v5644 = vld [vmem:[#allocation13 + $0x1b8] sm:$0xff]
    %v5645 = vld [vmem:[#allocation13 + $0x1c0] sm:$0xff]
    %v5646 = vld [vmem:[#allocation13 + $0x1c8] sm:$0xff]
    %v5647 = vld [vmem:[#allocation13 + $0x1d0] sm:$0xff]
    %v5648 = vld [vmem:[#allocation13 + $0x1d8] sm:$0xff]
    %v5649 = vld [vmem:[#allocation13 + $0x1e0] sm:$0xff]
    %v5650 = vld [vmem:[#allocation13 + $0x1e8] sm:$0xff]
    %v5651 = vld [vmem:[#allocation13 + $0x1f0] sm:$0xff]
    %v5652 = vld [vmem:[#allocation13 + $0x1f8] sm:$0xff]
    %5653 = vmatprep.subr.mxu0 %v5590
    %5654 = vmatpush1.msra.mxu0 %v5589
    %5655 = vmatprep.subr.mxu0 %v5594
    %5656 = vmatpush1.msra.mxu0 %v5593
    %5657 = vmatprep.subr.mxu0 %v5598
    %5658 = vmatpush1.msra.mxu0 %v5597
    %5659 = vmatprep.subr.mxu0 %v5602
    %5660 = vmatpush1.msra.mxu0 %v5601
    %5661 = vmatprep.subr.mxu0 %v5606
    %5662 = vmatpush1.msra.mxu0 %v5605
    %5663 = vmatprep.subr.mxu0 %v5610
    %5664 = vmatpush1.msra.mxu0 %v5609
    %5665 = vmatprep.subr.mxu0 %v5614
    %5666 = vmatpush1.msra.mxu0 %v5613
    %5667 = vmatprep.subr.mxu0 %v5618
    %5668 = vmatpush1.msra.mxu0 %v5617
    %5669 = vmatprep.subr.mxu0 %v5622
    %5670 = vmatpush1.msra.mxu0 %v5621
    %5671 = vmatprep.subr.mxu0 %v5626
    %5672 = vmatpush1.msra.mxu0 %v5625
    %5673 = vmatprep.subr.mxu0 %v5630
    %5674 = vmatpush1.msra.mxu0 %v5629
    %5675 = vmatprep.subr.mxu0 %v5634
    %5676 = vmatpush1.msra.mxu0 %v5633
    %5677 = vmatprep.subr.mxu0 %v5638
    %5678 = vmatpush1.msra.mxu0 %v5637
    %5679 = vmatprep.subr.mxu0 %v5642
    %5680 = vmatpush1.msra.mxu0 %v5641
    %5681 = vmatprep.subr.mxu0 %v5646
    %5682 = vmatpush1.msra.mxu0 %v5645
    %5683 = vmatprep.subr.mxu0 %v5650
    %5684 = vmatpush1.msra.mxu0 %v5649
    %5685 = vmatprep.subr.mxu0 0.0
    %5686 = vmatpush1.msra.mxu0 0.0
    %5687 = vmatprep.subr.mxu0 0.0
    %5688 = vmatpush1.msra.mxu0 0.0
    %5689 = vmatprep.subr.mxu0 0.0
    %5690 = vmatpush1.msra.mxu0 0.0
    %5691 = vmatprep.subr.mxu0 0.0
    %5692 = vmatpush1.msra.mxu0 0.0
    %5693 = vmatprep.subr.mxu0 0.0
    %5694 = vmatpush1.msra.mxu0 0.0
    %5695 = vmatprep.subr.mxu0 0.0
    %5696 = vmatpush1.msra.mxu0 0.0
    %5697 = vmatprep.subr.mxu0 0.0
    %5698 = vmatpush1.msra.mxu0 0.0
    %5699 = vmatprep.subr.mxu0 0.0
    %5700 = vmatpush1.msra.mxu0 0.0
    %5701 = vmatprep.subr.mxu0 0.0
    %5702 = vmatpush1.msra.mxu0 0.0
    %5703 = vmatprep.subr.mxu0 0.0
    %5704 = vmatpush1.msra.mxu0 0.0
    %5705 = vmatprep.subr.mxu0 0.0
    %5706 = vmatpush1.msra.mxu0 0.0
    %5707 = vmatprep.subr.mxu0 0.0
    %5708 = vmatpush1.msra.mxu0 0.0
    %5709 = vmatprep.subr.mxu0 0.0
    %5710 = vmatpush1.msra.mxu0 0.0
    %5711 = vmatprep.subr.mxu0 0.0
    %5712 = vmatpush1.msra.mxu0 0.0
    %5713 = vmatprep.subr.mxu0 0.0
    %5714 = vmatpush1.msra.mxu0 0.0
    %5715 = vmatprep.subr.mxu0 0.0
    %5716 = vmatpush1.msra.mxu0 0.0
    %5717 = vmatprep.mubr.f32.mxu0 0.0
    %5718 = vmatmul.mubr.f32.gmra.mrb[0].mxu0 0.0
    %v5719 = vpop.f32.mrb[0].mxu0
    %v5720 = vadd.f32 0.0, %v5719
    %v5721 = vpop.f32.mrb[0].mxu0
    %v5722 = vadd.f32 0.0, %v5721
    %5723 = vdwg.mxu0
    %5724 = vmatprep.subr.mxu0 %v5592
    %5725 = vmatpush1.msra.mxu0 %v5591
    %5726 = vmatprep.subr.mxu0 %v5596
    %5727 = vmatpush1.msra.mxu0 %v5595
    %5728 = vmatprep.subr.mxu0 %v5600
    %5729 = vmatpush1.msra.mxu0 %v5599
    %5730 = vmatprep.subr.mxu0 %v5604
    %5731 = vmatpush1.msra.mxu0 %v5603
    %5732 = vmatprep.subr.mxu0 %v5608
    %5733 = vmatpush1.msra.mxu0 %v5607
    %5734 = vmatprep.subr.mxu0 %v5612
    %5735 = vmatpush1.msra.mxu0 %v5611
    %5736 = vmatprep.subr.mxu0 %v5616
    %5737 = vmatpush1.msra.mxu0 %v5615
    %5738 = vmatprep.subr.mxu0 %v5620
    %5739 = vmatpush1.msra.mxu0 %v5619
    %5740 = vmatprep.subr.mxu0 %v5624
    %5741 = vmatpush1.msra.mxu0 %v5623
    %5742 = vmatprep.subr.mxu0 %v5628
    %5743 = vmatpush1.msra.mxu0 %v5627
    %5744 = vmatprep.subr.mxu0 %v5632
    %5745 = vmatpush1.msra.mxu0 %v5631
    %5746 = vmatprep.subr.mxu0 %v5636
    %5747 = vmatpush1.msra.mxu0 %v5635
    %5748 = vmatprep.subr.mxu0 %v5640
    %5749 = vmatpush1.msra.mxu0 %v5639
    %5750 = vmatprep.subr.mxu0 %v5644
    %5751 = vmatpush1.msra.mxu0 %v5643
    %5752 = vmatprep.subr.mxu0 %v5648
    %5753 = vmatpush1.msra.mxu0 %v5647
    %5754 = vmatprep.subr.mxu0 %v5652
    %5755 = vmatpush1.msra.mxu0 %v5651
    %5756 = vmatprep.subr.mxu0 0.0
    %5757 = vmatpush1.msra.mxu0 0.0
    %5758 = vmatprep.subr.mxu0 0.0
    %5759 = vmatpush1.msra.mxu0 0.0
    %5760 = vmatprep.subr.mxu0 0.0
    %5761 = vmatpush1.msra.mxu0 0.0
    %5762 = vmatprep.subr.mxu0 0.0
    %5763 = vmatpush1.msra.mxu0 0.0
    %5764 = vmatprep.subr.mxu0 0.0
    %5765 = vmatpush1.msra.mxu0 0.0
    %5766 = vmatprep.subr.mxu0 0.0
    %5767 = vmatpush1.msra.mxu0 0.0
    %5768 = vmatprep.subr.mxu0 0.0
    %5769 = vmatpush1.msra.mxu0 0.0
    %5770 = vmatprep.subr.mxu0 0.0
    %5771 = vmatpush1.msra.mxu0 0.0
    %5772 = vmatprep.subr.mxu0 0.0
    %5773 = vmatpush1.msra.mxu0 0.0
    %5774 = vmatprep.subr.mxu0 0.0
    %5775 = vmatpush1.msra.mxu0 0.0
    %5776 = vmatprep.subr.mxu0 0.0
    %5777 = vmatpush1.msra.mxu0 0.0
    %5778 = vmatprep.subr.mxu0 0.0
    %5779 = vmatpush1.msra.mxu0 0.0
    %5780 = vmatprep.subr.mxu0 0.0
    %5781 = vmatpush1.msra.mxu0 0.0
    %5782 = vmatprep.subr.mxu0 0.0
    %5783 = vmatpush1.msra.mxu0 0.0
    %5784 = vmatprep.subr.mxu0 0.0
    %5785 = vmatpush1.msra.mxu0 0.0
    %5786 = vmatprep.subr.mxu0 0.0
    %5787 = vmatpush1.msra.mxu0 0.0
    %5788 = vmatprep.mubr.f32.mxu0 0.0
    %5789 = vmatmul.mubr.f32.gmra.mrb[0].mxu0 0.0
    %v5790 = vpop.f32.mrb[0].mxu0
    %v5791 = vadd.f32 0.0, %v5790
    %v5792 = vpop.f32.mrb[0].mxu0
    %v5793 = vadd.f32 0.0, %v5792
    %5794 = vdwg.mxu0
    %v5795 = vadd.f32 %v5514, %v5720
    %v5796 = vadd.f32 %v5516, %v5722
    %v5797 = vadd.f32 %v5585, %v5791
    %v5798 = vadd.f32 %v5587, %v5793
    %v5799 = vxor.u32 %v5795, 2147483648
    %v5800 = vmul.f32 %v5799, 1.442695
    %v5801 = vpow.pop %v5800
    %v5802 = vadd.f32 %v5801, 1.0
    %v5803 = vrcp.pop %v5802
    %v5804 = vmul.f32 1.0, %v5803
    %v5805 = vxor.u32 %v5796, 2147483648
    %v5806 = vmul.f32 %v5805, 1.442695
    %v5807 = vpow.pop %v5806
    %v5808 = vadd.f32 %v5807, 1.0
    %v5809 = vrcp.pop %v5808
    %v5810 = vmul.f32 1.0, %v5809
    %v5811 = vtanh.pop %v5797
    %v5812 = vxor.u32 %v5798, 2147483648
    %v5813 = vmul.f32 %v5812, 1.442695
    %v5814 = vpow.pop %v5813
    %v5815 = vadd.f32 %v5814, 1.0
    %v5816 = vrcp.pop %v5815
    %v5817 = vmul.f32 1.0, %v5816
    %v5818 = vmul.f32 %v5810, 0.0
    %v5819 = vmul.f32 %v5804, %v5811
    %v5820 = vadd.f32 %v5818, %v5819
    %v5821 = vtanh.pop %v5820
    %v5822 = vmul.f32 %v5817, %v5821
    %5823 = vmatprep.subr.mxu0 %v5590
    %5824 = vmatpush1.msra.mxu0 %v5589
    %5825 = vmatprep.subr.mxu0 %v5594
    %5826 = vmatpush1.msra.mxu0 %v5593
    %5827 = vmatprep.subr.mxu0 %v5598
    %5828 = vmatpush1.msra.mxu0 %v5597
    %5829 = vmatprep.subr.mxu0 %v5602
    %5830 = vmatpush1.msra.mxu0 %v5601
    %5831 = vmatprep.subr.mxu0 %v5606
    %5832 = vmatpush1.msra.mxu0 %v5605
    %5833 = vmatprep.subr.mxu0 %v5610
    %5834 = vmatpush1.msra.mxu0 %v5609
    %5835 = vmatprep.subr.mxu0 %v5614
    %5836 = vmatpush1.msra.mxu0 %v5613
    %5837 = vmatprep.subr.mxu0 %v5618
    %5838 = vmatpush1.msra.mxu0 %v5617
    %5839 = vmatprep.subr.mxu0 %v5622
    %5840 = vmatpush1.msra.mxu0 %v5621
    %5841 = vmatprep.subr.mxu0 %v5626
    %5842 = vmatpush1.msra.mxu0 %v5625
    %5843 = vmatprep.subr.mxu0 %v5630
    %5844 = vmatpush1.msra.mxu0 %v5629
    %5845 = vmatprep.subr.mxu0 %v5634
    %5846 = vmatpush1.msra.mxu0 %v5633
    %5847 = vmatprep.subr.mxu0 %v5638
    %5848 = vmatpush1.msra.mxu0 %v5637
    %5849 = vmatprep.subr.mxu0 %v5642
    %5850 = vmatpush1.msra.mxu0 %v5641
    %5851 = vmatprep.subr.mxu0 %v5646
    %5852 = vmatpush1.msra.mxu0 %v5645
    %5853 = vmatprep.subr.mxu0 %v5650
    %5854 = vmatpush1.msra.mxu0 %v5649
    %5855 = vmatprep.subr.mxu0 0.0
    %5856 = vmatpush1.msra.mxu0 0.0
    %5857 = vmatprep.subr.mxu0 0.0
    %5858 = vmatpush1.msra.mxu0 0.0
    %5859 = vmatprep.subr.mxu0 0.0
    %5860 = vmatpush1.msra.mxu0 0.0
    %5861 = vmatprep.subr.mxu0 0.0
    %5862 = vmatpush1.msra.mxu0 0.0
    %5863 = vmatprep.subr.mxu0 0.0
    %5864 = vmatpush1.msra.mxu0 0.0
    %5865 = vmatprep.subr.mxu0 0.0
    %5866 = vmatpush1.msra.mxu0 0.0
    %5867 = vmatprep.subr.mxu0 0.0
    %5868 = vmatpush1.msra.mxu0 0.0
    %5869 = vmatprep.subr.mxu0 0.0
    %5870 = vmatpush1.msra.mxu0 0.0
    %5871 = vmatprep.subr.mxu0 0.0
    %5872 = vmatpush1.msra.mxu0 0.0
    %5873 = vmatprep.subr.mxu0 0.0
    %5874 = vmatpush1.msra.mxu0 0.0
    %5875 = vmatprep.subr.mxu0 0.0
    %5876 = vmatpush1.msra.mxu0 0.0
    %5877 = vmatprep.subr.mxu0 0.0
    %5878 = vmatpush1.msra.mxu0 0.0
    %5879 = vmatprep.subr.mxu0 0.0
    %5880 = vmatpush1.msra.mxu0 0.0
    %5881 = vmatprep.subr.mxu0 0.0
    %5882 = vmatpush1.msra.mxu0 0.0
    %5883 = vmatprep.subr.mxu0 0.0
    %5884 = vmatpush1.msra.mxu0 0.0
    %5885 = vmatprep.subr.mxu0 0.0
    %5886 = vmatpush1.msra.mxu0 0.0
    %5887 = vmatprep.mubr.f32.mxu0 0.0
    %5888 = vmatmul.mubr.f32.gmra.mrb[0].mxu0 %v5822
    %v5889 = vpop.f32.mrb[0].mxu0
    %v5890 = vadd.f32 0.0, %v5889
    %v5891 = vpop.f32.mrb[0].mxu0
    %v5892 = vadd.f32 0.0, %v5891
    %5893 = vdwg.mxu0
    %5894 = vmatprep.subr.mxu0 %v5592
    %5895 = vmatpush1.msra.mxu0 %v5591
    %5896 = vmatprep.subr.mxu0 %v5596
    %5897 = vmatpush1.msra.mxu0 %v5595
    %5898 = vmatprep.subr.mxu0 %v5600
    %5899 = vmatpush1.msra.mxu0 %v5599
    %5900 = vmatprep.subr.mxu0 %v5604
    %5901 = vmatpush1.msra.mxu0 %v5603
    %5902 = vmatprep.subr.mxu0 %v5608
    %5903 = vmatpush1.msra.mxu0 %v5607
    %5904 = vmatprep.subr.mxu0 %v5612
    %5905 = vmatpush1.msra.mxu0 %v5611
    %5906 = vmatprep.subr.mxu0 %v5616
    %5907 = vmatpush1.msra.mxu0 %v5615
    %5908 = vmatprep.subr.mxu0 %v5620
    %5909 = vmatpush1.msra.mxu0 %v5619
    %5910 = vmatprep.subr.mxu0 %v5624
    %5911 = vmatpush1.msra.mxu0 %v5623
    %5912 = vmatprep.subr.mxu0 %v5628
    %5913 = vmatpush1.msra.mxu0 %v5627
    %5914 = vmatprep.subr.mxu0 %v5632
    %5915 = vmatpush1.msra.mxu0 %v5631
    %5916 = vmatprep.subr.mxu0 %v5636
    %5917 = vmatpush1.msra.mxu0 %v5635
    %5918 = vmatprep.subr.mxu0 %v5640
    %5919 = vmatpush1.msra.mxu0 %v5639
    %5920 = vmatprep.subr.mxu0 %v5644
    %5921 = vmatpush1.msra.mxu0 %v5643
    %5922 = vmatprep.subr.mxu0 %v5648
    %5923 = vmatpush1.msra.mxu0 %v5647
    %5924 = vmatprep.subr.mxu0 %v5652
    %5925 = vmatpush1.msra.mxu0 %v5651
    %5926 = vmatprep.subr.mxu0 0.0
    %5927 = vmatpush1.msra.mxu0 0.0
    %5928 = vmatprep.subr.mxu0 0.0
    %5929 = vmatpush1.msra.mxu0 0.0
    %5930 = vmatprep.subr.mxu0 0.0
    %5931 = vmatpush1.msra.mxu0 0.0
    %5932 = vmatprep.subr.mxu0 0.0
    %5933 = vmatpush1.msra.mxu0 0.0
    %5934 = vmatprep.subr.mxu0 0.0
    %5935 = vmatpush1.msra.mxu0 0.0
    %5936 = vmatprep.subr.mxu0 0.0
    %5937 = vmatpush1.msra.mxu0 0.0
    %5938 = vmatprep.subr.mxu0 0.0
    %5939 = vmatpush1.msra.mxu0 0.0
    %5940 = vmatprep.subr.mxu0 0.0
    %5941 = vmatpush1.msra.mxu0 0.0
    %5942 = vmatprep.subr.mxu0 0.0
    %5943 = vmatpush1.msra.mxu0 0.0
    %5944 = vmatprep.subr.mxu0 0.0
    %5945 = vmatpush1.msra.mxu0 0.0
    %5946 = vmatprep.subr.mxu0 0.0
    %5947 = vmatpush1.msra.mxu0 0.0
    %5948 = vmatprep.subr.mxu0 0.0
    %5949 = vmatpush1.msra.mxu0 0.0
    %5950 = vmatprep.subr.mxu0 0.0
    %5951 = vmatpush1.msra.mxu0 0.0
    %5952 = vmatprep.subr.mxu0 0.0
    %5953 = vmatpush1.msra.mxu0 0.0
    %5954 = vmatprep.subr.mxu0 0.0
    %5955 = vmatpush1.msra.mxu0 0.0
    %5956 = vmatprep.subr.mxu0 0.0
    %5957 = vmatpush1.msra.mxu0 0.0
    %5958 = vmatprep.mubr.f32.mxu0 0.0
    %5959 = vmatmul.mubr.f32.gmra.mrb[0].mxu0 %v5822
    %v5960 = vpop.f32.mrb[0].mxu0
    %v5961 = vadd.f32 0.0, %v5960
    %v5962 = vpop.f32.mrb[0].mxu0
    %v5963 = vadd.f32 0.0, %v5962
    %5964 = vdwg.mxu0
    %v5969 = vrot.slane %v5890, 7
    %v5970 = vrot.slane %v5892, 7
    %v5971 = vrot.slane %v5961, 7
    %v5972 = vrot.slane %v5963, 7
    %v5977 = vadd.f32 %v5514, %v5969
    %v5978 = vadd.f32 %v5516, %v5970
    %v5979 = vadd.f32 %v5585, %v5971
    %v5980 = vadd.f32 %v5587, %v5972
    %v5981 = vxor.u32 %v5977, 2147483648
    %v5982 = vmul.f32 %v5981, 1.442695
    %v5983 = vpow.pop %v5982
    %v5984 = vadd.f32 %v5983, 1.0
    %v5985 = vrcp.pop %v5984
    %v5986 = vmul.f32 1.0, %v5985
    %v5987 = vxor.u32 %v5978, 2147483648
    %v5988 = vmul.f32 %v5987, 1.442695
    %v5989 = vpow.pop %v5988
    %v5990 = vadd.f32 %v5989, 1.0
    %v5991 = vrcp.pop %v5990
    %v5992 = vmul.f32 1.0, %v5991
    %v5993 = vtanh.pop %v5979
    %v5994 = vxor.u32 %v5980, 2147483648
    %v5995 = vmul.f32 %v5994, 1.442695
    %v5996 = vpow.pop %v5995
    %v5997 = vadd.f32 %v5996, 1.0
    %v5998 = vrcp.pop %v5997
    %v5999 = vmul.f32 1.0, %v5998
    %v6001 = vrot.slane %v5820, 7
    %v6003 = vmul.f32 %v5992, %v6001
    %v6004 = vmul.f32 %v5986, %v5993
    %v6005 = vadd.f32 %v6003, %v6004
    %v6006 = vtanh.pop %v6005
    %v6007 = vmul.f32 %v5999, %v6006
    %v6009 = vrot.slane %v6007, 1
    %6011 = vmatprep.subr.mxu0 %v5590
    %6012 = vmatpush1.msra.mxu0 %v5589
    %6013 = vmatprep.subr.mxu0 %v5594
    %6014 = vmatpush1.msra.mxu0 %v5593
    %6015 = vmatprep.subr.mxu0 %v5598
    %6016 = vmatpush1.msra.mxu0 %v5597
    %6017 = vmatprep.subr.mxu0 %v5602
    %6018 = vmatpush1.msra.mxu0 %v5601
    %6019 = vmatprep.subr.mxu0 %v5606
    %6020 = vmatpush1.msra.mxu0 %v5605
    %6021 = vmatprep.subr.mxu0 %v5610
    %6022 = vmatpush1.msra.mxu0 %v5609
    %6023 = vmatprep.subr.mxu0 %v5614
    %6024 = vmatpush1.msra.mxu0 %v5613
    %6025 = vmatprep.subr.mxu0 %v5618
    %6026 = vmatpush1.msra.mxu0 %v5617
    %6027 = vmatprep.subr.mxu0 %v5622
    %6028 = vmatpush1.msra.mxu0 %v5621
    %6029 = vmatprep.subr.mxu0 %v5626
    %6030 = vmatpush1.msra.mxu0 %v5625
    %6031 = vmatprep.subr.mxu0 %v5630
    %6032 = vmatpush1.msra.mxu0 %v5629
    %6033 = vmatprep.subr.mxu0 %v5634
    %6034 = vmatpush1.msra.mxu0 %v5633
    %6035 = vmatprep.subr.mxu0 %v5638
    %6036 = vmatpush1.msra.mxu0 %v5637
    %6037 = vmatprep.subr.mxu0 %v5642
    %6038 = vmatpush1.msra.mxu0 %v5641
    %6039 = vmatprep.subr.mxu0 %v5646
    %6040 = vmatpush1.msra.mxu0 %v5645
    %6041 = vmatprep.subr.mxu0 %v5650
    %6042 = vmatpush1.msra.mxu0 %v5649
    %6043 = vmatprep.subr.mxu0 0.0
    %6044 = vmatpush1.msra.mxu0 0.0
    %6045 = vmatprep.subr.mxu0 0.0
    %6046 = vmatpush1.msra.mxu0 0.0
    %6047 = vmatprep.subr.mxu0 0.0
    %6048 = vmatpush1.msra.mxu0 0.0
    %6049 = vmatprep.subr.mxu0 0.0
    %6050 = vmatpush1.msra.mxu0 0.0
    %6051 = vmatprep.subr.mxu0 0.0
    %6052 = vmatpush1.msra.mxu0 0.0
    %6053 = vmatprep.subr.mxu0 0.0
    %6054 = vmatpush1.msra.mxu0 0.0
    %6055 = vmatprep.subr.mxu0 0.0
    %6056 = vmatpush1.msra.mxu0 0.0
    %6057 = vmatprep.subr.mxu0 0.0
    %6058 = vmatpush1.msra.mxu0 0.0
    %6059 = vmatprep.subr.mxu0 0.0
    %6060 = vmatpush1.msra.mxu0 0.0
    %6061 = vmatprep.subr.mxu0 0.0
    %6062 = vmatpush1.msra.mxu0 0.0
    %6063 = vmatprep.subr.mxu0 0.0
    %6064 = vmatpush1.msra.mxu0 0.0
    %6065 = vmatprep.subr.mxu0 0.0
    %6066 = vmatpush1.msra.mxu0 0.0
    %6067 = vmatprep.subr.mxu0 0.0
    %6068 = vmatpush1.msra.mxu0 0.0
    %6069 = vmatprep.subr.mxu0 0.0
    %6070 = vmatpush1.msra.mxu0 0.0
    %6071 = vmatprep.subr.mxu0 0.0
    %6072 = vmatpush1.msra.mxu0 0.0
    %6073 = vmatprep.subr.mxu0 0.0
    %6074 = vmatpush1.msra.mxu0 0.0
    %6075 = vmatprep.mubr.f32.mxu0 0.0
    %6076 = vmatmul.mubr.f32.gmra.mrb[0].mxu0 %v6009
    %v6077 = vpop.f32.mrb[0].mxu0
    %v6078 = vadd.f32 0.0, %v6077
    %v6079 = vpop.f32.mrb[0].mxu0
    %v6080 = vadd.f32 0.0, %v6079
    %6081 = vdwg.mxu0
    %6082 = vmatprep.subr.mxu0 %v5592
    %6083 = vmatpush1.msra.mxu0 %v5591
    %6084 = vmatprep.subr.mxu0 %v5596
    %6085 = vmatpush1.msra.mxu0 %v5595
    %6086 = vmatprep.subr.mxu0 %v5600
    %6087 = vmatpush1.msra.mxu0 %v5599
    %6088 = vmatprep.subr.mxu0 %v5604
    %6089 = vmatpush1.msra.mxu0 %v5603
    %6090 = vmatprep.subr.mxu0 %v5608
    %6091 = vmatpush1.msra.mxu0 %v5607
    %6092 = vmatprep.subr.mxu0 %v5612
    %6093 = vmatpush1.msra.mxu0 %v5611
    %6094 = vmatprep.subr.mxu0 %v5616
    %6095 = vmatpush1.msra.mxu0 %v5615
    %6096 = vmatprep.subr.mxu0 %v5620
    %6097 = vmatpush1.msra.mxu0 %v5619
    %6098 = vmatprep.subr.mxu0 %v5624
    %6099 = vmatpush1.msra.mxu0 %v5623
    %6100 = vmatprep.subr.mxu0 %v5628
    %6101 = vmatpush1.msra.mxu0 %v5627
    %6102 = vmatprep.subr.mxu0 %v5632
    %6103 = vmatpush1.msra.mxu0 %v5631
    %6104 = vmatprep.subr.mxu0 %v5636
    %6105 = vmatpush1.msra.mxu0 %v5635
    %6106 = vmatprep.subr.mxu0 %v5640
    %6107 = vmatpush1.msra.mxu0 %v5639
    %6108 = vmatprep.subr.mxu0 %v5644
    %6109 = vmatpush1.msra.mxu0 %v5643
    %6110 = vmatprep.subr.mxu0 %v5648
    %6111 = vmatpush1.msra.mxu0 %v5647
    %6112 = vmatprep.subr.mxu0 %v5652
    %6113 = vmatpush1.msra.mxu0 %v5651
    %6114 = vmatprep.subr.mxu0 0.0
    %6115 = vmatpush1.msra.mxu0 0.0
    %6116 = vmatprep.subr.mxu0 0.0
    %6117 = vmatpush1.msra.mxu0 0.0
    %6118 = vmatprep.subr.mxu0 0.0
    %6119 = vmatpush1.msra.mxu0 0.0
    %6120 = vmatprep.subr.mxu0 0.0
    %6121 = vmatpush1.msra.mxu0 0.0
    %6122 = vmatprep.subr.mxu0 0.0
    %6123 = vmatpush1.msra.mxu0 0.0
    %6124 = vmatprep.subr.mxu0 0.0
    %6125 = vmatpush1.msra.mxu0 0.0
    %6126 = vmatprep.subr.mxu0 0.0
    %6127 = vmatpush1.msra.mxu0 0.0
    %6128 = vmatprep.subr.mxu0 0.0
    %6129 = vmatpush1.msra.mxu0 0.0
    %6130 = vmatprep.subr.mxu0 0.0
    %6131 = vmatpush1.msra.mxu0 0.0
    %6132 = vmatprep.subr.mxu0 0.0
    %6133 = vmatpush1.msra.mxu0 0.0
    %6134 = vmatprep.subr.mxu0 0.0
    %6135 = vmatpush1.msra.mxu0 0.0
    %6136 = vmatprep.subr.mxu0 0.0
    %6137 = vmatpush1.msra.mxu0 0.0
    %6138 = vmatprep.subr.mxu0 0.0
    %6139 = vmatpush1.msra.mxu0 0.0
    %6140 = vmatprep.subr.mxu0 0.0
    %6141 = vmatpush1.msra.mxu0 0.0
    %6142 = vmatprep.subr.mxu0 0.0
    %6143 = vmatpush1.msra.mxu0 0.0
    %6144 = vmatprep.subr.mxu0 0.0
    %6145 = vmatpush1.msra.mxu0 0.0
    %6146 = vmatprep.mubr.f32.mxu0 0.0
    %6147 = vmatmul.mubr.f32.gmra.mrb[0].mxu0 %v6009
    %v6148 = vpop.f32.mrb[0].mxu0
    %v6149 = vadd.f32 0.0, %v6148
    %v6150 = vpop.f32.mrb[0].mxu0
    %v6151 = vadd.f32 0.0, %v6150
    %6152 = vdwg.mxu0
    %v6157 = vrot.slane %v6078, 6
    %v6158 = vrot.slane %v6080, 6
    %v6159 = vrot.slane %v6149, 6
    %v6160 = vrot.slane %v6151, 6
    %v6165 = vadd.f32 %v5514, %v6157
    %v6166 = vadd.f32 %v5516, %v6158
    %v6167 = vadd.f32 %v5585, %v6159
    %v6168 = vadd.f32 %v5587, %v6160
    %v6169 = vxor.u32 %v6165, 2147483648
    %v6170 = vmul.f32 %v6169, 1.442695
    %v6171 = vpow.pop %v6170
    %v6172 = vadd.f32 %v6171, 1.0
    %v6173 = vrcp.pop %v6172
    %v6174 = vmul.f32 1.0, %v6173
    %v6175 = vxor.u32 %v6166, 2147483648
    %v6176 = vmul.f32 %v6175, 1.442695
    %v6177 = vpow.pop %v6176
    %v6178 = vadd.f32 %v6177, 1.0
    %v6179 = vrcp.pop %v6178
    %v6180 = vmul.f32 1.0, %v6179
    %v6181 = vtanh.pop %v6167
    %v6182 = vxor.u32 %v6168, 2147483648
    %v6183 = vmul.f32 %v6182, 1.442695
    %v6184 = vpow.pop %v6183
    %v6185 = vadd.f32 %v6184, 1.0
    %v6186 = vrcp.pop %v6185
    %v6187 = vmul.f32 1.0, %v6186
    %v6189 = vrot.slane %v6005, 7
    %v6191 = vmul.f32 %v6180, %v6189
    %v6192 = vmul.f32 %v6174, %v6181
    %v6193 = vadd.f32 %v6191, %v6192
    %v6194 = vtanh.pop %v6193
    %v6195 = vmul.f32 %v6187, %v6194
    %v6197 = vrot.slane %v6195, 2
    %6199 = vmatprep.subr.mxu0 %v5590
    %6200 = vmatpush1.msra.mxu0 %v5589
    %6201 = vmatprep.subr.mxu0 %v5594
    %6202 = vmatpush1.msra.mxu0 %v5593
    %6203 = vmatprep.subr.mxu0 %v5598
    %6204 = vmatpush1.msra.mxu0 %v5597
    %6205 = vmatprep.subr.mxu0 %v5602
    %6206 = vmatpush1.msra.mxu0 %v5601
    %6207 = vmatprep.subr.mxu0 %v5606
    %6208 = vmatpush1.msra.mxu0 %v5605
    %6209 = vmatprep.subr.mxu0 %v5610
    %6210 = vmatpush1.msra.mxu0 %v5609
    %6211 = vmatprep.subr.mxu0 %v5614
    %6212 = vmatpush1.msra.mxu0 %v5613
    %6213 = vmatprep.subr.mxu0 %v5618
    %6214 = vmatpush1.msra.mxu0 %v5617
    %6215 = vmatprep.subr.mxu0 %v5622
    %6216 = vmatpush1.msra.mxu0 %v5621
    %6217 = vmatprep.subr.mxu0 %v5626
    %6218 = vmatpush1.msra.mxu0 %v5625
    %6219 = vmatprep.subr.mxu0 %v5630
    %6220 = vmatpush1.msra.mxu0 %v5629
    %6221 = vmatprep.subr.mxu0 %v5634
    %6222 = vmatpush1.msra.mxu0 %v5633
    %6223 = vmatprep.subr.mxu0 %v5638
    %6224 = vmatpush1.msra.mxu0 %v5637
    %6225 = vmatprep.subr.mxu0 %v5642
    %6226 = vmatpush1.msra.mxu0 %v5641
    %6227 = vmatprep.subr.mxu0 %v5646
    %6228 = vmatpush1.msra.mxu0 %v5645
    %6229 = vmatprep.subr.mxu0 %v5650
    %6230 = vmatpush1.msra.mxu0 %v5649
    %6231 = vmatprep.subr.mxu0 0.0
    %6232 = vmatpush1.msra.mxu0 0.0
    %6233 = vmatprep.subr.mxu0 0.0
    %6234 = vmatpush1.msra.mxu0 0.0
    %6235 = vmatprep.subr.mxu0 0.0
    %6236 = vmatpush1.msra.mxu0 0.0
    %6237 = vmatprep.subr.mxu0 0.0
    %6238 = vmatpush1.msra.mxu0 0.0
    %6239 = vmatprep.subr.mxu0 0.0
    %6240 = vmatpush1.msra.mxu0 0.0
    %6241 = vmatprep.subr.mxu0 0.0
    %6242 = vmatpush1.msra.mxu0 0.0
    %6243 = vmatprep.subr.mxu0 0.0
    %6244 = vmatpush1.msra.mxu0 0.0
    %6245 = vmatprep.subr.mxu0 0.0
    %6246 = vmatpush1.msra.mxu0 0.0
    %6247 = vmatprep.subr.mxu0 0.0
    %6248 = vmatpush1.msra.mxu0 0.0
    %6249 = vmatprep.subr.mxu0 0.0
    %6250 = vmatpush1.msra.mxu0 0.0
    %6251 = vmatprep.subr.mxu0 0.0
    %6252 = vmatpush1.msra.mxu0 0.0
    %6253 = vmatprep.subr.mxu0 0.0
    %6254 = vmatpush1.msra.mxu0 0.0
    %6255 = vmatprep.subr.mxu0 0.0
    %6256 = vmatpush1.msra.mxu0 0.0
    %6257 = vmatprep.subr.mxu0 0.0
    %6258 = vmatpush1.msra.mxu0 0.0
    %6259 = vmatprep.subr.mxu0 0.0
    %6260 = vmatpush1.msra.mxu0 0.0
    %6261 = vmatprep.subr.mxu0 0.0
    %6262 = vmatpush1.msra.mxu0 0.0
    %6263 = vmatprep.mubr.f32.mxu0 0.0
    %6264 = vmatmul.mubr.f32.gmra.mrb[0].mxu0 %v6197
    %v6265 = vpop.f32.mrb[0].mxu0
    %v6266 = vadd.f32 0.0, %v6265
    %v6267 = vpop.f32.mrb[0].mxu0
    %v6268 = vadd.f32 0.0, %v6267
    %6269 = vdwg.mxu0
    %6270 = vmatprep.subr.mxu0 %v5592
    %6271 = vmatpush1.msra.mxu0 %v5591
    %6272 = vmatprep.subr.mxu0 %v5596
    %6273 = vmatpush1.msra.mxu0 %v5595
    %6274 = vmatprep.subr.mxu0 %v5600
    %6275 = vmatpush1.msra.mxu0 %v5599
    %6276 = vmatprep.subr.mxu0 %v5604
    %6277 = vmatpush1.msra.mxu0 %v5603
    %6278 = vmatprep.subr.mxu0 %v5608
    %6279 = vmatpush1.msra.mxu0 %v5607
    %6280 = vmatprep.subr.mxu0 %v5612
    %6281 = vmatpush1.msra.mxu0 %v5611
    %6282 = vmatprep.subr.mxu0 %v5616
    %6283 = vmatpush1.msra.mxu0 %v5615
    %6284 = vmatprep.subr.mxu0 %v5620
    %6285 = vmatpush1.msra.mxu0 %v5619
    %6286 = vmatprep.subr.mxu0 %v5624
    %6287 = vmatpush1.msra.mxu0 %v5623
    %6288 = vmatprep.subr.mxu0 %v5628
    %6289 = vmatpush1.msra.mxu0 %v5627
    %6290 = vmatprep.subr.mxu0 %v5632
    %6291 = vmatpush1.msra.mxu0 %v5631
    %6292 = vmatprep.subr.mxu0 %v5636
    %6293 = vmatpush1.msra.mxu0 %v5635
    %6294 = vmatprep.subr.mxu0 %v5640
    %6295 = vmatpush1.msra.mxu0 %v5639
    %6296 = vmatprep.subr.mxu0 %v5644
    %6297 = vmatpush1.msra.mxu0 %v5643
    %6298 = vmatprep.subr.mxu0 %v5648
    %6299 = vmatpush1.msra.mxu0 %v5647
    %6300 = vmatprep.subr.mxu0 %v5652
    %6301 = vmatpush1.msra.mxu0 %v5651
    %6302 = vmatprep.subr.mxu0 0.0
    %6303 = vmatpush1.msra.mxu0 0.0
    %6304 = vmatprep.subr.mxu0 0.0
    %6305 = vmatpush1.msra.mxu0 0.0
    %6306 = vmatprep.subr.mxu0 0.0
    %6307 = vmatpush1.msra.mxu0 0.0
    %6308 = vmatprep.subr.mxu0 0.0
    %6309 = vmatpush1.msra.mxu0 0.0
    %6310 = vmatprep.subr.mxu0 0.0
    %6311 = vmatpush1.msra.mxu0 0.0
    %6312 = vmatprep.subr.mxu0 0.0
    %6313 = vmatpush1.msra.mxu0 0.0
    %6314 = vmatprep.subr.mxu0 0.0
    %6315 = vmatpush1.msra.mxu0 0.0
    %6316 = vmatprep.subr.mxu0 0.0
    %6317 = vmatpush1.msra.mxu0 0.0
    %6318 = vmatprep.subr.mxu0 0.0
    %6319 = vmatpush1.msra.mxu0 0.0
    %6320 = vmatprep.subr.mxu0 0.0
    %6321 = vmatpush1.msra.mxu0 0.0
    %6322 = vmatprep.subr.mxu0 0.0
    %6323 = vmatpush1.msra.mxu0 0.0
    %6324 = vmatprep.subr.mxu0 0.0
    %6325 = vmatpush1.msra.mxu0 0.0
    %6326 = vmatprep.subr.mxu0 0.0
    %6327 = vmatpush1.msra.mxu0 0.0
    %6328 = vmatprep.subr.mxu0 0.0
    %6329 = vmatpush1.msra.mxu0 0.0
    %6330 = vmatprep.subr.mxu0 0.0
    %6331 = vmatpush1.msra.mxu0 0.0
    %6332 = vmatprep.subr.mxu0 0.0
    %6333 = vmatpush1.msra.mxu0 0.0
    %6334 = vmatprep.mubr.f32.mxu0 0.0
    %6335 = vmatmul.mubr.f32.gmra.mrb[0].mxu0 %v6197
    %v6336 = vpop.f32.mrb[0].mxu0
    %v6337 = vadd.f32 0.0, %v6336
    %v6338 = vpop.f32.mrb[0].mxu0
    %v6339 = vadd.f32 0.0, %v6338
    %6340 = vdwg.mxu0
    %v6345 = vrot.slane %v6266, 5
    %v6346 = vrot.slane %v6268, 5
    %v6347 = vrot.slane %v6337, 5
    %v6348 = vrot.slane %v6339, 5
    %v6353 = vadd.f32 %v5514, %v6345
    %v6354 = vadd.f32 %v5516, %v6346
    %v6355 = vadd.f32 %v5585, %v6347
    %v6356 = vadd.f32 %v5587, %v6348
    %v6357 = vxor.u32 %v6353, 2147483648
    %v6358 = vmul.f32 %v6357, 1.442695
    %v6359 = vpow.pop %v6358
    %v6360 = vadd.f32 %v6359, 1.0
    %v6361 = vrcp.pop %v6360
    %v6362 = vmul.f32 1.0, %v6361
    %v6363 = vxor.u32 %v6354, 2147483648
    %v6364 = vmul.f32 %v6363, 1.442695
    %v6365 = vpow.pop %v6364
    %v6366 = vadd.f32 %v6365, 1.0
    %v6367 = vrcp.pop %v6366
    %v6368 = vmul.f32 1.0, %v6367
    %v6369 = vtanh.pop %v6355
    %v6370 = vxor.u32 %v6356, 2147483648
    %v6371 = vmul.f32 %v6370, 1.442695
    %v6372 = vpow.pop %v6371
    %v6373 = vadd.f32 %v6372, 1.0
    %v6374 = vrcp.pop %v6373
    %v6375 = vmul.f32 1.0, %v6374
    %v6377 = vrot.slane %v6193, 7
    %v6379 = vmul.f32 %v6368, %v6377
    %v6380 = vmul.f32 %v6362, %v6369
    %v6381 = vadd.f32 %v6379, %v6380
    %v6382 = vtanh.pop %v6381
    %v6383 = vmul.f32 %v6375, %v6382
    %v6385 = vrot.slane %v6383, 3
    %6387 = vmatprep.subr.mxu0 %v5590
    %6388 = vmatpush1.msra.mxu0 %v5589
    %6389 = vmatprep.subr.mxu0 %v5594
    %6390 = vmatpush1.msra.mxu0 %v5593
    %6391 = vmatprep.subr.mxu0 %v5598
    %6392 = vmatpush1.msra.mxu0 %v5597
    %6393 = vmatprep.subr.mxu0 %v5602
    %6394 = vmatpush1.msra.mxu0 %v5601
    %6395 = vmatprep.subr.mxu0 %v5606
    %6396 = vmatpush1.msra.mxu0 %v5605
    %6397 = vmatprep.subr.mxu0 %v5610
    %6398 = vmatpush1.msra.mxu0 %v5609
    %6399 = vmatprep.subr.mxu0 %v5614
    %6400 = vmatpush1.msra.mxu0 %v5613
    %6401 = vmatprep.subr.mxu0 %v5618
    %6402 = vmatpush1.msra.mxu0 %v5617
    %6403 = vmatprep.subr.mxu0 %v5622
    %6404 = vmatpush1.msra.mxu0 %v5621
    %6405 = vmatprep.subr.mxu0 %v5626
    %6406 = vmatpush1.msra.mxu0 %v5625
    %6407 = vmatprep.subr.mxu0 %v5630
    %6408 = vmatpush1.msra.mxu0 %v5629
    %6409 = vmatprep.subr.mxu0 %v5634
    %6410 = vmatpush1.msra.mxu0 %v5633
    %6411 = vmatprep.subr.mxu0 %v5638
    %6412 = vmatpush1.msra.mxu0 %v5637
    %6413 = vmatprep.subr.mxu0 %v5642
    %6414 = vmatpush1.msra.mxu0 %v5641
    %6415 = vmatprep.subr.mxu0 %v5646
    %6416 = vmatpush1.msra.mxu0 %v5645
    %6417 = vmatprep.subr.mxu0 %v5650
    %6418 = vmatpush1.msra.mxu0 %v5649
    %6419 = vmatprep.subr.mxu0 0.0
    %6420 = vmatpush1.msra.mxu0 0.0
    %6421 = vmatprep.subr.mxu0 0.0
    %6422 = vmatpush1.msra.mxu0 0.0
    %6423 = vmatprep.subr.mxu0 0.0
    %6424 = vmatpush1.msra.mxu0 0.0
    %6425 = vmatprep.subr.mxu0 0.0
    %6426 = vmatpush1.msra.mxu0 0.0
    %6427 = vmatprep.subr.mxu0 0.0
    %6428 = vmatpush1.msra.mxu0 0.0
    %6429 = vmatprep.subr.mxu0 0.0
    %6430 = vmatpush1.msra.mxu0 0.0
    %6431 = vmatprep.subr.mxu0 0.0
    %6432 = vmatpush1.msra.mxu0 0.0
    %6433 = vmatprep.subr.mxu0 0.0
    %6434 = vmatpush1.msra.mxu0 0.0
    %6435 = vmatprep.subr.mxu0 0.0
    %6436 = vmatpush1.msra.mxu0 0.0
    %6437 = vmatprep.subr.mxu0 0.0
    %6438 = vmatpush1.msra.mxu0 0.0
    %6439 = vmatprep.subr.mxu0 0.0
    %6440 = vmatpush1.msra.mxu0 0.0
    %6441 = vmatprep.subr.mxu0 0.0
    %6442 = vmatpush1.msra.mxu0 0.0
    %6443 = vmatprep.subr.mxu0 0.0
    %6444 = vmatpush1.msra.mxu0 0.0
    %6445 = vmatprep.subr.mxu0 0.0
    %6446 = vmatpush1.msra.mxu0 0.0
    %6447 = vmatprep.subr.mxu0 0.0
    %6448 = vmatpush1.msra.mxu0 0.0
    %6449 = vmatprep.subr.mxu0 0.0
    %6450 = vmatpush1.msra.mxu0 0.0
    %6451 = vmatprep.mubr.f32.mxu0 0.0
    %6452 = vmatmul.mubr.f32.gmra.mrb[0].mxu0 %v6385
    %v6453 = vpop.f32.mrb[0].mxu0
    %v6454 = vadd.f32 0.0, %v6453
    %v6455 = vpop.f32.mrb[0].mxu0
    %v6456 = vadd.f32 0.0, %v6455
    %6457 = vdwg.mxu0
    %6458 = vmatprep.subr.mxu0 %v5592
    %6459 = vmatpush1.msra.mxu0 %v5591
    %6460 = vmatprep.subr.mxu0 %v5596
    %6461 = vmatpush1.msra.mxu0 %v5595
    %6462 = vmatprep.subr.mxu0 %v5600
    %6463 = vmatpush1.msra.mxu0 %v5599
    %6464 = vmatprep.subr.mxu0 %v5604
    %6465 = vmatpush1.msra.mxu0 %v5603
    %6466 = vmatprep.subr.mxu0 %v5608
    %6467 = vmatpush1.msra.mxu0 %v5607
    %6468 = vmatprep.subr.mxu0 %v5612
    %6469 = vmatpush1.msra.mxu0 %v5611
    %6470 = vmatprep.subr.mxu0 %v5616
    %6471 = vmatpush1.msra.mxu0 %v5615
    %6472 = vmatprep.subr.mxu0 %v5620
    %6473 = vmatpush1.msra.mxu0 %v5619
    %6474 = vmatprep.subr.mxu0 %v5624
    %6475 = vmatpush1.msra.mxu0 %v5623
    %6476 = vmatprep.subr.mxu0 %v5628
    %6477 = vmatpush1.msra.mxu0 %v5627
    %6478 = vmatprep.subr.mxu0 %v5632
    %6479 = vmatpush1.msra.mxu0 %v5631
    %6480 = vmatprep.subr.mxu0 %v5636
    %6481 = vmatpush1.msra.mxu0 %v5635
    %6482 = vmatprep.subr.mxu0 %v5640
    %6483 = vmatpush1.msra.mxu0 %v5639
    %6484 = vmatprep.subr.mxu0 %v5644
    %6485 = vmatpush1.msra.mxu0 %v5643
    %6486 = vmatprep.subr.mxu0 %v5648
    %6487 = vmatpush1.msra.mxu0 %v5647
    %6488 = vmatprep.subr.mxu0 %v5652
    %6489 = vmatpush1.msra.mxu0 %v5651
    %6490 = vmatprep.subr.mxu0 0.0
    %6491 = vmatpush1.msra.mxu0 0.0
    %6492 = vmatprep.subr.mxu0 0.0
    %6493 = vmatpush1.msra.mxu0 0.0
    %6494 = vmatprep.subr.mxu0 0.0
    %6495 = vmatpush1.msra.mxu0 0.0
    %6496 = vmatprep.subr.mxu0 0.0
    %6497 = vmatpush1.msra.mxu0 0.0
    %6498 = vmatprep.subr.mxu0 0.0
    %6499 = vmatpush1.msra.mxu0 0.0
    %6500 = vmatprep.subr.mxu0 0.0
    %6501 = vmatpush1.msra.mxu0 0.0
    %6502 = vmatprep.subr.mxu0 0.0
    %6503 = vmatpush1.msra.mxu0 0.0
    %6504 = vmatprep.subr.mxu0 0.0
    %6505 = vmatpush1.msra.mxu0 0.0
    %6506 = vmatprep.subr.mxu0 0.0
    %6507 = vmatpush1.msra.mxu0 0.0
    %6508 = vmatprep.subr.mxu0 0.0
    %6509 = vmatpush1.msra.mxu0 0.0
    %6510 = vmatprep.subr.mxu0 0.0
    %6511 = vmatpush1.msra.mxu0 0.0
    %6512 = vmatprep.subr.mxu0 0.0
    %6513 = vmatpush1.msra.mxu0 0.0
    %6514 = vmatprep.subr.mxu0 0.0
    %6515 = vmatpush1.msra.mxu0 0.0
    %6516 = vmatprep.subr.mxu0 0.0
    %6517 = vmatpush1.msra.mxu0 0.0
    %6518 = vmatprep.subr.mxu0 0.0
    %6519 = vmatpush1.msra.mxu0 0.0
    %6520 = vmatprep.subr.mxu0 0.0
    %6521 = vmatpush1.msra.mxu0 0.0
    %6522 = vmatprep.mubr.f32.mxu0 0.0
    %6523 = vmatmul.mubr.f32.gmra.mrb[0].mxu0 %v6385
    %v6524 = vpop.f32.mrb[0].mxu0
    %v6525 = vadd.f32 0.0, %v6524
    %v6526 = vpop.f32.mrb[0].mxu0
    %v6527 = vadd.f32 0.0, %v6526
    %6528 = vdwg.mxu0
    %v6533 = vrot.slane %v6454, 4
    %v6534 = vrot.slane %v6456, 4
    %v6535 = vrot.slane %v6525, 4
    %v6536 = vrot.slane %v6527, 4
    %v6541 = vadd.f32 %v5514, %v6533
    %v6542 = vadd.f32 %v5516, %v6534
    %v6543 = vadd.f32 %v5585, %v6535
    %v6544 = vadd.f32 %v5587, %v6536
    %v6545 = vxor.u32 %v6541, 2147483648
    %v6546 = vmul.f32 %v6545, 1.442695
    %v6547 = vpow.pop %v6546
    %v6548 = vadd.f32 %v6547, 1.0
    %v6549 = vrcp.pop %v6548
    %v6550 = vmul.f32 1.0, %v6549
    %v6551 = vxor.u32 %v6542, 2147483648
    %v6552 = vmul.f32 %v6551, 1.442695
    %v6553 = vpow.pop %v6552
    %v6554 = vadd.f32 %v6553, 1.0
    %v6555 = vrcp.pop %v6554
    %v6556 = vmul.f32 1.0, %v6555
    %v6557 = vtanh.pop %v6543
    %v6558 = vxor.u32 %v6544, 2147483648
    %v6559 = vmul.f32 %v6558, 1.442695
    %v6560 = vpow.pop %v6559
    %v6561 = vadd.f32 %v6560, 1.0
    %v6562 = vrcp.pop %v6561
    %v6563 = vmul.f32 1.0, %v6562
    %v6565 = vrot.slane %v6381, 7
    %v6567 = vmul.f32 %v6556, %v6565
    %v6568 = vmul.f32 %v6550, %v6557
    %v6569 = vadd.f32 %v6567, %v6568
    %v6570 = vtanh.pop %v6569
    %v6571 = vmul.f32 %v6563, %v6570
    %v6573 = vrot.slane %v6571, 4
    %6575 = vmatprep.subr.mxu0 %v5590
    %6576 = vmatpush1.msra.mxu0 %v5589
    %6577 = vmatprep.subr.mxu0 %v5594
    %6578 = vmatpush1.msra.mxu0 %v5593
    %6579 = vmatprep.subr.mxu0 %v5598
    %6580 = vmatpush1.msra.mxu0 %v5597
    %6581 = vmatprep.subr.mxu0 %v5602
    %6582 = vmatpush1.msra.mxu0 %v5601
    %6583 = vmatprep.subr.mxu0 %v5606
    %6584 = vmatpush1.msra.mxu0 %v5605
    %6585 = vmatprep.subr.mxu0 %v5610
    %6586 = vmatpush1.msra.mxu0 %v5609
    %6587 = vmatprep.subr.mxu0 %v5614
    %6588 = vmatpush1.msra.mxu0 %v5613
    %6589 = vmatprep.subr.mxu0 %v5618
    %6590 = vmatpush1.msra.mxu0 %v5617
    %6591 = vmatprep.subr.mxu0 %v5622
    %6592 = vmatpush1.msra.mxu0 %v5621
    %6593 = vmatprep.subr.mxu0 %v5626
    %6594 = vmatpush1.msra.mxu0 %v5625
    %6595 = vmatprep.subr.mxu0 %v5630
    %6596 = vmatpush1.msra.mxu0 %v5629
    %6597 = vmatprep.subr.mxu0 %v5634
    %6598 = vmatpush1.msra.mxu0 %v5633
    %6599 = vmatprep.subr.mxu0 %v5638
    %6600 = vmatpush1.msra.mxu0 %v5637
    %6601 = vmatprep.subr.mxu0 %v5642
    %6602 = vmatpush1.msra.mxu0 %v5641
    %6603 = vmatprep.subr.mxu0 %v5646
    %6604 = vmatpush1.msra.mxu0 %v5645
    %6605 = vmatprep.subr.mxu0 %v5650
    %6606 = vmatpush1.msra.mxu0 %v5649
    %6607 = vmatprep.subr.mxu0 0.0
    %6608 = vmatpush1.msra.mxu0 0.0
    %6609 = vmatprep.subr.mxu0 0.0
    %6610 = vmatpush1.msra.mxu0 0.0
    %6611 = vmatprep.subr.mxu0 0.0
    %6612 = vmatpush1.msra.mxu0 0.0
    %6613 = vmatprep.subr.mxu0 0.0
    %6614 = vmatpush1.msra.mxu0 0.0
    %6615 = vmatprep.subr.mxu0 0.0
    %6616 = vmatpush1.msra.mxu0 0.0
    %6617 = vmatprep.subr.mxu0 0.0
    %6618 = vmatpush1.msra.mxu0 0.0
    %6619 = vmatprep.subr.mxu0 0.0
    %6620 = vmatpush1.msra.mxu0 0.0
    %6621 = vmatprep.subr.mxu0 0.0
    %6622 = vmatpush1.msra.mxu0 0.0
    %6623 = vmatprep.subr.mxu0 0.0
    %6624 = vmatpush1.msra.mxu0 0.0
    %6625 = vmatprep.subr.mxu0 0.0
    %6626 = vmatpush1.msra.mxu0 0.0
    %6627 = vmatprep.subr.mxu0 0.0
    %6628 = vmatpush1.msra.mxu0 0.0
    %6629 = vmatprep.subr.mxu0 0.0
    %6630 = vmatpush1.msra.mxu0 0.0
    %6631 = vmatprep.subr.mxu0 0.0
    %6632 = vmatpush1.msra.mxu0 0.0
    %6633 = vmatprep.subr.mxu0 0.0
    %6634 = vmatpush1.msra.mxu0 0.0
    %6635 = vmatprep.subr.mxu0 0.0
    %6636 = vmatpush1.msra.mxu0 0.0
    %6637 = vmatprep.subr.mxu0 0.0
    %6638 = vmatpush1.msra.mxu0 0.0
    %6639 = vmatprep.mubr.f32.mxu0 0.0
    %6640 = vmatmul.mubr.f32.gmra.mrb[0].mxu0 %v6573
    %v6641 = vpop.f32.mrb[0].mxu0
    %v6642 = vadd.f32 0.0, %v6641
    %v6643 = vpop.f32.mrb[0].mxu0
    %v6644 = vadd.f32 0.0, %v6643
    %6645 = vdwg.mxu0
    %6646 = vmatprep.subr.mxu0 %v5592
    %6647 = vmatpush1.msra.mxu0 %v5591
    %6648 = vmatprep.subr.mxu0 %v5596
    %6649 = vmatpush1.msra.mxu0 %v5595
    %6650 = vmatprep.subr.mxu0 %v5600
    %6651 = vmatpush1.msra.mxu0 %v5599
    %6652 = vmatprep.subr.mxu0 %v5604
    %6653 = vmatpush1.msra.mxu0 %v5603
    %6654 = vmatprep.subr.mxu0 %v5608
    %6655 = vmatpush1.msra.mxu0 %v5607
    %6656 = vmatprep.subr.mxu0 %v5612
    %6657 = vmatpush1.msra.mxu0 %v5611
    %6658 = vmatprep.subr.mxu0 %v5616
    %6659 = vmatpush1.msra.mxu0 %v5615
    %6660 = vmatprep.subr.mxu0 %v5620
    %6661 = vmatpush1.msra.mxu0 %v5619
    %6662 = vmatprep.subr.mxu0 %v5624
    %6663 = vmatpush1.msra.mxu0 %v5623
    %6664 = vmatprep.subr.mxu0 %v5628
    %6665 = vmatpush1.msra.mxu0 %v5627
    %6666 = vmatprep.subr.mxu0 %v5632
    %6667 = vmatpush1.msra.mxu0 %v5631
    %6668 = vmatprep.subr.mxu0 %v5636
    %6669 = vmatpush1.msra.mxu0 %v5635
    %6670 = vmatprep.subr.mxu0 %v5640
    %6671 = vmatpush1.msra.mxu0 %v5639
    %6672 = vmatprep.subr.mxu0 %v5644
    %6673 = vmatpush1.msra.mxu0 %v5643
    %6674 = vmatprep.subr.mxu0 %v5648
    %6675 = vmatpush1.msra.mxu0 %v5647
    %6676 = vmatprep.subr.mxu0 %v5652
    %6677 = vmatpush1.msra.mxu0 %v5651
    %6678 = vmatprep.subr.mxu0 0.0
    %6679 = vmatpush1.msra.mxu0 0.0
    %6680 = vmatprep.subr.mxu0 0.0
    %6681 = vmatpush1.msra.mxu0 0.0
    %6682 = vmatprep.subr.mxu0 0.0
    %6683 = vmatpush1.msra.mxu0 0.0
    %6684 = vmatprep.subr.mxu0 0.0
    %6685 = vmatpush1.msra.mxu0 0.0
    %6686 = vmatprep.subr.mxu0 0.0
    %6687 = vmatpush1.msra.mxu0 0.0
    %6688 = vmatprep.subr.mxu0 0.0
    %6689 = vmatpush1.msra.mxu0 0.0
    %6690 = vmatprep.subr.mxu0 0.0
    %6691 = vmatpush1.msra.mxu0 0.0
    %6692 = vmatprep.subr.mxu0 0.0
    %6693 = vmatpush1.msra.mxu0 0.0
    %6694 = vmatprep.subr.mxu0 0.0
    %6695 = vmatpush1.msra.mxu0 0.0
    %6696 = vmatprep.subr.mxu0 0.0
    %6697 = vmatpush1.msra.mxu0 0.0
    %6698 = vmatprep.subr.mxu0 0.0
    %6699 = vmatpush1.msra.mxu0 0.0
    %6700 = vmatprep.subr.mxu0 0.0
    %6701 = vmatpush1.msra.mxu0 0.0
    %6702 = vmatprep.subr.mxu0 0.0
    %6703 = vmatpush1.msra.mxu0 0.0
    %6704 = vmatprep.subr.mxu0 0.0
    %6705 = vmatpush1.msra.mxu0 0.0
    %6706 = vmatprep.subr.mxu0 0.0
    %6707 = vmatpush1.msra.mxu0 0.0
    %6708 = vmatprep.subr.mxu0 0.0
    %6709 = vmatpush1.msra.mxu0 0.0
    %6710 = vmatprep.mubr.f32.mxu0 0.0
    %6711 = vmatmul.mubr.f32.gmra.mrb[0].mxu0 %v6573
    %v6712 = vpop.f32.mrb[0].mxu0
    %v6713 = vadd.f32 0.0, %v6712
    %v6714 = vpop.f32.mrb[0].mxu0
    %v6715 = vadd.f32 0.0, %v6714
    %6716 = vdwg.mxu0
    %v6721 = vrot.slane %v6642, 3
    %v6722 = vrot.slane %v6644, 3
    %v6723 = vrot.slane %v6713, 3
    %v6724 = vrot.slane %v6715, 3
    %v6729 = vadd.f32 %v5514, %v6721
    %v6730 = vadd.f32 %v5516, %v6722
    %v6731 = vadd.f32 %v5585, %v6723
    %v6732 = vadd.f32 %v5587, %v6724
    %v6733 = vxor.u32 %v6729, 2147483648
    %v6734 = vmul.f32 %v6733, 1.442695
    %v6735 = vpow.pop %v6734
    %v6736 = vadd.f32 %v6735, 1.0
    %v6737 = vrcp.pop %v6736
    %v6738 = vmul.f32 1.0, %v6737
    %v6739 = vxor.u32 %v6730, 2147483648
    %v6740 = vmul.f32 %v6739, 1.442695
    %v6741 = vpow.pop %v6740
    %v6742 = vadd.f32 %v6741, 1.0
    %v6743 = vrcp.pop %v6742
    %v6744 = vmul.f32 1.0, %v6743
    %v6745 = vtanh.pop %v6731
    %v6746 = vxor.u32 %v6732, 2147483648
    %v6747 = vmul.f32 %v6746, 1.442695
    %v6748 = vpow.pop %v6747
    %v6749 = vadd.f32 %v6748, 1.0
    %v6750 = vrcp.pop %v6749
    %v6751 = vmul.f32 1.0, %v6750
    %v6753 = vrot.slane %v6569, 7
    %v6755 = vmul.f32 %v6744, %v6753
    %v6756 = vmul.f32 %v6738, %v6745
    %v6757 = vadd.f32 %v6755, %v6756
    %v6758 = vtanh.pop %v6757
    %v6759 = vmul.f32 %v6751, %v6758
    %v6761 = vrot.slane %v6759, 5
    %6763 = vmatprep.subr.mxu0 %v5590
    %6764 = vmatpush1.msra.mxu0 %v5589
    %6765 = vmatprep.subr.mxu0 %v5594
    %6766 = vmatpush1.msra.mxu0 %v5593
    %6767 = vmatprep.subr.mxu0 %v5598
    %6768 = vmatpush1.msra.mxu0 %v5597
    %6769 = vmatprep.subr.mxu0 %v5602
    %6770 = vmatpush1.msra.mxu0 %v5601
    %6771 = vmatprep.subr.mxu0 %v5606
    %6772 = vmatpush1.msra.mxu0 %v5605
    %6773 = vmatprep.subr.mxu0 %v5610
    %6774 = vmatpush1.msra.mxu0 %v5609
    %6775 = vmatprep.subr.mxu0 %v5614
    %6776 = vmatpush1.msra.mxu0 %v5613
    %6777 = vmatprep.subr.mxu0 %v5618
    %6778 = vmatpush1.msra.mxu0 %v5617
    %6779 = vmatprep.subr.mxu0 %v5622
    %6780 = vmatpush1.msra.mxu0 %v5621
    %6781 = vmatprep.subr.mxu0 %v5626
    %6782 = vmatpush1.msra.mxu0 %v5625
    %6783 = vmatprep.subr.mxu0 %v5630
    %6784 = vmatpush1.msra.mxu0 %v5629
    %6785 = vmatprep.subr.mxu0 %v5634
    %6786 = vmatpush1.msra.mxu0 %v5633
    %6787 = vmatprep.subr.mxu0 %v5638
    %6788 = vmatpush1.msra.mxu0 %v5637
    %6789 = vmatprep.subr.mxu0 %v5642
    %6790 = vmatpush1.msra.mxu0 %v5641
    %6791 = vmatprep.subr.mxu0 %v5646
    %6792 = vmatpush1.msra.mxu0 %v5645
    %6793 = vmatprep.subr.mxu0 %v5650
    %6794 = vmatpush1.msra.mxu0 %v5649
    %6795 = vmatprep.subr.mxu0 0.0
    %6796 = vmatpush1.msra.mxu0 0.0
    %6797 = vmatprep.subr.mxu0 0.0
    %6798 = vmatpush1.msra.mxu0 0.0
    %6799 = vmatprep.subr.mxu0 0.0
    %6800 = vmatpush1.msra.mxu0 0.0
    %6801 = vmatprep.subr.mxu0 0.0
    %6802 = vmatpush1.msra.mxu0 0.0
    %6803 = vmatprep.subr.mxu0 0.0
    %6804 = vmatpush1.msra.mxu0 0.0
    %6805 = vmatprep.subr.mxu0 0.0
    %6806 = vmatpush1.msra.mxu0 0.0
    %6807 = vmatprep.subr.mxu0 0.0
    %6808 = vmatpush1.msra.mxu0 0.0
    %6809 = vmatprep.subr.mxu0 0.0
    %6810 = vmatpush1.msra.mxu0 0.0
    %6811 = vmatprep.subr.mxu0 0.0
    %6812 = vmatpush1.msra.mxu0 0.0
    %6813 = vmatprep.subr.mxu0 0.0
    %6814 = vmatpush1.msra.mxu0 0.0
    %6815 = vmatprep.subr.mxu0 0.0
    %6816 = vmatpush1.msra.mxu0 0.0
    %6817 = vmatprep.subr.mxu0 0.0
    %6818 = vmatpush1.msra.mxu0 0.0
    %6819 = vmatprep.subr.mxu0 0.0
    %6820 = vmatpush1.msra.mxu0 0.0
    %6821 = vmatprep.subr.mxu0 0.0
    %6822 = vmatpush1.msra.mxu0 0.0
    %6823 = vmatprep.subr.mxu0 0.0
    %6824 = vmatpush1.msra.mxu0 0.0
    %6825 = vmatprep.subr.mxu0 0.0
    %6826 = vmatpush1.msra.mxu0 0.0
    %6827 = vmatprep.mubr.f32.mxu0 0.0
    %6828 = vmatmul.mubr.f32.gmra.mrb[0].mxu0 %v6761
    %v6829 = vpop.f32.mrb[0].mxu0
    %v6830 = vadd.f32 0.0, %v6829
    %v6831 = vpop.f32.mrb[0].mxu0
    %v6832 = vadd.f32 0.0, %v6831
    %6833 = vdwg.mxu0
    %6834 = vmatprep.subr.mxu0 %v5592
    %6835 = vmatpush1.msra.mxu0 %v5591
    %6836 = vmatprep.subr.mxu0 %v5596
    %6837 = vmatpush1.msra.mxu0 %v5595
    %6838 = vmatprep.subr.mxu0 %v5600
    %6839 = vmatpush1.msra.mxu0 %v5599
    %6840 = vmatprep.subr.mxu0 %v5604
    %6841 = vmatpush1.msra.mxu0 %v5603
    %6842 = vmatprep.subr.mxu0 %v5608
    %6843 = vmatpush1.msra.mxu0 %v5607
    %6844 = vmatprep.subr.mxu0 %v5612
    %6845 = vmatpush1.msra.mxu0 %v5611
    %6846 = vmatprep.subr.mxu0 %v5616
    %6847 = vmatpush1.msra.mxu0 %v5615
    %6848 = vmatprep.subr.mxu0 %v5620
    %6849 = vmatpush1.msra.mxu0 %v5619
    %6850 = vmatprep.subr.mxu0 %v5624
    %6851 = vmatpush1.msra.mxu0 %v5623
    %6852 = vmatprep.subr.mxu0 %v5628
    %6853 = vmatpush1.msra.mxu0 %v5627
    %6854 = vmatprep.subr.mxu0 %v5632
    %6855 = vmatpush1.msra.mxu0 %v5631
    %6856 = vmatprep.subr.mxu0 %v5636
    %6857 = vmatpush1.msra.mxu0 %v5635
    %6858 = vmatprep.subr.mxu0 %v5640
    %6859 = vmatpush1.msra.mxu0 %v5639
    %6860 = vmatprep.subr.mxu0 %v5644
    %6861 = vmatpush1.msra.mxu0 %v5643
    %6862 = vmatprep.subr.mxu0 %v5648
    %6863 = vmatpush1.msra.mxu0 %v5647
    %6864 = vmatprep.subr.mxu0 %v5652
    %6865 = vmatpush1.msra.mxu0 %v5651
    %6866 = vmatprep.subr.mxu0 0.0
    %6867 = vmatpush1.msra.mxu0 0.0
    %6868 = vmatprep.subr.mxu0 0.0
    %6869 = vmatpush1.msra.mxu0 0.0
    %6870 = vmatprep.subr.mxu0 0.0
    %6871 = vmatpush1.msra.mxu0 0.0
    %6872 = vmatprep.subr.mxu0 0.0
    %6873 = vmatpush1.msra.mxu0 0.0
    %6874 = vmatprep.subr.mxu0 0.0
    %6875 = vmatpush1.msra.mxu0 0.0
    %6876 = vmatprep.subr.mxu0 0.0
    %6877 = vmatpush1.msra.mxu0 0.0
    %6878 = vmatprep.subr.mxu0 0.0
    %6879 = vmatpush1.msra.mxu0 0.0
    %6880 = vmatprep.subr.mxu0 0.0
    %6881 = vmatpush1.msra.mxu0 0.0
    %6882 = vmatprep.subr.mxu0 0.0
    %6883 = vmatpush1.msra.mxu0 0.0
    %6884 = vmatprep.subr.mxu0 0.0
    %6885 = vmatpush1.msra.mxu0 0.0
    %6886 = vmatprep.subr.mxu0 0.0
    %6887 = vmatpush1.msra.mxu0 0.0
    %6888 = vmatprep.subr.mxu0 0.0
    %6889 = vmatpush1.msra.mxu0 0.0
    %6890 = vmatprep.subr.mxu0 0.0
    %6891 = vmatpush1.msra.mxu0 0.0
    %6892 = vmatprep.subr.mxu0 0.0
    %6893 = vmatpush1.msra.mxu0 0.0
    %6894 = vmatprep.subr.mxu0 0.0
    %6895 = vmatpush1.msra.mxu0 0.0
    %6896 = vmatprep.subr.mxu0 0.0
    %6897 = vmatpush1.msra.mxu0 0.0
    %6898 = vmatprep.mubr.f32.mxu0 0.0
    %6899 = vmatmul.mubr.f32.gmra.mrb[0].mxu0 %v6761
    %v6900 = vpop.f32.mrb[0].mxu0
    %v6901 = vadd.f32 0.0, %v6900
    %v6902 = vpop.f32.mrb[0].mxu0
    %v6903 = vadd.f32 0.0, %v6902
    %6904 = vdwg.mxu0
    %v6909 = vrot.slane %v6830, 2
    %v6910 = vrot.slane %v6832, 2
    %v6911 = vrot.slane %v6901, 2
    %v6912 = vrot.slane %v6903, 2
    %v6917 = vadd.f32 %v5514, %v6909
    %v6918 = vadd.f32 %v5516, %v6910
    %v6919 = vadd.f32 %v5585, %v6911
    %v6920 = vadd.f32 %v5587, %v6912
    %v6921 = vxor.u32 %v6917, 2147483648
    %v6922 = vmul.f32 %v6921, 1.442695
    %v6923 = vpow.pop %v6922
    %v6924 = vadd.f32 %v6923, 1.0
    %v6925 = vrcp.pop %v6924
    %v6926 = vmul.f32 1.0, %v6925
    %v6927 = vxor.u32 %v6918, 2147483648
    %v6928 = vmul.f32 %v6927, 1.442695
    %v6929 = vpow.pop %v6928
    %v6930 = vadd.f32 %v6929, 1.0
    %v6931 = vrcp.pop %v6930
    %v6932 = vmul.f32 1.0, %v6931
    %v6933 = vtanh.pop %v6919
    %v6934 = vxor.u32 %v6920, 2147483648
    %v6935 = vmul.f32 %v6934, 1.442695
    %v6936 = vpow.pop %v6935
    %v6937 = vadd.f32 %v6936, 1.0
    %v6938 = vrcp.pop %v6937
    %v6939 = vmul.f32 1.0, %v6938
    %v6941 = vrot.slane %v6757, 7
    %v6943 = vmul.f32 %v6932, %v6941
    %v6944 = vmul.f32 %v6926, %v6933
    %v6945 = vadd.f32 %v6943, %v6944
    %v6946 = vtanh.pop %v6945
    %v6947 = vmul.f32 %v6939, %v6946
    %v6949 = vrot.slane %v6947, 6
    %6951 = vmatprep.subr.mxu0 %v5590
    %6952 = vmatpush1.msra.mxu0 %v5589
    %6953 = vmatprep.subr.mxu0 %v5594
    %6954 = vmatpush1.msra.mxu0 %v5593
    %6955 = vmatprep.subr.mxu0 %v5598
    %6956 = vmatpush1.msra.mxu0 %v5597
    %6957 = vmatprep.subr.mxu0 %v5602
    %6958 = vmatpush1.msra.mxu0 %v5601
    %6959 = vmatprep.subr.mxu0 %v5606
    %6960 = vmatpush1.msra.mxu0 %v5605
    %6961 = vmatprep.subr.mxu0 %v5610
    %6962 = vmatpush1.msra.mxu0 %v5609
    %6963 = vmatprep.subr.mxu0 %v5614
    %6964 = vmatpush1.msra.mxu0 %v5613
    %6965 = vmatprep.subr.mxu0 %v5618
    %6966 = vmatpush1.msra.mxu0 %v5617
    %6967 = vmatprep.subr.mxu0 %v5622
    %6968 = vmatpush1.msra.mxu0 %v5621
    %6969 = vmatprep.subr.mxu0 %v5626
    %6970 = vmatpush1.msra.mxu0 %v5625
    %6971 = vmatprep.subr.mxu0 %v5630
    %6972 = vmatpush1.msra.mxu0 %v5629
    %6973 = vmatprep.subr.mxu0 %v5634
    %6974 = vmatpush1.msra.mxu0 %v5633
    %6975 = vmatprep.subr.mxu0 %v5638
    %6976 = vmatpush1.msra.mxu0 %v5637
    %6977 = vmatprep.subr.mxu0 %v5642
    %6978 = vmatpush1.msra.mxu0 %v5641
    %6979 = vmatprep.subr.mxu0 %v5646
    %6980 = vmatpush1.msra.mxu0 %v5645
    %6981 = vmatprep.subr.mxu0 %v5650
    %6982 = vmatpush1.msra.mxu0 %v5649
    %6983 = vmatprep.subr.mxu0 0.0
    %6984 = vmatpush1.msra.mxu0 0.0
    %6985 = vmatprep.subr.mxu0 0.0
    %6986 = vmatpush1.msra.mxu0 0.0
    %6987 = vmatprep.subr.mxu0 0.0
    %6988 = vmatpush1.msra.mxu0 0.0
    %6989 = vmatprep.subr.mxu0 0.0
    %6990 = vmatpush1.msra.mxu0 0.0
    %6991 = vmatprep.subr.mxu0 0.0
    %6992 = vmatpush1.msra.mxu0 0.0
    %6993 = vmatprep.subr.mxu0 0.0
    %6994 = vmatpush1.msra.mxu0 0.0
    %6995 = vmatprep.subr.mxu0 0.0
    %6996 = vmatpush1.msra.mxu0 0.0
    %6997 = vmatprep.subr.mxu0 0.0
    %6998 = vmatpush1.msra.mxu0 0.0
    %6999 = vmatprep.subr.mxu0 0.0
    %7000 = vmatpush1.msra.mxu0 0.0
    %7001 = vmatprep.subr.mxu0 0.0
    %7002 = vmatpush1.msra.mxu0 0.0
    %7003 = vmatprep.subr.mxu0 0.0
    %7004 = vmatpush1.msra.mxu0 0.0
    %7005 = vmatprep.subr.mxu0 0.0
    %7006 = vmatpush1.msra.mxu0 0.0
    %7007 = vmatprep.subr.mxu0 0.0
    %7008 = vmatpush1.msra.mxu0 0.0
    %7009 = vmatprep.subr.mxu0 0.0
    %7010 = vmatpush1.msra.mxu0 0.0
    %7011 = vmatprep.subr.mxu0 0.0
    %7012 = vmatpush1.msra.mxu0 0.0
    %7013 = vmatprep.subr.mxu0 0.0
    %7014 = vmatpush1.msra.mxu0 0.0
    %7015 = vmatprep.mubr.f32.mxu0 0.0
    %7016 = vmatmul.mubr.f32.gmra.mrb[0].mxu0 %v6949
    %v7017 = vpop.f32.mrb[0].mxu0
    %v7018 = vadd.f32 0.0, %v7017
    %v7019 = vpop.f32.mrb[0].mxu0
    %v7020 = vadd.f32 0.0, %v7019
    %7021 = vdwg.mxu0
    %7022 = vmatprep.subr.mxu0 %v5592
    %7023 = vmatpush1.msra.mxu0 %v5591
    %7024 = vmatprep.subr.mxu0 %v5596
    %7025 = vmatpush1.msra.mxu0 %v5595
    %7026 = vmatprep.subr.mxu0 %v5600
    %7027 = vmatpush1.msra.mxu0 %v5599
    %7028 = vmatprep.subr.mxu0 %v5604
    %7029 = vmatpush1.msra.mxu0 %v5603
    %7030 = vmatprep.subr.mxu0 %v5608
    %7031 = vmatpush1.msra.mxu0 %v5607
    %7032 = vmatprep.subr.mxu0 %v5612
    %7033 = vmatpush1.msra.mxu0 %v5611
    %7034 = vmatprep.subr.mxu0 %v5616
    %7035 = vmatpush1.msra.mxu0 %v5615
    %7036 = vmatprep.subr.mxu0 %v5620
    %7037 = vmatpush1.msra.mxu0 %v5619
    %7038 = vmatprep.subr.mxu0 %v5624
    %7039 = vmatpush1.msra.mxu0 %v5623
    %7040 = vmatprep.subr.mxu0 %v5628
    %7041 = vmatpush1.msra.mxu0 %v5627
    %7042 = vmatprep.subr.mxu0 %v5632
    %7043 = vmatpush1.msra.mxu0 %v5631
    %7044 = vmatprep.subr.mxu0 %v5636
    %7045 = vmatpush1.msra.mxu0 %v5635
    %7046 = vmatprep.subr.mxu0 %v5640
    %7047 = vmatpush1.msra.mxu0 %v5639
    %7048 = vmatprep.subr.mxu0 %v5644
    %7049 = vmatpush1.msra.mxu0 %v5643
    %7050 = vmatprep.subr.mxu0 %v5648
    %7051 = vmatpush1.msra.mxu0 %v5647
    %7052 = vmatprep.subr.mxu0 %v5652
    %7053 = vmatpush1.msra.mxu0 %v5651
    %7054 = vmatprep.subr.mxu0 0.0
    %7055 = vmatpush1.msra.mxu0 0.0
    %7056 = vmatprep.subr.mxu0 0.0
    %7057 = vmatpush1.msra.mxu0 0.0
    %7058 = vmatprep.subr.mxu0 0.0
    %7059 = vmatpush1.msra.mxu0 0.0
    %7060 = vmatprep.subr.mxu0 0.0
    %7061 = vmatpush1.msra.mxu0 0.0
    %7062 = vmatprep.subr.mxu0 0.0
    %7063 = vmatpush1.msra.mxu0 0.0
    %7064 = vmatprep.subr.mxu0 0.0
    %7065 = vmatpush1.msra.mxu0 0.0
    %7066 = vmatprep.subr.mxu0 0.0
    %7067 = vmatpush1.msra.mxu0 0.0
    %7068 = vmatprep.subr.mxu0 0.0
    %7069 = vmatpush1.msra.mxu0 0.0
    %7070 = vmatprep.subr.mxu0 0.0
    %7071 = vmatpush1.msra.mxu0 0.0
    %7072 = vmatprep.subr.mxu0 0.0
    %7073 = vmatpush1.msra.mxu0 0.0
    %7074 = vmatprep.subr.mxu0 0.0
    %7075 = vmatpush1.msra.mxu0 0.0
    %7076 = vmatprep.subr.mxu0 0.0
    %7077 = vmatpush1.msra.mxu0 0.0
    %7078 = vmatprep.subr.mxu0 0.0
    %7079 = vmatpush1.msra.mxu0 0.0
    %7080 = vmatprep.subr.mxu0 0.0
    %7081 = vmatpush1.msra.mxu0 0.0
    %7082 = vmatprep.subr.mxu0 0.0
    %7083 = vmatpush1.msra.mxu0 0.0
    %7084 = vmatprep.subr.mxu0 0.0
    %7085 = vmatpush1.msra.mxu0 0.0
    %7086 = vmatprep.mubr.f32.mxu0 0.0
    %7087 = vmatmul.mubr.f32.gmra.mrb[0].mxu0 %v6949
    %v7088 = vpop.f32.mrb[0].mxu0
    %v7089 = vadd.f32 0.0, %v7088
    %v7090 = vpop.f32.mrb[0].mxu0
    %v7091 = vadd.f32 0.0, %v7090
    %7092 = vdwg.mxu0
    %v7097 = vrot.slane %v7018, 1
    %v7098 = vrot.slane %v7020, 1
    %v7099 = vrot.slane %v7089, 1
    %v7100 = vrot.slane %v7091, 1
    %v7105 = vadd.f32 %v5514, %v7097
    %v7106 = vadd.f32 %v5516, %v7098
    %v7107 = vadd.f32 %v5585, %v7099
    %v7108 = vadd.f32 %v5587, %v7100
    %v7109 = vxor.u32 %v7105, 2147483648
    %v7110 = vmul.f32 %v7109, 1.442695
    %v7111 = vpow.pop %v7110
    %v7112 = vadd.f32 %v7111, 1.0
    %v7113 = vrcp.pop %v7112
    %v7114 = vmul.f32 1.0, %v7113
    %v7115 = vxor.u32 %v7106, 2147483648
    %v7116 = vmul.f32 %v7115, 1.442695
    %v7117 = vpow.pop %v7116
    %v7118 = vadd.f32 %v7117, 1.0
    %v7119 = vrcp.pop %v7118
    %v7120 = vmul.f32 1.0, %v7119
    %v7121 = vtanh.pop %v7107
    %v7122 = vxor.u32 %v7108, 2147483648
    %v7123 = vmul.f32 %v7122, 1.442695
    %v7124 = vpow.pop %v7123
    %v7125 = vadd.f32 %v7124, 1.0
    %v7126 = vrcp.pop %v7125
    %v7127 = vmul.f32 1.0, %v7126
    %v7129 = vrot.slane %v6945, 7
    %v7131 = vmul.f32 %v7120, %v7129
    %v7132 = vmul.f32 %v7114, %v7121
    %v7133 = vadd.f32 %v7131, %v7132
    %v7134 = vtanh.pop %v7133
    %v7135 = vmul.f32 %v7127, %v7134
    %v7136 = vsel %vm192, %v5822, %v6007
    %v7137 = vsel %vm1891, %v7136, %v6195
    %v7138 = vsel %vm1893, %v7137, %v6383
    %v7139 = vsel %vm1895, %v7138, %v6571
    %v7140 = vsel %vm1897, %v7139, %v6759
    %v7141 = vsel %vm1899, %v7140, %v6947
    %v7142 = vsel %vm1901, %v7141, %v7135
    %v7143 = vld [vmem:[%s13] sm:$0xff]
    %v7144 = vld [vmem:[%s13 + $0x8] sm:$0xff]
    %v7145 = vld [vmem:[%s13 + $0x10] sm:$0xff]
    %v7146 = vld [vmem:[%s13 + $0x18] sm:$0xff]
    %v7147 = vld [vmem:[%s13 + $0x20] sm:$0xff]
    %v7148 = vld [vmem:[%s13 + $0x28] sm:$0xff]
    %v7149 = vld [vmem:[%s13 + $0x30] sm:$0xff]
    %v7150 = vld [vmem:[%s13 + $0x38] sm:$0xff]
    %v7151 = vld [vmem:[%s13 + $0x40] sm:$0xff]
    %v7152 = vld [vmem:[%s13 + $0x48] sm:$0xff]
    %v7153 = vld [vmem:[%s13 + $0x50] sm:$0xff]
    %v7154 = vld [vmem:[%s13 + $0x58] sm:$0xff]
    %v7155 = vld [vmem:[%s13 + $0x60] sm:$0xff]
    %v7156 = vld [vmem:[%s13 + $0x68] sm:$0xff]
    %v7157 = vld [vmem:[%s13 + $0x70] sm:$0xff]
    %v7158 = vld [vmem:[%s13 + $0x78] sm:$0xff]
    %v7159 = vld [vmem:[#allocation2] sm:$0x1]
    %v7161 = vlaneseq
    %v7162 = vshrl.u32 %v7161, 7
    %v7163 = vsub.s32 0, %v7162
    %v7164 = vrot.slane %v7159, %v7163
    %7166 = vmatprep.subr.mxu0 0.0
    %7167 = vmatpush1.msra.mxu0 %v7143
    %7168 = vmatprep.subr.mxu0 0.0
    %7169 = vmatpush1.msra.mxu0 %v7144
    %7170 = vmatprep.subr.mxu0 0.0
    %7171 = vmatpush1.msra.mxu0 %v7145
    %7172 = vmatprep.subr.mxu0 0.0
    %7173 = vmatpush1.msra.mxu0 %v7146
    %7174 = vmatprep.subr.mxu0 0.0
    %7175 = vmatpush1.msra.mxu0 %v7147
    %7176 = vmatprep.subr.mxu0 0.0
    %7177 = vmatpush1.msra.mxu0 %v7148
    %7178 = vmatprep.subr.mxu0 0.0
    %7179 = vmatpush1.msra.mxu0 %v7149
    %7180 = vmatprep.subr.mxu0 0.0
    %7181 = vmatpush1.msra.mxu0 %v7150
    %7182 = vmatprep.subr.mxu0 0.0
    %7183 = vmatpush1.msra.mxu0 %v7151
    %7184 = vmatprep.subr.mxu0 0.0
    %7185 = vmatpush1.msra.mxu0 %v7152
    %7186 = vmatprep.subr.mxu0 0.0
    %7187 = vmatpush1.msra.mxu0 %v7153
    %7188 = vmatprep.subr.mxu0 0.0
    %7189 = vmatpush1.msra.mxu0 %v7154
    %7190 = vmatprep.subr.mxu0 0.0
    %7191 = vmatpush1.msra.mxu0 %v7155
    %7192 = vmatprep.subr.mxu0 0.0
    %7193 = vmatpush1.msra.mxu0 %v7156
    %7194 = vmatprep.subr.mxu0 0.0
    %7195 = vmatpush1.msra.mxu0 %v7157
    %7196 = vmatprep.subr.mxu0 0.0
    %7197 = vmatpush1.msra.mxu0 %v7158
    %7198 = vmatprep.subr.mxu0 0.0
    %7199 = vmatpush1.msra.mxu0 0.0
    %7200 = vmatprep.subr.mxu0 0.0
    %7201 = vmatpush1.msra.mxu0 0.0
    %7202 = vmatprep.subr.mxu0 0.0
    %7203 = vmatpush1.msra.mxu0 0.0
    %7204 = vmatprep.subr.mxu0 0.0
    %7205 = vmatpush1.msra.mxu0 0.0
    %7206 = vmatprep.subr.mxu0 0.0
    %7207 = vmatpush1.msra.mxu0 0.0
    %7208 = vmatprep.subr.mxu0 0.0
    %7209 = vmatpush1.msra.mxu0 0.0
    %7210 = vmatprep.subr.mxu0 0.0
    %7211 = vmatpush1.msra.mxu0 0.0
    %7212 = vmatprep.subr.mxu0 0.0
    %7213 = vmatpush1.msra.mxu0 0.0
    %7214 = vmatprep.subr.mxu0 0.0
    %7215 = vmatpush1.msra.mxu0 0.0
    %7216 = vmatprep.subr.mxu0 0.0
    %7217 = vmatpush1.msra.mxu0 0.0
    %7218 = vmatprep.subr.mxu0 0.0
    %7219 = vmatpush1.msra.mxu0 0.0
    %7220 = vmatprep.subr.mxu0 0.0
    %7221 = vmatpush1.msra.mxu0 0.0
    %7222 = vmatprep.subr.mxu0 0.0
    %7223 = vmatpush1.msra.mxu0 0.0
    %7224 = vmatprep.subr.mxu0 0.0
    %7225 = vmatpush1.msra.mxu0 0.0
    %7226 = vmatprep.subr.mxu0 0.0
    %7227 = vmatpush1.msra.mxu0 0.0
    %7228 = vmatprep.subr.mxu0 0.0
    %7229 = vmatpush1.msra.mxu0 0.0
    %7230 = vmatprep.mubr.f32.mxu0 0.0
    %7231 = vmatmul.mubr.f32.gmra.mrb[0].mxu0 %v7142
    %v7232 = vpop.f32.mrb[0].mxu0
    %v7233 = vadd.f32 %v7164, %v7232
    %v7234 = vpop.f32.mrb[0].mxu0
    %7235 = vdwg.mxu0
    %7236 = vst.msk [vmem:[%s15] sm:$0xff] %vm188, %v7233
    // Predicated region
    $region90: #{tpu_custom_call.1} parent=1 // pred_check
      _
    $region91: #{tpu_custom_call.1} parent=1 // pred_check_branch
      %7238 = sbr.rel (0) target = $region93
    $region92: #{tpu_custom_call.1} parent=1 // pred_region
      _
    $region93: #{tpu_custom_call.1} parent=1 // pred_fallthru
      _
    // Predicated region
    $region94: #{tpu_custom_call.1} parent=1 // pred_check
      _
    $region95: #{tpu_custom_call.1} parent=1 // pred_check_branch
      %7240 = sbr.rel (0) target = $region97
    $region96: #{tpu_custom_call.1} parent=1 // pred_region
      _
    $region97: #{tpu_custom_call.1} parent=1 // pred_fallthru
      _
    %7241 = vsyncpa [#allocation4], 1
    %7242 = vsyncpa [#allocation6], 1
    %7243 = vsyncpa [#allocation9], 1
    %7244 = vsyncpa [#allocation12], 1

</llo_original>
